<compile_context>
chip_gen: v7x
topology: tpu7x:2x2x1
jax: 0.10.0
libtpu: 0.0.40
codegen_flags: <defaults>
</compile_context>

<pallas_src>
import functools
import math

import jax
import jax.numpy as jnp
from jax import lax
from jax.experimental import pallas as pl
from jax.experimental.pallas import tpu as pltpu

# ----------------------------- small config ---------------------------------
HIDDEN = 32
NUM_HEADS = 4
NUM_KV_HEADS = 2
HEAD_DIM = HIDDEN // NUM_HEADS          # 8
N_REP = NUM_HEADS // NUM_KV_HEADS       # 2
INTERMEDIATE = 64
RMS_EPS = 1e-6
ROPE_THETA = 10000.0
Q_LEN = 8
NUM_NODES = 4
NUM_EDGES = 6


# ----------------------------- helpers ---------------------------------------
def rope_tables(length, head_dim, theta):
    inv_freq = 1.0 / (theta ** (jnp.arange(0, head_dim, 2, dtype=jnp.float32) / head_dim))
    pos = jnp.arange(length, dtype=jnp.float32)
    freqs = pos[:, None] * inv_freq[None, :]
    emb = jnp.concatenate([freqs, freqs], axis=-1)
    return jnp.cos(emb), jnp.sin(emb)


# ----------------------------- the fused kernel -------------------------------
def _gofa_layer_kernel(h_ref, e_ref, ln_in_ref, post_ln_ref,
                       wn_ref, we_ref,
                       cos_qn_ref, sin_qn_ref, cos_kn_ref, sin_kn_ref,
                       cos_ke_ref, sin_ke_ref,
                       gdst_ref, gsrc_ref, gagg_ref, d1h_ref, d1ht_ref,
                       wo_ref, wgu_ref, wd_ref,
                       o_ref, *,
                       num_heads, head_dim, q_len, num_nodes, num_edges,
                       hidden, inter, eps):
    f32 = jnp.float32
    bf16 = jnp.bfloat16
    scale = 1.0 / math.sqrt(head_dim)
    nq = num_nodes * q_len
    eq = num_edges * q_len
    half = head_dim // 2

    def rms(x, w):                       # f32 stats (norm kept in f32)
        var = jnp.mean(x * x, axis=-1, keepdims=True)
        return x * lax.rsqrt(var + eps) * w

    def rope(x, cos, sin):               # x: (H, rows, hd) f32, cos/sin: (rows, hd) f32
        x1 = x[..., :half]
        x2 = x[..., half:]
        rot = jnp.concatenate([-x2, x1], axis=-1)
        return x * cos[None] + rot * sin[None]

    h = h_ref[...].astype(f32)           # (N*q, hidden) node hidden states
    eh = e_ref[...].astype(f32)          # (E*q, hidden) edge hidden states

    # ---- input_layernorm (nodes + edges) ----
    w_ln = ln_in_ref[...].astype(f32)
    hn = rms(h, w_ln)
    en = rms(eh, w_ln)

    # ---- fused per-head Q|K|V projection; heads on the leading (batch) axis so all
    #      attention math is head-batched (bf16 MXU inputs, f32 accumulation) ----
    hn_b = jnp.broadcast_to(hn.astype(bf16)[None], (num_heads, nq, hidden))
    en_b = jnp.broadcast_to(en.astype(bf16)[None], (num_heads, eq, hidden))
    qkv_n = jnp.einsum('hrc,hcd->hrd', hn_b, wn_ref[...].astype(bf16),
                       preferred_element_type=f32)               # (H, N*q, 3*hd)
    kv_e = jnp.einsum('hrc,hcd->hrd', en_b, we_ref[...].astype(bf16),
                      preferred_element_type=f32)                # (H, E*q, 2*hd)

    # ---- RoPE on q|k only (queries at pos t, node keys at 2t, edge keys at 2t+1) ----
    q_n = rope(qkv_n[..., :head_dim], cos_qn_ref[...], sin_qn_ref[...])
    k_n = rope(qkv_n[..., head_dim:2 * head_dim], cos_kn_ref[...], sin_kn_ref[...])
    v_n = qkv_n[..., 2 * head_dim:]
    k_e = rope(kv_e[..., :head_dim], cos_ke_ref[...], sin_ke_ref[...])
    v_e = kv_e[..., head_dim:]

    # ---- gather q[dst], k[src], v[src] with one-hot matmuls (stays in VMEM) ----
    # TODO(synk): at scale replace with scalar-prefetched index-driven gathers (O(E)).
    gdst_b = jnp.broadcast_to(gdst_ref[...].astype(bf16)[None], (num_heads, eq, nq))
    gsrc_b = jnp.broadcast_to(gsrc_ref[...].astype(bf16)[None], (num_heads, eq, nq))
    q_g = jnp.einsum('hrn,hnd->hrd', gdst_b, q_n.astype(bf16), preferred_element_type=f32)
    k_g = jnp.einsum('hrn,hnd->hrd', gsrc_b, k_n.astype(bf16), preferred_element_type=f32)
    v_g = jnp.einsum('hrn,hnd->hrd', gsrc_b, v_n.astype(bf16), preferred_element_type=f32)

    def to_edge_batch(x):                # (H, E*q, hd) -> (H*E, q, hd), leading-dim reshapes
        return x.reshape(num_heads, num_edges, q_len, head_dim).reshape(
            num_heads * num_edges, q_len, head_dim)

    q_b = to_edge_batch(q_g).astype(bf16)
    kn_b = to_edge_batch(k_g).astype(bf16)
    vn_b = to_edge_batch(v_g).astype(bf16)
    ke_b = to_edge_batch(k_e).astype(bf16)
    ve_b = to_edge_batch(v_e).astype(bf16)

    # ---- per-(head, edge) scores, one batched dot_general each; node-key and edge-key
    #      blocks are kept separate (softmax / alpha@V are order-invariant over kv) ----
    s_n = jnp.einsum('bqd,bkd->bqk', q_b, kn_b, preferred_element_type=f32) * scale
    s_e = jnp.einsum('bqd,bkd->bqk', q_b, ke_b, preferred_element_type=f32) * scale

    # ---- scatter softmax grouped by destination node (stats in f32) ----
    m_edge = jnp.maximum(jnp.max(s_n, axis=-1), jnp.max(s_e, axis=-1))          # (H*E, q)
    m_edge3 = m_edge.reshape(num_heads, num_edges, q_len)                        # (H, E, q)
    d1h = d1h_ref[...].astype(f32)                                               # (E, N)
    d1ht = d1ht_ref[...].astype(f32)                                             # (N, E)
    bigneg = -1e30
    masked = jnp.where(d1h[None, :, :, None] > 0.5, m_edge3[:, :, None, :], bigneg)
    m_node = jnp.max(masked, axis=1)                                             # (H, N, q)

    d1h_b = jnp.broadcast_to(d1h[None], (num_heads, num_edges, num_nodes))
    d1ht_b = jnp.broadcast_to(d1ht[None], (num_heads, num_nodes, num_edges))
    m_back = jnp.einsum('hen,hnq->heq', d1h_b, m_node, preferred_element_type=f32)
    m_back_b = m_back.reshape(num_heads * num_edges, q_len)[:, :, None]          # (H*E, q, 1)

    p_n = jnp.exp(s_n - m_back_b)
    p_e = jnp.exp(s_e - m_back_b)
    den_edge = (jnp.sum(p_n, axis=-1) + jnp.sum(p_e, axis=-1)).reshape(
        num_heads, num_edges, q_len)                                             # (H, E, q)
    den_node = jnp.einsum('hne,heq->hnq', d1ht_b, den_edge, preferred_element_type=f32)
    den_back = jnp.einsum('hen,hnq->heq', d1h_b, den_node, preferred_element_type=f32)
    inv_den = 1.0 / (den_back.reshape(num_heads * num_edges, q_len)[:, :, None] + 1e-16)

    # ---- alpha @ V, batched over (head, edge) ----
    a_n = (p_n * inv_den).astype(bf16)
    a_e = (p_e * inv_den).astype(bf16)
    o_b = (jnp.einsum('bqk,bkd->bqd', a_n, vn_b, preferred_element_type=f32)
           + jnp.einsum('bqk,bkd->bqd', a_e, ve_b, preferred_element_type=f32))  # (H*E, q, hd)

    # ---- scatter-add aggregation per destination node (aggr='add'), o_proj, residual ----
    o_h = o_b.reshape(num_heads, num_edges, q_len, head_dim).reshape(
        num_heads, eq, head_dim)                                                 # (H, E*q, hd)
    gagg_b = jnp.broadcast_to(gagg_ref[...].astype(bf16)[None], (num_heads, nq, eq))
    msg = jnp.einsum('hre,hed->hrd', gagg_b, o_h.astype(bf16),
                     preferred_element_type=f32)                                 # (H, N*q, hd)
    attn = jnp.sum(
        jnp.einsum('hrd,hdc->hrc', msg.astype(bf16), wo_ref[...].astype(bf16),
                   preferred_element_type=f32), axis=0)                          # (N*q, hidden)
    h1 = h + attn

    # ---- post_attention_layernorm -> SwiGLU MLP (fused gate|up) -> residual ----
    hn2 = rms(h1, post_ln_ref[...].astype(f32))
    gu = jnp.dot(hn2.astype(bf16), wgu_ref[...].astype(bf16),
                 preferred_element_type=f32)                                     # (N*q, 2*inter)
    g = gu[:, :inter]
    u = gu[:, inter:]
    act = g * jax.nn.sigmoid(g) * u                                              # f32 EUP path
    mlp = jnp.dot(act.astype(bf16), wd_ref[...].astype(bf16), preferred_element_type=f32)
    out = h1 + mlp                                                               # (N*q, hidden)

    # ---- lane-dense writeback: (N, q_len*hidden) slab (last dim 256, unmasked vst) ----
    out3 = out.reshape(num_nodes, q_len, hidden)
    slab = jnp.concatenate([out3[:, t, :] for t in range(q_len)], axis=-1)       # (N, q*hidden)
    o_ref[...] = slab.astype(o_ref.dtype)


# ----------------------------- full layer wrapper -----------------------------
@jax.jit
def gofa_decoder_layer(params, hidden_states, edge_index, edge_hidden_states):
    n, q_len, hidden = hidden_states.shape
    e = edge_hidden_states.shape[0]
    src, dst = edge_index[0], edge_index[1]

    h_flat = hidden_states.reshape(n * q_len, hidden).astype(jnp.float32)
    e_flat = edge_hidden_states.reshape(e * q_len, hidden).astype(jnp.float32)

    # --- per-head weights; GQA kv heads pre-expanded (repeat_kv folded into weights) ---
    def per_head(w, heads):
        return jnp.transpose(w.reshape(hidden, heads, HEAD_DIM), (1, 0, 2))
    wq3 = per_head(params["wq"], NUM_HEADS)                                  # (H, hidden, hd)
    wk3 = jnp.repeat(per_head(params["wk"], NUM_KV_HEADS), N_REP, axis=0)    # (H, hidden, hd)
    wv3 = jnp.repeat(per_head(params["wv"], NUM_KV_HEADS), N_REP, axis=0)
    w_node = jnp.concatenate([wq3, wk3, wv3], axis=-1)                       # (H, hidden, 3*hd)
    w_edge = jnp.concatenate([wk3, wv3], axis=-1)                            # (H, hidden, 2*hd)
    wo3 = params["wo"].reshape(NUM_HEADS, HEAD_DIM, hidden)                  # rows = (h, d)
    wgu = jnp.concatenate([params["wg"], params["wu"]], axis=1)              # (hidden, 2*inter)

    # --- RoPE tables (queries @ pos t, node keys @ 2t, edge keys @ 2t+1) ---
    cos2, sin2 = rope_tables(2 * q_len, HEAD_DIM, ROPE_THETA)
    cos_qn = jnp.tile(cos2[:q_len], (n, 1))
    sin_qn = jnp.tile(sin2[:q_len], (n, 1))
    cos_kn = jnp.tile(cos2[0::2], (n, 1))
    sin_kn = jnp.tile(sin2[0::2], (n, 1))
    cos_ke = jnp.tile(cos2[1::2], (e, 1))
    sin_ke = jnp.tile(sin2[1::2], (e, 1))

    # --- one-hot gather / scatter operators for the arbitrary edge_index ---
    # TODO(synk): at scale, sort edges by dst + drive gathers from scalar-prefetched
    # src/dst indices instead of these dense matrices.
    onehot_dst = jax.nn.one_hot(dst, n, dtype=jnp.float32)                   # (E, N)
    onehot_src = jax.nn.one_hot(src, n, dtype=jnp.float32)
    eye_q = jnp.eye(q_len, dtype=jnp.float32)
    g_dst = jnp.einsum('en,tu->etnu', onehot_dst, eye_q).reshape(e * q_len, n * q_len)
    g_src = jnp.einsum('en,tu->etnu', onehot_src, eye_q).reshape(e * q_len, n * q_len)
    g_agg = g_dst.T                                                          # (N*q, E*q)

    args = (h_flat, e_flat,
            params["input_ln"].reshape(1, hidden),
            params["post_ln"].reshape(1, hidden),
            w_node, w_edge,
            cos_qn, sin_qn, cos_kn, sin_kn, cos_ke, sin_ke,
            g_dst, g_src, g_agg, onehot_dst, onehot_dst.T,
            wo3, wgu, params["wd"])

    def full_spec(a):
        zeros = (0,) * a.ndim
        return pl.BlockSpec(a.shape, lambda i, z=zeros: z)

    # TODO(synk): for scaled shapes, use a real grid over edge tiles (reduction axis
    # last, pl.when init/finalise), a 'parallel' leading axis for v7x's 2 TensorCores
    # and an explicit vmem_limit_bytes budget.
    out = pl.pallas_call(
        functools.partial(
            _gofa_layer_kernel,
            num_heads=NUM_HEADS, head_dim=HEAD_DIM, q_len=q_len,
            num_nodes=n, num_edges=e, hidden=hidden, inter=INTERMEDIATE, eps=RMS_EPS),
        out_shape=jax.ShapeDtypeStruct((n, q_len * hidden), hidden_states.dtype),
        grid=(1,),
        in_specs=[full_spec(a) for a in args],
        out_specs=pl.BlockSpec((n, q_len * hidden), lambda i: (0, 0)),
        compiler_params=pltpu.CompilerParams(dimension_semantics=("arbitrary",)),
    )(*args)
    return out.reshape(n, q_len, hidden)


# ----------------------------- pure-JAX reference -----------------------------
def _ref_rmsnorm(x, w, eps=RMS_EPS):
    var = jnp.mean(x.astype(jnp.float32) ** 2, axis=-1, keepdims=True)
    return w * (x * lax.rsqrt(var + eps))


def _ref_rot_half(x):
    h = x.shape[-1] // 2
    return jnp.concatenate([-x[..., h:], x[..., :h]], axis=-1)


def ref_forward(params, hidden_states, edge_index, edge_hidden_states):
    n, q_len, hidden = hidden_states.shape
    e = edge_hidden_states.shape[0]
    src, dst = edge_index[0], edge_index[1]

    residual = hidden_states
    hs = _ref_rmsnorm(hidden_states, params["input_ln"])
    es = _ref_rmsnorm(edge_hidden_states, params["input_ln"])

    q = hs @ params["wq"]
    k = hs @ params["wk"]
    v = hs @ params["wv"]
    ek = es @ params["wk"]
    ev = es @ params["wv"]

    q_i, k_j, v_j = q[dst], k[src], v[src]
    key_states = jnp.stack([k_j, ek], axis=2).reshape(e, 2 * q_len, -1)
    value_states = jnp.stack([v_j, ev], axis=2).reshape(e, 2 * q_len, -1)
    qs = q_i.reshape(e, q_len, NUM_HEADS, HEAD_DIM).transpose(0, 2, 1, 3)
    ks = key_states.reshape(e, 2 * q_len, NUM_KV_HEADS, HEAD_DIM).transpose(0, 2, 1, 3)
    vs = value_states.reshape(e, 2 * q_len, NUM_KV_HEADS, HEAD_DIM).transpose(0, 2, 1, 3)

    cos_q, sin_q = rope_tables(q_len, HEAD_DIM, ROPE_THETA)
    cos_k, sin_k = rope_tables(2 * q_len, HEAD_DIM, ROPE_THETA)
    qs = qs * cos_q[None, None] + _ref_rot_half(qs) * sin_q[None, None]
    ks = ks * cos_k[None, None] + _ref_rot_half(ks) * sin_k[None, None]
    ks = jnp.repeat(ks, N_REP, axis=1)
    vs = jnp.repeat(vs, N_REP, axis=1)

    alpha = jnp.einsum("ehqd,ehkd->ehqk", qs, ks) / math.sqrt(HEAD_DIM)
    m_edge = alpha.max(axis=-1)
    m_node = jax.ops.segment_max(m_edge, dst, num_segments=n)
    ex = jnp.exp(alpha - m_node[dst][..., None])
    den = jax.ops.segment_sum(ex.sum(-1), dst, num_segments=n)
    aw = ex / (den[dst][..., None] + 1e-16)

    out = jnp.einsum("ehqk,ehkd->ehqd", aw, vs)
    out = out.transpose(0, 2, 1, 3).reshape(e, q_len, hidden)
    out = jax.ops.segment_sum(out, dst, num_segments=n)
    out = out @ params["wo"]

    hidden_states = residual + out
    residual = hidden_states
    hn = _ref_rmsnorm(hidden_states, params["post_ln"])
    g = hn @ params["wg"]
    u = hn @ params["wu"]
    mlp = (g * jax.nn.sigmoid(g) * u) @ params["wd"]
    return residual + mlp


# ----------------------------- main -------------------------------------------
if __name__ == "__main__":
    key = jax.random.PRNGKey(0)
    ks = jax.random.split(key, 9)
    scale = 0.02
    params = {
        "input_ln": jnp.ones((HIDDEN,), jnp.float32),
        "post_ln": jnp.ones((HIDDEN,), jnp.float32),
        "wq": (jax.random.normal(ks[0], (HIDDEN, NUM_HEADS * HEAD_DIM)) * scale).astype(jnp.float32),
        "wk": (jax.random.normal(ks[1], (HIDDEN, NUM_KV_HEADS * HEAD_DIM)) * scale).astype(jnp.float32),
        "wv": (jax.random.normal(ks[2], (HIDDEN, NUM_KV_HEADS * HEAD_DIM)) * scale).astype(jnp.float32),
        "wo": (jax.random.normal(ks[3], (HIDDEN, HIDDEN)) * scale).astype(jnp.float32),
        "wg": (jax.random.normal(ks[4], (HIDDEN, INTERMEDIATE)) * scale).astype(jnp.float32),
        "wu": (jax.random.normal(ks[5], (HIDDEN, INTERMEDIATE)) * scale).astype(jnp.float32),
        "wd": (jax.random.normal(ks[6], (INTERMEDIATE, HIDDEN)) * scale).astype(jnp.float32),
    }

    hidden_states = jax.random.normal(ks[7], (NUM_NODES, Q_LEN, HIDDEN), jnp.float32)
    edge_hidden_states = jax.random.normal(ks[8], (NUM_EDGES, Q_LEN, HIDDEN), jnp.float32)
    edge_index = jnp.array([[0, 1, 2, 3, 1, 2],     # source nodes (j)
                            [1, 2, 3, 0, 0, 1]],    # target nodes (i)
                           dtype=jnp.int32)

    out = gofa_decoder_layer(params, hidden_states, edge_index, edge_hidden_states)
    out = jax.block_until_ready(out)

    # accurate f32 reference (the kernel itself uses bf16 MXU inputs / f32 accumulation)
    with jax.default_matmul_precision("highest"):
        ref = ref_forward(params, hidden_states, edge_index, edge_hidden_states)
    ref = jax.block_until_ready(ref)

    assert out.shape == (NUM_NODES, Q_LEN, HIDDEN)
    if not bool(jnp.allclose(out, ref, atol=3e-3, rtol=3e-3)):
        max_err = float(jnp.max(jnp.abs(out - ref)))
        raise AssertionError(f"Pallas output mismatch vs reference (max abs err {max_err})")
    print("KERNEL_OK")
</pallas_src>

<mosaic_0001>
module attributes {stable_mosaic.version = 11 : i64} {
  func.func @_gofa_layer_kernel(%arg0: i32, %arg1: memref<32x32xf32, #tpu.memory_space<vmem>>, %arg2: memref<48x32xf32, #tpu.memory_space<vmem>>, %arg3: memref<1x32xf32, #tpu.memory_space<vmem>>, %arg4: memref<1x32xf32, #tpu.memory_space<vmem>>, %arg5: memref<4x32x24xf32, #tpu.memory_space<vmem>>, %arg6: memref<4x32x16xf32, #tpu.memory_space<vmem>>, %arg7: memref<32x8xf32, #tpu.memory_space<vmem>>, %arg8: memref<32x8xf32, #tpu.memory_space<vmem>>, %arg9: memref<32x8xf32, #tpu.memory_space<vmem>>, %arg10: memref<32x8xf32, #tpu.memory_space<vmem>>, %arg11: memref<48x8xf32, #tpu.memory_space<vmem>>, %arg12: memref<48x8xf32, #tpu.memory_space<vmem>>, %arg13: memref<48x32xf32, #tpu.memory_space<vmem>>, %arg14: memref<48x32xf32, #tpu.memory_space<vmem>>, %arg15: memref<32x48xf32, #tpu.memory_space<vmem>>, %arg16: memref<6x4xf32, #tpu.memory_space<vmem>>, %arg17: memref<4x6xf32, #tpu.memory_space<vmem>>, %arg18: memref<4x8x32xf32, #tpu.memory_space<vmem>>, %arg19: memref<32x128xf32, #tpu.memory_space<vmem>>, %arg20: memref<64x32xf32, #tpu.memory_space<vmem>>, %arg21: memref<4x256xf32, #tpu.memory_space<vmem>>) attributes {dimension_semantics = [#tpu.dimension_semantics<arbitrary>], iteration_bounds = array<i64: 1>, scalar_prefetch = 0 : i64, scratch_operands = 0 : i64, tpu.core_type = #tpu.core_type<tc>, window_params = [{pipeline_mode = #tpu.pipeline_mode<synchronous>, transform_indices = @transform_0, window_bounds = array<i64: 32, 32>}, {pipeline_mode = #tpu.pipeline_mode<synchronous>, transform_indices = @transform_1, window_bounds = array<i64: 48, 32>}, {pipeline_mode = #tpu.pipeline_mode<synchronous>, transform_indices = @transform_2, window_bounds = array<i64: 1, 32>}, {pipeline_mode = #tpu.pipeline_mode<synchronous>, transform_indices = @transform_3, window_bounds = array<i64: 1, 32>}, {pipeline_mode = #tpu.pipeline_mode<synchronous>, transform_indices = @transform_4, window_bounds = array<i64: 4, 32, 24>}, {pipeline_mode = #tpu.pipeline_mode<synchronous>, transform_indices = @transform_5, window_bounds = array<i64: 4, 32, 16>}, {pipeline_mode = #tpu.pipeline_mode<synchronous>, transform_indices = @transform_6, window_bounds = array<i64: 32, 8>}, {pipeline_mode = #tpu.pipeline_mode<synchronous>, transform_indices = @transform_7, window_bounds = array<i64: 32, 8>}, {pipeline_mode = #tpu.pipeline_mode<synchronous>, transform_indices = @transform_8, window_bounds = array<i64: 32, 8>}, {pipeline_mode = #tpu.pipeline_mode<synchronous>, transform_indices = @transform_9, window_bounds = array<i64: 32, 8>}, {pipeline_mode = #tpu.pipeline_mode<synchronous>, transform_indices = @transform_10, window_bounds = array<i64: 48, 8>}, {pipeline_mode = #tpu.pipeline_mode<synchronous>, transform_indices = @transform_11, window_bounds = array<i64: 48, 8>}, {pipeline_mode = #tpu.pipeline_mode<synchronous>, transform_indices = @transform_12, window_bounds = array<i64: 48, 32>}, {pipeline_mode = #tpu.pipeline_mode<synchronous>, transform_indices = @transform_13, window_bounds = array<i64: 48, 32>}, {pipeline_mode = #tpu.pipeline_mode<synchronous>, transform_indices = @transform_14, window_bounds = array<i64: 32, 48>}, {pipeline_mode = #tpu.pipeline_mode<synchronous>, transform_indices = @transform_15, window_bounds = array<i64: 6, 4>}, {pipeline_mode = #tpu.pipeline_mode<synchronous>, transform_indices = @transform_16, window_bounds = array<i64: 4, 6>}, {pipeline_mode = #tpu.pipeline_mode<synchronous>, transform_indices = @transform_17, window_bounds = array<i64: 4, 8, 32>}, {pipeline_mode = #tpu.pipeline_mode<synchronous>, transform_indices = @transform_18, window_bounds = array<i64: 32, 128>}, {pipeline_mode = #tpu.pipeline_mode<synchronous>, transform_indices = @transform_19, window_bounds = array<i64: 64, 32>}, {pipeline_mode = #tpu.pipeline_mode<synchronous>, transform_indices = @transform_20, window_bounds = array<i64: 4, 256>}]} {
    %c0 = arith.constant 0 : index
    %c0_0 = arith.constant 0 : index
    %0 = vector.load %arg1[%c0, %c0_0] : memref<32x32xf32, #tpu.memory_space<vmem>>, vector<32x32xf32>
    %c0_1 = arith.constant 0 : index
    %c0_2 = arith.constant 0 : index
    %1 = vector.load %arg2[%c0_1, %c0_2] : memref<48x32xf32, #tpu.memory_space<vmem>>, vector<48x32xf32>
    %c0_3 = arith.constant 0 : index
    %c0_4 = arith.constant 0 : index
    %2 = vector.load %arg3[%c0_3, %c0_4] : memref<1x32xf32, #tpu.memory_space<vmem>>, vector<1x32xf32>
    %3 = arith.mulf %0, %0 : vector<32x32xf32>
    %cst = arith.constant dense<0.000000e+00> : vector<32xf32>
    %4 = vector.multi_reduction <add>, %3, %cst [1] : vector<32x32xf32> to vector<32xf32>
    %5 = vector.shape_cast %4 : vector<32xf32> to vector<32x1xf32>
    %cst_5 = arith.constant 3.200000e+01 : f32
    %6 = vector.broadcast %cst_5 : f32 to vector<32x1xf32>
    %7 = arith.divf %5, %6 : vector<32x1xf32>
    %cst_6 = arith.constant 9.99999997E-7 : f32
    %8 = vector.broadcast %cst_6 : f32 to vector<32x1xf32>
    %9 = arith.addf %7, %8 : vector<32x1xf32>
    %10 = math.rsqrt %9 : vector<32x1xf32>
    %11 = vector.broadcast %10 : vector<32x1xf32> to vector<32x32xf32>
    %12 = arith.mulf %0, %11 : vector<32x32xf32>
    %13 = vector.broadcast %2 : vector<1x32xf32> to vector<32x32xf32>
    %14 = arith.mulf %12, %13 : vector<32x32xf32>
    %15 = arith.mulf %1, %1 : vector<48x32xf32>
    %cst_7 = arith.constant dense<0.000000e+00> : vector<48xf32>
    %16 = vector.multi_reduction <add>, %15, %cst_7 [1] : vector<48x32xf32> to vector<48xf32>
    %17 = vector.shape_cast %16 : vector<48xf32> to vector<48x1xf32>
    %cst_8 = arith.constant 3.200000e+01 : f32
    %18 = vector.broadcast %cst_8 : f32 to vector<48x1xf32>
    %19 = arith.divf %17, %18 : vector<48x1xf32>
    %cst_9 = arith.constant 9.99999997E-7 : f32
    %20 = vector.broadcast %cst_9 : f32 to vector<48x1xf32>
    %21 = arith.addf %19, %20 : vector<48x1xf32>
    %22 = math.rsqrt %21 : vector<48x1xf32>
    %23 = vector.broadcast %22 : vector<48x1xf32> to vector<48x32xf32>
    %24 = arith.mulf %1, %23 : vector<48x32xf32>
    %25 = vector.broadcast %2 : vector<1x32xf32> to vector<48x32xf32>
    %26 = arith.mulf %24, %25 : vector<48x32xf32>
    %27 = arith.truncf %14 : vector<32x32xf32> to vector<32x32xbf16>
    %28 = vector.shape_cast %27 : vector<32x32xbf16> to vector<1x32x32xbf16>
    %29 = vector.shape_cast %28 : vector<1x32x32xbf16> to vector<1x32x32xbf16>
    %30 = vector.broadcast %29 : vector<1x32x32xbf16> to vector<4x32x32xbf16>
    %31 = arith.truncf %26 : vector<48x32xf32> to vector<48x32xbf16>
    %32 = vector.shape_cast %31 : vector<48x32xbf16> to vector<1x48x32xbf16>
    %33 = vector.shape_cast %32 : vector<1x48x32xbf16> to vector<1x48x32xbf16>
    %34 = vector.broadcast %33 : vector<1x48x32xbf16> to vector<4x48x32xbf16>
    %c0_10 = arith.constant 0 : index
    %c0_11 = arith.constant 0 : index
    %c0_12 = arith.constant 0 : index
    %35 = vector.load %arg5[%c0_10, %c0_11, %c0_12] : memref<4x32x24xf32, #tpu.memory_space<vmem>>, vector<4x32x24xf32>
    %36 = arith.truncf %35 : vector<4x32x24xf32> to vector<4x32x24xbf16>
    "tpu.trace_start"() <{level = 10 : i32, message = "hrc,hcd->hrd"}> : () -> ()
    %cst_13 = arith.constant dense<0.000000e+00> : vector<4x32x24xf32>
    %37 = tpu.matmul %30, %36, %cst_13 {dimension_numbers = #tpu.dot_dimension_numbers<[2], [1], [1], [2], [0, 0, 0, 1, 1, 2], [0], [0]>} : vector<4x32x32xbf16>, vector<4x32x24xbf16>, vector<4x32x24xf32> -> vector<4x32x24xf32>
    "tpu.trace_stop"() : () -> ()
    %c0_14 = arith.constant 0 : index
    %c0_15 = arith.constant 0 : index
    %c0_16 = arith.constant 0 : index
    %38 = vector.load %arg6[%c0_14, %c0_15, %c0_16] : memref<4x32x16xf32, #tpu.memory_space<vmem>>, vector<4x32x16xf32>
    %39 = arith.truncf %38 : vector<4x32x16xf32> to vector<4x32x16xbf16>
    "tpu.trace_start"() <{level = 10 : i32, message = "hrc,hcd->hrd"}> : () -> ()
    %cst_17 = arith.constant dense<0.000000e+00> : vector<4x48x16xf32>
    %40 = tpu.matmul %34, %39, %cst_17 {dimension_numbers = #tpu.dot_dimension_numbers<[2], [1], [1], [2], [0, 0, 0, 1, 1, 2], [0], [0]>} : vector<4x48x32xbf16>, vector<4x32x16xbf16>, vector<4x48x16xf32> -> vector<4x48x16xf32>
    "tpu.trace_stop"() : () -> ()
    %41 = vector.extract_strided_slice %37 {offsets = [0, 0, 0], sizes = [4, 32, 8], strides = [1, 1, 1]} : vector<4x32x24xf32> to vector<4x32x8xf32>
    %c0_18 = arith.constant 0 : index
    %c0_19 = arith.constant 0 : index
    %42 = vector.load %arg7[%c0_18, %c0_19] : memref<32x8xf32, #tpu.memory_space<vmem>>, vector<32x8xf32>
    %c0_20 = arith.constant 0 : index
    %c0_21 = arith.constant 0 : index
    %43 = vector.load %arg8[%c0_20, %c0_21] : memref<32x8xf32, #tpu.memory_space<vmem>>, vector<32x8xf32>
    %44 = vector.extract_strided_slice %41 {offsets = [0, 0, 0], sizes = [4, 32, 4], strides = [1, 1, 1]} : vector<4x32x8xf32> to vector<4x32x4xf32>
    %45 = vector.extract_strided_slice %41 {offsets = [0, 0, 4], sizes = [4, 32, 4], strides = [1, 1, 1]} : vector<4x32x8xf32> to vector<4x32x4xf32>
    %cst_22 = arith.constant 0.000000e+00 : f32
    %46 = vector.broadcast %cst_22 : f32 to vector<4x32x4xf32>
    %47 = arith.subf %46, %45 : vector<4x32x4xf32>
    %48 = tpu.concatenate %47, %44 in 2 : vector<4x32x4xf32>, vector<4x32x4xf32> -> vector<4x32x8xf32>
    %49 = vector.shape_cast %42 : vector<32x8xf32> to vector<1x32x8xf32>
    %50 = vector.broadcast %49 : vector<1x32x8xf32> to vector<4x32x8xf32>
    %51 = arith.mulf %41, %50 : vector<4x32x8xf32>
    %52 = vector.shape_cast %43 : vector<32x8xf32> to vector<1x32x8xf32>
    %53 = vector.broadcast %52 : vector<1x32x8xf32> to vector<4x32x8xf32>
    %54 = arith.mulf %48, %53 : vector<4x32x8xf32>
    %55 = arith.addf %51, %54 : vector<4x32x8xf32>
    %56 = vector.extract_strided_slice %37 {offsets = [0, 0, 8], sizes = [4, 32, 8], strides = [1, 1, 1]} : vector<4x32x24xf32> to vector<4x32x8xf32>
    %c0_23 = arith.constant 0 : index
    %c0_24 = arith.constant 0 : index
    %57 = vector.load %arg9[%c0_23, %c0_24] : memref<32x8xf32, #tpu.memory_space<vmem>>, vector<32x8xf32>
    %c0_25 = arith.constant 0 : index
    %c0_26 = arith.constant 0 : index
    %58 = vector.load %arg10[%c0_25, %c0_26] : memref<32x8xf32, #tpu.memory_space<vmem>>, vector<32x8xf32>
    %59 = vector.extract_strided_slice %56 {offsets = [0, 0, 0], sizes = [4, 32, 4], strides = [1, 1, 1]} : vector<4x32x8xf32> to vector<4x32x4xf32>
    %60 = vector.extract_strided_slice %56 {offsets = [0, 0, 4], sizes = [4, 32, 4], strides = [1, 1, 1]} : vector<4x32x8xf32> to vector<4x32x4xf32>
    %cst_27 = arith.constant 0.000000e+00 : f32
    %61 = vector.broadcast %cst_27 : f32 to vector<4x32x4xf32>
    %62 = arith.subf %61, %60 : vector<4x32x4xf32>
    %63 = tpu.concatenate %62, %59 in 2 : vector<4x32x4xf32>, vector<4x32x4xf32> -> vector<4x32x8xf32>
    %64 = vector.shape_cast %57 : vector<32x8xf32> to vector<1x32x8xf32>
    %65 = vector.broadcast %64 : vector<1x32x8xf32> to vector<4x32x8xf32>
    %66 = arith.mulf %56, %65 : vector<4x32x8xf32>
    %67 = vector.shape_cast %58 : vector<32x8xf32> to vector<1x32x8xf32>
    %68 = vector.broadcast %67 : vector<1x32x8xf32> to vector<4x32x8xf32>
    %69 = arith.mulf %63, %68 : vector<4x32x8xf32>
    %70 = arith.addf %66, %69 : vector<4x32x8xf32>
    %71 = vector.extract_strided_slice %37 {offsets = [0, 0, 16], sizes = [4, 32, 8], strides = [1, 1, 1]} : vector<4x32x24xf32> to vector<4x32x8xf32>
    %72 = vector.extract_strided_slice %40 {offsets = [0, 0, 0], sizes = [4, 48, 8], strides = [1, 1, 1]} : vector<4x48x16xf32> to vector<4x48x8xf32>
    %c0_28 = arith.constant 0 : index
    %c0_29 = arith.constant 0 : index
    %73 = vector.load %arg11[%c0_28, %c0_29] : memref<48x8xf32, #tpu.memory_space<vmem>>, vector<48x8xf32>
    %c0_30 = arith.constant 0 : index
    %c0_31 = arith.constant 0 : index
    %74 = vector.load %arg12[%c0_30, %c0_31] : memref<48x8xf32, #tpu.memory_space<vmem>>, vector<48x8xf32>
    %75 = vector.extract_strided_slice %72 {offsets = [0, 0, 0], sizes = [4, 48, 4], strides = [1, 1, 1]} : vector<4x48x8xf32> to vector<4x48x4xf32>
    %76 = vector.extract_strided_slice %72 {offsets = [0, 0, 4], sizes = [4, 48, 4], strides = [1, 1, 1]} : vector<4x48x8xf32> to vector<4x48x4xf32>
    %cst_32 = arith.constant 0.000000e+00 : f32
    %77 = vector.broadcast %cst_32 : f32 to vector<4x48x4xf32>
    %78 = arith.subf %77, %76 : vector<4x48x4xf32>
    %79 = tpu.concatenate %78, %75 in 2 : vector<4x48x4xf32>, vector<4x48x4xf32> -> vector<4x48x8xf32>
    %80 = vector.shape_cast %73 : vector<48x8xf32> to vector<1x48x8xf32>
    %81 = vector.broadcast %80 : vector<1x48x8xf32> to vector<4x48x8xf32>
    %82 = arith.mulf %72, %81 : vector<4x48x8xf32>
    %83 = vector.shape_cast %74 : vector<48x8xf32> to vector<1x48x8xf32>
    %84 = vector.broadcast %83 : vector<1x48x8xf32> to vector<4x48x8xf32>
    %85 = arith.mulf %79, %84 : vector<4x48x8xf32>
    %86 = arith.addf %82, %85 : vector<4x48x8xf32>
    %87 = vector.extract_strided_slice %40 {offsets = [0, 0, 8], sizes = [4, 48, 8], strides = [1, 1, 1]} : vector<4x48x16xf32> to vector<4x48x8xf32>
    %c0_33 = arith.constant 0 : index
    %c0_34 = arith.constant 0 : index
    %88 = vector.load %arg13[%c0_33, %c0_34] : memref<48x32xf32, #tpu.memory_space<vmem>>, vector<48x32xf32>
    %89 = arith.truncf %88 : vector<48x32xf32> to vector<48x32xbf16>
    %90 = vector.shape_cast %89 : vector<48x32xbf16> to vector<1x48x32xbf16>
    %91 = vector.shape_cast %90 : vector<1x48x32xbf16> to vector<1x48x32xbf16>
    %92 = vector.broadcast %91 : vector<1x48x32xbf16> to vector<4x48x32xbf16>
    %c0_35 = arith.constant 0 : index
    %c0_36 = arith.constant 0 : index
    %93 = vector.load %arg14[%c0_35, %c0_36] : memref<48x32xf32, #tpu.memory_space<vmem>>, vector<48x32xf32>
    %94 = arith.truncf %93 : vector<48x32xf32> to vector<48x32xbf16>
    %95 = vector.shape_cast %94 : vector<48x32xbf16> to vector<1x48x32xbf16>
    %96 = vector.shape_cast %95 : vector<1x48x32xbf16> to vector<1x48x32xbf16>
    %97 = vector.broadcast %96 : vector<1x48x32xbf16> to vector<4x48x32xbf16>
    %98 = arith.truncf %55 : vector<4x32x8xf32> to vector<4x32x8xbf16>
    "tpu.trace_start"() <{level = 10 : i32, message = "hrn,hnd->hrd"}> : () -> ()
    %cst_37 = arith.constant dense<0.000000e+00> : vector<4x48x8xf32>
    %99 = tpu.matmul %92, %98, %cst_37 {dimension_numbers = #tpu.dot_dimension_numbers<[2], [1], [1], [2], [0, 0, 0, 1, 1, 2], [0], [0]>} : vector<4x48x32xbf16>, vector<4x32x8xbf16>, vector<4x48x8xf32> -> vector<4x48x8xf32>
    "tpu.trace_stop"() : () -> ()
    %100 = arith.truncf %70 : vector<4x32x8xf32> to vector<4x32x8xbf16>
    "tpu.trace_start"() <{level = 10 : i32, message = "hrn,hnd->hrd"}> : () -> ()
    %cst_38 = arith.constant dense<0.000000e+00> : vector<4x48x8xf32>
    %101 = tpu.matmul %97, %100, %cst_38 {dimension_numbers = #tpu.dot_dimension_numbers<[2], [1], [1], [2], [0, 0, 0, 1, 1, 2], [0], [0]>} : vector<4x48x32xbf16>, vector<4x32x8xbf16>, vector<4x48x8xf32> -> vector<4x48x8xf32>
    "tpu.trace_stop"() : () -> ()
    %102 = arith.truncf %71 : vector<4x32x8xf32> to vector<4x32x8xbf16>
    "tpu.trace_start"() <{level = 10 : i32, message = "hrn,hnd->hrd"}> : () -> ()
    %cst_39 = arith.constant dense<0.000000e+00> : vector<4x48x8xf32>
    %103 = tpu.matmul %97, %102, %cst_39 {dimension_numbers = #tpu.dot_dimension_numbers<[2], [1], [1], [2], [0, 0, 0, 1, 1, 2], [0], [0]>} : vector<4x48x32xbf16>, vector<4x32x8xbf16>, vector<4x48x8xf32> -> vector<4x48x8xf32>
    "tpu.trace_stop"() : () -> ()
    %104 = vector.shape_cast %99 : vector<4x48x8xf32> to vector<4x6x8x8xf32>
    %105 = vector.shape_cast %104 : vector<4x6x8x8xf32> to vector<24x8x8xf32>
    %106 = arith.truncf %105 : vector<24x8x8xf32> to vector<24x8x8xbf16>
    %107 = vector.shape_cast %101 : vector<4x48x8xf32> to vector<4x6x8x8xf32>
    %108 = vector.shape_cast %107 : vector<4x6x8x8xf32> to vector<24x8x8xf32>
    %109 = arith.truncf %108 : vector<24x8x8xf32> to vector<24x8x8xbf16>
    %110 = vector.shape_cast %103 : vector<4x48x8xf32> to vector<4x6x8x8xf32>
    %111 = vector.shape_cast %110 : vector<4x6x8x8xf32> to vector<24x8x8xf32>
    %112 = arith.truncf %111 : vector<24x8x8xf32> to vector<24x8x8xbf16>
    %113 = vector.shape_cast %86 : vector<4x48x8xf32> to vector<4x6x8x8xf32>
    %114 = vector.shape_cast %113 : vector<4x6x8x8xf32> to vector<24x8x8xf32>
    %115 = arith.truncf %114 : vector<24x8x8xf32> to vector<24x8x8xbf16>
    %116 = vector.shape_cast %87 : vector<4x48x8xf32> to vector<4x6x8x8xf32>
    %117 = vector.shape_cast %116 : vector<4x6x8x8xf32> to vector<24x8x8xf32>
    %118 = arith.truncf %117 : vector<24x8x8xf32> to vector<24x8x8xbf16>
    "tpu.trace_start"() <{level = 10 : i32, message = "bqd,bkd->bqk"}> : () -> ()
    %cst_40 = arith.constant dense<0.000000e+00> : vector<24x8x8xf32>
    %119 = tpu.matmul %106, %109, %cst_40 {dimension_numbers = #tpu.dot_dimension_numbers<[2], [2], [1], [1], [0, 0, 0, 1, 1, 1], [0], [0]>} : vector<24x8x8xbf16>, vector<24x8x8xbf16>, vector<24x8x8xf32> -> vector<24x8x8xf32>
    "tpu.trace_stop"() : () -> ()
    %cst_41 = arith.constant 0.353553385 : f32
    %120 = vector.broadcast %cst_41 : f32 to vector<24x8x8xf32>
    %121 = arith.mulf %119, %120 : vector<24x8x8xf32>
    "tpu.trace_start"() <{level = 10 : i32, message = "bqd,bkd->bqk"}> : () -> ()
    %cst_42 = arith.constant dense<0.000000e+00> : vector<24x8x8xf32>
    %122 = tpu.matmul %106, %115, %cst_42 {dimension_numbers = #tpu.dot_dimension_numbers<[2], [2], [1], [1], [0, 0, 0, 1, 1, 1], [0], [0]>} : vector<24x8x8xbf16>, vector<24x8x8xbf16>, vector<24x8x8xf32> -> vector<24x8x8xf32>
    "tpu.trace_stop"() : () -> ()
    %cst_43 = arith.constant 0.353553385 : f32
    %123 = vector.broadcast %cst_43 : f32 to vector<24x8x8xf32>
    %124 = arith.mulf %122, %123 : vector<24x8x8xf32>
    %cst_44 = arith.constant dense<0xFF800000> : vector<24x8xf32>
    %125 = vector.multi_reduction <maximumf>, %121, %cst_44 [2] : vector<24x8x8xf32> to vector<24x8xf32>
    %cst_45 = arith.constant dense<0xFF800000> : vector<24x8xf32>
    %126 = vector.multi_reduction <maximumf>, %124, %cst_45 [2] : vector<24x8x8xf32> to vector<24x8xf32>
    %127 = arith.maximumf %125, %126 : vector<24x8xf32>
    %128 = vector.shape_cast %127 : vector<24x8xf32> to vector<4x6x8xf32>
    %c0_46 = arith.constant 0 : index
    %c0_47 = arith.constant 0 : index
    %129 = vector.load %arg16[%c0_46, %c0_47] : memref<6x4xf32, #tpu.memory_space<vmem>>, vector<6x4xf32>
    %c0_48 = arith.constant 0 : index
    %c0_49 = arith.constant 0 : index
    %130 = vector.load %arg17[%c0_48, %c0_49] : memref<4x6xf32, #tpu.memory_space<vmem>>, vector<4x6xf32>
    %131 = vector.shape_cast %129 : vector<6x4xf32> to vector<1x6x4x1xf32>
    %cst_50 = arith.constant 5.000000e-01 : f32
    %132 = vector.broadcast %cst_50 : f32 to vector<1x6x4x1xf32>
    %133 = arith.cmpf ogt, %131, %132 : vector<1x6x4x1xf32>
    %134 = vector.shape_cast %128 : vector<4x6x8xf32> to vector<4x6x1x8xf32>
    %cst_51 = arith.constant -1.000000e+30 : f32
    %135 = vector.shape_cast %133 : vector<1x6x4x1xi1> to vector<1x6x4x1xi1>
    %136 = vector.broadcast %135 : vector<1x6x4x1xi1> to vector<4x6x4x8xi1>
    %137 = vector.shape_cast %134 : vector<4x6x1x8xf32> to vector<4x6x1x8xf32>
    %138 = vector.broadcast %137 : vector<4x6x1x8xf32> to vector<4x6x4x8xf32>
    %139 = vector.broadcast %cst_51 : f32 to vector<4x6x4x8xf32>
    %140 = arith.select %136, %138, %139 : vector<4x6x4x8xi1>, vector<4x6x4x8xf32>
    %cst_52 = arith.constant dense<0xFF800000> : vector<4x4x8xf32>
    %141 = vector.multi_reduction <maximumf>, %140, %cst_52 [1] : vector<4x6x4x8xf32> to vector<4x4x8xf32>
    %142 = vector.shape_cast %129 : vector<6x4xf32> to vector<1x6x4xf32>
    %143 = vector.shape_cast %142 : vector<1x6x4xf32> to vector<1x6x4xf32>
    %144 = vector.broadcast %143 : vector<1x6x4xf32> to vector<4x6x4xf32>
    %145 = vector.shape_cast %130 : vector<4x6xf32> to vector<1x4x6xf32>
    %146 = vector.shape_cast %145 : vector<1x4x6xf32> to vector<1x4x6xf32>
    %147 = vector.broadcast %146 : vector<1x4x6xf32> to vector<4x4x6xf32>
    "tpu.trace_start"() <{level = 10 : i32, message = "hen,hnq->heq"}> : () -> ()
    %cst_53 = arith.constant dense<0.000000e+00> : vector<4x6x8xf32>
    %148 = tpu.matmul %144, %141, %cst_53 {dimension_numbers = #tpu.dot_dimension_numbers<[2], [1], [1], [2], [0, 0, 0, 1, 1, 2], [0], [0]>} : vector<4x6x4xf32>, vector<4x4x8xf32>, vector<4x6x8xf32> -> vector<4x6x8xf32>
    "tpu.trace_stop"() : () -> ()
    %149 = vector.shape_cast %148 : vector<4x6x8xf32> to vector<24x8xf32>
    %150 = vector.shape_cast %149 : vector<24x8xf32> to vector<24x8x1xf32>
    %151 = vector.broadcast %150 : vector<24x8x1xf32> to vector<24x8x8xf32>
    %152 = arith.subf %121, %151 : vector<24x8x8xf32>
    %153 = math.exp %152 : vector<24x8x8xf32>
    %154 = vector.broadcast %150 : vector<24x8x1xf32> to vector<24x8x8xf32>
    %155 = arith.subf %124, %154 : vector<24x8x8xf32>
    %156 = math.exp %155 : vector<24x8x8xf32>
    %cst_54 = arith.constant dense<0.000000e+00> : vector<24x8xf32>
    %157 = vector.multi_reduction <add>, %153, %cst_54 [2] : vector<24x8x8xf32> to vector<24x8xf32>
    %cst_55 = arith.constant dense<0.000000e+00> : vector<24x8xf32>
    %158 = vector.multi_reduction <add>, %156, %cst_55 [2] : vector<24x8x8xf32> to vector<24x8xf32>
    %159 = arith.addf %157, %158 : vector<24x8xf32>
    %160 = vector.shape_cast %159 : vector<24x8xf32> to vector<4x6x8xf32>
    "tpu.trace_start"() <{level = 10 : i32, message = "hne,heq->hnq"}> : () -> ()
    %cst_56 = arith.constant dense<0.000000e+00> : vector<4x4x8xf32>
    %161 = tpu.matmul %147, %160, %cst_56 {dimension_numbers = #tpu.dot_dimension_numbers<[2], [1], [1], [2], [0, 0, 0, 1, 1, 2], [0], [0]>} : vector<4x4x6xf32>, vector<4x6x8xf32>, vector<4x4x8xf32> -> vector<4x4x8xf32>
    "tpu.trace_stop"() : () -> ()
    "tpu.trace_start"() <{level = 10 : i32, message = "hen,hnq->heq"}> : () -> ()
    %cst_57 = arith.constant dense<0.000000e+00> : vector<4x6x8xf32>
    %162 = tpu.matmul %144, %161, %cst_57 {dimension_numbers = #tpu.dot_dimension_numbers<[2], [1], [1], [2], [0, 0, 0, 1, 1, 2], [0], [0]>} : vector<4x6x4xf32>, vector<4x4x8xf32>, vector<4x6x8xf32> -> vector<4x6x8xf32>
    "tpu.trace_stop"() : () -> ()
    %163 = vector.shape_cast %162 : vector<4x6x8xf32> to vector<24x8xf32>
    %164 = vector.shape_cast %163 : vector<24x8xf32> to vector<24x8x1xf32>
    %cst_58 = arith.constant 1.000000e-16 : f32
    %165 = vector.broadcast %cst_58 : f32 to vector<24x8x1xf32>
    %166 = arith.addf %164, %165 : vector<24x8x1xf32>
    %cst_59 = arith.constant 1.000000e+00 : f32
    %167 = vector.broadcast %cst_59 : f32 to vector<24x8x1xf32>
    %168 = arith.divf %167, %166 : vector<24x8x1xf32>
    %169 = vector.broadcast %168 : vector<24x8x1xf32> to vector<24x8x8xf32>
    %170 = arith.mulf %153, %169 : vector<24x8x8xf32>
    %171 = arith.truncf %170 : vector<24x8x8xf32> to vector<24x8x8xbf16>
    %172 = vector.broadcast %168 : vector<24x8x1xf32> to vector<24x8x8xf32>
    %173 = arith.mulf %156, %172 : vector<24x8x8xf32>
    %174 = arith.truncf %173 : vector<24x8x8xf32> to vector<24x8x8xbf16>
    "tpu.trace_start"() <{level = 10 : i32, message = "bqk,bkd->bqd"}> : () -> ()
    %cst_60 = arith.constant dense<0.000000e+00> : vector<24x8x8xf32>
    %175 = tpu.matmul %171, %112, %cst_60 {dimension_numbers = #tpu.dot_dimension_numbers<[2], [1], [1], [2], [0, 0, 0, 1, 1, 2], [0], [0]>} : vector<24x8x8xbf16>, vector<24x8x8xbf16>, vector<24x8x8xf32> -> vector<24x8x8xf32>
    %cst_61 = arith.constant dense<0.000000e+00> : vector<24x8x8xf32>
    %176 = tpu.matmul %174, %118, %cst_61 {dimension_numbers = #tpu.dot_dimension_numbers<[2], [1], [1], [2], [0, 0, 0, 1, 1, 2], [0], [0]>} : vector<24x8x8xbf16>, vector<24x8x8xbf16>, vector<24x8x8xf32> -> vector<24x8x8xf32>
    "tpu.trace_stop"() : () -> ()
    %177 = arith.addf %175, %176 : vector<24x8x8xf32>
    %178 = vector.shape_cast %177 : vector<24x8x8xf32> to vector<4x6x8x8xf32>
    %179 = vector.shape_cast %178 : vector<4x6x8x8xf32> to vector<4x48x8xf32>
    %c0_62 = arith.constant 0 : index
    %c0_63 = arith.constant 0 : index
    %180 = vector.load %arg15[%c0_62, %c0_63] : memref<32x48xf32, #tpu.memory_space<vmem>>, vector<32x48xf32>
    %181 = arith.truncf %180 : vector<32x48xf32> to vector<32x48xbf16>
    %182 = vector.shape_cast %181 : vector<32x48xbf16> to vector<1x32x48xbf16>
    %183 = vector.shape_cast %182 : vector<1x32x48xbf16> to vector<1x32x48xbf16>
    %184 = vector.broadcast %183 : vector<1x32x48xbf16> to vector<4x32x48xbf16>
    %185 = arith.truncf %179 : vector<4x48x8xf32> to vector<4x48x8xbf16>
    "tpu.trace_start"() <{level = 10 : i32, message = "hre,hed->hrd"}> : () -> ()
    %cst_64 = arith.constant dense<0.000000e+00> : vector<4x32x8xf32>
    %186 = tpu.matmul %184, %185, %cst_64 {dimension_numbers = #tpu.dot_dimension_numbers<[2], [1], [1], [2], [0, 0, 0, 1, 1, 2], [0], [0]>} : vector<4x32x48xbf16>, vector<4x48x8xbf16>, vector<4x32x8xf32> -> vector<4x32x8xf32>
    "tpu.trace_stop"() : () -> ()
    %187 = arith.truncf %186 : vector<4x32x8xf32> to vector<4x32x8xbf16>
    %c0_65 = arith.constant 0 : index
    %c0_66 = arith.constant 0 : index
    %c0_67 = arith.constant 0 : index
    %188 = vector.load %arg18[%c0_65, %c0_66, %c0_67] : memref<4x8x32xf32, #tpu.memory_space<vmem>>, vector<4x8x32xf32>
    %189 = arith.truncf %188 : vector<4x8x32xf32> to vector<4x8x32xbf16>
    "tpu.trace_start"() <{level = 10 : i32, message = "hrd,hdc->hrc"}> : () -> ()
    %cst_68 = arith.constant dense<0.000000e+00> : vector<4x32x32xf32>
    %190 = tpu.matmul %187, %189, %cst_68 {dimension_numbers = #tpu.dot_dimension_numbers<[2], [1], [1], [2], [0, 0, 0, 1, 1, 2], [0], [0]>} : vector<4x32x8xbf16>, vector<4x8x32xbf16>, vector<4x32x32xf32> -> vector<4x32x32xf32>
    "tpu.trace_stop"() : () -> ()
    %cst_69 = arith.constant dense<0.000000e+00> : vector<32x32xf32>
    %191 = vector.multi_reduction <add>, %190, %cst_69 [0] : vector<4x32x32xf32> to vector<32x32xf32>
    %192 = arith.addf %0, %191 : vector<32x32xf32>
    %c0_70 = arith.constant 0 : index
    %c0_71 = arith.constant 0 : index
    %193 = vector.load %arg4[%c0_70, %c0_71] : memref<1x32xf32, #tpu.memory_space<vmem>>, vector<1x32xf32>
    %194 = arith.mulf %192, %192 : vector<32x32xf32>
    %cst_72 = arith.constant dense<0.000000e+00> : vector<32xf32>
    %195 = vector.multi_reduction <add>, %194, %cst_72 [1] : vector<32x32xf32> to vector<32xf32>
    %196 = vector.shape_cast %195 : vector<32xf32> to vector<32x1xf32>
    %cst_73 = arith.constant 3.200000e+01 : f32
    %197 = vector.broadcast %cst_73 : f32 to vector<32x1xf32>
    %198 = arith.divf %196, %197 : vector<32x1xf32>
    %cst_74 = arith.constant 9.99999997E-7 : f32
    %199 = vector.broadcast %cst_74 : f32 to vector<32x1xf32>
    %200 = arith.addf %198, %199 : vector<32x1xf32>
    %201 = math.rsqrt %200 : vector<32x1xf32>
    %202 = vector.broadcast %201 : vector<32x1xf32> to vector<32x32xf32>
    %203 = arith.mulf %192, %202 : vector<32x32xf32>
    %204 = vector.broadcast %193 : vector<1x32xf32> to vector<32x32xf32>
    %205 = arith.mulf %203, %204 : vector<32x32xf32>
    %206 = arith.truncf %205 : vector<32x32xf32> to vector<32x32xbf16>
    %c0_75 = arith.constant 0 : index
    %c0_76 = arith.constant 0 : index
    %207 = vector.load %arg19[%c0_75, %c0_76] : memref<32x128xf32, #tpu.memory_space<vmem>>, vector<32x128xf32>
    %208 = arith.truncf %207 : vector<32x128xf32> to vector<32x128xbf16>
    %cst_77 = arith.constant dense<0.000000e+00> : vector<32x128xf32>
    %209 = tpu.matmul %206, %208, %cst_77 {dimension_numbers = #tpu.dot_dimension_numbers<[1], [0], [0], [1], [0, 0, 1, 1], [], []>} : vector<32x32xbf16>, vector<32x128xbf16>, vector<32x128xf32> -> vector<32x128xf32>
    %210 = vector.extract_strided_slice %209 {offsets = [0, 0], sizes = [32, 64], strides = [1, 1]} : vector<32x128xf32> to vector<32x64xf32>
    %211 = vector.extract_strided_slice %209 {offsets = [0, 64], sizes = [32, 64], strides = [1, 1]} : vector<32x128xf32> to vector<32x64xf32>
    %212 = arith.negf %210 : vector<32x64xf32>
    %213 = math.exp %212 : vector<32x64xf32>
    %cst_78 = arith.constant 1.000000e+00 : f32
    %214 = vector.broadcast %cst_78 : f32 to vector<32x64xf32>
    %215 = arith.addf %214, %213 : vector<32x64xf32>
    %216 = arith.divf %214, %215 : vector<32x64xf32>
    %217 = arith.mulf %210, %216 : vector<32x64xf32>
    %218 = arith.mulf %217, %211 : vector<32x64xf32>
    %219 = arith.truncf %218 : vector<32x64xf32> to vector<32x64xbf16>
    %c0_79 = arith.constant 0 : index
    %c0_80 = arith.constant 0 : index
    %220 = vector.load %arg20[%c0_79, %c0_80] : memref<64x32xf32, #tpu.memory_space<vmem>>, vector<64x32xf32>
    %221 = arith.truncf %220 : vector<64x32xf32> to vector<64x32xbf16>
    %cst_81 = arith.constant dense<0.000000e+00> : vector<32x32xf32>
    %222 = tpu.matmul %219, %221, %cst_81 {dimension_numbers = #tpu.dot_dimension_numbers<[1], [0], [0], [1], [0, 0, 1, 1], [], []>} : vector<32x64xbf16>, vector<64x32xbf16>, vector<32x32xf32> -> vector<32x32xf32>
    %223 = arith.addf %192, %222 : vector<32x32xf32>
    %224 = vector.shape_cast %223 : vector<32x32xf32> to vector<4x8x32xf32>
    %225 = vector.extract_strided_slice %224 {offsets = [0, 0, 0], sizes = [4, 1, 32], strides = [1, 1, 1]} : vector<4x8x32xf32> to vector<4x1x32xf32>
    %226 = vector.shape_cast %225 : vector<4x1x32xf32> to vector<4x32xf32>
    %227 = vector.extract_strided_slice %224 {offsets = [0, 1, 0], sizes = [4, 1, 32], strides = [1, 1, 1]} : vector<4x8x32xf32> to vector<4x1x32xf32>
    %228 = vector.shape_cast %227 : vector<4x1x32xf32> to vector<4x32xf32>
    %229 = vector.extract_strided_slice %224 {offsets = [0, 2, 0], sizes = [4, 1, 32], strides = [1, 1, 1]} : vector<4x8x32xf32> to vector<4x1x32xf32>
    %230 = vector.shape_cast %229 : vector<4x1x32xf32> to vector<4x32xf32>
    %231 = vector.extract_strided_slice %224 {offsets = [0, 3, 0], sizes = [4, 1, 32], strides = [1, 1, 1]} : vector<4x8x32xf32> to vector<4x1x32xf32>
    %232 = vector.shape_cast %231 : vector<4x1x32xf32> to vector<4x32xf32>
    %233 = vector.extract_strided_slice %224 {offsets = [0, 4, 0], sizes = [4, 1, 32], strides = [1, 1, 1]} : vector<4x8x32xf32> to vector<4x1x32xf32>
    %234 = vector.shape_cast %233 : vector<4x1x32xf32> to vector<4x32xf32>
    %235 = vector.extract_strided_slice %224 {offsets = [0, 5, 0], sizes = [4, 1, 32], strides = [1, 1, 1]} : vector<4x8x32xf32> to vector<4x1x32xf32>
    %236 = vector.shape_cast %235 : vector<4x1x32xf32> to vector<4x32xf32>
    %237 = vector.extract_strided_slice %224 {offsets = [0, 6, 0], sizes = [4, 1, 32], strides = [1, 1, 1]} : vector<4x8x32xf32> to vector<4x1x32xf32>
    %238 = vector.shape_cast %237 : vector<4x1x32xf32> to vector<4x32xf32>
    %239 = vector.extract_strided_slice %224 {offsets = [0, 7, 0], sizes = [4, 1, 32], strides = [1, 1, 1]} : vector<4x8x32xf32> to vector<4x1x32xf32>
    %240 = vector.shape_cast %239 : vector<4x1x32xf32> to vector<4x32xf32>
    %241 = tpu.concatenate %226, %228, %230, %232, %234, %236, %238, %240 in 1 : vector<4x32xf32>, vector<4x32xf32>, vector<4x32xf32>, vector<4x32xf32>, vector<4x32xf32>, vector<4x32xf32>, vector<4x32xf32>, vector<4x32xf32> -> vector<4x256xf32>
    %c0_82 = arith.constant 0 : index
    %c0_83 = arith.constant 0 : index
    %242 = vector.load %arg21[%c0_82, %c0_83] : memref<4x256xf32, #tpu.memory_space<vmem>>, vector<4x256xf32>
    tpu.vector_store %arg21[%c0_82, %c0_83], %241 {strides = array<i32>} : memref<4x256xf32, #tpu.memory_space<vmem>>, vector<4x256xf32>,
    return
  }
  func.func @transform_0(%arg0: i32) -> (i32, i32) {
    %c0_i32 = arith.constant 0 : i32
    %c0_i32_0 = arith.constant 0 : i32
    %c0_i32_1 = arith.constant 0 : i32
    return %c0_i32, %c0_i32_0 : i32, i32
  }
  func.func @transform_1(%arg0: i32) -> (i32, i32) {
    %c0_i32 = arith.constant 0 : i32
    %c0_i32_0 = arith.constant 0 : i32
    %c0_i32_1 = arith.constant 0 : i32
    return %c0_i32, %c0_i32_0 : i32, i32
  }
  func.func @transform_2(%arg0: i32) -> (i32, i32) {
    %c0_i32 = arith.constant 0 : i32
    %c0_i32_0 = arith.constant 0 : i32
    %c0_i32_1 = arith.constant 0 : i32
    return %c0_i32, %c0_i32_0 : i32, i32
  }
  func.func @transform_3(%arg0: i32) -> (i32, i32) {
    %c0_i32 = arith.constant 0 : i32
    %c0_i32_0 = arith.constant 0 : i32
    %c0_i32_1 = arith.constant 0 : i32
    return %c0_i32, %c0_i32_0 : i32, i32
  }
  func.func @transform_4(%arg0: i32) -> (i32, i32, i32) {
    %c0_i32 = arith.constant 0 : i32
    %c0_i32_0 = arith.constant 0 : i32
    %c0_i32_1 = arith.constant 0 : i32
    %c0_i32_2 = arith.constant 0 : i32
    return %c0_i32, %c0_i32_0, %c0_i32_1 : i32, i32, i32
  }
  func.func @transform_5(%arg0: i32) -> (i32, i32, i32) {
    %c0_i32 = arith.constant 0 : i32
    %c0_i32_0 = arith.constant 0 : i32
    %c0_i32_1 = arith.constant 0 : i32
    %c0_i32_2 = arith.constant 0 : i32
    return %c0_i32, %c0_i32_0, %c0_i32_1 : i32, i32, i32
  }
  func.func @transform_6(%arg0: i32) -> (i32, i32) {
    %c0_i32 = arith.constant 0 : i32
    %c0_i32_0 = arith.constant 0 : i32
    %c0_i32_1 = arith.constant 0 : i32
    return %c0_i32, %c0_i32_0 : i32, i32
  }
  func.func @transform_7(%arg0: i32) -> (i32, i32) {
    %c0_i32 = arith.constant 0 : i32
    %c0_i32_0 = arith.constant 0 : i32
    %c0_i32_1 = arith.constant 0 : i32
    return %c0_i32, %c0_i32_0 : i32, i32
  }
  func.func @transform_8(%arg0: i32) -> (i32, i32) {
    %c0_i32 = arith.constant 0 : i32
    %c0_i32_0 = arith.constant 0 : i32
    %c0_i32_1 = arith.constant 0 : i32
    return %c0_i32, %c0_i32_0 : i32, i32
  }
  func.func @transform_9(%arg0: i32) -> (i32, i32) {
    %c0_i32 = arith.constant 0 : i32
    %c0_i32_0 = arith.constant 0 : i32
    %c0_i32_1 = arith.constant 0 : i32
    return %c0_i32, %c0_i32_0 : i32, i32
  }
  func.func @transform_10(%arg0: i32) -> (i32, i32) {
    %c0_i32 = arith.constant 0 : i32
    %c0_i32_0 = arith.constant 0 : i32
    %c0_i32_1 = arith.constant 0 : i32
    return %c0_i32, %c0_i32_0 : i32, i32
  }
  func.func @transform_11(%arg0: i32) -> (i32, i32) {
    %c0_i32 = arith.constant 0 : i32
    %c0_i32_0 = arith.constant 0 : i32
    %c0_i32_1 = arith.constant 0 : i32
    return %c0_i32, %c0_i32_0 : i32, i32
  }
  func.func @transform_12(%arg0: i32) -> (i32, i32) {
    %c0_i32 = arith.constant 0 : i32
    %c0_i32_0 = arith.constant 0 : i32
    %c0_i32_1 = arith.constant 0 : i32
    return %c0_i32, %c0_i32_0 : i32, i32
  }
  func.func @transform_13(%arg0: i32) -> (i32, i32) {
    %c0_i32 = arith.constant 0 : i32
    %c0_i32_0 = arith.constant 0 : i32
    %c0_i32_1 = arith.constant 0 : i32
    return %c0_i32, %c0_i32_0 : i32, i32
  }
  func.func @transform_14(%arg0: i32) -> (i32, i32) {
    %c0_i32 = arith.constant 0 : i32
    %c0_i32_0 = arith.constant 0 : i32
    %c0_i32_1 = arith.constant 0 : i32
    return %c0_i32, %c0_i32_0 : i32, i32
  }
  func.func @transform_15(%arg0: i32) -> (i32, i32) {
    %c0_i32 = arith.constant 0 : i32
    %c0_i32_0 = arith.constant 0 : i32
    %c0_i32_1 = arith.constant 0 : i32
    return %c0_i32, %c0_i32_0 : i32, i32
  }
  func.func @transform_16(%arg0: i32) -> (i32, i32) {
    %c0_i32 = arith.constant 0 : i32
    %c0_i32_0 = arith.constant 0 : i32
    %c0_i32_1 = arith.constant 0 : i32
    return %c0_i32, %c0_i32_0 : i32, i32
  }
  func.func @transform_17(%arg0: i32) -> (i32, i32, i32) {
    %c0_i32 = arith.constant 0 : i32
    %c0_i32_0 = arith.constant 0 : i32
    %c0_i32_1 = arith.constant 0 : i32
    %c0_i32_2 = arith.constant 0 : i32
    return %c0_i32, %c0_i32_0, %c0_i32_1 : i32, i32, i32
  }
  func.func @transform_18(%arg0: i32) -> (i32, i32) {
    %c0_i32 = arith.constant 0 : i32
    %c0_i32_0 = arith.constant 0 : i32
    %c0_i32_1 = arith.constant 0 : i32
    return %c0_i32, %c0_i32_0 : i32, i32
  }
  func.func @transform_19(%arg0: i32) -> (i32, i32) {
    %c0_i32 = arith.constant 0 : i32
    %c0_i32_0 = arith.constant 0 : i32
    %c0_i32_1 = arith.constant 0 : i32
    return %c0_i32, %c0_i32_0 : i32, i32
  }
  func.func @transform_20(%arg0: i32) -> (i32, i32) {
    %c0_i32 = arith.constant 0 : i32
    %c0_i32_0 = arith.constant 0 : i32
    %c0_i32_1 = arith.constant 0 : i32
    return %c0_i32, %c0_i32_0 : i32, i32
  }
}

</mosaic_0001>

<llo_original>
// kernel: gofa_decoder_layer.1
$region0: #{gofa_decoder_layer.1}
  #allocation0 [shape = 'u32[]', space=smem, size = 0x4, offset = 0x4, fixed_abs, tag = 'smem constant byte address 0x4 - core index']
  #allocation1 [shape = 'u32[144,128]{1,0:T(1,128)}', space=vmem, size = 0x12000, scoped, tag = 'internal scratch']
  %s0 = inlined_call_operand.vmem [shape: f32[32,32], index: 0, kind: input, shape index: {}]
  %s1 = inlined_call_operand.vmem [shape: f32[48,32], index: 1, kind: input, shape index: {}]
  %s2 = inlined_call_operand.vmem [shape: f32[1,32], index: 2, kind: input, shape index: {}]
  %s3 = inlined_call_operand.vmem [shape: f32[1,32], index: 3, kind: input, shape index: {}]
  %s4 = inlined_call_operand.vmem [shape: f32[4,32,24], index: 4, kind: input, shape index: {}]
  %s5 = inlined_call_operand.vmem [shape: f32[4,32,16], index: 5, kind: input, shape index: {}]
  %s6 = inlined_call_operand.vmem [shape: f32[32,8], index: 6, kind: input, shape index: {}]
  %s7 = inlined_call_operand.vmem [shape: f32[32,8], index: 7, kind: input, shape index: {}]
  %s8 = inlined_call_operand.vmem [shape: f32[32,8], index: 8, kind: input, shape index: {}]
  %s9 = inlined_call_operand.vmem [shape: f32[32,8], index: 9, kind: input, shape index: {}]
  %s10 = inlined_call_operand.vmem [shape: f32[48,8], index: 10, kind: input, shape index: {}]
  %s11 = inlined_call_operand.vmem [shape: f32[48,8], index: 11, kind: input, shape index: {}]
  %s12 = inlined_call_operand.vmem [shape: f32[48,32], index: 12, kind: input, shape index: {}]
  %s13 = inlined_call_operand.vmem [shape: f32[48,32], index: 13, kind: input, shape index: {}]
  %s14 = inlined_call_operand.vmem [shape: f32[32,48], index: 14, kind: input, shape index: {}]
  %s15 = inlined_call_operand.vmem [shape: f32[6,4], index: 15, kind: input, shape index: {}]
  %s16 = inlined_call_operand.vmem [shape: f32[4,6], index: 16, kind: input, shape index: {}]
  %s17 = inlined_call_operand.vmem [shape: f32[4,8,32], index: 17, kind: input, shape index: {}]
  %s18 = inlined_call_operand.vmem [shape: f32[32,128], index: 18, kind: input, shape index: {}]
  %s19 = inlined_call_operand.vmem [shape: f32[64,32], index: 19, kind: input, shape index: {}]
  %s20 = inlined_call_operand.vmem [shape: f32[4,256], index: 20, kind: output, shape index: {}]
  %s21 = sld [smem:[#allocation0]]
  $region90: #{gofa_decoder_layer.1} parent=0
    _
  %s23 = ssub.s32 1, %s21
  %s24 = scalar_select 0, %s23, %s21
  // Predicated region
  $region2: #{gofa_decoder_layer.1} parent=0 // pred_check
    _
  $region3: #{gofa_decoder_layer.1} parent=0 // pred_check_branch
    %26 = sbr.rel (0) target = $region5
  $region4: #{gofa_decoder_layer.1} parent=0 // pred_region
    _
  $region5: #{gofa_decoder_layer.1} parent=0 // pred_fallthru
    _
  // Predicated region
  $region6: #{gofa_decoder_layer.1} parent=0 // pred_check
    _
  $region7: #{gofa_decoder_layer.1} parent=0 // pred_check_branch
    %28 = sbr.rel (0) target = $region9
  $region8: #{gofa_decoder_layer.1} parent=0 // pred_region
    _
  $region9: #{gofa_decoder_layer.1} parent=0 // pred_fallthru
    _
  // Predicated region
  $region10: #{gofa_decoder_layer.1} parent=0 // pred_check
    _
  $region11: #{gofa_decoder_layer.1} parent=0 // pred_check_branch
    %30 = sbr.rel (0) target = $region13
  $region12: #{gofa_decoder_layer.1} parent=0 // pred_region
    _
  $region13: #{gofa_decoder_layer.1} parent=0 // pred_fallthru
    _
  // Predicated region
  $region14: #{gofa_decoder_layer.1} parent=0 // pred_check
    _
  $region15: #{gofa_decoder_layer.1} parent=0 // pred_check_branch
    %32 = sbr.rel (0) target = $region17
  $region16: #{gofa_decoder_layer.1} parent=0 // pred_region
    _
  $region17: #{gofa_decoder_layer.1} parent=0 // pred_fallthru
    _
  // Predicated region
  $region18: #{gofa_decoder_layer.1} parent=0 // pred_check
    _
  $region19: #{gofa_decoder_layer.1} parent=0 // pred_check_branch
    %34 = sbr.rel (0) target = $region21
  $region20: #{gofa_decoder_layer.1} parent=0 // pred_region
    _
  $region21: #{gofa_decoder_layer.1} parent=0 // pred_fallthru
    _
  // Predicated region
  $region22: #{gofa_decoder_layer.1} parent=0 // pred_check
    _
  $region23: #{gofa_decoder_layer.1} parent=0 // pred_check_branch
    %36 = sbr.rel (0) target = $region25
  $region24: #{gofa_decoder_layer.1} parent=0 // pred_region
    _
  $region25: #{gofa_decoder_layer.1} parent=0 // pred_fallthru
    _
  // Predicated region
  $region26: #{gofa_decoder_layer.1} parent=0 // pred_check
    _
  $region27: #{gofa_decoder_layer.1} parent=0 // pred_check_branch
    %38 = sbr.rel (0) target = $region29
  $region28: #{gofa_decoder_layer.1} parent=0 // pred_region
    _
  $region29: #{gofa_decoder_layer.1} parent=0 // pred_fallthru
    _
  // Predicated region
  $region30: #{gofa_decoder_layer.1} parent=0 // pred_check
    _
  $region31: #{gofa_decoder_layer.1} parent=0 // pred_check_branch
    %40 = sbr.rel (0) target = $region33
  $region32: #{gofa_decoder_layer.1} parent=0 // pred_region
    _
  $region33: #{gofa_decoder_layer.1} parent=0 // pred_fallthru
    _
  // Predicated region
  $region34: #{gofa_decoder_layer.1} parent=0 // pred_check
    _
  $region35: #{gofa_decoder_layer.1} parent=0 // pred_check_branch
    %42 = sbr.rel (0) target = $region37
  $region36: #{gofa_decoder_layer.1} parent=0 // pred_region
    _
  $region37: #{gofa_decoder_layer.1} parent=0 // pred_fallthru
    _
  // Predicated region
  $region38: #{gofa_decoder_layer.1} parent=0 // pred_check
    _
  $region39: #{gofa_decoder_layer.1} parent=0 // pred_check_branch
    %44 = sbr.rel (0) target = $region41
  $region40: #{gofa_decoder_layer.1} parent=0 // pred_region
    _
  $region41: #{gofa_decoder_layer.1} parent=0 // pred_fallthru
    _
  // Predicated region
  $region42: #{gofa_decoder_layer.1} parent=0 // pred_check
    _
  $region43: #{gofa_decoder_layer.1} parent=0 // pred_check_branch
    %46 = sbr.rel (0) target = $region45
  $region44: #{gofa_decoder_layer.1} parent=0 // pred_region
    _
  $region45: #{gofa_decoder_layer.1} parent=0 // pred_fallthru
    _
  // Predicated region
  $region46: #{gofa_decoder_layer.1} parent=0 // pred_check
    _
  $region47: #{gofa_decoder_layer.1} parent=0 // pred_check_branch
    %48 = sbr.rel (0) target = $region49
  $region48: #{gofa_decoder_layer.1} parent=0 // pred_region
    _
  $region49: #{gofa_decoder_layer.1} parent=0 // pred_fallthru
    _
  // Predicated region
  $region50: #{gofa_decoder_layer.1} parent=0 // pred_check
    _
  $region51: #{gofa_decoder_layer.1} parent=0 // pred_check_branch
    %50 = sbr.rel (0) target = $region53
  $region52: #{gofa_decoder_layer.1} parent=0 // pred_region
    _
  $region53: #{gofa_decoder_layer.1} parent=0 // pred_fallthru
    _
  // Predicated region
  $region54: #{gofa_decoder_layer.1} parent=0 // pred_check
    _
  $region55: #{gofa_decoder_layer.1} parent=0 // pred_check_branch
    %52 = sbr.rel (0) target = $region57
  $region56: #{gofa_decoder_layer.1} parent=0 // pred_region
    _
  $region57: #{gofa_decoder_layer.1} parent=0 // pred_fallthru
    _
  // Predicated region
  $region58: #{gofa_decoder_layer.1} parent=0 // pred_check
    _
  $region59: #{gofa_decoder_layer.1} parent=0 // pred_check_branch
    %54 = sbr.rel (0) target = $region61
  $region60: #{gofa_decoder_layer.1} parent=0 // pred_region
    _
  $region61: #{gofa_decoder_layer.1} parent=0 // pred_fallthru
    _
  // Predicated region
  $region62: #{gofa_decoder_layer.1} parent=0 // pred_check
    _
  $region63: #{gofa_decoder_layer.1} parent=0 // pred_check_branch
    %56 = sbr.rel (0) target = $region65
  $region64: #{gofa_decoder_layer.1} parent=0 // pred_region
    _
  $region65: #{gofa_decoder_layer.1} parent=0 // pred_fallthru
    _
  // Predicated region
  $region66: #{gofa_decoder_layer.1} parent=0 // pred_check
    _
  $region67: #{gofa_decoder_layer.1} parent=0 // pred_check_branch
    %58 = sbr.rel (0) target = $region69
  $region68: #{gofa_decoder_layer.1} parent=0 // pred_region
    _
  $region69: #{gofa_decoder_layer.1} parent=0 // pred_fallthru
    _
  // Predicated region
  $region70: #{gofa_decoder_layer.1} parent=0 // pred_check
    _
  $region71: #{gofa_decoder_layer.1} parent=0 // pred_check_branch
    %60 = sbr.rel (0) target = $region73
  $region72: #{gofa_decoder_layer.1} parent=0 // pred_region
    _
  $region73: #{gofa_decoder_layer.1} parent=0 // pred_fallthru
    _
  // Predicated region
  $region74: #{gofa_decoder_layer.1} parent=0 // pred_check
    _
  $region75: #{gofa_decoder_layer.1} parent=0 // pred_check_branch
    %62 = sbr.rel (0) target = $region77
  $region76: #{gofa_decoder_layer.1} parent=0 // pred_region
    _
  $region77: #{gofa_decoder_layer.1} parent=0 // pred_fallthru
    _
  // Predicated region
  $region78: #{gofa_decoder_layer.1} parent=0 // pred_check
    _
  $region79: #{gofa_decoder_layer.1} parent=0 // pred_check_branch
    %64 = sbr.rel (0) target = $region81
  $region80: #{gofa_decoder_layer.1} parent=0 // pred_region
    _
  $region81: #{gofa_decoder_layer.1} parent=0 // pred_fallthru
    _
  %v66 = vld [vmem:[%s0] sm:$0xff]
  %v67 = vld [vmem:[%s0 + $0x8] sm:$0xff]
  %v68 = vld [vmem:[%s0 + $0x10] sm:$0xff]
  %v69 = vld [vmem:[%s0 + $0x18] sm:$0xff]
  %v70 = vld [vmem:[%s1] sm:$0xff]
  %v71 = vld [vmem:[%s1 + $0x8] sm:$0xff]
  %v72 = vld [vmem:[%s1 + $0x10] sm:$0xff]
  %v73 = vld [vmem:[%s1 + $0x18] sm:$0xff]
  %v74 = vld [vmem:[%s1 + $0x20] sm:$0xff]
  %v75 = vld [vmem:[%s1 + $0x28] sm:$0xff]
  %v76 = vld [vmem:[%s2] sm:$0x1]
  %v77 = vmul.f32 %v66, %v66
  %v78 = vmul.f32 %v67, %v67
  %v79 = vmul.f32 %v68, %v68
  %v80 = vmul.f32 %v69, %v69
  %vm81 = vcmask 261120
  %v82 = vsel %vm81, %v77, 0.0
  %83 = vadd.xlane.f32.xlu0 %v82
  %v84 = vpop.xlane.xlu0 %83
  %v85 = vsel %vm81, %v78, 0.0
  %86 = vadd.xlane.f32.xlu0 %v85
  %v87 = vpop.xlane.xlu0 %86
  %v88 = vsel %vm81, %v79, 0.0
  %89 = vadd.xlane.f32.xlu0 %v88
  %v90 = vpop.xlane.xlu0 %89
  %v91 = vsel %vm81, %v80, 0.0
  %92 = vadd.xlane.f32.xlu0 %v91
  %v93 = vpop.xlane.xlu0 %92
  %v94 = vrcp.pop 32.0
  %v95 = vmul.f32 %v84, %v94
  %v96 = vmul.f32 %v87, %v94
  %v97 = vmul.f32 %v90, %v94
  %v98 = vmul.f32 %v93, %v94
  %v99 = vadd.f32 %v95, 1e-06
  %v100 = vadd.f32 %v96, 1e-06
  %v101 = vadd.f32 %v97, 1e-06
  %v102 = vadd.f32 %v98, 1e-06
  %v103 = vrsqrt.pop %v99
  %v104 = vrsqrt.pop %v100
  %v105 = vrsqrt.pop %v101
  %v106 = vrsqrt.pop %v102
  %v107 = vmul.f32 %v66, %v103
  %v108 = vmul.f32 %v67, %v104
  %v109 = vmul.f32 %v68, %v105
  %v110 = vmul.f32 %v69, %v106
  %v112 = vlaneseq
  %v113 = vshrl.u32 %v112, 7
  %v114 = vsub.s32 0, %v113
  %v115 = vrot.slane %v76, %v114
  %v117 = vmul.f32 %v107, %v115
  %v118 = vmul.f32 %v108, %v115
  %v119 = vmul.f32 %v109, %v115
  %v120 = vmul.f32 %v110, %v115
  %v121 = vmul.f32 %v70, %v70
  %v122 = vmul.f32 %v71, %v71
  %v123 = vmul.f32 %v72, %v72
  %v124 = vmul.f32 %v73, %v73
  %v125 = vmul.f32 %v74, %v74
  %v126 = vmul.f32 %v75, %v75
  %v127 = vsel %vm81, %v121, 0.0
  %128 = vadd.xlane.f32.xlu0 %v127
  %v129 = vpop.xlane.xlu0 %128
  %v130 = vsel %vm81, %v122, 0.0
  %131 = vadd.xlane.f32.xlu0 %v130
  %v132 = vpop.xlane.xlu0 %131
  %v133 = vsel %vm81, %v123, 0.0
  %134 = vadd.xlane.f32.xlu0 %v133
  %v135 = vpop.xlane.xlu0 %134
  %v136 = vsel %vm81, %v124, 0.0
  %137 = vadd.xlane.f32.xlu0 %v136
  %v138 = vpop.xlane.xlu0 %137
  %v139 = vsel %vm81, %v125, 0.0
  %140 = vadd.xlane.f32.xlu0 %v139
  %v141 = vpop.xlane.xlu0 %140
  %v142 = vsel %vm81, %v126, 0.0
  %143 = vadd.xlane.f32.xlu0 %v142
  %v144 = vpop.xlane.xlu0 %143
  %v145 = vmul.f32 %v129, %v94
  %v146 = vmul.f32 %v132, %v94
  %v147 = vmul.f32 %v135, %v94
  %v148 = vmul.f32 %v138, %v94
  %v149 = vmul.f32 %v141, %v94
  %v150 = vmul.f32 %v144, %v94
  %v151 = vadd.f32 %v145, 1e-06
  %v152 = vadd.f32 %v146, 1e-06
  %v153 = vadd.f32 %v147, 1e-06
  %v154 = vadd.f32 %v148, 1e-06
  %v155 = vadd.f32 %v149, 1e-06
  %v156 = vadd.f32 %v150, 1e-06
  %v157 = vrsqrt.pop %v151
  %v158 = vrsqrt.pop %v152
  %v159 = vrsqrt.pop %v153
  %v160 = vrsqrt.pop %v154
  %v161 = vrsqrt.pop %v155
  %v162 = vrsqrt.pop %v156
  %v163 = vmul.f32 %v70, %v157
  %v164 = vmul.f32 %v71, %v158
  %v165 = vmul.f32 %v72, %v159
  %v166 = vmul.f32 %v73, %v160
  %v167 = vmul.f32 %v74, %v161
  %v168 = vmul.f32 %v75, %v162
  %v169 = vmul.f32 %v163, %v115
  %v170 = vmul.f32 %v164, %v115
  %v171 = vmul.f32 %v165, %v115
  %v172 = vmul.f32 %v166, %v115
  %v173 = vmul.f32 %v167, %v115
  %v174 = vmul.f32 %v168, %v115
  %v175 = vpack.c.bf16 %v118, %v117
  %v176 = vpack.c.bf16 %v120, %v119
  %v177 = vpack.c.bf16 %v170, %v169
  %v178 = vpack.c.bf16 %v172, %v171
  %v179 = vpack.c.bf16 %v174, %v173
  %v180 = vld [vmem:[%s4] sm:$0xff]
  %v181 = vld [vmem:[%s4 + $0x8] sm:$0xff]
  %v182 = vld [vmem:[%s4 + $0x10] sm:$0xff]
  %v183 = vld [vmem:[%s4 + $0x18] sm:$0xff]
  %v184 = vld [vmem:[%s4 + $0x20] sm:$0xff]
  %v185 = vld [vmem:[%s4 + $0x28] sm:$0xff]
  %v186 = vld [vmem:[%s4 + $0x30] sm:$0xff]
  %v187 = vld [vmem:[%s4 + $0x38] sm:$0xff]
  %v188 = vld [vmem:[%s4 + $0x40] sm:$0xff]
  %v189 = vld [vmem:[%s4 + $0x48] sm:$0xff]
  %v190 = vld [vmem:[%s4 + $0x50] sm:$0xff]
  %v191 = vld [vmem:[%s4 + $0x58] sm:$0xff]
  %v192 = vld [vmem:[%s4 + $0x60] sm:$0xff]
  %v193 = vld [vmem:[%s4 + $0x68] sm:$0xff]
  %v194 = vld [vmem:[%s4 + $0x70] sm:$0xff]
  %v195 = vld [vmem:[%s4 + $0x78] sm:$0xff]
  %v196 = vpack.c.bf16 %v181, %v180
  %v197 = vpack.c.bf16 %v183, %v182
  %v198 = vpack.c.bf16 %v185, %v184
  %v199 = vpack.c.bf16 %v187, %v186
  %v200 = vpack.c.bf16 %v189, %v188
  %v201 = vpack.c.bf16 %v191, %v190
  %v202 = vpack.c.bf16 %v193, %v192
  %v203 = vpack.c.bf16 %v195, %v194
  %v205 = vsel %vm81, %v175, 0
  %v208 = vsel %vm81, %v176, 0
  %210 = vmatprep.subr.bf16.mxu0 0
  %211 = vmatpush1.bf16.msra.mxu0 %v196
  %212 = vmatprep.subr.bf16.mxu0 0
  %213 = vmatpush1.bf16.msra.mxu0 %v197
  %214 = vmatprep.subr.bf16.mxu0 0
  %215 = vmatpush1.bf16.msra.mxu0 0
  %216 = vmatprep.subr.bf16.mxu0 0
  %217 = vmatpush1.bf16.msra.mxu0 0
  %218 = vmatprep.subr.bf16.mxu0 0
  %219 = vmatpush1.bf16.msra.mxu0 0
  %220 = vmatprep.subr.bf16.mxu0 0
  %221 = vmatpush1.bf16.msra.mxu0 0
  %222 = vmatprep.subr.bf16.mxu0 0
  %223 = vmatpush1.bf16.msra.mxu0 0
  %224 = vmatprep.subr.bf16.mxu0 0
  %225 = vmatpush1.bf16.msra.mxu0 0
  %226 = vmatprep.subr.bf16.mxu0 0
  %227 = vmatpush1.bf16.msra.mxu0 0
  %228 = vmatprep.subr.bf16.mxu0 0
  %229 = vmatpush1.bf16.msra.mxu0 0
  %230 = vmatprep.subr.bf16.mxu0 0
  %231 = vmatpush1.bf16.msra.mxu0 0
  %232 = vmatprep.subr.bf16.mxu0 0
  %233 = vmatpush1.bf16.msra.mxu0 0
  %234 = vmatprep.subr.bf16.mxu0 0
  %235 = vmatpush1.bf16.msra.mxu0 0
  %236 = vmatprep.subr.bf16.mxu0 0
  %237 = vmatpush1.bf16.msra.mxu0 0
  %238 = vmatprep.subr.bf16.mxu0 0
  %239 = vmatpush1.bf16.msra.mxu0 0
  %240 = vmatprep.subr.bf16.mxu0 0
  %241 = vmatpush1.bf16.msra.mxu0 0
  %242 = vmatprep.mubr.bf16.mxu0 0
  %243 = vmatmul.mubr.bf16.gmra.mrb[0].mxu0 %v205
  %v244 = vpop.f32.mrb[0].mxu0
  %v245 = vadd.f32 0.0, %v244
  %v246 = vpop.f32.mrb[0].mxu0
  %v247 = vpop.f32.mrb[0].mxu0
  %v248 = vadd.f32 0.0, %v247
  %v249 = vpop.f32.mrb[0].mxu0
  %250 = vmatprep.mubr.bf16.mxu0 0
  %251 = vmatmul.mubr.bf16.gmra.mrb[0].mxu0 %v208
  %v252 = vpop.f32.mrb[0].mxu0
  %v253 = vadd.f32 0.0, %v252
  %v254 = vpop.f32.mrb[0].mxu0
  %v255 = vpop.f32.mrb[0].mxu0
  %v256 = vadd.f32 0.0, %v255
  %v257 = vpop.f32.mrb[0].mxu0
  %258 = vdwg.mxu0
  %259 = vmatprep.subr.bf16.mxu0 0
  %260 = vmatpush1.bf16.msra.mxu0 %v198
  %261 = vmatprep.subr.bf16.mxu0 0
  %262 = vmatpush1.bf16.msra.mxu0 %v199
  %263 = vmatprep.subr.bf16.mxu0 0
  %264 = vmatpush1.bf16.msra.mxu0 0
  %265 = vmatprep.subr.bf16.mxu0 0
  %266 = vmatpush1.bf16.msra.mxu0 0
  %267 = vmatprep.subr.bf16.mxu0 0
  %268 = vmatpush1.bf16.msra.mxu0 0
  %269 = vmatprep.subr.bf16.mxu0 0
  %270 = vmatpush1.bf16.msra.mxu0 0
  %271 = vmatprep.subr.bf16.mxu0 0
  %272 = vmatpush1.bf16.msra.mxu0 0
  %273 = vmatprep.subr.bf16.mxu0 0
  %274 = vmatpush1.bf16.msra.mxu0 0
  %275 = vmatprep.subr.bf16.mxu0 0
  %276 = vmatpush1.bf16.msra.mxu0 0
  %277 = vmatprep.subr.bf16.mxu0 0
  %278 = vmatpush1.bf16.msra.mxu0 0
  %279 = vmatprep.subr.bf16.mxu0 0
  %280 = vmatpush1.bf16.msra.mxu0 0
  %281 = vmatprep.subr.bf16.mxu0 0
  %282 = vmatpush1.bf16.msra.mxu0 0
  %283 = vmatprep.subr.bf16.mxu0 0
  %284 = vmatpush1.bf16.msra.mxu0 0
  %285 = vmatprep.subr.bf16.mxu0 0
  %286 = vmatpush1.bf16.msra.mxu0 0
  %287 = vmatprep.subr.bf16.mxu0 0
  %288 = vmatpush1.bf16.msra.mxu0 0
  %289 = vmatprep.subr.bf16.mxu0 0
  %290 = vmatpush1.bf16.msra.mxu0 0
  %291 = vmatprep.mubr.bf16.mxu0 0
  %292 = vmatmul.mubr.bf16.gmra.mrb[0].mxu0 %v205
  %v293 = vpop.f32.mrb[0].mxu0
  %v294 = vadd.f32 0.0, %v293
  %v295 = vpop.f32.mrb[0].mxu0
  %v296 = vpop.f32.mrb[0].mxu0
  %v297 = vadd.f32 0.0, %v296
  %v298 = vpop.f32.mrb[0].mxu0
  %299 = vmatprep.mubr.bf16.mxu0 0
  %300 = vmatmul.mubr.bf16.gmra.mrb[0].mxu0 %v208
  %v301 = vpop.f32.mrb[0].mxu0
  %v302 = vadd.f32 0.0, %v301
  %v303 = vpop.f32.mrb[0].mxu0
  %v304 = vpop.f32.mrb[0].mxu0
  %v305 = vadd.f32 0.0, %v304
  %v306 = vpop.f32.mrb[0].mxu0
  %307 = vdwg.mxu0
  %308 = vmatprep.subr.bf16.mxu0 0
  %309 = vmatpush1.bf16.msra.mxu0 %v200
  %310 = vmatprep.subr.bf16.mxu0 0
  %311 = vmatpush1.bf16.msra.mxu0 %v201
  %312 = vmatprep.subr.bf16.mxu0 0
  %313 = vmatpush1.bf16.msra.mxu0 0
  %314 = vmatprep.subr.bf16.mxu0 0
  %315 = vmatpush1.bf16.msra.mxu0 0
  %316 = vmatprep.subr.bf16.mxu0 0
  %317 = vmatpush1.bf16.msra.mxu0 0
  %318 = vmatprep.subr.bf16.mxu0 0
  %319 = vmatpush1.bf16.msra.mxu0 0
  %320 = vmatprep.subr.bf16.mxu0 0
  %321 = vmatpush1.bf16.msra.mxu0 0
  %322 = vmatprep.subr.bf16.mxu0 0
  %323 = vmatpush1.bf16.msra.mxu0 0
  %324 = vmatprep.subr.bf16.mxu0 0
  %325 = vmatpush1.bf16.msra.mxu0 0
  %326 = vmatprep.subr.bf16.mxu0 0
  %327 = vmatpush1.bf16.msra.mxu0 0
  %328 = vmatprep.subr.bf16.mxu0 0
  %329 = vmatpush1.bf16.msra.mxu0 0
  %330 = vmatprep.subr.bf16.mxu0 0
  %331 = vmatpush1.bf16.msra.mxu0 0
  %332 = vmatprep.subr.bf16.mxu0 0
  %333 = vmatpush1.bf16.msra.mxu0 0
  %334 = vmatprep.subr.bf16.mxu0 0
  %335 = vmatpush1.bf16.msra.mxu0 0
  %336 = vmatprep.subr.bf16.mxu0 0
  %337 = vmatpush1.bf16.msra.mxu0 0
  %338 = vmatprep.subr.bf16.mxu0 0
  %339 = vmatpush1.bf16.msra.mxu0 0
  %340 = vmatprep.mubr.bf16.mxu0 0
  %341 = vmatmul.mubr.bf16.gmra.mrb[0].mxu0 %v205
  %v342 = vpop.f32.mrb[0].mxu0
  %v343 = vadd.f32 0.0, %v342
  %v344 = vpop.f32.mrb[0].mxu0
  %v345 = vpop.f32.mrb[0].mxu0
  %v346 = vadd.f32 0.0, %v345
  %v347 = vpop.f32.mrb[0].mxu0
  %348 = vmatprep.mubr.bf16.mxu0 0
  %349 = vmatmul.mubr.bf16.gmra.mrb[0].mxu0 %v208
  %v350 = vpop.f32.mrb[0].mxu0
  %v351 = vadd.f32 0.0, %v350
  %v352 = vpop.f32.mrb[0].mxu0
  %v353 = vpop.f32.mrb[0].mxu0
  %v354 = vadd.f32 0.0, %v353
  %v355 = vpop.f32.mrb[0].mxu0
  %356 = vdwg.mxu0
  %357 = vmatprep.subr.bf16.mxu0 0
  %358 = vmatpush1.bf16.msra.mxu0 %v202
  %359 = vmatprep.subr.bf16.mxu0 0
  %360 = vmatpush1.bf16.msra.mxu0 %v203
  %361 = vmatprep.subr.bf16.mxu0 0
  %362 = vmatpush1.bf16.msra.mxu0 0
  %363 = vmatprep.subr.bf16.mxu0 0
  %364 = vmatpush1.bf16.msra.mxu0 0
  %365 = vmatprep.subr.bf16.mxu0 0
  %366 = vmatpush1.bf16.msra.mxu0 0
  %367 = vmatprep.subr.bf16.mxu0 0
  %368 = vmatpush1.bf16.msra.mxu0 0
  %369 = vmatprep.subr.bf16.mxu0 0
  %370 = vmatpush1.bf16.msra.mxu0 0
  %371 = vmatprep.subr.bf16.mxu0 0
  %372 = vmatpush1.bf16.msra.mxu0 0
  %373 = vmatprep.subr.bf16.mxu0 0
  %374 = vmatpush1.bf16.msra.mxu0 0
  %375 = vmatprep.subr.bf16.mxu0 0
  %376 = vmatpush1.bf16.msra.mxu0 0
  %377 = vmatprep.subr.bf16.mxu0 0
  %378 = vmatpush1.bf16.msra.mxu0 0
  %379 = vmatprep.subr.bf16.mxu0 0
  %380 = vmatpush1.bf16.msra.mxu0 0
  %381 = vmatprep.subr.bf16.mxu0 0
  %382 = vmatpush1.bf16.msra.mxu0 0
  %383 = vmatprep.subr.bf16.mxu0 0
  %384 = vmatpush1.bf16.msra.mxu0 0
  %385 = vmatprep.subr.bf16.mxu0 0
  %386 = vmatpush1.bf16.msra.mxu0 0
  %387 = vmatprep.subr.bf16.mxu0 0
  %388 = vmatpush1.bf16.msra.mxu0 0
  %389 = vmatprep.mubr.bf16.mxu0 0
  %390 = vmatmul.mubr.bf16.gmra.mrb[0].mxu0 %v205
  %v391 = vpop.f32.mrb[0].mxu0
  %v392 = vadd.f32 0.0, %v391
  %v393 = vpop.f32.mrb[0].mxu0
  %v394 = vpop.f32.mrb[0].mxu0
  %v395 = vadd.f32 0.0, %v394
  %v396 = vpop.f32.mrb[0].mxu0
  %397 = vmatprep.mubr.bf16.mxu0 0
  %398 = vmatmul.mubr.bf16.gmra.mrb[0].mxu0 %v208
  %v399 = vpop.f32.mrb[0].mxu0
  %v400 = vadd.f32 0.0, %v399
  %v401 = vpop.f32.mrb[0].mxu0
  %v402 = vpop.f32.mrb[0].mxu0
  %v403 = vadd.f32 0.0, %v402
  %v404 = vpop.f32.mrb[0].mxu0
  %405 = vdwg.mxu0
  %v406 = vld [vmem:[%s5] sm:$0xff]
  %v407 = vld [vmem:[%s5 + $0x8] sm:$0xff]
  %v408 = vld [vmem:[%s5 + $0x10] sm:$0xff]
  %v409 = vld [vmem:[%s5 + $0x18] sm:$0xff]
  %v410 = vld [vmem:[%s5 + $0x20] sm:$0xff]
  %v411 = vld [vmem:[%s5 + $0x28] sm:$0xff]
  %v412 = vld [vmem:[%s5 + $0x30] sm:$0xff]
  %v413 = vld [vmem:[%s5 + $0x38] sm:$0xff]
  %v414 = vld [vmem:[%s5 + $0x40] sm:$0xff]
  %v415 = vld [vmem:[%s5 + $0x48] sm:$0xff]
  %v416 = vld [vmem:[%s5 + $0x50] sm:$0xff]
  %v417 = vld [vmem:[%s5 + $0x58] sm:$0xff]
  %v418 = vld [vmem:[%s5 + $0x60] sm:$0xff]
  %v419 = vld [vmem:[%s5 + $0x68] sm:$0xff]
  %v420 = vld [vmem:[%s5 + $0x70] sm:$0xff]
  %v421 = vld [vmem:[%s5 + $0x78] sm:$0xff]
  %v422 = vpack.c.bf16 %v407, %v406
  %v423 = vpack.c.bf16 %v409, %v408
  %v424 = vpack.c.bf16 %v411, %v410
  %v425 = vpack.c.bf16 %v413, %v412
  %v426 = vpack.c.bf16 %v415, %v414
  %v427 = vpack.c.bf16 %v417, %v416
  %v428 = vpack.c.bf16 %v419, %v418
  %v429 = vpack.c.bf16 %v421, %v420
  %v431 = vsel %vm81, %v177, 0
  %v434 = vsel %vm81, %v178, 0
  %v437 = vsel %vm81, %v179, 0
  %439 = vmatprep.subr.bf16.mxu0 0
  %440 = vmatpush1.bf16.msra.mxu0 %v422
  %441 = vmatprep.subr.bf16.mxu0 0
  %442 = vmatpush1.bf16.msra.mxu0 %v423
  %443 = vmatprep.subr.bf16.mxu0 0
  %444 = vmatpush1.bf16.msra.mxu0 0
  %445 = vmatprep.subr.bf16.mxu0 0
  %446 = vmatpush1.bf16.msra.mxu0 0
  %447 = vmatprep.subr.bf16.mxu0 0
  %448 = vmatpush1.bf16.msra.mxu0 0
  %449 = vmatprep.subr.bf16.mxu0 0
  %450 = vmatpush1.bf16.msra.mxu0 0
  %451 = vmatprep.subr.bf16.mxu0 0
  %452 = vmatpush1.bf16.msra.mxu0 0
  %453 = vmatprep.subr.bf16.mxu0 0
  %454 = vmatpush1.bf16.msra.mxu0 0
  %455 = vmatprep.subr.bf16.mxu0 0
  %456 = vmatpush1.bf16.msra.mxu0 0
  %457 = vmatprep.subr.bf16.mxu0 0
  %458 = vmatpush1.bf16.msra.mxu0 0
  %459 = vmatprep.subr.bf16.mxu0 0
  %460 = vmatpush1.bf16.msra.mxu0 0
  %461 = vmatprep.subr.bf16.mxu0 0
  %462 = vmatpush1.bf16.msra.mxu0 0
  %463 = vmatprep.subr.bf16.mxu0 0
  %464 = vmatpush1.bf16.msra.mxu0 0
  %465 = vmatprep.subr.bf16.mxu0 0
  %466 = vmatpush1.bf16.msra.mxu0 0
  %467 = vmatprep.subr.bf16.mxu0 0
  %468 = vmatpush1.bf16.msra.mxu0 0
  %469 = vmatprep.subr.bf16.mxu0 0
  %470 = vmatpush1.bf16.msra.mxu0 0
  %471 = vmatprep.mubr.bf16.mxu0 0
  %472 = vmatmul.mubr.bf16.gmra.mrb[0].mxu0 %v431
  %v473 = vpop.f32.mrb[0].mxu0
  %v474 = vadd.f32 0.0, %v473
  %v475 = vpop.f32.mrb[0].mxu0
  %v476 = vpop.f32.mrb[0].mxu0
  %v477 = vadd.f32 0.0, %v476
  %v478 = vpop.f32.mrb[0].mxu0
  %479 = vmatprep.mubr.bf16.mxu0 0
  %480 = vmatmul.mubr.bf16.gmra.mrb[0].mxu0 %v434
  %v481 = vpop.f32.mrb[0].mxu0
  %v482 = vadd.f32 0.0, %v481
  %v483 = vpop.f32.mrb[0].mxu0
  %v484 = vpop.f32.mrb[0].mxu0
  %v485 = vadd.f32 0.0, %v484
  %v486 = vpop.f32.mrb[0].mxu0
  %487 = vmatprep.mubr.bf16.mxu0 0
  %488 = vmatmul.mubr.bf16.gmra.mrb[0].mxu0 %v437
  %v489 = vpop.f32.mrb[0].mxu0
  %v490 = vadd.f32 0.0, %v489
  %v491 = vpop.f32.mrb[0].mxu0
  %v492 = vpop.f32.mrb[0].mxu0
  %v493 = vadd.f32 0.0, %v492
  %v494 = vpop.f32.mrb[0].mxu0
  %495 = vdwg.mxu0
  %496 = vmatprep.subr.bf16.mxu0 0
  %497 = vmatpush1.bf16.msra.mxu0 %v424
  %498 = vmatprep.subr.bf16.mxu0 0
  %499 = vmatpush1.bf16.msra.mxu0 %v425
  %500 = vmatprep.subr.bf16.mxu0 0
  %501 = vmatpush1.bf16.msra.mxu0 0
  %502 = vmatprep.subr.bf16.mxu0 0
  %503 = vmatpush1.bf16.msra.mxu0 0
  %504 = vmatprep.subr.bf16.mxu0 0
  %505 = vmatpush1.bf16.msra.mxu0 0
  %506 = vmatprep.subr.bf16.mxu0 0
  %507 = vmatpush1.bf16.msra.mxu0 0
  %508 = vmatprep.subr.bf16.mxu0 0
  %509 = vmatpush1.bf16.msra.mxu0 0
  %510 = vmatprep.subr.bf16.mxu0 0
  %511 = vmatpush1.bf16.msra.mxu0 0
  %512 = vmatprep.subr.bf16.mxu0 0
  %513 = vmatpush1.bf16.msra.mxu0 0
  %514 = vmatprep.subr.bf16.mxu0 0
  %515 = vmatpush1.bf16.msra.mxu0 0
  %516 = vmatprep.subr.bf16.mxu0 0
  %517 = vmatpush1.bf16.msra.mxu0 0
  %518 = vmatprep.subr.bf16.mxu0 0
  %519 = vmatpush1.bf16.msra.mxu0 0
  %520 = vmatprep.subr.bf16.mxu0 0
  %521 = vmatpush1.bf16.msra.mxu0 0
  %522 = vmatprep.subr.bf16.mxu0 0
  %523 = vmatpush1.bf16.msra.mxu0 0
  %524 = vmatprep.subr.bf16.mxu0 0
  %525 = vmatpush1.bf16.msra.mxu0 0
  %526 = vmatprep.subr.bf16.mxu0 0
  %527 = vmatpush1.bf16.msra.mxu0 0
  %528 = vmatprep.mubr.bf16.mxu0 0
  %529 = vmatmul.mubr.bf16.gmra.mrb[0].mxu0 %v431
  %v530 = vpop.f32.mrb[0].mxu0
  %v531 = vadd.f32 0.0, %v530
  %v532 = vpop.f32.mrb[0].mxu0
  %v533 = vpop.f32.mrb[0].mxu0
  %v534 = vadd.f32 0.0, %v533
  %v535 = vpop.f32.mrb[0].mxu0
  %536 = vmatprep.mubr.bf16.mxu0 0
  %537 = vmatmul.mubr.bf16.gmra.mrb[0].mxu0 %v434
  %v538 = vpop.f32.mrb[0].mxu0
  %v539 = vadd.f32 0.0, %v538
  %v540 = vpop.f32.mrb[0].mxu0
  %v541 = vpop.f32.mrb[0].mxu0
  %v542 = vadd.f32 0.0, %v541
  %v543 = vpop.f32.mrb[0].mxu0
  %544 = vmatprep.mubr.bf16.mxu0 0
  %545 = vmatmul.mubr.bf16.gmra.mrb[0].mxu0 %v437
  %v546 = vpop.f32.mrb[0].mxu0
  %v547 = vadd.f32 0.0, %v546
  %v548 = vpop.f32.mrb[0].mxu0
  %v549 = vpop.f32.mrb[0].mxu0
  %v550 = vadd.f32 0.0, %v549
  %v551 = vpop.f32.mrb[0].mxu0
  %552 = vdwg.mxu0
  %553 = vmatprep.subr.bf16.mxu0 0
  %554 = vmatpush1.bf16.msra.mxu0 %v426
  %555 = vmatprep.subr.bf16.mxu0 0
  %556 = vmatpush1.bf16.msra.mxu0 %v427
  %557 = vmatprep.subr.bf16.mxu0 0
  %558 = vmatpush1.bf16.msra.mxu0 0
  %559 = vmatprep.subr.bf16.mxu0 0
  %560 = vmatpush1.bf16.msra.mxu0 0
  %561 = vmatprep.subr.bf16.mxu0 0
  %562 = vmatpush1.bf16.msra.mxu0 0
  %563 = vmatprep.subr.bf16.mxu0 0
  %564 = vmatpush1.bf16.msra.mxu0 0
  %565 = vmatprep.subr.bf16.mxu0 0
  %566 = vmatpush1.bf16.msra.mxu0 0
  %567 = vmatprep.subr.bf16.mxu0 0
  %568 = vmatpush1.bf16.msra.mxu0 0
  %569 = vmatprep.subr.bf16.mxu0 0
  %570 = vmatpush1.bf16.msra.mxu0 0
  %571 = vmatprep.subr.bf16.mxu0 0
  %572 = vmatpush1.bf16.msra.mxu0 0
  %573 = vmatprep.subr.bf16.mxu0 0
  %574 = vmatpush1.bf16.msra.mxu0 0
  %575 = vmatprep.subr.bf16.mxu0 0
  %576 = vmatpush1.bf16.msra.mxu0 0
  %577 = vmatprep.subr.bf16.mxu0 0
  %578 = vmatpush1.bf16.msra.mxu0 0
  %579 = vmatprep.subr.bf16.mxu0 0
  %580 = vmatpush1.bf16.msra.mxu0 0
  %581 = vmatprep.subr.bf16.mxu0 0
  %582 = vmatpush1.bf16.msra.mxu0 0
  %583 = vmatprep.subr.bf16.mxu0 0
  %584 = vmatpush1.bf16.msra.mxu0 0
  %585 = vmatprep.mubr.bf16.mxu0 0
  %586 = vmatmul.mubr.bf16.gmra.mrb[0].mxu0 %v431
  %v587 = vpop.f32.mrb[0].mxu0
  %v588 = vadd.f32 0.0, %v587
  %v589 = vpop.f32.mrb[0].mxu0
  %v590 = vpop.f32.mrb[0].mxu0
  %v591 = vadd.f32 0.0, %v590
  %v592 = vpop.f32.mrb[0].mxu0
  %593 = vmatprep.mubr.bf16.mxu0 0
  %594 = vmatmul.mubr.bf16.gmra.mrb[0].mxu0 %v434
  %v595 = vpop.f32.mrb[0].mxu0
  %v596 = vadd.f32 0.0, %v595
  %v597 = vpop.f32.mrb[0].mxu0
  %v598 = vpop.f32.mrb[0].mxu0
  %v599 = vadd.f32 0.0, %v598
  %v600 = vpop.f32.mrb[0].mxu0
  %601 = vmatprep.mubr.bf16.mxu0 0
  %602 = vmatmul.mubr.bf16.gmra.mrb[0].mxu0 %v437
  %v603 = vpop.f32.mrb[0].mxu0
  %v604 = vadd.f32 0.0, %v603
  %v605 = vpop.f32.mrb[0].mxu0
  %v606 = vpop.f32.mrb[0].mxu0
  %v607 = vadd.f32 0.0, %v606
  %v608 = vpop.f32.mrb[0].mxu0
  %609 = vdwg.mxu0
  %610 = vmatprep.subr.bf16.mxu0 0
  %611 = vmatpush1.bf16.msra.mxu0 %v428
  %612 = vmatprep.subr.bf16.mxu0 0
  %613 = vmatpush1.bf16.msra.mxu0 %v429
  %614 = vmatprep.subr.bf16.mxu0 0
  %615 = vmatpush1.bf16.msra.mxu0 0
  %616 = vmatprep.subr.bf16.mxu0 0
  %617 = vmatpush1.bf16.msra.mxu0 0
  %618 = vmatprep.subr.bf16.mxu0 0
  %619 = vmatpush1.bf16.msra.mxu0 0
  %620 = vmatprep.subr.bf16.mxu0 0
  %621 = vmatpush1.bf16.msra.mxu0 0
  %622 = vmatprep.subr.bf16.mxu0 0
  %623 = vmatpush1.bf16.msra.mxu0 0
  %624 = vmatprep.subr.bf16.mxu0 0
  %625 = vmatpush1.bf16.msra.mxu0 0
  %626 = vmatprep.subr.bf16.mxu0 0
  %627 = vmatpush1.bf16.msra.mxu0 0
  %628 = vmatprep.subr.bf16.mxu0 0
  %629 = vmatpush1.bf16.msra.mxu0 0
  %630 = vmatprep.subr.bf16.mxu0 0
  %631 = vmatpush1.bf16.msra.mxu0 0
  %632 = vmatprep.subr.bf16.mxu0 0
  %633 = vmatpush1.bf16.msra.mxu0 0
  %634 = vmatprep.subr.bf16.mxu0 0
  %635 = vmatpush1.bf16.msra.mxu0 0
  %636 = vmatprep.subr.bf16.mxu0 0
  %637 = vmatpush1.bf16.msra.mxu0 0
  %638 = vmatprep.subr.bf16.mxu0 0
  %639 = vmatpush1.bf16.msra.mxu0 0
  %640 = vmatprep.subr.bf16.mxu0 0
  %641 = vmatpush1.bf16.msra.mxu0 0
  %642 = vmatprep.mubr.bf16.mxu0 0
  %643 = vmatmul.mubr.bf16.gmra.mrb[0].mxu0 %v431
  %v644 = vpop.f32.mrb[0].mxu0
  %v645 = vadd.f32 0.0, %v644
  %v646 = vpop.f32.mrb[0].mxu0
  %v647 = vpop.f32.mrb[0].mxu0
  %v648 = vadd.f32 0.0, %v647
  %v649 = vpop.f32.mrb[0].mxu0
  %650 = vmatprep.mubr.bf16.mxu0 0
  %651 = vmatmul.mubr.bf16.gmra.mrb[0].mxu0 %v434
  %v652 = vpop.f32.mrb[0].mxu0
  %v653 = vadd.f32 0.0, %v652
  %v654 = vpop.f32.mrb[0].mxu0
  %v655 = vpop.f32.mrb[0].mxu0
  %v656 = vadd.f32 0.0, %v655
  %v657 = vpop.f32.mrb[0].mxu0
  %658 = vmatprep.mubr.bf16.mxu0 0
  %659 = vmatmul.mubr.bf16.gmra.mrb[0].mxu0 %v437
  %v660 = vpop.f32.mrb[0].mxu0
  %v661 = vadd.f32 0.0, %v660
  %v662 = vpop.f32.mrb[0].mxu0
  %v663 = vpop.f32.mrb[0].mxu0
  %v664 = vadd.f32 0.0, %v663
  %v665 = vpop.f32.mrb[0].mxu0
  %666 = vdwg.mxu0
  %v667 = vld [vmem:[%s6] sm:$0xff]
  %v668 = vld [vmem:[%s6 + $0x8] sm:$0xff]
  %v669 = vld [vmem:[%s6 + $0x10] sm:$0xff]
  %v670 = vld [vmem:[%s6 + $0x18] sm:$0xff]
  %v671 = vld [vmem:[%s7] sm:$0xff]
  %v672 = vld [vmem:[%s7 + $0x8] sm:$0xff]
  %v673 = vld [vmem:[%s7 + $0x10] sm:$0xff]
  %v674 = vld [vmem:[%s7 + $0x18] sm:$0xff]
  %v675 = vsub.f32 0.0, %v245
  %v676 = vsub.f32 0.0, %v248
  %v677 = vsub.f32 0.0, %v253
  %v678 = vsub.f32 0.0, %v256
  %v679 = vsub.f32 0.0, %v294
  %v680 = vsub.f32 0.0, %v297
  %v681 = vsub.f32 0.0, %v302
  %v682 = vsub.f32 0.0, %v305
  %v683 = vsub.f32 0.0, %v343
  %v684 = vsub.f32 0.0, %v346
  %v685 = vsub.f32 0.0, %v351
  %v686 = vsub.f32 0.0, %v354
  %v687 = vsub.f32 0.0, %v392
  %v688 = vsub.f32 0.0, %v395
  %v689 = vsub.f32 0.0, %v400
  %v690 = vsub.f32 0.0, %v403
  %707 = vrot.lane.b32.xlu0 %v675, 124
  %v708 = vpop.permute.xlu0 %707
  %709 = vrot.lane.b32.xlu0 %v676, 124
  %v710 = vpop.permute.xlu0 %709
  %711 = vrot.lane.b32.xlu0 %v677, 124
  %v712 = vpop.permute.xlu0 %711
  %713 = vrot.lane.b32.xlu0 %v678, 124
  %v714 = vpop.permute.xlu0 %713
  %715 = vrot.lane.b32.xlu0 %v679, 124
  %v716 = vpop.permute.xlu0 %715
  %717 = vrot.lane.b32.xlu0 %v680, 124
  %v718 = vpop.permute.xlu0 %717
  %719 = vrot.lane.b32.xlu0 %v681, 124
  %v720 = vpop.permute.xlu0 %719
  %721 = vrot.lane.b32.xlu0 %v682, 124
  %v722 = vpop.permute.xlu0 %721
  %723 = vrot.lane.b32.xlu0 %v683, 124
  %v724 = vpop.permute.xlu0 %723
  %725 = vrot.lane.b32.xlu0 %v684, 124
  %v726 = vpop.permute.xlu0 %725
  %727 = vrot.lane.b32.xlu0 %v685, 124
  %v728 = vpop.permute.xlu0 %727
  %729 = vrot.lane.b32.xlu0 %v686, 124
  %v730 = vpop.permute.xlu0 %729
  %731 = vrot.lane.b32.xlu0 %v687, 124
  %v732 = vpop.permute.xlu0 %731
  %733 = vrot.lane.b32.xlu0 %v688, 124
  %v734 = vpop.permute.xlu0 %733
  %735 = vrot.lane.b32.xlu0 %v689, 124
  %v736 = vpop.permute.xlu0 %735
  %737 = vrot.lane.b32.xlu0 %v690, 124
  %v738 = vpop.permute.xlu0 %737
  %771 = vrot.lane.b32.xlu0 %v245, 4
  %v772 = vpop.permute.xlu0 %771
  %773 = vrot.lane.b32.xlu0 %v248, 4
  %v774 = vpop.permute.xlu0 %773
  %775 = vrot.lane.b32.xlu0 %v253, 4
  %v776 = vpop.permute.xlu0 %775
  %777 = vrot.lane.b32.xlu0 %v256, 4
  %v778 = vpop.permute.xlu0 %777
  %779 = vrot.lane.b32.xlu0 %v294, 4
  %v780 = vpop.permute.xlu0 %779
  %781 = vrot.lane.b32.xlu0 %v297, 4
  %v782 = vpop.permute.xlu0 %781
  %783 = vrot.lane.b32.xlu0 %v302, 4
  %v784 = vpop.permute.xlu0 %783
  %785 = vrot.lane.b32.xlu0 %v305, 4
  %v786 = vpop.permute.xlu0 %785
  %787 = vrot.lane.b32.xlu0 %v343, 4
  %v788 = vpop.permute.xlu0 %787
  %789 = vrot.lane.b32.xlu0 %v346, 4
  %v790 = vpop.permute.xlu0 %789
  %791 = vrot.lane.b32.xlu0 %v351, 4
  %v792 = vpop.permute.xlu0 %791
  %793 = vrot.lane.b32.xlu0 %v354, 4
  %v794 = vpop.permute.xlu0 %793
  %795 = vrot.lane.b32.xlu0 %v392, 4
  %v796 = vpop.permute.xlu0 %795
  %797 = vrot.lane.b32.xlu0 %v395, 4
  %v798 = vpop.permute.xlu0 %797
  %799 = vrot.lane.b32.xlu0 %v400, 4
  %v800 = vpop.permute.xlu0 %799
  %801 = vrot.lane.b32.xlu0 %v403, 4
  %v802 = vpop.permute.xlu0 %801
  %vm819 = vcmask 31744
  %v820 = vsel %vm819, %v708, %v772
  %v821 = vsel %vm819, %v710, %v774
  %v822 = vsel %vm819, %v712, %v776
  %v823 = vsel %vm819, %v714, %v778
  %v824 = vsel %vm819, %v716, %v780
  %v825 = vsel %vm819, %v718, %v782
  %v826 = vsel %vm819, %v720, %v784
  %v827 = vsel %vm819, %v722, %v786
  %v828 = vsel %vm819, %v724, %v788
  %v829 = vsel %vm819, %v726, %v790
  %v830 = vsel %vm819, %v728, %v792
  %v831 = vsel %vm819, %v730, %v794
  %v832 = vsel %vm819, %v732, %v796
  %v833 = vsel %vm819, %v734, %v798
  %v834 = vsel %vm819, %v736, %v800
  %v835 = vsel %vm819, %v738, %v802
  %v836 = vmul.f32 %v245, %v667
  %v837 = vmul.f32 %v248, %v668
  %v838 = vmul.f32 %v253, %v669
  %v839 = vmul.f32 %v256, %v670
  %v840 = vmul.f32 %v294, %v667
  %v841 = vmul.f32 %v297, %v668
  %v842 = vmul.f32 %v302, %v669
  %v843 = vmul.f32 %v305, %v670
  %v844 = vmul.f32 %v343, %v667
  %v845 = vmul.f32 %v346, %v668
  %v846 = vmul.f32 %v351, %v669
  %v847 = vmul.f32 %v354, %v670
  %v848 = vmul.f32 %v392, %v667
  %v849 = vmul.f32 %v395, %v668
  %v850 = vmul.f32 %v400, %v669
  %v851 = vmul.f32 %v403, %v670
  %v852 = vmul.f32 %v820, %v671
  %v853 = vmul.f32 %v821, %v672
  %v854 = vmul.f32 %v822, %v673
  %v855 = vmul.f32 %v823, %v674
  %v856 = vmul.f32 %v824, %v671
  %v857 = vmul.f32 %v825, %v672
  %v858 = vmul.f32 %v826, %v673
  %v859 = vmul.f32 %v827, %v674
  %v860 = vmul.f32 %v828, %v671
  %v861 = vmul.f32 %v829, %v672
  %v862 = vmul.f32 %v830, %v673
  %v863 = vmul.f32 %v831, %v674
  %v864 = vmul.f32 %v832, %v671
  %v865 = vmul.f32 %v833, %v672
  %v866 = vmul.f32 %v834, %v673
  %v867 = vmul.f32 %v835, %v674
  %v868 = vadd.f32 %v836, %v852
  %v869 = vadd.f32 %v837, %v853
  %v870 = vadd.f32 %v838, %v854
  %v871 = vadd.f32 %v839, %v855
  %v872 = vadd.f32 %v840, %v856
  %v873 = vadd.f32 %v841, %v857
  %v874 = vadd.f32 %v842, %v858
  %v875 = vadd.f32 %v843, %v859
  %v876 = vadd.f32 %v844, %v860
  %v877 = vadd.f32 %v845, %v861
  %v878 = vadd.f32 %v846, %v862
  %v879 = vadd.f32 %v847, %v863
  %v880 = vadd.f32 %v848, %v864
  %v881 = vadd.f32 %v849, %v865
  %v882 = vadd.f32 %v850, %v866
  %v883 = vadd.f32 %v851, %v867
  %v884 = vld [vmem:[%s8] sm:$0xff]
  %v885 = vld [vmem:[%s8 + $0x8] sm:$0xff]
  %v886 = vld [vmem:[%s8 + $0x10] sm:$0xff]
  %v887 = vld [vmem:[%s8 + $0x18] sm:$0xff]
  %v888 = vld [vmem:[%s9] sm:$0xff]
  %v889 = vld [vmem:[%s9 + $0x8] sm:$0xff]
  %v890 = vld [vmem:[%s9 + $0x10] sm:$0xff]
  %v891 = vld [vmem:[%s9 + $0x18] sm:$0xff]
  %892 = vrot.lane.b32.xlu0 %v675, 116
  %v893 = vpop.permute.xlu0 %892
  %894 = vrot.lane.b32.xlu0 %v676, 116
  %v895 = vpop.permute.xlu0 %894
  %896 = vrot.lane.b32.xlu0 %v677, 116
  %v897 = vpop.permute.xlu0 %896
  %898 = vrot.lane.b32.xlu0 %v678, 116
  %v899 = vpop.permute.xlu0 %898
  %900 = vrot.lane.b32.xlu0 %v679, 116
  %v901 = vpop.permute.xlu0 %900
  %902 = vrot.lane.b32.xlu0 %v680, 116
  %v903 = vpop.permute.xlu0 %902
  %904 = vrot.lane.b32.xlu0 %v681, 116
  %v905 = vpop.permute.xlu0 %904
  %906 = vrot.lane.b32.xlu0 %v682, 116
  %v907 = vpop.permute.xlu0 %906
  %908 = vrot.lane.b32.xlu0 %v683, 116
  %v909 = vpop.permute.xlu0 %908
  %910 = vrot.lane.b32.xlu0 %v684, 116
  %v911 = vpop.permute.xlu0 %910
  %912 = vrot.lane.b32.xlu0 %v685, 116
  %v913 = vpop.permute.xlu0 %912
  %914 = vrot.lane.b32.xlu0 %v686, 116
  %v915 = vpop.permute.xlu0 %914
  %916 = vrot.lane.b32.xlu0 %v687, 116
  %v917 = vpop.permute.xlu0 %916
  %918 = vrot.lane.b32.xlu0 %v688, 116
  %v919 = vpop.permute.xlu0 %918
  %920 = vrot.lane.b32.xlu0 %v689, 116
  %v921 = vpop.permute.xlu0 %920
  %922 = vrot.lane.b32.xlu0 %v690, 116
  %v923 = vpop.permute.xlu0 %922
  %940 = vrot.lane.b32.xlu0 %v245, 124
  %v941 = vpop.permute.xlu0 %940
  %942 = vrot.lane.b32.xlu0 %v248, 124
  %v943 = vpop.permute.xlu0 %942
  %944 = vrot.lane.b32.xlu0 %v253, 124
  %v945 = vpop.permute.xlu0 %944
  %946 = vrot.lane.b32.xlu0 %v256, 124
  %v947 = vpop.permute.xlu0 %946
  %948 = vrot.lane.b32.xlu0 %v294, 124
  %v949 = vpop.permute.xlu0 %948
  %950 = vrot.lane.b32.xlu0 %v297, 124
  %v951 = vpop.permute.xlu0 %950
  %952 = vrot.lane.b32.xlu0 %v302, 124
  %v953 = vpop.permute.xlu0 %952
  %954 = vrot.lane.b32.xlu0 %v305, 124
  %v955 = vpop.permute.xlu0 %954
  %956 = vrot.lane.b32.xlu0 %v343, 124
  %v957 = vpop.permute.xlu0 %956
  %958 = vrot.lane.b32.xlu0 %v346, 124
  %v959 = vpop.permute.xlu0 %958
  %960 = vrot.lane.b32.xlu0 %v351, 124
  %v961 = vpop.permute.xlu0 %960
  %962 = vrot.lane.b32.xlu0 %v354, 124
  %v963 = vpop.permute.xlu0 %962
  %964 = vrot.lane.b32.xlu0 %v392, 124
  %v965 = vpop.permute.xlu0 %964
  %966 = vrot.lane.b32.xlu0 %v395, 124
  %v967 = vpop.permute.xlu0 %966
  %968 = vrot.lane.b32.xlu0 %v400, 124
  %v969 = vpop.permute.xlu0 %968
  %970 = vrot.lane.b32.xlu0 %v403, 124
  %v971 = vpop.permute.xlu0 %970
  %v988 = vsel %vm819, %v893, %v941
  %v989 = vsel %vm819, %v895, %v943
  %v990 = vsel %vm819, %v897, %v945
  %v991 = vsel %vm819, %v899, %v947
  %v992 = vsel %vm819, %v901, %v949
  %v993 = vsel %vm819, %v903, %v951
  %v994 = vsel %vm819, %v905, %v953
  %v995 = vsel %vm819, %v907, %v955
  %v996 = vsel %vm819, %v909, %v957
  %v997 = vsel %vm819, %v911, %v959
  %v998 = vsel %vm819, %v913, %v961
  %v999 = vsel %vm819, %v915, %v963
  %v1000 = vsel %vm819, %v917, %v965
  %v1001 = vsel %vm819, %v919, %v967
  %v1002 = vsel %vm819, %v921, %v969
  %v1003 = vsel %vm819, %v923, %v971
  %1008 = vrot.lane.b32.xlu0 %v884, 8
  %v1009 = vpop.permute.xlu0 %1008
  %1010 = vrot.lane.b32.xlu0 %v885, 8
  %v1011 = vpop.permute.xlu0 %1010
  %1012 = vrot.lane.b32.xlu0 %v886, 8
  %v1013 = vpop.permute.xlu0 %1012
  %1014 = vrot.lane.b32.xlu0 %v887, 8
  %v1015 = vpop.permute.xlu0 %1014
  %v1020 = vmul.f32 %v245, %v1009
  %v1021 = vmul.f32 %v248, %v1011
  %v1022 = vmul.f32 %v253, %v1013
  %v1023 = vmul.f32 %v256, %v1015
  %v1024 = vmul.f32 %v294, %v1009
  %v1025 = vmul.f32 %v297, %v1011
  %v1026 = vmul.f32 %v302, %v1013
  %v1027 = vmul.f32 %v305, %v1015
  %v1028 = vmul.f32 %v343, %v1009
  %v1029 = vmul.f32 %v346, %v1011
  %v1030 = vmul.f32 %v351, %v1013
  %v1031 = vmul.f32 %v354, %v1015
  %v1032 = vmul.f32 %v392, %v1009
  %v1033 = vmul.f32 %v395, %v1011
  %v1034 = vmul.f32 %v400, %v1013
  %v1035 = vmul.f32 %v403, %v1015
  %v1036 = vmul.f32 %v988, %v888
  %v1037 = vmul.f32 %v989, %v889
  %v1038 = vmul.f32 %v990, %v890
  %v1039 = vmul.f32 %v991, %v891
  %v1040 = vmul.f32 %v992, %v888
  %v1041 = vmul.f32 %v993, %v889
  %v1042 = vmul.f32 %v994, %v890
  %v1043 = vmul.f32 %v995, %v891
  %v1044 = vmul.f32 %v996, %v888
  %v1045 = vmul.f32 %v997, %v889
  %v1046 = vmul.f32 %v998, %v890
  %v1047 = vmul.f32 %v999, %v891
  %v1048 = vmul.f32 %v1000, %v888
  %v1049 = vmul.f32 %v1001, %v889
  %v1050 = vmul.f32 %v1002, %v890
  %v1051 = vmul.f32 %v1003, %v891
  %1068 = vrot.lane.b32.xlu0 %v1036, 8
  %v1069 = vpop.permute.xlu0 %1068
  %1070 = vrot.lane.b32.xlu0 %v1037, 8
  %v1071 = vpop.permute.xlu0 %1070
  %1072 = vrot.lane.b32.xlu0 %v1038, 8
  %v1073 = vpop.permute.xlu0 %1072
  %1074 = vrot.lane.b32.xlu0 %v1039, 8
  %v1075 = vpop.permute.xlu0 %1074
  %1076 = vrot.lane.b32.xlu0 %v1040, 8
  %v1077 = vpop.permute.xlu0 %1076
  %1078 = vrot.lane.b32.xlu0 %v1041, 8
  %v1079 = vpop.permute.xlu0 %1078
  %1080 = vrot.lane.b32.xlu0 %v1042, 8
  %v1081 = vpop.permute.xlu0 %1080
  %1082 = vrot.lane.b32.xlu0 %v1043, 8
  %v1083 = vpop.permute.xlu0 %1082
  %1084 = vrot.lane.b32.xlu0 %v1044, 8
  %v1085 = vpop.permute.xlu0 %1084
  %1086 = vrot.lane.b32.xlu0 %v1045, 8
  %v1087 = vpop.permute.xlu0 %1086
  %1088 = vrot.lane.b32.xlu0 %v1046, 8
  %v1089 = vpop.permute.xlu0 %1088
  %1090 = vrot.lane.b32.xlu0 %v1047, 8
  %v1091 = vpop.permute.xlu0 %1090
  %1092 = vrot.lane.b32.xlu0 %v1048, 8
  %v1093 = vpop.permute.xlu0 %1092
  %1094 = vrot.lane.b32.xlu0 %v1049, 8
  %v1095 = vpop.permute.xlu0 %1094
  %1096 = vrot.lane.b32.xlu0 %v1050, 8
  %v1097 = vpop.permute.xlu0 %1096
  %1098 = vrot.lane.b32.xlu0 %v1051, 8
  %v1099 = vpop.permute.xlu0 %1098
  %v1116 = vadd.f32 %v1020, %v1069
  %v1117 = vadd.f32 %v1021, %v1071
  %v1118 = vadd.f32 %v1022, %v1073
  %v1119 = vadd.f32 %v1023, %v1075
  %v1120 = vadd.f32 %v1024, %v1077
  %v1121 = vadd.f32 %v1025, %v1079
  %v1122 = vadd.f32 %v1026, %v1081
  %v1123 = vadd.f32 %v1027, %v1083
  %v1124 = vadd.f32 %v1028, %v1085
  %v1125 = vadd.f32 %v1029, %v1087
  %v1126 = vadd.f32 %v1030, %v1089
  %v1127 = vadd.f32 %v1031, %v1091
  %v1128 = vadd.f32 %v1032, %v1093
  %v1129 = vadd.f32 %v1033, %v1095
  %v1130 = vadd.f32 %v1034, %v1097
  %v1131 = vadd.f32 %v1035, %v1099
  %v1132 = vld [vmem:[%s10] sm:$0xff]
  %v1133 = vld [vmem:[%s10 + $0x8] sm:$0xff]
  %v1134 = vld [vmem:[%s10 + $0x10] sm:$0xff]
  %v1135 = vld [vmem:[%s10 + $0x18] sm:$0xff]
  %v1136 = vld [vmem:[%s10 + $0x20] sm:$0xff]
  %v1137 = vld [vmem:[%s10 + $0x28] sm:$0xff]
  %v1138 = vld [vmem:[%s11] sm:$0xff]
  %v1139 = vld [vmem:[%s11 + $0x8] sm:$0xff]
  %v1140 = vld [vmem:[%s11 + $0x10] sm:$0xff]
  %v1141 = vld [vmem:[%s11 + $0x18] sm:$0xff]
  %v1142 = vld [vmem:[%s11 + $0x20] sm:$0xff]
  %v1143 = vld [vmem:[%s11 + $0x28] sm:$0xff]
  %v1144 = vsub.f32 0.0, %v474
  %v1145 = vsub.f32 0.0, %v477
  %v1146 = vsub.f32 0.0, %v482
  %v1147 = vsub.f32 0.0, %v485
  %v1148 = vsub.f32 0.0, %v490
  %v1149 = vsub.f32 0.0, %v493
  %v1150 = vsub.f32 0.0, %v531
  %v1151 = vsub.f32 0.0, %v534
  %v1152 = vsub.f32 0.0, %v539
  %v1153 = vsub.f32 0.0, %v542
  %v1154 = vsub.f32 0.0, %v547
  %v1155 = vsub.f32 0.0, %v550
  %v1156 = vsub.f32 0.0, %v588
  %v1157 = vsub.f32 0.0, %v591
  %v1158 = vsub.f32 0.0, %v596
  %v1159 = vsub.f32 0.0, %v599
  %v1160 = vsub.f32 0.0, %v604
  %v1161 = vsub.f32 0.0, %v607
  %v1162 = vsub.f32 0.0, %v645
  %v1163 = vsub.f32 0.0, %v648
  %v1164 = vsub.f32 0.0, %v653
  %v1165 = vsub.f32 0.0, %v656
  %v1166 = vsub.f32 0.0, %v661
  %v1167 = vsub.f32 0.0, %v664
  %1192 = vrot.lane.b32.xlu0 %v1144, 124
  %v1193 = vpop.permute.xlu0 %1192
  %1194 = vrot.lane.b32.xlu0 %v1145, 124
  %v1195 = vpop.permute.xlu0 %1194
  %1196 = vrot.lane.b32.xlu0 %v1146, 124
  %v1197 = vpop.permute.xlu0 %1196
  %1198 = vrot.lane.b32.xlu0 %v1147, 124
  %v1199 = vpop.permute.xlu0 %1198
  %1200 = vrot.lane.b32.xlu0 %v1148, 124
  %v1201 = vpop.permute.xlu0 %1200
  %1202 = vrot.lane.b32.xlu0 %v1149, 124
  %v1203 = vpop.permute.xlu0 %1202
  %1204 = vrot.lane.b32.xlu0 %v1150, 124
  %v1205 = vpop.permute.xlu0 %1204
  %1206 = vrot.lane.b32.xlu0 %v1151, 124
  %v1207 = vpop.permute.xlu0 %1206
  %1208 = vrot.lane.b32.xlu0 %v1152, 124
  %v1209 = vpop.permute.xlu0 %1208
  %1210 = vrot.lane.b32.xlu0 %v1153, 124
  %v1211 = vpop.permute.xlu0 %1210
  %1212 = vrot.lane.b32.xlu0 %v1154, 124
  %v1213 = vpop.permute.xlu0 %1212
  %1214 = vrot.lane.b32.xlu0 %v1155, 124
  %v1215 = vpop.permute.xlu0 %1214
  %1216 = vrot.lane.b32.xlu0 %v1156, 124
  %v1217 = vpop.permute.xlu0 %1216
  %1218 = vrot.lane.b32.xlu0 %v1157, 124
  %v1219 = vpop.permute.xlu0 %1218
  %1220 = vrot.lane.b32.xlu0 %v1158, 124
  %v1221 = vpop.permute.xlu0 %1220
  %1222 = vrot.lane.b32.xlu0 %v1159, 124
  %v1223 = vpop.permute.xlu0 %1222
  %1224 = vrot.lane.b32.xlu0 %v1160, 124
  %v1225 = vpop.permute.xlu0 %1224
  %1226 = vrot.lane.b32.xlu0 %v1161, 124
  %v1227 = vpop.permute.xlu0 %1226
  %1228 = vrot.lane.b32.xlu0 %v1162, 124
  %v1229 = vpop.permute.xlu0 %1228
  %1230 = vrot.lane.b32.xlu0 %v1163, 124
  %v1231 = vpop.permute.xlu0 %1230
  %1232 = vrot.lane.b32.xlu0 %v1164, 124
  %v1233 = vpop.permute.xlu0 %1232
  %1234 = vrot.lane.b32.xlu0 %v1165, 124
  %v1235 = vpop.permute.xlu0 %1234
  %1236 = vrot.lane.b32.xlu0 %v1166, 124
  %v1237 = vpop.permute.xlu0 %1236
  %1238 = vrot.lane.b32.xlu0 %v1167, 124
  %v1239 = vpop.permute.xlu0 %1238
  %1288 = vrot.lane.b32.xlu0 %v474, 4
  %v1289 = vpop.permute.xlu0 %1288
  %1290 = vrot.lane.b32.xlu0 %v477, 4
  %v1291 = vpop.permute.xlu0 %1290
  %1292 = vrot.lane.b32.xlu0 %v482, 4
  %v1293 = vpop.permute.xlu0 %1292
  %1294 = vrot.lane.b32.xlu0 %v485, 4
  %v1295 = vpop.permute.xlu0 %1294
  %1296 = vrot.lane.b32.xlu0 %v490, 4
  %v1297 = vpop.permute.xlu0 %1296
  %1298 = vrot.lane.b32.xlu0 %v493, 4
  %v1299 = vpop.permute.xlu0 %1298
  %1300 = vrot.lane.b32.xlu0 %v531, 4
  %v1301 = vpop.permute.xlu0 %1300
  %1302 = vrot.lane.b32.xlu0 %v534, 4
  %v1303 = vpop.permute.xlu0 %1302
  %1304 = vrot.lane.b32.xlu0 %v539, 4
  %v1305 = vpop.permute.xlu0 %1304
  %1306 = vrot.lane.b32.xlu0 %v542, 4
  %v1307 = vpop.permute.xlu0 %1306
  %1308 = vrot.lane.b32.xlu0 %v547, 4
  %v1309 = vpop.permute.xlu0 %1308
  %1310 = vrot.lane.b32.xlu0 %v550, 4
  %v1311 = vpop.permute.xlu0 %1310
  %1312 = vrot.lane.b32.xlu0 %v588, 4
  %v1313 = vpop.permute.xlu0 %1312
  %1314 = vrot.lane.b32.xlu0 %v591, 4
  %v1315 = vpop.permute.xlu0 %1314
  %1316 = vrot.lane.b32.xlu0 %v596, 4
  %v1317 = vpop.permute.xlu0 %1316
  %1318 = vrot.lane.b32.xlu0 %v599, 4
  %v1319 = vpop.permute.xlu0 %1318
  %1320 = vrot.lane.b32.xlu0 %v604, 4
  %v1321 = vpop.permute.xlu0 %1320
  %1322 = vrot.lane.b32.xlu0 %v607, 4
  %v1323 = vpop.permute.xlu0 %1322
  %1324 = vrot.lane.b32.xlu0 %v645, 4
  %v1325 = vpop.permute.xlu0 %1324
  %1326 = vrot.lane.b32.xlu0 %v648, 4
  %v1327 = vpop.permute.xlu0 %1326
  %1328 = vrot.lane.b32.xlu0 %v653, 4
  %v1329 = vpop.permute.xlu0 %1328
  %1330 = vrot.lane.b32.xlu0 %v656, 4
  %v1331 = vpop.permute.xlu0 %1330
  %1332 = vrot.lane.b32.xlu0 %v661, 4
  %v1333 = vpop.permute.xlu0 %1332
  %1334 = vrot.lane.b32.xlu0 %v664, 4
  %v1335 = vpop.permute.xlu0 %1334
  %v1360 = vsel %vm819, %v1193, %v1289
  %v1361 = vsel %vm819, %v1195, %v1291
  %v1362 = vsel %vm819, %v1197, %v1293
  %v1363 = vsel %vm819, %v1199, %v1295
  %v1364 = vsel %vm819, %v1201, %v1297
  %v1365 = vsel %vm819, %v1203, %v1299
  %v1366 = vsel %vm819, %v1205, %v1301
  %v1367 = vsel %vm819, %v1207, %v1303
  %v1368 = vsel %vm819, %v1209, %v1305
  %v1369 = vsel %vm819, %v1211, %v1307
  %v1370 = vsel %vm819, %v1213, %v1309
  %v1371 = vsel %vm819, %v1215, %v1311
  %v1372 = vsel %vm819, %v1217, %v1313
  %v1373 = vsel %vm819, %v1219, %v1315
  %v1374 = vsel %vm819, %v1221, %v1317
  %v1375 = vsel %vm819, %v1223, %v1319
  %v1376 = vsel %vm819, %v1225, %v1321
  %v1377 = vsel %vm819, %v1227, %v1323
  %v1378 = vsel %vm819, %v1229, %v1325
  %v1379 = vsel %vm819, %v1231, %v1327
  %v1380 = vsel %vm819, %v1233, %v1329
  %v1381 = vsel %vm819, %v1235, %v1331
  %v1382 = vsel %vm819, %v1237, %v1333
  %v1383 = vsel %vm819, %v1239, %v1335
  %v1384 = vmul.f32 %v474, %v1132
  %v1385 = vmul.f32 %v477, %v1133
  %v1386 = vmul.f32 %v482, %v1134
  %v1387 = vmul.f32 %v485, %v1135
  %v1388 = vmul.f32 %v490, %v1136
  %v1389 = vmul.f32 %v493, %v1137
  %v1390 = vmul.f32 %v531, %v1132
  %v1391 = vmul.f32 %v534, %v1133
  %v1392 = vmul.f32 %v539, %v1134
  %v1393 = vmul.f32 %v542, %v1135
  %v1394 = vmul.f32 %v547, %v1136
  %v1395 = vmul.f32 %v550, %v1137
  %v1396 = vmul.f32 %v588, %v1132
  %v1397 = vmul.f32 %v591, %v1133
  %v1398 = vmul.f32 %v596, %v1134
  %v1399 = vmul.f32 %v599, %v1135
  %v1400 = vmul.f32 %v604, %v1136
  %v1401 = vmul.f32 %v607, %v1137
  %v1402 = vmul.f32 %v645, %v1132
  %v1403 = vmul.f32 %v648, %v1133
  %v1404 = vmul.f32 %v653, %v1134
  %v1405 = vmul.f32 %v656, %v1135
  %v1406 = vmul.f32 %v661, %v1136
  %v1407 = vmul.f32 %v664, %v1137
  %v1408 = vmul.f32 %v1360, %v1138
  %v1409 = vmul.f32 %v1361, %v1139
  %v1410 = vmul.f32 %v1362, %v1140
  %v1411 = vmul.f32 %v1363, %v1141
  %v1412 = vmul.f32 %v1364, %v1142
  %v1413 = vmul.f32 %v1365, %v1143
  %v1414 = vmul.f32 %v1366, %v1138
  %v1415 = vmul.f32 %v1367, %v1139
  %v1416 = vmul.f32 %v1368, %v1140
  %v1417 = vmul.f32 %v1369, %v1141
  %v1418 = vmul.f32 %v1370, %v1142
  %v1419 = vmul.f32 %v1371, %v1143
  %v1420 = vmul.f32 %v1372, %v1138
  %v1421 = vmul.f32 %v1373, %v1139
  %v1422 = vmul.f32 %v1374, %v1140
  %v1423 = vmul.f32 %v1375, %v1141
  %v1424 = vmul.f32 %v1376, %v1142
  %v1425 = vmul.f32 %v1377, %v1143
  %v1426 = vmul.f32 %v1378, %v1138
  %v1427 = vmul.f32 %v1379, %v1139
  %v1428 = vmul.f32 %v1380, %v1140
  %v1429 = vmul.f32 %v1381, %v1141
  %v1430 = vmul.f32 %v1382, %v1142
  %v1431 = vmul.f32 %v1383, %v1143
  %v1432 = vadd.f32 %v1384, %v1408
  %v1433 = vadd.f32 %v1385, %v1409
  %v1434 = vadd.f32 %v1386, %v1410
  %v1435 = vadd.f32 %v1387, %v1411
  %v1436 = vadd.f32 %v1388, %v1412
  %v1437 = vadd.f32 %v1389, %v1413
  %v1438 = vadd.f32 %v1390, %v1414
  %v1439 = vadd.f32 %v1391, %v1415
  %v1440 = vadd.f32 %v1392, %v1416
  %v1441 = vadd.f32 %v1393, %v1417
  %v1442 = vadd.f32 %v1394, %v1418
  %v1443 = vadd.f32 %v1395, %v1419
  %v1444 = vadd.f32 %v1396, %v1420
  %v1445 = vadd.f32 %v1397, %v1421
  %v1446 = vadd.f32 %v1398, %v1422
  %v1447 = vadd.f32 %v1399, %v1423
  %v1448 = vadd.f32 %v1400, %v1424
  %v1449 = vadd.f32 %v1401, %v1425
  %v1450 = vadd.f32 %v1402, %v1426
  %v1451 = vadd.f32 %v1403, %v1427
  %v1452 = vadd.f32 %v1404, %v1428
  %v1453 = vadd.f32 %v1405, %v1429
  %v1454 = vadd.f32 %v1406, %v1430
  %v1455 = vadd.f32 %v1407, %v1431
  %v1456 = vld [vmem:[%s12] sm:$0xff]
  %v1457 = vld [vmem:[%s12 + $0x8] sm:$0xff]
  %v1458 = vld [vmem:[%s12 + $0x10] sm:$0xff]
  %v1459 = vld [vmem:[%s12 + $0x18] sm:$0xff]
  %v1460 = vld [vmem:[%s12 + $0x20] sm:$0xff]
  %v1461 = vld [vmem:[%s12 + $0x28] sm:$0xff]
  %v1462 = vpack.c.bf16 %v1457, %v1456
  %v1463 = vpack.c.bf16 %v1459, %v1458
  %v1464 = vpack.c.bf16 %v1461, %v1460
  %v1465 = vld [vmem:[%s13] sm:$0xff]
  %v1466 = vld [vmem:[%s13 + $0x8] sm:$0xff]
  %v1467 = vld [vmem:[%s13 + $0x10] sm:$0xff]
  %v1468 = vld [vmem:[%s13 + $0x18] sm:$0xff]
  %v1469 = vld [vmem:[%s13 + $0x20] sm:$0xff]
  %v1470 = vld [vmem:[%s13 + $0x28] sm:$0xff]
  %v1471 = vpack.c.bf16 %v1466, %v1465
  %v1472 = vpack.c.bf16 %v1468, %v1467
  %v1473 = vpack.c.bf16 %v1470, %v1469
  %v1474 = vpack.c.bf16 %v869, %v868
  %v1475 = vpack.c.bf16 %v871, %v870
  %v1476 = vpack.c.bf16 %v873, %v872
  %v1477 = vpack.c.bf16 %v875, %v874
  %v1478 = vpack.c.bf16 %v877, %v876
  %v1479 = vpack.c.bf16 %v879, %v878
  %v1480 = vpack.c.bf16 %v881, %v880
  %v1481 = vpack.c.bf16 %v883, %v882
  %v1483 = vsel %vm81, %v1462, 0
  %v1486 = vsel %vm81, %v1463, 0
  %v1489 = vsel %vm81, %v1464, 0
  %1491 = vmatprep.subr.bf16.mxu0 0
  %1492 = vmatpush1.bf16.msra.mxu0 %v1474
  %1493 = vmatprep.subr.bf16.mxu0 0
  %1494 = vmatpush1.bf16.msra.mxu0 %v1475
  %1495 = vmatprep.subr.bf16.mxu0 0
  %1496 = vmatpush1.bf16.msra.mxu0 0
  %1497 = vmatprep.subr.bf16.mxu0 0
  %1498 = vmatpush1.bf16.msra.mxu0 0
  %1499 = vmatprep.subr.bf16.mxu0 0
  %1500 = vmatpush1.bf16.msra.mxu0 0
  %1501 = vmatprep.subr.bf16.mxu0 0
  %1502 = vmatpush1.bf16.msra.mxu0 0
  %1503 = vmatprep.subr.bf16.mxu0 0
  %1504 = vmatpush1.bf16.msra.mxu0 0
  %1505 = vmatprep.subr.bf16.mxu0 0
  %1506 = vmatpush1.bf16.msra.mxu0 0
  %1507 = vmatprep.subr.bf16.mxu0 0
  %1508 = vmatpush1.bf16.msra.mxu0 0
  %1509 = vmatprep.subr.bf16.mxu0 0
  %1510 = vmatpush1.bf16.msra.mxu0 0
  %1511 = vmatprep.subr.bf16.mxu0 0
  %1512 = vmatpush1.bf16.msra.mxu0 0
  %1513 = vmatprep.subr.bf16.mxu0 0
  %1514 = vmatpush1.bf16.msra.mxu0 0
  %1515 = vmatprep.subr.bf16.mxu0 0
  %1516 = vmatpush1.bf16.msra.mxu0 0
  %1517 = vmatprep.subr.bf16.mxu0 0
  %1518 = vmatpush1.bf16.msra.mxu0 0
  %1519 = vmatprep.subr.bf16.mxu0 0
  %1520 = vmatpush1.bf16.msra.mxu0 0
  %1521 = vmatprep.subr.bf16.mxu0 0
  %1522 = vmatpush1.bf16.msra.mxu0 0
  %1523 = vmatprep.mubr.bf16.mxu0 0
  %1524 = vmatmul.mubr.bf16.gmra.mrb[0].mxu0 %v1483
  %v1525 = vpop.f32.mrb[0].mxu0
  %v1526 = vadd.f32 0.0, %v1525
  %v1527 = vpop.f32.mrb[0].mxu0
  %v1528 = vpop.f32.mrb[0].mxu0
  %v1529 = vadd.f32 0.0, %v1528
  %v1530 = vpop.f32.mrb[0].mxu0
  %1531 = vmatprep.mubr.bf16.mxu0 0
  %1532 = vmatmul.mubr.bf16.gmra.mrb[0].mxu0 %v1486
  %v1533 = vpop.f32.mrb[0].mxu0
  %v1534 = vadd.f32 0.0, %v1533
  %v1535 = vpop.f32.mrb[0].mxu0
  %v1536 = vpop.f32.mrb[0].mxu0
  %v1537 = vadd.f32 0.0, %v1536
  %v1538 = vpop.f32.mrb[0].mxu0
  %1539 = vmatprep.mubr.bf16.mxu0 0
  %1540 = vmatmul.mubr.bf16.gmra.mrb[0].mxu0 %v1489
  %v1541 = vpop.f32.mrb[0].mxu0
  %v1542 = vadd.f32 0.0, %v1541
  %v1543 = vpop.f32.mrb[0].mxu0
  %v1544 = vpop.f32.mrb[0].mxu0
  %v1545 = vadd.f32 0.0, %v1544
  %v1546 = vpop.f32.mrb[0].mxu0
  %1547 = vdwg.mxu0
  %1548 = vmatprep.subr.bf16.mxu0 0
  %1549 = vmatpush1.bf16.msra.mxu0 %v1476
  %1550 = vmatprep.subr.bf16.mxu0 0
  %1551 = vmatpush1.bf16.msra.mxu0 %v1477
  %1552 = vmatprep.subr.bf16.mxu0 0
  %1553 = vmatpush1.bf16.msra.mxu0 0
  %1554 = vmatprep.subr.bf16.mxu0 0
  %1555 = vmatpush1.bf16.msra.mxu0 0
  %1556 = vmatprep.subr.bf16.mxu0 0
  %1557 = vmatpush1.bf16.msra.mxu0 0
  %1558 = vmatprep.subr.bf16.mxu0 0
  %1559 = vmatpush1.bf16.msra.mxu0 0
  %1560 = vmatprep.subr.bf16.mxu0 0
  %1561 = vmatpush1.bf16.msra.mxu0 0
  %1562 = vmatprep.subr.bf16.mxu0 0
  %1563 = vmatpush1.bf16.msra.mxu0 0
  %1564 = vmatprep.subr.bf16.mxu0 0
  %1565 = vmatpush1.bf16.msra.mxu0 0
  %1566 = vmatprep.subr.bf16.mxu0 0
  %1567 = vmatpush1.bf16.msra.mxu0 0
  %1568 = vmatprep.subr.bf16.mxu0 0
  %1569 = vmatpush1.bf16.msra.mxu0 0
  %1570 = vmatprep.subr.bf16.mxu0 0
  %1571 = vmatpush1.bf16.msra.mxu0 0
  %1572 = vmatprep.subr.bf16.mxu0 0
  %1573 = vmatpush1.bf16.msra.mxu0 0
  %1574 = vmatprep.subr.bf16.mxu0 0
  %1575 = vmatpush1.bf16.msra.mxu0 0
  %1576 = vmatprep.subr.bf16.mxu0 0
  %1577 = vmatpush1.bf16.msra.mxu0 0
  %1578 = vmatprep.subr.bf16.mxu0 0
  %1579 = vmatpush1.bf16.msra.mxu0 0
  %1580 = vmatprep.mubr.bf16.mxu0 0
  %1581 = vmatmul.mubr.bf16.gmra.mrb[0].mxu0 %v1483
  %v1582 = vpop.f32.mrb[0].mxu0
  %v1583 = vadd.f32 0.0, %v1582
  %v1584 = vpop.f32.mrb[0].mxu0
  %v1585 = vpop.f32.mrb[0].mxu0
  %v1586 = vadd.f32 0.0, %v1585
  %v1587 = vpop.f32.mrb[0].mxu0
  %1588 = vmatprep.mubr.bf16.mxu0 0
  %1589 = vmatmul.mubr.bf16.gmra.mrb[0].mxu0 %v1486
  %v1590 = vpop.f32.mrb[0].mxu0
  %v1591 = vadd.f32 0.0, %v1590
  %v1592 = vpop.f32.mrb[0].mxu0
  %v1593 = vpop.f32.mrb[0].mxu0
  %v1594 = vadd.f32 0.0, %v1593
  %v1595 = vpop.f32.mrb[0].mxu0
  %1596 = vmatprep.mubr.bf16.mxu0 0
  %1597 = vmatmul.mubr.bf16.gmra.mrb[0].mxu0 %v1489
  %v1598 = vpop.f32.mrb[0].mxu0
  %v1599 = vadd.f32 0.0, %v1598
  %v1600 = vpop.f32.mrb[0].mxu0
  %v1601 = vpop.f32.mrb[0].mxu0
  %v1602 = vadd.f32 0.0, %v1601
  %v1603 = vpop.f32.mrb[0].mxu0
  %1604 = vdwg.mxu0
  %1605 = vmatprep.subr.bf16.mxu0 0
  %1606 = vmatpush1.bf16.msra.mxu0 %v1478
  %1607 = vmatprep.subr.bf16.mxu0 0
  %1608 = vmatpush1.bf16.msra.mxu0 %v1479
  %1609 = vmatprep.subr.bf16.mxu0 0
  %1610 = vmatpush1.bf16.msra.mxu0 0
  %1611 = vmatprep.subr.bf16.mxu0 0
  %1612 = vmatpush1.bf16.msra.mxu0 0
  %1613 = vmatprep.subr.bf16.mxu0 0
  %1614 = vmatpush1.bf16.msra.mxu0 0
  %1615 = vmatprep.subr.bf16.mxu0 0
  %1616 = vmatpush1.bf16.msra.mxu0 0
  %1617 = vmatprep.subr.bf16.mxu0 0
  %1618 = vmatpush1.bf16.msra.mxu0 0
  %1619 = vmatprep.subr.bf16.mxu0 0
  %1620 = vmatpush1.bf16.msra.mxu0 0
  %1621 = vmatprep.subr.bf16.mxu0 0
  %1622 = vmatpush1.bf16.msra.mxu0 0
  %1623 = vmatprep.subr.bf16.mxu0 0
  %1624 = vmatpush1.bf16.msra.mxu0 0
  %1625 = vmatprep.subr.bf16.mxu0 0
  %1626 = vmatpush1.bf16.msra.mxu0 0
  %1627 = vmatprep.subr.bf16.mxu0 0
  %1628 = vmatpush1.bf16.msra.mxu0 0
  %1629 = vmatprep.subr.bf16.mxu0 0
  %1630 = vmatpush1.bf16.msra.mxu0 0
  %1631 = vmatprep.subr.bf16.mxu0 0
  %1632 = vmatpush1.bf16.msra.mxu0 0
  %1633 = vmatprep.subr.bf16.mxu0 0
  %1634 = vmatpush1.bf16.msra.mxu0 0
  %1635 = vmatprep.subr.bf16.mxu0 0
  %1636 = vmatpush1.bf16.msra.mxu0 0
  %1637 = vmatprep.mubr.bf16.mxu0 0
  %1638 = vmatmul.mubr.bf16.gmra.mrb[0].mxu0 %v1483
  %v1639 = vpop.f32.mrb[0].mxu0
  %v1640 = vadd.f32 0.0, %v1639
  %v1641 = vpop.f32.mrb[0].mxu0
  %v1642 = vpop.f32.mrb[0].mxu0
  %v1643 = vadd.f32 0.0, %v1642
  %v1644 = vpop.f32.mrb[0].mxu0
  %1645 = vmatprep.mubr.bf16.mxu0 0
  %1646 = vmatmul.mubr.bf16.gmra.mrb[0].mxu0 %v1486
  %v1647 = vpop.f32.mrb[0].mxu0
  %v1648 = vadd.f32 0.0, %v1647
  %v1649 = vpop.f32.mrb[0].mxu0
  %v1650 = vpop.f32.mrb[0].mxu0
  %v1651 = vadd.f32 0.0, %v1650
  %v1652 = vpop.f32.mrb[0].mxu0
  %1653 = vmatprep.mubr.bf16.mxu0 0
  %1654 = vmatmul.mubr.bf16.gmra.mrb[0].mxu0 %v1489
  %v1655 = vpop.f32.mrb[0].mxu0
  %v1656 = vadd.f32 0.0, %v1655
  %v1657 = vpop.f32.mrb[0].mxu0
  %v1658 = vpop.f32.mrb[0].mxu0
  %v1659 = vadd.f32 0.0, %v1658
  %v1660 = vpop.f32.mrb[0].mxu0
  %1661 = vdwg.mxu0
  %1662 = vmatprep.subr.bf16.mxu0 0
  %1663 = vmatpush1.bf16.msra.mxu0 %v1480
  %1664 = vmatprep.subr.bf16.mxu0 0
  %1665 = vmatpush1.bf16.msra.mxu0 %v1481
  %1666 = vmatprep.subr.bf16.mxu0 0
  %1667 = vmatpush1.bf16.msra.mxu0 0
  %1668 = vmatprep.subr.bf16.mxu0 0
  %1669 = vmatpush1.bf16.msra.mxu0 0
  %1670 = vmatprep.subr.bf16.mxu0 0
  %1671 = vmatpush1.bf16.msra.mxu0 0
  %1672 = vmatprep.subr.bf16.mxu0 0
  %1673 = vmatpush1.bf16.msra.mxu0 0
  %1674 = vmatprep.subr.bf16.mxu0 0
  %1675 = vmatpush1.bf16.msra.mxu0 0
  %1676 = vmatprep.subr.bf16.mxu0 0
  %1677 = vmatpush1.bf16.msra.mxu0 0
  %1678 = vmatprep.subr.bf16.mxu0 0
  %1679 = vmatpush1.bf16.msra.mxu0 0
  %1680 = vmatprep.subr.bf16.mxu0 0
  %1681 = vmatpush1.bf16.msra.mxu0 0
  %1682 = vmatprep.subr.bf16.mxu0 0
  %1683 = vmatpush1.bf16.msra.mxu0 0
  %1684 = vmatprep.subr.bf16.mxu0 0
  %1685 = vmatpush1.bf16.msra.mxu0 0
  %1686 = vmatprep.subr.bf16.mxu0 0
  %1687 = vmatpush1.bf16.msra.mxu0 0
  %1688 = vmatprep.subr.bf16.mxu0 0
  %1689 = vmatpush1.bf16.msra.mxu0 0
  %1690 = vmatprep.subr.bf16.mxu0 0
  %1691 = vmatpush1.bf16.msra.mxu0 0
  %1692 = vmatprep.subr.bf16.mxu0 0
  %1693 = vmatpush1.bf16.msra.mxu0 0
  %1694 = vmatprep.mubr.bf16.mxu0 0
  %1695 = vmatmul.mubr.bf16.gmra.mrb[0].mxu0 %v1483
  %v1696 = vpop.f32.mrb[0].mxu0
  %v1697 = vadd.f32 0.0, %v1696
  %v1698 = vpop.f32.mrb[0].mxu0
  %v1699 = vpop.f32.mrb[0].mxu0
  %v1700 = vadd.f32 0.0, %v1699
  %v1701 = vpop.f32.mrb[0].mxu0
  %1702 = vmatprep.mubr.bf16.mxu0 0
  %1703 = vmatmul.mubr.bf16.gmra.mrb[0].mxu0 %v1486
  %v1704 = vpop.f32.mrb[0].mxu0
  %v1705 = vadd.f32 0.0, %v1704
  %v1706 = vpop.f32.mrb[0].mxu0
  %v1707 = vpop.f32.mrb[0].mxu0
  %v1708 = vadd.f32 0.0, %v1707
  %v1709 = vpop.f32.mrb[0].mxu0
  %1710 = vmatprep.mubr.bf16.mxu0 0
  %1711 = vmatmul.mubr.bf16.gmra.mrb[0].mxu0 %v1489
  %v1712 = vpop.f32.mrb[0].mxu0
  %v1713 = vadd.f32 0.0, %v1712
  %v1714 = vpop.f32.mrb[0].mxu0
  %v1715 = vpop.f32.mrb[0].mxu0
  %v1716 = vadd.f32 0.0, %v1715
  %v1717 = vpop.f32.mrb[0].mxu0
  %1718 = vdwg.mxu0
  %v1719 = vpack.c.bf16 %v1117, %v1116
  %v1720 = vpack.c.bf16 %v1119, %v1118
  %v1721 = vpack.c.bf16 %v1121, %v1120
  %v1722 = vpack.c.bf16 %v1123, %v1122
  %v1723 = vpack.c.bf16 %v1125, %v1124
  %v1724 = vpack.c.bf16 %v1127, %v1126
  %v1725 = vpack.c.bf16 %v1129, %v1128
  %v1726 = vpack.c.bf16 %v1131, %v1130
  %1729 = vrot.lane.b32.xlu0 %v1719, 120
  %v1730 = vpop.permute.xlu0 %1729
  %1731 = vrot.lane.b32.xlu0 %v1720, 120
  %v1732 = vpop.permute.xlu0 %1731
  %v1736 = vsel %vm81, %v1471, 0
  %v1739 = vsel %vm81, %v1472, 0
  %v1742 = vsel %vm81, %v1473, 0
  %1744 = vmatprep.subr.bf16.mxu0 0
  %1745 = vmatpush1.bf16.msra.mxu0 %v1730
  %1746 = vmatprep.subr.bf16.mxu0 0
  %1747 = vmatpush1.bf16.msra.mxu0 %v1732
  %1748 = vmatprep.subr.bf16.mxu0 0
  %1749 = vmatpush1.bf16.msra.mxu0 0
  %1750 = vmatprep.subr.bf16.mxu0 0
  %1751 = vmatpush1.bf16.msra.mxu0 0
  %1752 = vmatprep.subr.bf16.mxu0 0
  %1753 = vmatpush1.bf16.msra.mxu0 0
  %1754 = vmatprep.subr.bf16.mxu0 0
  %1755 = vmatpush1.bf16.msra.mxu0 0
  %1756 = vmatprep.subr.bf16.mxu0 0
  %1757 = vmatpush1.bf16.msra.mxu0 0
  %1758 = vmatprep.subr.bf16.mxu0 0
  %1759 = vmatpush1.bf16.msra.mxu0 0
  %1760 = vmatprep.subr.bf16.mxu0 0
  %1761 = vmatpush1.bf16.msra.mxu0 0
  %1762 = vmatprep.subr.bf16.mxu0 0
  %1763 = vmatpush1.bf16.msra.mxu0 0
  %1764 = vmatprep.subr.bf16.mxu0 0
  %1765 = vmatpush1.bf16.msra.mxu0 0
  %1766 = vmatprep.subr.bf16.mxu0 0
  %1767 = vmatpush1.bf16.msra.mxu0 0
  %1768 = vmatprep.subr.bf16.mxu0 0
  %1769 = vmatpush1.bf16.msra.mxu0 0
  %1770 = vmatprep.subr.bf16.mxu0 0
  %1771 = vmatpush1.bf16.msra.mxu0 0
  %1772 = vmatprep.subr.bf16.mxu0 0
  %1773 = vmatpush1.bf16.msra.mxu0 0
  %1774 = vmatprep.subr.bf16.mxu0 0
  %1775 = vmatpush1.bf16.msra.mxu0 0
  %1776 = vmatprep.mubr.bf16.mxu0 0
  %1777 = vmatmul.mubr.bf16.gmra.mrb[0].mxu0 %v1736
  %v1778 = vpop.f32.mrb[0].mxu0
  %v1779 = vadd.f32 0.0, %v1778
  %v1780 = vpop.f32.mrb[0].mxu0
  %v1781 = vpop.f32.mrb[0].mxu0
  %v1782 = vadd.f32 0.0, %v1781
  %v1783 = vpop.f32.mrb[0].mxu0
  %1784 = vmatprep.mubr.bf16.mxu0 0
  %1785 = vmatmul.mubr.bf16.gmra.mrb[0].mxu0 %v1739
  %v1786 = vpop.f32.mrb[0].mxu0
  %v1787 = vadd.f32 0.0, %v1786
  %v1788 = vpop.f32.mrb[0].mxu0
  %v1789 = vpop.f32.mrb[0].mxu0
  %v1790 = vadd.f32 0.0, %v1789
  %v1791 = vpop.f32.mrb[0].mxu0
  %1792 = vmatprep.mubr.bf16.mxu0 0
  %1793 = vmatmul.mubr.bf16.gmra.mrb[0].mxu0 %v1742
  %v1794 = vpop.f32.mrb[0].mxu0
  %v1795 = vadd.f32 0.0, %v1794
  %v1796 = vpop.f32.mrb[0].mxu0
  %v1797 = vpop.f32.mrb[0].mxu0
  %v1798 = vadd.f32 0.0, %v1797
  %v1799 = vpop.f32.mrb[0].mxu0
  %1800 = vdwg.mxu0
  %1803 = vrot.lane.b32.xlu0 %v1721, 120
  %v1804 = vpop.permute.xlu0 %1803
  %1805 = vrot.lane.b32.xlu0 %v1722, 120
  %v1806 = vpop.permute.xlu0 %1805
  %1809 = vmatprep.subr.bf16.mxu0 0
  %1810 = vmatpush1.bf16.msra.mxu0 %v1804
  %1811 = vmatprep.subr.bf16.mxu0 0
  %1812 = vmatpush1.bf16.msra.mxu0 %v1806
  %1813 = vmatprep.subr.bf16.mxu0 0
  %1814 = vmatpush1.bf16.msra.mxu0 0
  %1815 = vmatprep.subr.bf16.mxu0 0
  %1816 = vmatpush1.bf16.msra.mxu0 0
  %1817 = vmatprep.subr.bf16.mxu0 0
  %1818 = vmatpush1.bf16.msra.mxu0 0
  %1819 = vmatprep.subr.bf16.mxu0 0
  %1820 = vmatpush1.bf16.msra.mxu0 0
  %1821 = vmatprep.subr.bf16.mxu0 0
  %1822 = vmatpush1.bf16.msra.mxu0 0
  %1823 = vmatprep.subr.bf16.mxu0 0
  %1824 = vmatpush1.bf16.msra.mxu0 0
  %1825 = vmatprep.subr.bf16.mxu0 0
  %1826 = vmatpush1.bf16.msra.mxu0 0
  %1827 = vmatprep.subr.bf16.mxu0 0
  %1828 = vmatpush1.bf16.msra.mxu0 0
  %1829 = vmatprep.subr.bf16.mxu0 0
  %1830 = vmatpush1.bf16.msra.mxu0 0
  %1831 = vmatprep.subr.bf16.mxu0 0
  %1832 = vmatpush1.bf16.msra.mxu0 0
  %1833 = vmatprep.subr.bf16.mxu0 0
  %1834 = vmatpush1.bf16.msra.mxu0 0
  %1835 = vmatprep.subr.bf16.mxu0 0
  %1836 = vmatpush1.bf16.msra.mxu0 0
  %1837 = vmatprep.subr.bf16.mxu0 0
  %1838 = vmatpush1.bf16.msra.mxu0 0
  %1839 = vmatprep.subr.bf16.mxu0 0
  %1840 = vmatpush1.bf16.msra.mxu0 0
  %1841 = vmatprep.mubr.bf16.mxu0 0
  %1842 = vmatmul.mubr.bf16.gmra.mrb[0].mxu0 %v1736
  %v1843 = vpop.f32.mrb[0].mxu0
  %v1844 = vadd.f32 0.0, %v1843
  %v1845 = vpop.f32.mrb[0].mxu0
  %v1846 = vpop.f32.mrb[0].mxu0
  %v1847 = vadd.f32 0.0, %v1846
  %v1848 = vpop.f32.mrb[0].mxu0
  %1849 = vmatprep.mubr.bf16.mxu0 0
  %1850 = vmatmul.mubr.bf16.gmra.mrb[0].mxu0 %v1739
  %v1851 = vpop.f32.mrb[0].mxu0
  %v1852 = vadd.f32 0.0, %v1851
  %v1853 = vpop.f32.mrb[0].mxu0
  %v1854 = vpop.f32.mrb[0].mxu0
  %v1855 = vadd.f32 0.0, %v1854
  %v1856 = vpop.f32.mrb[0].mxu0
  %1857 = vmatprep.mubr.bf16.mxu0 0
  %1858 = vmatmul.mubr.bf16.gmra.mrb[0].mxu0 %v1742
  %v1859 = vpop.f32.mrb[0].mxu0
  %v1860 = vadd.f32 0.0, %v1859
  %v1861 = vpop.f32.mrb[0].mxu0
  %v1862 = vpop.f32.mrb[0].mxu0
  %v1863 = vadd.f32 0.0, %v1862
  %v1864 = vpop.f32.mrb[0].mxu0
  %1865 = vdwg.mxu0
  %1868 = vrot.lane.b32.xlu0 %v1723, 120
  %v1869 = vpop.permute.xlu0 %1868
  %1870 = vrot.lane.b32.xlu0 %v1724, 120
  %v1871 = vpop.permute.xlu0 %1870
  %1874 = vmatprep.subr.bf16.mxu0 0
  %1875 = vmatpush1.bf16.msra.mxu0 %v1869
  %1876 = vmatprep.subr.bf16.mxu0 0
  %1877 = vmatpush1.bf16.msra.mxu0 %v1871
  %1878 = vmatprep.subr.bf16.mxu0 0
  %1879 = vmatpush1.bf16.msra.mxu0 0
  %1880 = vmatprep.subr.bf16.mxu0 0
  %1881 = vmatpush1.bf16.msra.mxu0 0
  %1882 = vmatprep.subr.bf16.mxu0 0
  %1883 = vmatpush1.bf16.msra.mxu0 0
  %1884 = vmatprep.subr.bf16.mxu0 0
  %1885 = vmatpush1.bf16.msra.mxu0 0
  %1886 = vmatprep.subr.bf16.mxu0 0
  %1887 = vmatpush1.bf16.msra.mxu0 0
  %1888 = vmatprep.subr.bf16.mxu0 0
  %1889 = vmatpush1.bf16.msra.mxu0 0
  %1890 = vmatprep.subr.bf16.mxu0 0
  %1891 = vmatpush1.bf16.msra.mxu0 0
  %1892 = vmatprep.subr.bf16.mxu0 0
  %1893 = vmatpush1.bf16.msra.mxu0 0
  %1894 = vmatprep.subr.bf16.mxu0 0
  %1895 = vmatpush1.bf16.msra.mxu0 0
  %1896 = vmatprep.subr.bf16.mxu0 0
  %1897 = vmatpush1.bf16.msra.mxu0 0
  %1898 = vmatprep.subr.bf16.mxu0 0
  %1899 = vmatpush1.bf16.msra.mxu0 0
  %1900 = vmatprep.subr.bf16.mxu0 0
  %1901 = vmatpush1.bf16.msra.mxu0 0
  %1902 = vmatprep.subr.bf16.mxu0 0
  %1903 = vmatpush1.bf16.msra.mxu0 0
  %1904 = vmatprep.subr.bf16.mxu0 0
  %1905 = vmatpush1.bf16.msra.mxu0 0
  %1906 = vmatprep.mubr.bf16.mxu0 0
  %1907 = vmatmul.mubr.bf16.gmra.mrb[0].mxu0 %v1736
  %v1908 = vpop.f32.mrb[0].mxu0
  %v1909 = vadd.f32 0.0, %v1908
  %v1910 = vpop.f32.mrb[0].mxu0
  %v1911 = vpop.f32.mrb[0].mxu0
  %v1912 = vadd.f32 0.0, %v1911
  %v1913 = vpop.f32.mrb[0].mxu0
  %1914 = vmatprep.mubr.bf16.mxu0 0
  %1915 = vmatmul.mubr.bf16.gmra.mrb[0].mxu0 %v1739
  %v1916 = vpop.f32.mrb[0].mxu0
  %v1917 = vadd.f32 0.0, %v1916
  %v1918 = vpop.f32.mrb[0].mxu0
  %v1919 = vpop.f32.mrb[0].mxu0
  %v1920 = vadd.f32 0.0, %v1919
  %v1921 = vpop.f32.mrb[0].mxu0
  %1922 = vmatprep.mubr.bf16.mxu0 0
  %1923 = vmatmul.mubr.bf16.gmra.mrb[0].mxu0 %v1742
  %v1924 = vpop.f32.mrb[0].mxu0
  %v1925 = vadd.f32 0.0, %v1924
  %v1926 = vpop.f32.mrb[0].mxu0
  %v1927 = vpop.f32.mrb[0].mxu0
  %v1928 = vadd.f32 0.0, %v1927
  %v1929 = vpop.f32.mrb[0].mxu0
  %1930 = vdwg.mxu0
  %1933 = vrot.lane.b32.xlu0 %v1725, 120
  %v1934 = vpop.permute.xlu0 %1933
  %1935 = vrot.lane.b32.xlu0 %v1726, 120
  %v1936 = vpop.permute.xlu0 %1935
  %1939 = vmatprep.subr.bf16.mxu0 0
  %1940 = vmatpush1.bf16.msra.mxu0 %v1934
  %1941 = vmatprep.subr.bf16.mxu0 0
  %1942 = vmatpush1.bf16.msra.mxu0 %v1936
  %1943 = vmatprep.subr.bf16.mxu0 0
  %1944 = vmatpush1.bf16.msra.mxu0 0
  %1945 = vmatprep.subr.bf16.mxu0 0
  %1946 = vmatpush1.bf16.msra.mxu0 0
  %1947 = vmatprep.subr.bf16.mxu0 0
  %1948 = vmatpush1.bf16.msra.mxu0 0
  %1949 = vmatprep.subr.bf16.mxu0 0
  %1950 = vmatpush1.bf16.msra.mxu0 0
  %1951 = vmatprep.subr.bf16.mxu0 0
  %1952 = vmatpush1.bf16.msra.mxu0 0
  %1953 = vmatprep.subr.bf16.mxu0 0
  %1954 = vmatpush1.bf16.msra.mxu0 0
  %1955 = vmatprep.subr.bf16.mxu0 0
  %1956 = vmatpush1.bf16.msra.mxu0 0
  %1957 = vmatprep.subr.bf16.mxu0 0
  %1958 = vmatpush1.bf16.msra.mxu0 0
  %1959 = vmatprep.subr.bf16.mxu0 0
  %1960 = vmatpush1.bf16.msra.mxu0 0
  %1961 = vmatprep.subr.bf16.mxu0 0
  %1962 = vmatpush1.bf16.msra.mxu0 0
  %1963 = vmatprep.subr.bf16.mxu0 0
  %1964 = vmatpush1.bf16.msra.mxu0 0
  %1965 = vmatprep.subr.bf16.mxu0 0
  %1966 = vmatpush1.bf16.msra.mxu0 0
  %1967 = vmatprep.subr.bf16.mxu0 0
  %1968 = vmatpush1.bf16.msra.mxu0 0
  %1969 = vmatprep.subr.bf16.mxu0 0
  %1970 = vmatpush1.bf16.msra.mxu0 0
  %1971 = vmatprep.mubr.bf16.mxu0 0
  %1972 = vmatmul.mubr.bf16.gmra.mrb[0].mxu0 %v1736
  %v1973 = vpop.f32.mrb[0].mxu0
  %v1974 = vadd.f32 0.0, %v1973
  %v1975 = vpop.f32.mrb[0].mxu0
  %v1976 = vpop.f32.mrb[0].mxu0
  %v1977 = vadd.f32 0.0, %v1976
  %v1978 = vpop.f32.mrb[0].mxu0
  %1979 = vmatprep.mubr.bf16.mxu0 0
  %1980 = vmatmul.mubr.bf16.gmra.mrb[0].mxu0 %v1739
  %v1981 = vpop.f32.mrb[0].mxu0
  %v1982 = vadd.f32 0.0, %v1981
  %v1983 = vpop.f32.mrb[0].mxu0
  %v1984 = vpop.f32.mrb[0].mxu0
  %v1985 = vadd.f32 0.0, %v1984
  %v1986 = vpop.f32.mrb[0].mxu0
  %1987 = vmatprep.mubr.bf16.mxu0 0
  %1988 = vmatmul.mubr.bf16.gmra.mrb[0].mxu0 %v1742
  %v1989 = vpop.f32.mrb[0].mxu0
  %v1990 = vadd.f32 0.0, %v1989
  %v1991 = vpop.f32.mrb[0].mxu0
  %v1992 = vpop.f32.mrb[0].mxu0
  %v1993 = vadd.f32 0.0, %v1992
  %v1994 = vpop.f32.mrb[0].mxu0
  %1995 = vdwg.mxu0
  %v1996 = vpack.c.bf16 %v248, %v245
  %v1997 = vpack.c.bf16 %v256, %v253
  %v1998 = vpack.c.bf16 %v297, %v294
  %v1999 = vpack.c.bf16 %v305, %v302
  %v2000 = vpack.c.bf16 %v346, %v343
  %v2001 = vpack.c.bf16 %v354, %v351
  %v2002 = vpack.c.bf16 %v395, %v392
  %v2003 = vpack.c.bf16 %v403, %v400
  %2006 = vrot.lane.b32.xlu0 %v1996, 112
  %v2007 = vpop.permute.xlu0 %2006
  %2008 = vrot.lane.b32.xlu0 %v1997, 112
  %v2009 = vpop.permute.xlu0 %2008
  %2012 = vmatprep.subr.bf16.mxu0 0
  %2013 = vmatpush1.bf16.msra.mxu0 %v2007
  %2014 = vmatprep.subr.bf16.mxu0 0
  %2015 = vmatpush1.bf16.msra.mxu0 %v2009
  %2016 = vmatprep.subr.bf16.mxu0 0
  %2017 = vmatpush1.bf16.msra.mxu0 0
  %2018 = vmatprep.subr.bf16.mxu0 0
  %2019 = vmatpush1.bf16.msra.mxu0 0
  %2020 = vmatprep.subr.bf16.mxu0 0
  %2021 = vmatpush1.bf16.msra.mxu0 0
  %2022 = vmatprep.subr.bf16.mxu0 0
  %2023 = vmatpush1.bf16.msra.mxu0 0
  %2024 = vmatprep.subr.bf16.mxu0 0
  %2025 = vmatpush1.bf16.msra.mxu0 0
  %2026 = vmatprep.subr.bf16.mxu0 0
  %2027 = vmatpush1.bf16.msra.mxu0 0
  %2028 = vmatprep.subr.bf16.mxu0 0
  %2029 = vmatpush1.bf16.msra.mxu0 0
  %2030 = vmatprep.subr.bf16.mxu0 0
  %2031 = vmatpush1.bf16.msra.mxu0 0
  %2032 = vmatprep.subr.bf16.mxu0 0
  %2033 = vmatpush1.bf16.msra.mxu0 0
  %2034 = vmatprep.subr.bf16.mxu0 0
  %2035 = vmatpush1.bf16.msra.mxu0 0
  %2036 = vmatprep.subr.bf16.mxu0 0
  %2037 = vmatpush1.bf16.msra.mxu0 0
  %2038 = vmatprep.subr.bf16.mxu0 0
  %2039 = vmatpush1.bf16.msra.mxu0 0
  %2040 = vmatprep.subr.bf16.mxu0 0
  %2041 = vmatpush1.bf16.msra.mxu0 0
  %2042 = vmatprep.subr.bf16.mxu0 0
  %2043 = vmatpush1.bf16.msra.mxu0 0
  %2044 = vmatprep.mubr.bf16.mxu0 0
  %2045 = vmatmul.mubr.bf16.gmra.mrb[0].mxu0 %v1736
  %v2046 = vpop.f32.mrb[0].mxu0
  %v2047 = vadd.f32 0.0, %v2046
  %v2048 = vpop.f32.mrb[0].mxu0
  %v2049 = vpop.f32.mrb[0].mxu0
  %v2050 = vadd.f32 0.0, %v2049
  %v2051 = vpop.f32.mrb[0].mxu0
  %2052 = vmatprep.mubr.bf16.mxu0 0
  %2053 = vmatmul.mubr.bf16.gmra.mrb[0].mxu0 %v1739
  %v2054 = vpop.f32.mrb[0].mxu0
  %v2055 = vadd.f32 0.0, %v2054
  %v2056 = vpop.f32.mrb[0].mxu0
  %v2057 = vpop.f32.mrb[0].mxu0
  %v2058 = vadd.f32 0.0, %v2057
  %v2059 = vpop.f32.mrb[0].mxu0
  %2060 = vmatprep.mubr.bf16.mxu0 0
  %2061 = vmatmul.mubr.bf16.gmra.mrb[0].mxu0 %v1742
  %v2062 = vpop.f32.mrb[0].mxu0
  %v2063 = vadd.f32 0.0, %v2062
  %v2064 = vpop.f32.mrb[0].mxu0
  %v2065 = vpop.f32.mrb[0].mxu0
  %v2066 = vadd.f32 0.0, %v2065
  %v2067 = vpop.f32.mrb[0].mxu0
  %2068 = vdwg.mxu0
  %2071 = vrot.lane.b32.xlu0 %v1998, 112
  %v2072 = vpop.permute.xlu0 %2071
  %2073 = vrot.lane.b32.xlu0 %v1999, 112
  %v2074 = vpop.permute.xlu0 %2073
  %2077 = vmatprep.subr.bf16.mxu0 0
  %2078 = vmatpush1.bf16.msra.mxu0 %v2072
  %2079 = vmatprep.subr.bf16.mxu0 0
  %2080 = vmatpush1.bf16.msra.mxu0 %v2074
  %2081 = vmatprep.subr.bf16.mxu0 0
  %2082 = vmatpush1.bf16.msra.mxu0 0
  %2083 = vmatprep.subr.bf16.mxu0 0
  %2084 = vmatpush1.bf16.msra.mxu0 0
  %2085 = vmatprep.subr.bf16.mxu0 0
  %2086 = vmatpush1.bf16.msra.mxu0 0
  %2087 = vmatprep.subr.bf16.mxu0 0
  %2088 = vmatpush1.bf16.msra.mxu0 0
  %2089 = vmatprep.subr.bf16.mxu0 0
  %2090 = vmatpush1.bf16.msra.mxu0 0
  %2091 = vmatprep.subr.bf16.mxu0 0
  %2092 = vmatpush1.bf16.msra.mxu0 0
  %2093 = vmatprep.subr.bf16.mxu0 0
  %2094 = vmatpush1.bf16.msra.mxu0 0
  %2095 = vmatprep.subr.bf16.mxu0 0
  %2096 = vmatpush1.bf16.msra.mxu0 0
  %2097 = vmatprep.subr.bf16.mxu0 0
  %2098 = vmatpush1.bf16.msra.mxu0 0
  %2099 = vmatprep.subr.bf16.mxu0 0
  %2100 = vmatpush1.bf16.msra.mxu0 0
  %2101 = vmatprep.subr.bf16.mxu0 0
  %2102 = vmatpush1.bf16.msra.mxu0 0
  %2103 = vmatprep.subr.bf16.mxu0 0
  %2104 = vmatpush1.bf16.msra.mxu0 0
  %2105 = vmatprep.subr.bf16.mxu0 0
  %2106 = vmatpush1.bf16.msra.mxu0 0
  %2107 = vmatprep.subr.bf16.mxu0 0
  %2108 = vmatpush1.bf16.msra.mxu0 0
  %2109 = vmatprep.mubr.bf16.mxu0 0
  %2110 = vmatmul.mubr.bf16.gmra.mrb[0].mxu0 %v1736
  %v2111 = vpop.f32.mrb[0].mxu0
  %v2112 = vadd.f32 0.0, %v2111
  %v2113 = vpop.f32.mrb[0].mxu0
  %v2114 = vpop.f32.mrb[0].mxu0
  %v2115 = vadd.f32 0.0, %v2114
  %v2116 = vpop.f32.mrb[0].mxu0
  %2117 = vmatprep.mubr.bf16.mxu0 0
  %2118 = vmatmul.mubr.bf16.gmra.mrb[0].mxu0 %v1739
  %v2119 = vpop.f32.mrb[0].mxu0
  %v2120 = vadd.f32 0.0, %v2119
  %v2121 = vpop.f32.mrb[0].mxu0
  %v2122 = vpop.f32.mrb[0].mxu0
  %v2123 = vadd.f32 0.0, %v2122
  %v2124 = vpop.f32.mrb[0].mxu0
  %2125 = vmatprep.mubr.bf16.mxu0 0
  %2126 = vmatmul.mubr.bf16.gmra.mrb[0].mxu0 %v1742
  %v2127 = vpop.f32.mrb[0].mxu0
  %v2128 = vadd.f32 0.0, %v2127
  %v2129 = vpop.f32.mrb[0].mxu0
  %v2130 = vpop.f32.mrb[0].mxu0
  %v2131 = vadd.f32 0.0, %v2130
  %v2132 = vpop.f32.mrb[0].mxu0
  %2133 = vdwg.mxu0
  %2136 = vrot.lane.b32.xlu0 %v2000, 112
  %v2137 = vpop.permute.xlu0 %2136
  %2138 = vrot.lane.b32.xlu0 %v2001, 112
  %v2139 = vpop.permute.xlu0 %2138
  %2142 = vmatprep.subr.bf16.mxu0 0
  %2143 = vmatpush1.bf16.msra.mxu0 %v2137
  %2144 = vmatprep.subr.bf16.mxu0 0
  %2145 = vmatpush1.bf16.msra.mxu0 %v2139
  %2146 = vmatprep.subr.bf16.mxu0 0
  %2147 = vmatpush1.bf16.msra.mxu0 0
  %2148 = vmatprep.subr.bf16.mxu0 0
  %2149 = vmatpush1.bf16.msra.mxu0 0
  %2150 = vmatprep.subr.bf16.mxu0 0
  %2151 = vmatpush1.bf16.msra.mxu0 0
  %2152 = vmatprep.subr.bf16.mxu0 0
  %2153 = vmatpush1.bf16.msra.mxu0 0
  %2154 = vmatprep.subr.bf16.mxu0 0
  %2155 = vmatpush1.bf16.msra.mxu0 0
  %2156 = vmatprep.subr.bf16.mxu0 0
  %2157 = vmatpush1.bf16.msra.mxu0 0
  %2158 = vmatprep.subr.bf16.mxu0 0
  %2159 = vmatpush1.bf16.msra.mxu0 0
  %2160 = vmatprep.subr.bf16.mxu0 0
  %2161 = vmatpush1.bf16.msra.mxu0 0
  %2162 = vmatprep.subr.bf16.mxu0 0
  %2163 = vmatpush1.bf16.msra.mxu0 0
  %2164 = vmatprep.subr.bf16.mxu0 0
  %2165 = vmatpush1.bf16.msra.mxu0 0
  %2166 = vmatprep.subr.bf16.mxu0 0
  %2167 = vmatpush1.bf16.msra.mxu0 0
  %2168 = vmatprep.subr.bf16.mxu0 0
  %2169 = vmatpush1.bf16.msra.mxu0 0
  %2170 = vmatprep.subr.bf16.mxu0 0
  %2171 = vmatpush1.bf16.msra.mxu0 0
  %2172 = vmatprep.subr.bf16.mxu0 0
  %2173 = vmatpush1.bf16.msra.mxu0 0
  %2174 = vmatprep.mubr.bf16.mxu0 0
  %2175 = vmatmul.mubr.bf16.gmra.mrb[0].mxu0 %v1736
  %v2176 = vpop.f32.mrb[0].mxu0
  %v2177 = vadd.f32 0.0, %v2176
  %v2178 = vpop.f32.mrb[0].mxu0
  %v2179 = vpop.f32.mrb[0].mxu0
  %v2180 = vadd.f32 0.0, %v2179
  %v2181 = vpop.f32.mrb[0].mxu0
  %2182 = vmatprep.mubr.bf16.mxu0 0
  %2183 = vmatmul.mubr.bf16.gmra.mrb[0].mxu0 %v1739
  %v2184 = vpop.f32.mrb[0].mxu0
  %v2185 = vadd.f32 0.0, %v2184
  %v2186 = vpop.f32.mrb[0].mxu0
  %v2187 = vpop.f32.mrb[0].mxu0
  %v2188 = vadd.f32 0.0, %v2187
  %v2189 = vpop.f32.mrb[0].mxu0
  %2190 = vmatprep.mubr.bf16.mxu0 0
  %2191 = vmatmul.mubr.bf16.gmra.mrb[0].mxu0 %v1742
  %v2192 = vpop.f32.mrb[0].mxu0
  %v2193 = vadd.f32 0.0, %v2192
  %v2194 = vpop.f32.mrb[0].mxu0
  %v2195 = vpop.f32.mrb[0].mxu0
  %v2196 = vadd.f32 0.0, %v2195
  %v2197 = vpop.f32.mrb[0].mxu0
  %2198 = vdwg.mxu0
  %2201 = vrot.lane.b32.xlu0 %v2002, 112
  %v2202 = vpop.permute.xlu0 %2201
  %2203 = vrot.lane.b32.xlu0 %v2003, 112
  %v2204 = vpop.permute.xlu0 %2203
  %2207 = vmatprep.subr.bf16.mxu0 0
  %2208 = vmatpush1.bf16.msra.mxu0 %v2202
  %2209 = vmatprep.subr.bf16.mxu0 0
  %2210 = vmatpush1.bf16.msra.mxu0 %v2204
  %2211 = vmatprep.subr.bf16.mxu0 0
  %2212 = vmatpush1.bf16.msra.mxu0 0
  %2213 = vmatprep.subr.bf16.mxu0 0
  %2214 = vmatpush1.bf16.msra.mxu0 0
  %2215 = vmatprep.subr.bf16.mxu0 0
  %2216 = vmatpush1.bf16.msra.mxu0 0
  %2217 = vmatprep.subr.bf16.mxu0 0
  %2218 = vmatpush1.bf16.msra.mxu0 0
  %2219 = vmatprep.subr.bf16.mxu0 0
  %2220 = vmatpush1.bf16.msra.mxu0 0
  %2221 = vmatprep.subr.bf16.mxu0 0
  %2222 = vmatpush1.bf16.msra.mxu0 0
  %2223 = vmatprep.subr.bf16.mxu0 0
  %2224 = vmatpush1.bf16.msra.mxu0 0
  %2225 = vmatprep.subr.bf16.mxu0 0
  %2226 = vmatpush1.bf16.msra.mxu0 0
  %2227 = vmatprep.subr.bf16.mxu0 0
  %2228 = vmatpush1.bf16.msra.mxu0 0
  %2229 = vmatprep.subr.bf16.mxu0 0
  %2230 = vmatpush1.bf16.msra.mxu0 0
  %2231 = vmatprep.subr.bf16.mxu0 0
  %2232 = vmatpush1.bf16.msra.mxu0 0
  %2233 = vmatprep.subr.bf16.mxu0 0
  %2234 = vmatpush1.bf16.msra.mxu0 0
  %2235 = vmatprep.subr.bf16.mxu0 0
  %2236 = vmatpush1.bf16.msra.mxu0 0
  %2237 = vmatprep.subr.bf16.mxu0 0
  %2238 = vmatpush1.bf16.msra.mxu0 0
  %2239 = vmatprep.mubr.bf16.mxu0 0
  %2240 = vmatmul.mubr.bf16.gmra.mrb[0].mxu0 %v1736
  %v2241 = vpop.f32.mrb[0].mxu0
  %v2242 = vadd.f32 0.0, %v2241
  %v2243 = vpop.f32.mrb[0].mxu0
  %v2244 = vpop.f32.mrb[0].mxu0
  %v2245 = vadd.f32 0.0, %v2244
  %v2246 = vpop.f32.mrb[0].mxu0
  %2247 = vmatprep.mubr.bf16.mxu0 0
  %2248 = vmatmul.mubr.bf16.gmra.mrb[0].mxu0 %v1739
  %v2249 = vpop.f32.mrb[0].mxu0
  %v2250 = vadd.f32 0.0, %v2249
  %v2251 = vpop.f32.mrb[0].mxu0
  %v2252 = vpop.f32.mrb[0].mxu0
  %v2253 = vadd.f32 0.0, %v2252
  %v2254 = vpop.f32.mrb[0].mxu0
  %2255 = vmatprep.mubr.bf16.mxu0 0
  %2256 = vmatmul.mubr.bf16.gmra.mrb[0].mxu0 %v1742
  %v2257 = vpop.f32.mrb[0].mxu0
  %v2258 = vadd.f32 0.0, %v2257
  %v2259 = vpop.f32.mrb[0].mxu0
  %v2260 = vpop.f32.mrb[0].mxu0
  %v2261 = vadd.f32 0.0, %v2260
  %v2262 = vpop.f32.mrb[0].mxu0
  %2263 = vdwg.mxu0
  %v2264 = vpack.c.bf16 %v1526, %v1526
  %v2265 = vpack.c.bf16 %v1529, %v1529
  %v2266 = vpack.c.bf16 %v1534, %v1534
  %v2267 = vpack.c.bf16 %v1537, %v1537
  %v2268 = vpack.c.bf16 %v1542, %v1542
  %v2269 = vpack.c.bf16 %v1545, %v1545
  %v2270 = vpack.c.bf16 %v1583, %v1583
  %v2271 = vpack.c.bf16 %v1586, %v1586
  %v2272 = vpack.c.bf16 %v1591, %v1591
  %v2273 = vpack.c.bf16 %v1594, %v1594
  %v2274 = vpack.c.bf16 %v1599, %v1599
  %v2275 = vpack.c.bf16 %v1602, %v1602
  %v2276 = vpack.c.bf16 %v1640, %v1640
  %v2277 = vpack.c.bf16 %v1643, %v1643
  %v2278 = vpack.c.bf16 %v1648, %v1648
  %v2279 = vpack.c.bf16 %v1651, %v1651
  %v2280 = vpack.c.bf16 %v1656, %v1656
  %v2281 = vpack.c.bf16 %v1659, %v1659
  %v2282 = vpack.c.bf16 %v1697, %v1697
  %v2283 = vpack.c.bf16 %v1700, %v1700
  %v2284 = vpack.c.bf16 %v1705, %v1705
  %v2285 = vpack.c.bf16 %v1708, %v1708
  %v2286 = vpack.c.bf16 %v1713, %v1713
  %v2287 = vpack.c.bf16 %v1716, %v1716
  %v2288 = vpack.c.bf16 %v1779, %v1779
  %v2289 = vpack.c.bf16 %v1782, %v1782
  %v2290 = vpack.c.bf16 %v1787, %v1787
  %v2291 = vpack.c.bf16 %v1790, %v1790
  %v2292 = vpack.c.bf16 %v1795, %v1795
  %v2293 = vpack.c.bf16 %v1798, %v1798
  %v2294 = vpack.c.bf16 %v1844, %v1844
  %v2295 = vpack.c.bf16 %v1847, %v1847
  %v2296 = vpack.c.bf16 %v1852, %v1852
  %v2297 = vpack.c.bf16 %v1855, %v1855
  %v2298 = vpack.c.bf16 %v1860, %v1860
  %v2299 = vpack.c.bf16 %v1863, %v1863
  %v2300 = vpack.c.bf16 %v1909, %v1909
  %v2301 = vpack.c.bf16 %v1912, %v1912
  %v2302 = vpack.c.bf16 %v1917, %v1917
  %v2303 = vpack.c.bf16 %v1920, %v1920
  %v2304 = vpack.c.bf16 %v1925, %v1925
  %v2305 = vpack.c.bf16 %v1928, %v1928
  %v2306 = vpack.c.bf16 %v1974, %v1974
  %v2307 = vpack.c.bf16 %v1977, %v1977
  %v2308 = vpack.c.bf16 %v1982, %v1982
  %v2309 = vpack.c.bf16 %v1985, %v1985
  %v2310 = vpack.c.bf16 %v1990, %v1990
  %v2311 = vpack.c.bf16 %v1993, %v1993
  %v2312 = vpack.c.bf16 %v2047, %v2047
  %v2313 = vpack.c.bf16 %v2050, %v2050
  %v2314 = vpack.c.bf16 %v2055, %v2055
  %v2315 = vpack.c.bf16 %v2058, %v2058
  %v2316 = vpack.c.bf16 %v2063, %v2063
  %v2317 = vpack.c.bf16 %v2066, %v2066
  %v2318 = vpack.c.bf16 %v2112, %v2112
  %v2319 = vpack.c.bf16 %v2115, %v2115
  %v2320 = vpack.c.bf16 %v2120, %v2120
  %v2321 = vpack.c.bf16 %v2123, %v2123
  %v2322 = vpack.c.bf16 %v2128, %v2128
  %v2323 = vpack.c.bf16 %v2131, %v2131
  %v2324 = vpack.c.bf16 %v2177, %v2177
  %v2325 = vpack.c.bf16 %v2180, %v2180
  %v2326 = vpack.c.bf16 %v2185, %v2185
  %v2327 = vpack.c.bf16 %v2188, %v2188
  %v2328 = vpack.c.bf16 %v2193, %v2193
  %v2329 = vpack.c.bf16 %v2196, %v2196
  %v2330 = vpack.c.bf16 %v2242, %v2242
  %v2331 = vpack.c.bf16 %v2245, %v2245
  %v2332 = vpack.c.bf16 %v2250, %v2250
  %v2333 = vpack.c.bf16 %v2253, %v2253
  %v2334 = vpack.c.bf16 %v2258, %v2258
  %v2335 = vpack.c.bf16 %v2261, %v2261
  %v2336 = vpack.c.bf16 %v1432, %v1432
  %v2337 = vpack.c.bf16 %v1433, %v1433
  %v2338 = vpack.c.bf16 %v1434, %v1434
  %v2339 = vpack.c.bf16 %v1435, %v1435
  %v2340 = vpack.c.bf16 %v1436, %v1436
  %v2341 = vpack.c.bf16 %v1437, %v1437
  %v2342 = vpack.c.bf16 %v1438, %v1438
  %v2343 = vpack.c.bf16 %v1439, %v1439
  %v2344 = vpack.c.bf16 %v1440, %v1440
  %v2345 = vpack.c.bf16 %v1441, %v1441
  %v2346 = vpack.c.bf16 %v1442, %v1442
  %v2347 = vpack.c.bf16 %v1443, %v1443
  %v2348 = vpack.c.bf16 %v1444, %v1444
  %v2349 = vpack.c.bf16 %v1445, %v1445
  %v2350 = vpack.c.bf16 %v1446, %v1446
  %v2351 = vpack.c.bf16 %v1447, %v1447
  %v2352 = vpack.c.bf16 %v1448, %v1448
  %v2353 = vpack.c.bf16 %v1449, %v1449
  %v2354 = vpack.c.bf16 %v1450, %v1450
  %v2355 = vpack.c.bf16 %v1451, %v1451
  %v2356 = vpack.c.bf16 %v1452, %v1452
  %v2357 = vpack.c.bf16 %v1453, %v1453
  %v2358 = vpack.c.bf16 %v1454, %v1454
  %v2359 = vpack.c.bf16 %v1455, %v1455
  %v2360 = vpack.c.bf16 %v474, %v474
  %v2361 = vpack.c.bf16 %v477, %v477
  %v2362 = vpack.c.bf16 %v482, %v482
  %v2363 = vpack.c.bf16 %v485, %v485
  %v2364 = vpack.c.bf16 %v490, %v490
  %v2365 = vpack.c.bf16 %v493, %v493
  %v2366 = vpack.c.bf16 %v531, %v531
  %v2367 = vpack.c.bf16 %v534, %v534
  %v2368 = vpack.c.bf16 %v539, %v539
  %v2369 = vpack.c.bf16 %v542, %v542
  %v2370 = vpack.c.bf16 %v547, %v547
  %v2371 = vpack.c.bf16 %v550, %v550
  %v2372 = vpack.c.bf16 %v588, %v588
  %v2373 = vpack.c.bf16 %v591, %v591
  %v2374 = vpack.c.bf16 %v596, %v596
  %v2375 = vpack.c.bf16 %v599, %v599
  %v2376 = vpack.c.bf16 %v604, %v604
  %v2377 = vpack.c.bf16 %v607, %v607
  %v2378 = vpack.c.bf16 %v645, %v645
  %v2379 = vpack.c.bf16 %v648, %v648
  %v2380 = vpack.c.bf16 %v653, %v653
  %v2381 = vpack.c.bf16 %v656, %v656
  %v2382 = vpack.c.bf16 %v661, %v661
  %v2383 = vpack.c.bf16 %v664, %v664
  %vm2384 = vcmask 64512
  %v2386 = vsel %vm2384, %v2264, 0
  %v2389 = vsel %vm2384, %v2288, 0
  %2391 = vmatprep.subr.bf16.mxu0 0
  %2392 = vmatpush1.bf16.xpose.msra.mxu0 %v2389
  %2393 = vmatprep.subr.bf16.mxu0 0
  %2394 = vmatpush1.bf16.xpose.msra.mxu0 0
  %2395 = vmatprep.subr.bf16.mxu0 0
  %2396 = vmatpush1.bf16.xpose.msra.mxu0 0
  %2397 = vmatprep.subr.bf16.mxu0 0
  %2398 = vmatpush1.bf16.xpose.msra.mxu0 0
  %2399 = vmatprep.subr.bf16.mxu0 0
  %2400 = vmatpush1.bf16.xpose.msra.mxu0 0
  %2401 = vmatprep.subr.bf16.mxu0 0
  %2402 = vmatpush1.bf16.xpose.msra.mxu0 0
  %2403 = vmatprep.subr.bf16.mxu0 0
  %2404 = vmatpush1.bf16.xpose.msra.mxu0 0
  %2405 = vmatprep.subr.bf16.mxu0 0
  %2406 = vmatpush1.bf16.xpose.msra.mxu0 0
  %2407 = vmatprep.subr.bf16.mxu0 0
  %2408 = vmatpush1.bf16.xpose.msra.mxu0 0
  %2409 = vmatprep.subr.bf16.mxu0 0
  %2410 = vmatpush1.bf16.xpose.msra.mxu0 0
  %2411 = vmatprep.subr.bf16.mxu0 0
  %2412 = vmatpush1.bf16.xpose.msra.mxu0 0
  %2413 = vmatprep.subr.bf16.mxu0 0
  %2414 = vmatpush1.bf16.xpose.msra.mxu0 0
  %2415 = vmatprep.subr.bf16.mxu0 0
  %2416 = vmatpush1.bf16.xpose.msra.mxu0 0
  %2417 = vmatprep.subr.bf16.mxu0 0
  %2418 = vmatpush1.bf16.xpose.msra.mxu0 0
  %2419 = vmatprep.subr.bf16.mxu0 0
  %2420 = vmatpush1.bf16.xpose.msra.mxu0 0
  %2421 = vmatprep.subr.bf16.mxu0 0
  %2422 = vmatpush1.bf16.xpose.msra.mxu0 0
  %2423 = vmatprep.mubr.bf16.mxu0 0
  %2424 = vmatmul.mubr.bf16.gmra.mrb[0].mxu0 %v2386
  %v2425 = vpop.f32.mrb[0].mxu0
  %v2426 = vadd.f32 0.0, %v2425
  %v2427 = vpop.f32.mrb[0].mxu0
  %v2428 = vpop.f32.mrb[0].mxu0
  %v2429 = vpop.f32.mrb[0].mxu0
  %2430 = vdwg.mxu0
  %v2432 = vsel %vm2384, %v2265, 0
  %v2435 = vsel %vm2384, %v2289, 0
  %2437 = vmatprep.subr.bf16.mxu0 0
  %2438 = vmatpush1.bf16.xpose.msra.mxu0 %v2435
  %2439 = vmatprep.subr.bf16.mxu0 0
  %2440 = vmatpush1.bf16.xpose.msra.mxu0 0
  %2441 = vmatprep.subr.bf16.mxu0 0
  %2442 = vmatpush1.bf16.xpose.msra.mxu0 0
  %2443 = vmatprep.subr.bf16.mxu0 0
  %2444 = vmatpush1.bf16.xpose.msra.mxu0 0
  %2445 = vmatprep.subr.bf16.mxu0 0
  %2446 = vmatpush1.bf16.xpose.msra.mxu0 0
  %2447 = vmatprep.subr.bf16.mxu0 0
  %2448 = vmatpush1.bf16.xpose.msra.mxu0 0
  %2449 = vmatprep.subr.bf16.mxu0 0
  %2450 = vmatpush1.bf16.xpose.msra.mxu0 0
  %2451 = vmatprep.subr.bf16.mxu0 0
  %2452 = vmatpush1.bf16.xpose.msra.mxu0 0
  %2453 = vmatprep.subr.bf16.mxu0 0
  %2454 = vmatpush1.bf16.xpose.msra.mxu0 0
  %2455 = vmatprep.subr.bf16.mxu0 0
  %2456 = vmatpush1.bf16.xpose.msra.mxu0 0
  %2457 = vmatprep.subr.bf16.mxu0 0
  %2458 = vmatpush1.bf16.xpose.msra.mxu0 0
  %2459 = vmatprep.subr.bf16.mxu0 0
  %2460 = vmatpush1.bf16.xpose.msra.mxu0 0
  %2461 = vmatprep.subr.bf16.mxu0 0
  %2462 = vmatpush1.bf16.xpose.msra.mxu0 0
  %2463 = vmatprep.subr.bf16.mxu0 0
  %2464 = vmatpush1.bf16.xpose.msra.mxu0 0
  %2465 = vmatprep.subr.bf16.mxu0 0
  %2466 = vmatpush1.bf16.xpose.msra.mxu0 0
  %2467 = vmatprep.subr.bf16.mxu0 0
  %2468 = vmatpush1.bf16.xpose.msra.mxu0 0
  %2469 = vmatprep.mubr.bf16.mxu0 0
  %2470 = vmatmul.mubr.bf16.gmra.mrb[0].mxu0 %v2432
  %v2471 = vpop.f32.mrb[0].mxu0
  %v2472 = vadd.f32 0.0, %v2471
  %v2473 = vpop.f32.mrb[0].mxu0
  %v2474 = vpop.f32.mrb[0].mxu0
  %v2475 = vpop.f32.mrb[0].mxu0
  %2476 = vdwg.mxu0
  %v2478 = vsel %vm2384, %v2266, 0
  %v2481 = vsel %vm2384, %v2290, 0
  %2483 = vmatprep.subr.bf16.mxu0 0
  %2484 = vmatpush1.bf16.xpose.msra.mxu0 %v2481
  %2485 = vmatprep.subr.bf16.mxu0 0
  %2486 = vmatpush1.bf16.xpose.msra.mxu0 0
  %2487 = vmatprep.subr.bf16.mxu0 0
  %2488 = vmatpush1.bf16.xpose.msra.mxu0 0
  %2489 = vmatprep.subr.bf16.mxu0 0
  %2490 = vmatpush1.bf16.xpose.msra.mxu0 0
  %2491 = vmatprep.subr.bf16.mxu0 0
  %2492 = vmatpush1.bf16.xpose.msra.mxu0 0
  %2493 = vmatprep.subr.bf16.mxu0 0
  %2494 = vmatpush1.bf16.xpose.msra.mxu0 0
  %2495 = vmatprep.subr.bf16.mxu0 0
  %2496 = vmatpush1.bf16.xpose.msra.mxu0 0
  %2497 = vmatprep.subr.bf16.mxu0 0
  %2498 = vmatpush1.bf16.xpose.msra.mxu0 0
  %2499 = vmatprep.subr.bf16.mxu0 0
  %2500 = vmatpush1.bf16.xpose.msra.mxu0 0
  %2501 = vmatprep.subr.bf16.mxu0 0
  %2502 = vmatpush1.bf16.xpose.msra.mxu0 0
  %2503 = vmatprep.subr.bf16.mxu0 0
  %2504 = vmatpush1.bf16.xpose.msra.mxu0 0
  %2505 = vmatprep.subr.bf16.mxu0 0
  %2506 = vmatpush1.bf16.xpose.msra.mxu0 0
  %2507 = vmatprep.subr.bf16.mxu0 0
  %2508 = vmatpush1.bf16.xpose.msra.mxu0 0
  %2509 = vmatprep.subr.bf16.mxu0 0
  %2510 = vmatpush1.bf16.xpose.msra.mxu0 0
  %2511 = vmatprep.subr.bf16.mxu0 0
  %2512 = vmatpush1.bf16.xpose.msra.mxu0 0
  %2513 = vmatprep.subr.bf16.mxu0 0
  %2514 = vmatpush1.bf16.xpose.msra.mxu0 0
  %2515 = vmatprep.mubr.bf16.mxu0 0
  %2516 = vmatmul.mubr.bf16.gmra.mrb[0].mxu0 %v2478
  %v2517 = vpop.f32.mrb[0].mxu0
  %v2518 = vadd.f32 0.0, %v2517
  %v2519 = vpop.f32.mrb[0].mxu0
  %v2520 = vpop.f32.mrb[0].mxu0
  %v2521 = vpop.f32.mrb[0].mxu0
  %2522 = vdwg.mxu0
  %v2524 = vsel %vm2384, %v2267, 0
  %v2527 = vsel %vm2384, %v2291, 0
  %2529 = vmatprep.subr.bf16.mxu0 0
  %2530 = vmatpush1.bf16.xpose.msra.mxu0 %v2527
  %2531 = vmatprep.subr.bf16.mxu0 0
  %2532 = vmatpush1.bf16.xpose.msra.mxu0 0
  %2533 = vmatprep.subr.bf16.mxu0 0
  %2534 = vmatpush1.bf16.xpose.msra.mxu0 0
  %2535 = vmatprep.subr.bf16.mxu0 0
  %2536 = vmatpush1.bf16.xpose.msra.mxu0 0
  %2537 = vmatprep.subr.bf16.mxu0 0
  %2538 = vmatpush1.bf16.xpose.msra.mxu0 0
  %2539 = vmatprep.subr.bf16.mxu0 0
  %2540 = vmatpush1.bf16.xpose.msra.mxu0 0
  %2541 = vmatprep.subr.bf16.mxu0 0
  %2542 = vmatpush1.bf16.xpose.msra.mxu0 0
  %2543 = vmatprep.subr.bf16.mxu0 0
  %2544 = vmatpush1.bf16.xpose.msra.mxu0 0
  %2545 = vmatprep.subr.bf16.mxu0 0
  %2546 = vmatpush1.bf16.xpose.msra.mxu0 0
  %2547 = vmatprep.subr.bf16.mxu0 0
  %2548 = vmatpush1.bf16.xpose.msra.mxu0 0
  %2549 = vmatprep.subr.bf16.mxu0 0
  %2550 = vmatpush1.bf16.xpose.msra.mxu0 0
  %2551 = vmatprep.subr.bf16.mxu0 0
  %2552 = vmatpush1.bf16.xpose.msra.mxu0 0
  %2553 = vmatprep.subr.bf16.mxu0 0
  %2554 = vmatpush1.bf16.xpose.msra.mxu0 0
  %2555 = vmatprep.subr.bf16.mxu0 0
  %2556 = vmatpush1.bf16.xpose.msra.mxu0 0
  %2557 = vmatprep.subr.bf16.mxu0 0
  %2558 = vmatpush1.bf16.xpose.msra.mxu0 0
  %2559 = vmatprep.subr.bf16.mxu0 0
  %2560 = vmatpush1.bf16.xpose.msra.mxu0 0
  %2561 = vmatprep.mubr.bf16.mxu0 0
  %2562 = vmatmul.mubr.bf16.gmra.mrb[0].mxu0 %v2524
  %v2563 = vpop.f32.mrb[0].mxu0
  %v2564 = vadd.f32 0.0, %v2563
  %v2565 = vpop.f32.mrb[0].mxu0
  %v2566 = vpop.f32.mrb[0].mxu0
  %v2567 = vpop.f32.mrb[0].mxu0
  %2568 = vdwg.mxu0
  %v2570 = vsel %vm2384, %v2268, 0
  %v2573 = vsel %vm2384, %v2292, 0
  %2575 = vmatprep.subr.bf16.mxu0 0
  %2576 = vmatpush1.bf16.xpose.msra.mxu0 %v2573
  %2577 = vmatprep.subr.bf16.mxu0 0
  %2578 = vmatpush1.bf16.xpose.msra.mxu0 0
  %2579 = vmatprep.subr.bf16.mxu0 0
  %2580 = vmatpush1.bf16.xpose.msra.mxu0 0
  %2581 = vmatprep.subr.bf16.mxu0 0
  %2582 = vmatpush1.bf16.xpose.msra.mxu0 0
  %2583 = vmatprep.subr.bf16.mxu0 0
  %2584 = vmatpush1.bf16.xpose.msra.mxu0 0
  %2585 = vmatprep.subr.bf16.mxu0 0
  %2586 = vmatpush1.bf16.xpose.msra.mxu0 0
  %2587 = vmatprep.subr.bf16.mxu0 0
  %2588 = vmatpush1.bf16.xpose.msra.mxu0 0
  %2589 = vmatprep.subr.bf16.mxu0 0
  %2590 = vmatpush1.bf16.xpose.msra.mxu0 0
  %2591 = vmatprep.subr.bf16.mxu0 0
  %2592 = vmatpush1.bf16.xpose.msra.mxu0 0
  %2593 = vmatprep.subr.bf16.mxu0 0
  %2594 = vmatpush1.bf16.xpose.msra.mxu0 0
  %2595 = vmatprep.subr.bf16.mxu0 0
  %2596 = vmatpush1.bf16.xpose.msra.mxu0 0
  %2597 = vmatprep.subr.bf16.mxu0 0
  %2598 = vmatpush1.bf16.xpose.msra.mxu0 0
  %2599 = vmatprep.subr.bf16.mxu0 0
  %2600 = vmatpush1.bf16.xpose.msra.mxu0 0
  %2601 = vmatprep.subr.bf16.mxu0 0
  %2602 = vmatpush1.bf16.xpose.msra.mxu0 0
  %2603 = vmatprep.subr.bf16.mxu0 0
  %2604 = vmatpush1.bf16.xpose.msra.mxu0 0
  %2605 = vmatprep.subr.bf16.mxu0 0
  %2606 = vmatpush1.bf16.xpose.msra.mxu0 0
  %2607 = vmatprep.mubr.bf16.mxu0 0
  %2608 = vmatmul.mubr.bf16.gmra.mrb[0].mxu0 %v2570
  %v2609 = vpop.f32.mrb[0].mxu0
  %v2610 = vadd.f32 0.0, %v2609
  %v2611 = vpop.f32.mrb[0].mxu0
  %v2612 = vpop.f32.mrb[0].mxu0
  %v2613 = vpop.f32.mrb[0].mxu0
  %2614 = vdwg.mxu0
  %v2616 = vsel %vm2384, %v2269, 0
  %v2619 = vsel %vm2384, %v2293, 0
  %2621 = vmatprep.subr.bf16.mxu0 0
  %2622 = vmatpush1.bf16.xpose.msra.mxu0 %v2619
  %2623 = vmatprep.subr.bf16.mxu0 0
  %2624 = vmatpush1.bf16.xpose.msra.mxu0 0
  %2625 = vmatprep.subr.bf16.mxu0 0
  %2626 = vmatpush1.bf16.xpose.msra.mxu0 0
  %2627 = vmatprep.subr.bf16.mxu0 0
  %2628 = vmatpush1.bf16.xpose.msra.mxu0 0
  %2629 = vmatprep.subr.bf16.mxu0 0
  %2630 = vmatpush1.bf16.xpose.msra.mxu0 0
  %2631 = vmatprep.subr.bf16.mxu0 0
  %2632 = vmatpush1.bf16.xpose.msra.mxu0 0
  %2633 = vmatprep.subr.bf16.mxu0 0
  %2634 = vmatpush1.bf16.xpose.msra.mxu0 0
  %2635 = vmatprep.subr.bf16.mxu0 0
  %2636 = vmatpush1.bf16.xpose.msra.mxu0 0
  %2637 = vmatprep.subr.bf16.mxu0 0
  %2638 = vmatpush1.bf16.xpose.msra.mxu0 0
  %2639 = vmatprep.subr.bf16.mxu0 0
  %2640 = vmatpush1.bf16.xpose.msra.mxu0 0
  %2641 = vmatprep.subr.bf16.mxu0 0
  %2642 = vmatpush1.bf16.xpose.msra.mxu0 0
  %2643 = vmatprep.subr.bf16.mxu0 0
  %2644 = vmatpush1.bf16.xpose.msra.mxu0 0
  %2645 = vmatprep.subr.bf16.mxu0 0
  %2646 = vmatpush1.bf16.xpose.msra.mxu0 0
  %2647 = vmatprep.subr.bf16.mxu0 0
  %2648 = vmatpush1.bf16.xpose.msra.mxu0 0
  %2649 = vmatprep.subr.bf16.mxu0 0
  %2650 = vmatpush1.bf16.xpose.msra.mxu0 0
  %2651 = vmatprep.subr.bf16.mxu0 0
  %2652 = vmatpush1.bf16.xpose.msra.mxu0 0
  %2653 = vmatprep.mubr.bf16.mxu0 0
  %2654 = vmatmul.mubr.bf16.gmra.mrb[0].mxu0 %v2616
  %v2655 = vpop.f32.mrb[0].mxu0
  %v2656 = vadd.f32 0.0, %v2655
  %v2657 = vpop.f32.mrb[0].mxu0
  %v2658 = vpop.f32.mrb[0].mxu0
  %v2659 = vpop.f32.mrb[0].mxu0
  %2660 = vdwg.mxu0
  %v2662 = vsel %vm2384, %v2270, 0
  %v2665 = vsel %vm2384, %v2294, 0
  %2667 = vmatprep.subr.bf16.mxu0 0
  %2668 = vmatpush1.bf16.xpose.msra.mxu0 %v2665
  %2669 = vmatprep.subr.bf16.mxu0 0
  %2670 = vmatpush1.bf16.xpose.msra.mxu0 0
  %2671 = vmatprep.subr.bf16.mxu0 0
  %2672 = vmatpush1.bf16.xpose.msra.mxu0 0
  %2673 = vmatprep.subr.bf16.mxu0 0
  %2674 = vmatpush1.bf16.xpose.msra.mxu0 0
  %2675 = vmatprep.subr.bf16.mxu0 0
  %2676 = vmatpush1.bf16.xpose.msra.mxu0 0
  %2677 = vmatprep.subr.bf16.mxu0 0
  %2678 = vmatpush1.bf16.xpose.msra.mxu0 0
  %2679 = vmatprep.subr.bf16.mxu0 0
  %2680 = vmatpush1.bf16.xpose.msra.mxu0 0
  %2681 = vmatprep.subr.bf16.mxu0 0
  %2682 = vmatpush1.bf16.xpose.msra.mxu0 0
  %2683 = vmatprep.subr.bf16.mxu0 0
  %2684 = vmatpush1.bf16.xpose.msra.mxu0 0
  %2685 = vmatprep.subr.bf16.mxu0 0
  %2686 = vmatpush1.bf16.xpose.msra.mxu0 0
  %2687 = vmatprep.subr.bf16.mxu0 0
  %2688 = vmatpush1.bf16.xpose.msra.mxu0 0
  %2689 = vmatprep.subr.bf16.mxu0 0
  %2690 = vmatpush1.bf16.xpose.msra.mxu0 0
  %2691 = vmatprep.subr.bf16.mxu0 0
  %2692 = vmatpush1.bf16.xpose.msra.mxu0 0
  %2693 = vmatprep.subr.bf16.mxu0 0
  %2694 = vmatpush1.bf16.xpose.msra.mxu0 0
  %2695 = vmatprep.subr.bf16.mxu0 0
  %2696 = vmatpush1.bf16.xpose.msra.mxu0 0
  %2697 = vmatprep.subr.bf16.mxu0 0
  %2698 = vmatpush1.bf16.xpose.msra.mxu0 0
  %2699 = vmatprep.mubr.bf16.mxu0 0
  %2700 = vmatmul.mubr.bf16.gmra.mrb[0].mxu0 %v2662
  %v2701 = vpop.f32.mrb[0].mxu0
  %v2702 = vadd.f32 0.0, %v2701
  %v2703 = vpop.f32.mrb[0].mxu0
  %v2704 = vpop.f32.mrb[0].mxu0
  %v2705 = vpop.f32.mrb[0].mxu0
  %2706 = vdwg.mxu0
  %v2708 = vsel %vm2384, %v2271, 0
  %v2711 = vsel %vm2384, %v2295, 0
  %2713 = vmatprep.subr.bf16.mxu0 0
  %2714 = vmatpush1.bf16.xpose.msra.mxu0 %v2711
  %2715 = vmatprep.subr.bf16.mxu0 0
  %2716 = vmatpush1.bf16.xpose.msra.mxu0 0
  %2717 = vmatprep.subr.bf16.mxu0 0
  %2718 = vmatpush1.bf16.xpose.msra.mxu0 0
  %2719 = vmatprep.subr.bf16.mxu0 0
  %2720 = vmatpush1.bf16.xpose.msra.mxu0 0
  %2721 = vmatprep.subr.bf16.mxu0 0
  %2722 = vmatpush1.bf16.xpose.msra.mxu0 0
  %2723 = vmatprep.subr.bf16.mxu0 0
  %2724 = vmatpush1.bf16.xpose.msra.mxu0 0
  %2725 = vmatprep.subr.bf16.mxu0 0
  %2726 = vmatpush1.bf16.xpose.msra.mxu0 0
  %2727 = vmatprep.subr.bf16.mxu0 0
  %2728 = vmatpush1.bf16.xpose.msra.mxu0 0
  %2729 = vmatprep.subr.bf16.mxu0 0
  %2730 = vmatpush1.bf16.xpose.msra.mxu0 0
  %2731 = vmatprep.subr.bf16.mxu0 0
  %2732 = vmatpush1.bf16.xpose.msra.mxu0 0
  %2733 = vmatprep.subr.bf16.mxu0 0
  %2734 = vmatpush1.bf16.xpose.msra.mxu0 0
  %2735 = vmatprep.subr.bf16.mxu0 0
  %2736 = vmatpush1.bf16.xpose.msra.mxu0 0
  %2737 = vmatprep.subr.bf16.mxu0 0
  %2738 = vmatpush1.bf16.xpose.msra.mxu0 0
  %2739 = vmatprep.subr.bf16.mxu0 0
  %2740 = vmatpush1.bf16.xpose.msra.mxu0 0
  %2741 = vmatprep.subr.bf16.mxu0 0
  %2742 = vmatpush1.bf16.xpose.msra.mxu0 0
  %2743 = vmatprep.subr.bf16.mxu0 0
  %2744 = vmatpush1.bf16.xpose.msra.mxu0 0
  %2745 = vmatprep.mubr.bf16.mxu0 0
  %2746 = vmatmul.mubr.bf16.gmra.mrb[0].mxu0 %v2708
  %v2747 = vpop.f32.mrb[0].mxu0
  %v2748 = vadd.f32 0.0, %v2747
  %v2749 = vpop.f32.mrb[0].mxu0
  %v2750 = vpop.f32.mrb[0].mxu0
  %v2751 = vpop.f32.mrb[0].mxu0
  %2752 = vdwg.mxu0
  %v2754 = vsel %vm2384, %v2272, 0
  %v2757 = vsel %vm2384, %v2296, 0
  %2759 = vmatprep.subr.bf16.mxu0 0
  %2760 = vmatpush1.bf16.xpose.msra.mxu0 %v2757
  %2761 = vmatprep.subr.bf16.mxu0 0
  %2762 = vmatpush1.bf16.xpose.msra.mxu0 0
  %2763 = vmatprep.subr.bf16.mxu0 0
  %2764 = vmatpush1.bf16.xpose.msra.mxu0 0
  %2765 = vmatprep.subr.bf16.mxu0 0
  %2766 = vmatpush1.bf16.xpose.msra.mxu0 0
  %2767 = vmatprep.subr.bf16.mxu0 0
  %2768 = vmatpush1.bf16.xpose.msra.mxu0 0
  %2769 = vmatprep.subr.bf16.mxu0 0
  %2770 = vmatpush1.bf16.xpose.msra.mxu0 0
  %2771 = vmatprep.subr.bf16.mxu0 0
  %2772 = vmatpush1.bf16.xpose.msra.mxu0 0
  %2773 = vmatprep.subr.bf16.mxu0 0
  %2774 = vmatpush1.bf16.xpose.msra.mxu0 0
  %2775 = vmatprep.subr.bf16.mxu0 0
  %2776 = vmatpush1.bf16.xpose.msra.mxu0 0
  %2777 = vmatprep.subr.bf16.mxu0 0
  %2778 = vmatpush1.bf16.xpose.msra.mxu0 0
  %2779 = vmatprep.subr.bf16.mxu0 0
  %2780 = vmatpush1.bf16.xpose.msra.mxu0 0
  %2781 = vmatprep.subr.bf16.mxu0 0
  %2782 = vmatpush1.bf16.xpose.msra.mxu0 0
  %2783 = vmatprep.subr.bf16.mxu0 0
  %2784 = vmatpush1.bf16.xpose.msra.mxu0 0
  %2785 = vmatprep.subr.bf16.mxu0 0
  %2786 = vmatpush1.bf16.xpose.msra.mxu0 0
  %2787 = vmatprep.subr.bf16.mxu0 0
  %2788 = vmatpush1.bf16.xpose.msra.mxu0 0
  %2789 = vmatprep.subr.bf16.mxu0 0
  %2790 = vmatpush1.bf16.xpose.msra.mxu0 0
  %2791 = vmatprep.mubr.bf16.mxu0 0
  %2792 = vmatmul.mubr.bf16.gmra.mrb[0].mxu0 %v2754
  %v2793 = vpop.f32.mrb[0].mxu0
  %v2794 = vadd.f32 0.0, %v2793
  %v2795 = vpop.f32.mrb[0].mxu0
  %v2796 = vpop.f32.mrb[0].mxu0
  %v2797 = vpop.f32.mrb[0].mxu0
  %2798 = vdwg.mxu0
  %v2800 = vsel %vm2384, %v2273, 0
  %v2803 = vsel %vm2384, %v2297, 0
  %2805 = vmatprep.subr.bf16.mxu0 0
  %2806 = vmatpush1.bf16.xpose.msra.mxu0 %v2803
  %2807 = vmatprep.subr.bf16.mxu0 0
  %2808 = vmatpush1.bf16.xpose.msra.mxu0 0
  %2809 = vmatprep.subr.bf16.mxu0 0
  %2810 = vmatpush1.bf16.xpose.msra.mxu0 0
  %2811 = vmatprep.subr.bf16.mxu0 0
  %2812 = vmatpush1.bf16.xpose.msra.mxu0 0
  %2813 = vmatprep.subr.bf16.mxu0 0
  %2814 = vmatpush1.bf16.xpose.msra.mxu0 0
  %2815 = vmatprep.subr.bf16.mxu0 0
  %2816 = vmatpush1.bf16.xpose.msra.mxu0 0
  %2817 = vmatprep.subr.bf16.mxu0 0
  %2818 = vmatpush1.bf16.xpose.msra.mxu0 0
  %2819 = vmatprep.subr.bf16.mxu0 0
  %2820 = vmatpush1.bf16.xpose.msra.mxu0 0
  %2821 = vmatprep.subr.bf16.mxu0 0
  %2822 = vmatpush1.bf16.xpose.msra.mxu0 0
  %2823 = vmatprep.subr.bf16.mxu0 0
  %2824 = vmatpush1.bf16.xpose.msra.mxu0 0
  %2825 = vmatprep.subr.bf16.mxu0 0
  %2826 = vmatpush1.bf16.xpose.msra.mxu0 0
  %2827 = vmatprep.subr.bf16.mxu0 0
  %2828 = vmatpush1.bf16.xpose.msra.mxu0 0
  %2829 = vmatprep.subr.bf16.mxu0 0
  %2830 = vmatpush1.bf16.xpose.msra.mxu0 0
  %2831 = vmatprep.subr.bf16.mxu0 0
  %2832 = vmatpush1.bf16.xpose.msra.mxu0 0
  %2833 = vmatprep.subr.bf16.mxu0 0
  %2834 = vmatpush1.bf16.xpose.msra.mxu0 0
  %2835 = vmatprep.subr.bf16.mxu0 0
  %2836 = vmatpush1.bf16.xpose.msra.mxu0 0
  %2837 = vmatprep.mubr.bf16.mxu0 0
  %2838 = vmatmul.mubr.bf16.gmra.mrb[0].mxu0 %v2800
  %v2839 = vpop.f32.mrb[0].mxu0
  %v2840 = vadd.f32 0.0, %v2839
  %v2841 = vpop.f32.mrb[0].mxu0
  %v2842 = vpop.f32.mrb[0].mxu0
  %v2843 = vpop.f32.mrb[0].mxu0
  %2844 = vdwg.mxu0
  %v2846 = vsel %vm2384, %v2274, 0
  %v2849 = vsel %vm2384, %v2298, 0
  %2851 = vmatprep.subr.bf16.mxu0 0
  %2852 = vmatpush1.bf16.xpose.msra.mxu0 %v2849
  %2853 = vmatprep.subr.bf16.mxu0 0
  %2854 = vmatpush1.bf16.xpose.msra.mxu0 0
  %2855 = vmatprep.subr.bf16.mxu0 0
  %2856 = vmatpush1.bf16.xpose.msra.mxu0 0
  %2857 = vmatprep.subr.bf16.mxu0 0
  %2858 = vmatpush1.bf16.xpose.msra.mxu0 0
  %2859 = vmatprep.subr.bf16.mxu0 0
  %2860 = vmatpush1.bf16.xpose.msra.mxu0 0
  %2861 = vmatprep.subr.bf16.mxu0 0
  %2862 = vmatpush1.bf16.xpose.msra.mxu0 0
  %2863 = vmatprep.subr.bf16.mxu0 0
  %2864 = vmatpush1.bf16.xpose.msra.mxu0 0
  %2865 = vmatprep.subr.bf16.mxu0 0
  %2866 = vmatpush1.bf16.xpose.msra.mxu0 0
  %2867 = vmatprep.subr.bf16.mxu0 0
  %2868 = vmatpush1.bf16.xpose.msra.mxu0 0
  %2869 = vmatprep.subr.bf16.mxu0 0
  %2870 = vmatpush1.bf16.xpose.msra.mxu0 0
  %2871 = vmatprep.subr.bf16.mxu0 0
  %2872 = vmatpush1.bf16.xpose.msra.mxu0 0
  %2873 = vmatprep.subr.bf16.mxu0 0
  %2874 = vmatpush1.bf16.xpose.msra.mxu0 0
  %2875 = vmatprep.subr.bf16.mxu0 0
  %2876 = vmatpush1.bf16.xpose.msra.mxu0 0
  %2877 = vmatprep.subr.bf16.mxu0 0
  %2878 = vmatpush1.bf16.xpose.msra.mxu0 0
  %2879 = vmatprep.subr.bf16.mxu0 0
  %2880 = vmatpush1.bf16.xpose.msra.mxu0 0
  %2881 = vmatprep.subr.bf16.mxu0 0
  %2882 = vmatpush1.bf16.xpose.msra.mxu0 0
  %2883 = vmatprep.mubr.bf16.mxu0 0
  %2884 = vmatmul.mubr.bf16.gmra.mrb[0].mxu0 %v2846
  %v2885 = vpop.f32.mrb[0].mxu0
  %v2886 = vadd.f32 0.0, %v2885
  %v2887 = vpop.f32.mrb[0].mxu0
  %v2888 = vpop.f32.mrb[0].mxu0
  %v2889 = vpop.f32.mrb[0].mxu0
  %2890 = vdwg.mxu0
  %v2892 = vsel %vm2384, %v2275, 0
  %v2895 = vsel %vm2384, %v2299, 0
  %2897 = vmatprep.subr.bf16.mxu0 0
  %2898 = vmatpush1.bf16.xpose.msra.mxu0 %v2895
  %2899 = vmatprep.subr.bf16.mxu0 0
  %2900 = vmatpush1.bf16.xpose.msra.mxu0 0
  %2901 = vmatprep.subr.bf16.mxu0 0
  %2902 = vmatpush1.bf16.xpose.msra.mxu0 0
  %2903 = vmatprep.subr.bf16.mxu0 0
  %2904 = vmatpush1.bf16.xpose.msra.mxu0 0
  %2905 = vmatprep.subr.bf16.mxu0 0
  %2906 = vmatpush1.bf16.xpose.msra.mxu0 0
  %2907 = vmatprep.subr.bf16.mxu0 0
  %2908 = vmatpush1.bf16.xpose.msra.mxu0 0
  %2909 = vmatprep.subr.bf16.mxu0 0
  %2910 = vmatpush1.bf16.xpose.msra.mxu0 0
  %2911 = vmatprep.subr.bf16.mxu0 0
  %2912 = vmatpush1.bf16.xpose.msra.mxu0 0
  %2913 = vmatprep.subr.bf16.mxu0 0
  %2914 = vmatpush1.bf16.xpose.msra.mxu0 0
  %2915 = vmatprep.subr.bf16.mxu0 0
  %2916 = vmatpush1.bf16.xpose.msra.mxu0 0
  %2917 = vmatprep.subr.bf16.mxu0 0
  %2918 = vmatpush1.bf16.xpose.msra.mxu0 0
  %2919 = vmatprep.subr.bf16.mxu0 0
  %2920 = vmatpush1.bf16.xpose.msra.mxu0 0
  %2921 = vmatprep.subr.bf16.mxu0 0
  %2922 = vmatpush1.bf16.xpose.msra.mxu0 0
  %2923 = vmatprep.subr.bf16.mxu0 0
  %2924 = vmatpush1.bf16.xpose.msra.mxu0 0
  %2925 = vmatprep.subr.bf16.mxu0 0
  %2926 = vmatpush1.bf16.xpose.msra.mxu0 0
  %2927 = vmatprep.subr.bf16.mxu0 0
  %2928 = vmatpush1.bf16.xpose.msra.mxu0 0
  %2929 = vmatprep.mubr.bf16.mxu0 0
  %2930 = vmatmul.mubr.bf16.gmra.mrb[0].mxu0 %v2892
  %v2931 = vpop.f32.mrb[0].mxu0
  %v2932 = vadd.f32 0.0, %v2931
  %v2933 = vpop.f32.mrb[0].mxu0
  %v2934 = vpop.f32.mrb[0].mxu0
  %v2935 = vpop.f32.mrb[0].mxu0
  %2936 = vdwg.mxu0
  %v2938 = vsel %vm2384, %v2276, 0
  %v2941 = vsel %vm2384, %v2300, 0
  %2943 = vmatprep.subr.bf16.mxu0 0
  %2944 = vmatpush1.bf16.xpose.msra.mxu0 %v2941
  %2945 = vmatprep.subr.bf16.mxu0 0
  %2946 = vmatpush1.bf16.xpose.msra.mxu0 0
  %2947 = vmatprep.subr.bf16.mxu0 0
  %2948 = vmatpush1.bf16.xpose.msra.mxu0 0
  %2949 = vmatprep.subr.bf16.mxu0 0
  %2950 = vmatpush1.bf16.xpose.msra.mxu0 0
  %2951 = vmatprep.subr.bf16.mxu0 0
  %2952 = vmatpush1.bf16.xpose.msra.mxu0 0
  %2953 = vmatprep.subr.bf16.mxu0 0
  %2954 = vmatpush1.bf16.xpose.msra.mxu0 0
  %2955 = vmatprep.subr.bf16.mxu0 0
  %2956 = vmatpush1.bf16.xpose.msra.mxu0 0
  %2957 = vmatprep.subr.bf16.mxu0 0
  %2958 = vmatpush1.bf16.xpose.msra.mxu0 0
  %2959 = vmatprep.subr.bf16.mxu0 0
  %2960 = vmatpush1.bf16.xpose.msra.mxu0 0
  %2961 = vmatprep.subr.bf16.mxu0 0
  %2962 = vmatpush1.bf16.xpose.msra.mxu0 0
  %2963 = vmatprep.subr.bf16.mxu0 0
  %2964 = vmatpush1.bf16.xpose.msra.mxu0 0
  %2965 = vmatprep.subr.bf16.mxu0 0
  %2966 = vmatpush1.bf16.xpose.msra.mxu0 0
  %2967 = vmatprep.subr.bf16.mxu0 0
  %2968 = vmatpush1.bf16.xpose.msra.mxu0 0
  %2969 = vmatprep.subr.bf16.mxu0 0
  %2970 = vmatpush1.bf16.xpose.msra.mxu0 0
  %2971 = vmatprep.subr.bf16.mxu0 0
  %2972 = vmatpush1.bf16.xpose.msra.mxu0 0
  %2973 = vmatprep.subr.bf16.mxu0 0
  %2974 = vmatpush1.bf16.xpose.msra.mxu0 0
  %2975 = vmatprep.mubr.bf16.mxu0 0
  %2976 = vmatmul.mubr.bf16.gmra.mrb[0].mxu0 %v2938
  %v2977 = vpop.f32.mrb[0].mxu0
  %v2978 = vadd.f32 0.0, %v2977
  %v2979 = vpop.f32.mrb[0].mxu0
  %v2980 = vpop.f32.mrb[0].mxu0
  %v2981 = vpop.f32.mrb[0].mxu0
  %2982 = vdwg.mxu0
  %v2984 = vsel %vm2384, %v2277, 0
  %v2987 = vsel %vm2384, %v2301, 0
  %2989 = vmatprep.subr.bf16.mxu0 0
  %2990 = vmatpush1.bf16.xpose.msra.mxu0 %v2987
  %2991 = vmatprep.subr.bf16.mxu0 0
  %2992 = vmatpush1.bf16.xpose.msra.mxu0 0
  %2993 = vmatprep.subr.bf16.mxu0 0
  %2994 = vmatpush1.bf16.xpose.msra.mxu0 0
  %2995 = vmatprep.subr.bf16.mxu0 0
  %2996 = vmatpush1.bf16.xpose.msra.mxu0 0
  %2997 = vmatprep.subr.bf16.mxu0 0
  %2998 = vmatpush1.bf16.xpose.msra.mxu0 0
  %2999 = vmatprep.subr.bf16.mxu0 0
  %3000 = vmatpush1.bf16.xpose.msra.mxu0 0
  %3001 = vmatprep.subr.bf16.mxu0 0
  %3002 = vmatpush1.bf16.xpose.msra.mxu0 0
  %3003 = vmatprep.subr.bf16.mxu0 0
  %3004 = vmatpush1.bf16.xpose.msra.mxu0 0
  %3005 = vmatprep.subr.bf16.mxu0 0
  %3006 = vmatpush1.bf16.xpose.msra.mxu0 0
  %3007 = vmatprep.subr.bf16.mxu0 0
  %3008 = vmatpush1.bf16.xpose.msra.mxu0 0
  %3009 = vmatprep.subr.bf16.mxu0 0
  %3010 = vmatpush1.bf16.xpose.msra.mxu0 0
  %3011 = vmatprep.subr.bf16.mxu0 0
  %3012 = vmatpush1.bf16.xpose.msra.mxu0 0
  %3013 = vmatprep.subr.bf16.mxu0 0
  %3014 = vmatpush1.bf16.xpose.msra.mxu0 0
  %3015 = vmatprep.subr.bf16.mxu0 0
  %3016 = vmatpush1.bf16.xpose.msra.mxu0 0
  %3017 = vmatprep.subr.bf16.mxu0 0
  %3018 = vmatpush1.bf16.xpose.msra.mxu0 0
  %3019 = vmatprep.subr.bf16.mxu0 0
  %3020 = vmatpush1.bf16.xpose.msra.mxu0 0
  %3021 = vmatprep.mubr.bf16.mxu0 0
  %3022 = vmatmul.mubr.bf16.gmra.mrb[0].mxu0 %v2984
  %v3023 = vpop.f32.mrb[0].mxu0
  %v3024 = vadd.f32 0.0, %v3023
  %v3025 = vpop.f32.mrb[0].mxu0
  %v3026 = vpop.f32.mrb[0].mxu0
  %v3027 = vpop.f32.mrb[0].mxu0
  %3028 = vdwg.mxu0
  %v3030 = vsel %vm2384, %v2278, 0
  %v3033 = vsel %vm2384, %v2302, 0
  %3035 = vmatprep.subr.bf16.mxu0 0
  %3036 = vmatpush1.bf16.xpose.msra.mxu0 %v3033
  %3037 = vmatprep.subr.bf16.mxu0 0
  %3038 = vmatpush1.bf16.xpose.msra.mxu0 0
  %3039 = vmatprep.subr.bf16.mxu0 0
  %3040 = vmatpush1.bf16.xpose.msra.mxu0 0
  %3041 = vmatprep.subr.bf16.mxu0 0
  %3042 = vmatpush1.bf16.xpose.msra.mxu0 0
  %3043 = vmatprep.subr.bf16.mxu0 0
  %3044 = vmatpush1.bf16.xpose.msra.mxu0 0
  %3045 = vmatprep.subr.bf16.mxu0 0
  %3046 = vmatpush1.bf16.xpose.msra.mxu0 0
  %3047 = vmatprep.subr.bf16.mxu0 0
  %3048 = vmatpush1.bf16.xpose.msra.mxu0 0
  %3049 = vmatprep.subr.bf16.mxu0 0
  %3050 = vmatpush1.bf16.xpose.msra.mxu0 0
  %3051 = vmatprep.subr.bf16.mxu0 0
  %3052 = vmatpush1.bf16.xpose.msra.mxu0 0
  %3053 = vmatprep.subr.bf16.mxu0 0
  %3054 = vmatpush1.bf16.xpose.msra.mxu0 0
  %3055 = vmatprep.subr.bf16.mxu0 0
  %3056 = vmatpush1.bf16.xpose.msra.mxu0 0
  %3057 = vmatprep.subr.bf16.mxu0 0
  %3058 = vmatpush1.bf16.xpose.msra.mxu0 0
  %3059 = vmatprep.subr.bf16.mxu0 0
  %3060 = vmatpush1.bf16.xpose.msra.mxu0 0
  %3061 = vmatprep.subr.bf16.mxu0 0
  %3062 = vmatpush1.bf16.xpose.msra.mxu0 0
  %3063 = vmatprep.subr.bf16.mxu0 0
  %3064 = vmatpush1.bf16.xpose.msra.mxu0 0
  %3065 = vmatprep.subr.bf16.mxu0 0
  %3066 = vmatpush1.bf16.xpose.msra.mxu0 0
  %3067 = vmatprep.mubr.bf16.mxu0 0
  %3068 = vmatmul.mubr.bf16.gmra.mrb[0].mxu0 %v3030
  %v3069 = vpop.f32.mrb[0].mxu0
  %v3070 = vadd.f32 0.0, %v3069
  %v3071 = vpop.f32.mrb[0].mxu0
  %v3072 = vpop.f32.mrb[0].mxu0
  %v3073 = vpop.f32.mrb[0].mxu0
  %3074 = vdwg.mxu0
  %v3076 = vsel %vm2384, %v2279, 0
  %v3079 = vsel %vm2384, %v2303, 0
  %3081 = vmatprep.subr.bf16.mxu0 0
  %3082 = vmatpush1.bf16.xpose.msra.mxu0 %v3079
  %3083 = vmatprep.subr.bf16.mxu0 0
  %3084 = vmatpush1.bf16.xpose.msra.mxu0 0
  %3085 = vmatprep.subr.bf16.mxu0 0
  %3086 = vmatpush1.bf16.xpose.msra.mxu0 0
  %3087 = vmatprep.subr.bf16.mxu0 0
  %3088 = vmatpush1.bf16.xpose.msra.mxu0 0
  %3089 = vmatprep.subr.bf16.mxu0 0
  %3090 = vmatpush1.bf16.xpose.msra.mxu0 0
  %3091 = vmatprep.subr.bf16.mxu0 0
  %3092 = vmatpush1.bf16.xpose.msra.mxu0 0
  %3093 = vmatprep.subr.bf16.mxu0 0
  %3094 = vmatpush1.bf16.xpose.msra.mxu0 0
  %3095 = vmatprep.subr.bf16.mxu0 0
  %3096 = vmatpush1.bf16.xpose.msra.mxu0 0
  %3097 = vmatprep.subr.bf16.mxu0 0
  %3098 = vmatpush1.bf16.xpose.msra.mxu0 0
  %3099 = vmatprep.subr.bf16.mxu0 0
  %3100 = vmatpush1.bf16.xpose.msra.mxu0 0
  %3101 = vmatprep.subr.bf16.mxu0 0
  %3102 = vmatpush1.bf16.xpose.msra.mxu0 0
  %3103 = vmatprep.subr.bf16.mxu0 0
  %3104 = vmatpush1.bf16.xpose.msra.mxu0 0
  %3105 = vmatprep.subr.bf16.mxu0 0
  %3106 = vmatpush1.bf16.xpose.msra.mxu0 0
  %3107 = vmatprep.subr.bf16.mxu0 0
  %3108 = vmatpush1.bf16.xpose.msra.mxu0 0
  %3109 = vmatprep.subr.bf16.mxu0 0
  %3110 = vmatpush1.bf16.xpose.msra.mxu0 0
  %3111 = vmatprep.subr.bf16.mxu0 0
  %3112 = vmatpush1.bf16.xpose.msra.mxu0 0
  %3113 = vmatprep.mubr.bf16.mxu0 0
  %3114 = vmatmul.mubr.bf16.gmra.mrb[0].mxu0 %v3076
  %v3115 = vpop.f32.mrb[0].mxu0
  %v3116 = vadd.f32 0.0, %v3115
  %v3117 = vpop.f32.mrb[0].mxu0
  %v3118 = vpop.f32.mrb[0].mxu0
  %v3119 = vpop.f32.mrb[0].mxu0
  %3120 = vdwg.mxu0
  %v3122 = vsel %vm2384, %v2280, 0
  %v3125 = vsel %vm2384, %v2304, 0
  %3127 = vmatprep.subr.bf16.mxu0 0
  %3128 = vmatpush1.bf16.xpose.msra.mxu0 %v3125
  %3129 = vmatprep.subr.bf16.mxu0 0
  %3130 = vmatpush1.bf16.xpose.msra.mxu0 0
  %3131 = vmatprep.subr.bf16.mxu0 0
  %3132 = vmatpush1.bf16.xpose.msra.mxu0 0
  %3133 = vmatprep.subr.bf16.mxu0 0
  %3134 = vmatpush1.bf16.xpose.msra.mxu0 0
  %3135 = vmatprep.subr.bf16.mxu0 0
  %3136 = vmatpush1.bf16.xpose.msra.mxu0 0
  %3137 = vmatprep.subr.bf16.mxu0 0
  %3138 = vmatpush1.bf16.xpose.msra.mxu0 0
  %3139 = vmatprep.subr.bf16.mxu0 0
  %3140 = vmatpush1.bf16.xpose.msra.mxu0 0
  %3141 = vmatprep.subr.bf16.mxu0 0
  %3142 = vmatpush1.bf16.xpose.msra.mxu0 0
  %3143 = vmatprep.subr.bf16.mxu0 0
  %3144 = vmatpush1.bf16.xpose.msra.mxu0 0
  %3145 = vmatprep.subr.bf16.mxu0 0
  %3146 = vmatpush1.bf16.xpose.msra.mxu0 0
  %3147 = vmatprep.subr.bf16.mxu0 0
  %3148 = vmatpush1.bf16.xpose.msra.mxu0 0
  %3149 = vmatprep.subr.bf16.mxu0 0
  %3150 = vmatpush1.bf16.xpose.msra.mxu0 0
  %3151 = vmatprep.subr.bf16.mxu0 0
  %3152 = vmatpush1.bf16.xpose.msra.mxu0 0
  %3153 = vmatprep.subr.bf16.mxu0 0
  %3154 = vmatpush1.bf16.xpose.msra.mxu0 0
  %3155 = vmatprep.subr.bf16.mxu0 0
  %3156 = vmatpush1.bf16.xpose.msra.mxu0 0
  %3157 = vmatprep.subr.bf16.mxu0 0
  %3158 = vmatpush1.bf16.xpose.msra.mxu0 0
  %3159 = vmatprep.mubr.bf16.mxu0 0
  %3160 = vmatmul.mubr.bf16.gmra.mrb[0].mxu0 %v3122
  %v3161 = vpop.f32.mrb[0].mxu0
  %v3162 = vadd.f32 0.0, %v3161
  %v3163 = vpop.f32.mrb[0].mxu0
  %v3164 = vpop.f32.mrb[0].mxu0
  %v3165 = vpop.f32.mrb[0].mxu0
  %3166 = vdwg.mxu0
  %v3168 = vsel %vm2384, %v2281, 0
  %v3171 = vsel %vm2384, %v2305, 0
  %3173 = vmatprep.subr.bf16.mxu0 0
  %3174 = vmatpush1.bf16.xpose.msra.mxu0 %v3171
  %3175 = vmatprep.subr.bf16.mxu0 0
  %3176 = vmatpush1.bf16.xpose.msra.mxu0 0
  %3177 = vmatprep.subr.bf16.mxu0 0
  %3178 = vmatpush1.bf16.xpose.msra.mxu0 0
  %3179 = vmatprep.subr.bf16.mxu0 0
  %3180 = vmatpush1.bf16.xpose.msra.mxu0 0
  %3181 = vmatprep.subr.bf16.mxu0 0
  %3182 = vmatpush1.bf16.xpose.msra.mxu0 0
  %3183 = vmatprep.subr.bf16.mxu0 0
  %3184 = vmatpush1.bf16.xpose.msra.mxu0 0
  %3185 = vmatprep.subr.bf16.mxu0 0
  %3186 = vmatpush1.bf16.xpose.msra.mxu0 0
  %3187 = vmatprep.subr.bf16.mxu0 0
  %3188 = vmatpush1.bf16.xpose.msra.mxu0 0
  %3189 = vmatprep.subr.bf16.mxu0 0
  %3190 = vmatpush1.bf16.xpose.msra.mxu0 0
  %3191 = vmatprep.subr.bf16.mxu0 0
  %3192 = vmatpush1.bf16.xpose.msra.mxu0 0
  %3193 = vmatprep.subr.bf16.mxu0 0
  %3194 = vmatpush1.bf16.xpose.msra.mxu0 0
  %3195 = vmatprep.subr.bf16.mxu0 0
  %3196 = vmatpush1.bf16.xpose.msra.mxu0 0
  %3197 = vmatprep.subr.bf16.mxu0 0
  %3198 = vmatpush1.bf16.xpose.msra.mxu0 0
  %3199 = vmatprep.subr.bf16.mxu0 0
  %3200 = vmatpush1.bf16.xpose.msra.mxu0 0
  %3201 = vmatprep.subr.bf16.mxu0 0
  %3202 = vmatpush1.bf16.xpose.msra.mxu0 0
  %3203 = vmatprep.subr.bf16.mxu0 0
  %3204 = vmatpush1.bf16.xpose.msra.mxu0 0
  %3205 = vmatprep.mubr.bf16.mxu0 0
  %3206 = vmatmul.mubr.bf16.gmra.mrb[0].mxu0 %v3168
  %v3207 = vpop.f32.mrb[0].mxu0
  %v3208 = vadd.f32 0.0, %v3207
  %v3209 = vpop.f32.mrb[0].mxu0
  %v3210 = vpop.f32.mrb[0].mxu0
  %v3211 = vpop.f32.mrb[0].mxu0
  %3212 = vdwg.mxu0
  %v3214 = vsel %vm2384, %v2282, 0
  %v3217 = vsel %vm2384, %v2306, 0
  %3219 = vmatprep.subr.bf16.mxu0 0
  %3220 = vmatpush1.bf16.xpose.msra.mxu0 %v3217
  %3221 = vmatprep.subr.bf16.mxu0 0
  %3222 = vmatpush1.bf16.xpose.msra.mxu0 0
  %3223 = vmatprep.subr.bf16.mxu0 0
  %3224 = vmatpush1.bf16.xpose.msra.mxu0 0
  %3225 = vmatprep.subr.bf16.mxu0 0
  %3226 = vmatpush1.bf16.xpose.msra.mxu0 0
  %3227 = vmatprep.subr.bf16.mxu0 0
  %3228 = vmatpush1.bf16.xpose.msra.mxu0 0
  %3229 = vmatprep.subr.bf16.mxu0 0
  %3230 = vmatpush1.bf16.xpose.msra.mxu0 0
  %3231 = vmatprep.subr.bf16.mxu0 0
  %3232 = vmatpush1.bf16.xpose.msra.mxu0 0
  %3233 = vmatprep.subr.bf16.mxu0 0
  %3234 = vmatpush1.bf16.xpose.msra.mxu0 0
  %3235 = vmatprep.subr.bf16.mxu0 0
  %3236 = vmatpush1.bf16.xpose.msra.mxu0 0
  %3237 = vmatprep.subr.bf16.mxu0 0
  %3238 = vmatpush1.bf16.xpose.msra.mxu0 0
  %3239 = vmatprep.subr.bf16.mxu0 0
  %3240 = vmatpush1.bf16.xpose.msra.mxu0 0
  %3241 = vmatprep.subr.bf16.mxu0 0
  %3242 = vmatpush1.bf16.xpose.msra.mxu0 0
  %3243 = vmatprep.subr.bf16.mxu0 0
  %3244 = vmatpush1.bf16.xpose.msra.mxu0 0
  %3245 = vmatprep.subr.bf16.mxu0 0
  %3246 = vmatpush1.bf16.xpose.msra.mxu0 0
  %3247 = vmatprep.subr.bf16.mxu0 0
  %3248 = vmatpush1.bf16.xpose.msra.mxu0 0
  %3249 = vmatprep.subr.bf16.mxu0 0
  %3250 = vmatpush1.bf16.xpose.msra.mxu0 0
  %3251 = vmatprep.mubr.bf16.mxu0 0
  %3252 = vmatmul.mubr.bf16.gmra.mrb[0].mxu0 %v3214
  %v3253 = vpop.f32.mrb[0].mxu0
  %v3254 = vadd.f32 0.0, %v3253
  %v3255 = vpop.f32.mrb[0].mxu0
  %v3256 = vpop.f32.mrb[0].mxu0
  %v3257 = vpop.f32.mrb[0].mxu0
  %3258 = vdwg.mxu0
  %v3260 = vsel %vm2384, %v2283, 0
  %v3263 = vsel %vm2384, %v2307, 0
  %3265 = vmatprep.subr.bf16.mxu0 0
  %3266 = vmatpush1.bf16.xpose.msra.mxu0 %v3263
  %3267 = vmatprep.subr.bf16.mxu0 0
  %3268 = vmatpush1.bf16.xpose.msra.mxu0 0
  %3269 = vmatprep.subr.bf16.mxu0 0
  %3270 = vmatpush1.bf16.xpose.msra.mxu0 0
  %3271 = vmatprep.subr.bf16.mxu0 0
  %3272 = vmatpush1.bf16.xpose.msra.mxu0 0
  %3273 = vmatprep.subr.bf16.mxu0 0
  %3274 = vmatpush1.bf16.xpose.msra.mxu0 0
  %3275 = vmatprep.subr.bf16.mxu0 0
  %3276 = vmatpush1.bf16.xpose.msra.mxu0 0
  %3277 = vmatprep.subr.bf16.mxu0 0
  %3278 = vmatpush1.bf16.xpose.msra.mxu0 0
  %3279 = vmatprep.subr.bf16.mxu0 0
  %3280 = vmatpush1.bf16.xpose.msra.mxu0 0
  %3281 = vmatprep.subr.bf16.mxu0 0
  %3282 = vmatpush1.bf16.xpose.msra.mxu0 0
  %3283 = vmatprep.subr.bf16.mxu0 0
  %3284 = vmatpush1.bf16.xpose.msra.mxu0 0
  %3285 = vmatprep.subr.bf16.mxu0 0
  %3286 = vmatpush1.bf16.xpose.msra.mxu0 0
  %3287 = vmatprep.subr.bf16.mxu0 0
  %3288 = vmatpush1.bf16.xpose.msra.mxu0 0
  %3289 = vmatprep.subr.bf16.mxu0 0
  %3290 = vmatpush1.bf16.xpose.msra.mxu0 0
  %3291 = vmatprep.subr.bf16.mxu0 0
  %3292 = vmatpush1.bf16.xpose.msra.mxu0 0
  %3293 = vmatprep.subr.bf16.mxu0 0
  %3294 = vmatpush1.bf16.xpose.msra.mxu0 0
  %3295 = vmatprep.subr.bf16.mxu0 0
  %3296 = vmatpush1.bf16.xpose.msra.mxu0 0
  %3297 = vmatprep.mubr.bf16.mxu0 0
  %3298 = vmatmul.mubr.bf16.gmra.mrb[0].mxu0 %v3260
  %v3299 = vpop.f32.mrb[0].mxu0
  %v3300 = vadd.f32 0.0, %v3299
  %v3301 = vpop.f32.mrb[0].mxu0
  %v3302 = vpop.f32.mrb[0].mxu0
  %v3303 = vpop.f32.mrb[0].mxu0
  %3304 = vdwg.mxu0
  %v3306 = vsel %vm2384, %v2284, 0
  %v3309 = vsel %vm2384, %v2308, 0
  %3311 = vmatprep.subr.bf16.mxu0 0
  %3312 = vmatpush1.bf16.xpose.msra.mxu0 %v3309
  %3313 = vmatprep.subr.bf16.mxu0 0
  %3314 = vmatpush1.bf16.xpose.msra.mxu0 0
  %3315 = vmatprep.subr.bf16.mxu0 0
  %3316 = vmatpush1.bf16.xpose.msra.mxu0 0
  %3317 = vmatprep.subr.bf16.mxu0 0
  %3318 = vmatpush1.bf16.xpose.msra.mxu0 0
  %3319 = vmatprep.subr.bf16.mxu0 0
  %3320 = vmatpush1.bf16.xpose.msra.mxu0 0
  %3321 = vmatprep.subr.bf16.mxu0 0
  %3322 = vmatpush1.bf16.xpose.msra.mxu0 0
  %3323 = vmatprep.subr.bf16.mxu0 0
  %3324 = vmatpush1.bf16.xpose.msra.mxu0 0
  %3325 = vmatprep.subr.bf16.mxu0 0
  %3326 = vmatpush1.bf16.xpose.msra.mxu0 0
  %3327 = vmatprep.subr.bf16.mxu0 0
  %3328 = vmatpush1.bf16.xpose.msra.mxu0 0
  %3329 = vmatprep.subr.bf16.mxu0 0
  %3330 = vmatpush1.bf16.xpose.msra.mxu0 0
  %3331 = vmatprep.subr.bf16.mxu0 0
  %3332 = vmatpush1.bf16.xpose.msra.mxu0 0
  %3333 = vmatprep.subr.bf16.mxu0 0
  %3334 = vmatpush1.bf16.xpose.msra.mxu0 0
  %3335 = vmatprep.subr.bf16.mxu0 0
  %3336 = vmatpush1.bf16.xpose.msra.mxu0 0
  %3337 = vmatprep.subr.bf16.mxu0 0
  %3338 = vmatpush1.bf16.xpose.msra.mxu0 0
  %3339 = vmatprep.subr.bf16.mxu0 0
  %3340 = vmatpush1.bf16.xpose.msra.mxu0 0
  %3341 = vmatprep.subr.bf16.mxu0 0
  %3342 = vmatpush1.bf16.xpose.msra.mxu0 0
  %3343 = vmatprep.mubr.bf16.mxu0 0
  %3344 = vmatmul.mubr.bf16.gmra.mrb[0].mxu0 %v3306
  %v3345 = vpop.f32.mrb[0].mxu0
  %v3346 = vadd.f32 0.0, %v3345
  %v3347 = vpop.f32.mrb[0].mxu0
  %v3348 = vpop.f32.mrb[0].mxu0
  %v3349 = vpop.f32.mrb[0].mxu0
  %3350 = vdwg.mxu0
  %v3352 = vsel %vm2384, %v2285, 0
  %v3355 = vsel %vm2384, %v2309, 0
  %3357 = vmatprep.subr.bf16.mxu0 0
  %3358 = vmatpush1.bf16.xpose.msra.mxu0 %v3355
  %3359 = vmatprep.subr.bf16.mxu0 0
  %3360 = vmatpush1.bf16.xpose.msra.mxu0 0
  %3361 = vmatprep.subr.bf16.mxu0 0
  %3362 = vmatpush1.bf16.xpose.msra.mxu0 0
  %3363 = vmatprep.subr.bf16.mxu0 0
  %3364 = vmatpush1.bf16.xpose.msra.mxu0 0
  %3365 = vmatprep.subr.bf16.mxu0 0
  %3366 = vmatpush1.bf16.xpose.msra.mxu0 0
  %3367 = vmatprep.subr.bf16.mxu0 0
  %3368 = vmatpush1.bf16.xpose.msra.mxu0 0
  %3369 = vmatprep.subr.bf16.mxu0 0
  %3370 = vmatpush1.bf16.xpose.msra.mxu0 0
  %3371 = vmatprep.subr.bf16.mxu0 0
  %3372 = vmatpush1.bf16.xpose.msra.mxu0 0
  %3373 = vmatprep.subr.bf16.mxu0 0
  %3374 = vmatpush1.bf16.xpose.msra.mxu0 0
  %3375 = vmatprep.subr.bf16.mxu0 0
  %3376 = vmatpush1.bf16.xpose.msra.mxu0 0
  %3377 = vmatprep.subr.bf16.mxu0 0
  %3378 = vmatpush1.bf16.xpose.msra.mxu0 0
  %3379 = vmatprep.subr.bf16.mxu0 0
  %3380 = vmatpush1.bf16.xpose.msra.mxu0 0
  %3381 = vmatprep.subr.bf16.mxu0 0
  %3382 = vmatpush1.bf16.xpose.msra.mxu0 0
  %3383 = vmatprep.subr.bf16.mxu0 0
  %3384 = vmatpush1.bf16.xpose.msra.mxu0 0
  %3385 = vmatprep.subr.bf16.mxu0 0
  %3386 = vmatpush1.bf16.xpose.msra.mxu0 0
  %3387 = vmatprep.subr.bf16.mxu0 0
  %3388 = vmatpush1.bf16.xpose.msra.mxu0 0
  %3389 = vmatprep.mubr.bf16.mxu0 0
  %3390 = vmatmul.mubr.bf16.gmra.mrb[0].mxu0 %v3352
  %v3391 = vpop.f32.mrb[0].mxu0
  %v3392 = vadd.f32 0.0, %v3391
  %v3393 = vpop.f32.mrb[0].mxu0
  %v3394 = vpop.f32.mrb[0].mxu0
  %v3395 = vpop.f32.mrb[0].mxu0
  %3396 = vdwg.mxu0
  %v3398 = vsel %vm2384, %v2286, 0
  %v3401 = vsel %vm2384, %v2310, 0
  %3403 = vmatprep.subr.bf16.mxu0 0
  %3404 = vmatpush1.bf16.xpose.msra.mxu0 %v3401
  %3405 = vmatprep.subr.bf16.mxu0 0
  %3406 = vmatpush1.bf16.xpose.msra.mxu0 0
  %3407 = vmatprep.subr.bf16.mxu0 0
  %3408 = vmatpush1.bf16.xpose.msra.mxu0 0
  %3409 = vmatprep.subr.bf16.mxu0 0
  %3410 = vmatpush1.bf16.xpose.msra.mxu0 0
  %3411 = vmatprep.subr.bf16.mxu0 0
  %3412 = vmatpush1.bf16.xpose.msra.mxu0 0
  %3413 = vmatprep.subr.bf16.mxu0 0
  %3414 = vmatpush1.bf16.xpose.msra.mxu0 0
  %3415 = vmatprep.subr.bf16.mxu0 0
  %3416 = vmatpush1.bf16.xpose.msra.mxu0 0
  %3417 = vmatprep.subr.bf16.mxu0 0
  %3418 = vmatpush1.bf16.xpose.msra.mxu0 0
  %3419 = vmatprep.subr.bf16.mxu0 0
  %3420 = vmatpush1.bf16.xpose.msra.mxu0 0
  %3421 = vmatprep.subr.bf16.mxu0 0
  %3422 = vmatpush1.bf16.xpose.msra.mxu0 0
  %3423 = vmatprep.subr.bf16.mxu0 0
  %3424 = vmatpush1.bf16.xpose.msra.mxu0 0
  %3425 = vmatprep.subr.bf16.mxu0 0
  %3426 = vmatpush1.bf16.xpose.msra.mxu0 0
  %3427 = vmatprep.subr.bf16.mxu0 0
  %3428 = vmatpush1.bf16.xpose.msra.mxu0 0
  %3429 = vmatprep.subr.bf16.mxu0 0
  %3430 = vmatpush1.bf16.xpose.msra.mxu0 0
  %3431 = vmatprep.subr.bf16.mxu0 0
  %3432 = vmatpush1.bf16.xpose.msra.mxu0 0
  %3433 = vmatprep.subr.bf16.mxu0 0
  %3434 = vmatpush1.bf16.xpose.msra.mxu0 0
  %3435 = vmatprep.mubr.bf16.mxu0 0
  %3436 = vmatmul.mubr.bf16.gmra.mrb[0].mxu0 %v3398
  %v3437 = vpop.f32.mrb[0].mxu0
  %v3438 = vadd.f32 0.0, %v3437
  %v3439 = vpop.f32.mrb[0].mxu0
  %v3440 = vpop.f32.mrb[0].mxu0
  %v3441 = vpop.f32.mrb[0].mxu0
  %3442 = vdwg.mxu0
  %v3444 = vsel %vm2384, %v2287, 0
  %v3447 = vsel %vm2384, %v2311, 0
  %3449 = vmatprep.subr.bf16.mxu0 0
  %3450 = vmatpush1.bf16.xpose.msra.mxu0 %v3447
  %3451 = vmatprep.subr.bf16.mxu0 0
  %3452 = vmatpush1.bf16.xpose.msra.mxu0 0
  %3453 = vmatprep.subr.bf16.mxu0 0
  %3454 = vmatpush1.bf16.xpose.msra.mxu0 0
  %3455 = vmatprep.subr.bf16.mxu0 0
  %3456 = vmatpush1.bf16.xpose.msra.mxu0 0
  %3457 = vmatprep.subr.bf16.mxu0 0
  %3458 = vmatpush1.bf16.xpose.msra.mxu0 0
  %3459 = vmatprep.subr.bf16.mxu0 0
  %3460 = vmatpush1.bf16.xpose.msra.mxu0 0
  %3461 = vmatprep.subr.bf16.mxu0 0
  %3462 = vmatpush1.bf16.xpose.msra.mxu0 0
  %3463 = vmatprep.subr.bf16.mxu0 0
  %3464 = vmatpush1.bf16.xpose.msra.mxu0 0
  %3465 = vmatprep.subr.bf16.mxu0 0
  %3466 = vmatpush1.bf16.xpose.msra.mxu0 0
  %3467 = vmatprep.subr.bf16.mxu0 0
  %3468 = vmatpush1.bf16.xpose.msra.mxu0 0
  %3469 = vmatprep.subr.bf16.mxu0 0
  %3470 = vmatpush1.bf16.xpose.msra.mxu0 0
  %3471 = vmatprep.subr.bf16.mxu0 0
  %3472 = vmatpush1.bf16.xpose.msra.mxu0 0
  %3473 = vmatprep.subr.bf16.mxu0 0
  %3474 = vmatpush1.bf16.xpose.msra.mxu0 0
  %3475 = vmatprep.subr.bf16.mxu0 0
  %3476 = vmatpush1.bf16.xpose.msra.mxu0 0
  %3477 = vmatprep.subr.bf16.mxu0 0
  %3478 = vmatpush1.bf16.xpose.msra.mxu0 0
  %3479 = vmatprep.subr.bf16.mxu0 0
  %3480 = vmatpush1.bf16.xpose.msra.mxu0 0
  %3481 = vmatprep.mubr.bf16.mxu0 0
  %3482 = vmatmul.mubr.bf16.gmra.mrb[0].mxu0 %v3444
  %v3483 = vpop.f32.mrb[0].mxu0
  %v3484 = vadd.f32 0.0, %v3483
  %v3485 = vpop.f32.mrb[0].mxu0
  %v3486 = vpop.f32.mrb[0].mxu0
  %v3487 = vpop.f32.mrb[0].mxu0
  %3488 = vdwg.mxu0
  %v3489 = vmul.f32 %v2426, 0.35355338
  %v3490 = vmul.f32 %v2472, 0.35355338
  %v3491 = vmul.f32 %v2518, 0.35355338
  %v3492 = vmul.f32 %v2564, 0.35355338
  %v3493 = vmul.f32 %v2610, 0.35355338
  %v3494 = vmul.f32 %v2656, 0.35355338
  %v3495 = vmul.f32 %v2702, 0.35355338
  %v3496 = vmul.f32 %v2748, 0.35355338
  %v3497 = vmul.f32 %v2794, 0.35355338
  %v3498 = vmul.f32 %v2840, 0.35355338
  %v3499 = vmul.f32 %v2886, 0.35355338
  %v3500 = vmul.f32 %v2932, 0.35355338
  %v3501 = vmul.f32 %v2978, 0.35355338
  %v3502 = vmul.f32 %v3024, 0.35355338
  %v3503 = vmul.f32 %v3070, 0.35355338
  %v3504 = vmul.f32 %v3116, 0.35355338
  %v3505 = vmul.f32 %v3162, 0.35355338
  %v3506 = vmul.f32 %v3208, 0.35355338
  %v3507 = vmul.f32 %v3254, 0.35355338
  %v3508 = vmul.f32 %v3300, 0.35355338
  %v3509 = vmul.f32 %v3346, 0.35355338
  %v3510 = vmul.f32 %v3392, 0.35355338
  %v3511 = vmul.f32 %v3438, 0.35355338
  %v3512 = vmul.f32 %v3484, 0.35355338
  %v3514 = vsel %vm2384, %v2336, 0
  %3516 = vmatprep.subr.bf16.mxu0 0
  %3517 = vmatpush1.bf16.xpose.msra.mxu0 %v3514
  %3518 = vmatprep.subr.bf16.mxu0 0
  %3519 = vmatpush1.bf16.xpose.msra.mxu0 0
  %3520 = vmatprep.subr.bf16.mxu0 0
  %3521 = vmatpush1.bf16.xpose.msra.mxu0 0
  %3522 = vmatprep.subr.bf16.mxu0 0
  %3523 = vmatpush1.bf16.xpose.msra.mxu0 0
  %3524 = vmatprep.subr.bf16.mxu0 0
  %3525 = vmatpush1.bf16.xpose.msra.mxu0 0
  %3526 = vmatprep.subr.bf16.mxu0 0
  %3527 = vmatpush1.bf16.xpose.msra.mxu0 0
  %3528 = vmatprep.subr.bf16.mxu0 0
  %3529 = vmatpush1.bf16.xpose.msra.mxu0 0
  %3530 = vmatprep.subr.bf16.mxu0 0
  %3531 = vmatpush1.bf16.xpose.msra.mxu0 0
  %3532 = vmatprep.subr.bf16.mxu0 0
  %3533 = vmatpush1.bf16.xpose.msra.mxu0 0
  %3534 = vmatprep.subr.bf16.mxu0 0
  %3535 = vmatpush1.bf16.xpose.msra.mxu0 0
  %3536 = vmatprep.subr.bf16.mxu0 0
  %3537 = vmatpush1.bf16.xpose.msra.mxu0 0
  %3538 = vmatprep.subr.bf16.mxu0 0
  %3539 = vmatpush1.bf16.xpose.msra.mxu0 0
  %3540 = vmatprep.subr.bf16.mxu0 0
  %3541 = vmatpush1.bf16.xpose.msra.mxu0 0
  %3542 = vmatprep.subr.bf16.mxu0 0
  %3543 = vmatpush1.bf16.xpose.msra.mxu0 0
  %3544 = vmatprep.subr.bf16.mxu0 0
  %3545 = vmatpush1.bf16.xpose.msra.mxu0 0
  %3546 = vmatprep.subr.bf16.mxu0 0
  %3547 = vmatpush1.bf16.xpose.msra.mxu0 0
  %3548 = vmatprep.mubr.bf16.mxu0 0
  %3549 = vmatmul.mubr.bf16.gmra.mrb[0].mxu0 %v2386
  %v3550 = vpop.f32.mrb[0].mxu0
  %v3551 = vadd.f32 0.0, %v3550
  %v3552 = vpop.f32.mrb[0].mxu0
  %v3553 = vpop.f32.mrb[0].mxu0
  %v3554 = vpop.f32.mrb[0].mxu0
  %3555 = vdwg.mxu0
  %v3557 = vsel %vm2384, %v2337, 0
  %3559 = vmatprep.subr.bf16.mxu0 0
  %3560 = vmatpush1.bf16.xpose.msra.mxu0 %v3557
  %3561 = vmatprep.subr.bf16.mxu0 0
  %3562 = vmatpush1.bf16.xpose.msra.mxu0 0
  %3563 = vmatprep.subr.bf16.mxu0 0
  %3564 = vmatpush1.bf16.xpose.msra.mxu0 0
  %3565 = vmatprep.subr.bf16.mxu0 0
  %3566 = vmatpush1.bf16.xpose.msra.mxu0 0
  %3567 = vmatprep.subr.bf16.mxu0 0
  %3568 = vmatpush1.bf16.xpose.msra.mxu0 0
  %3569 = vmatprep.subr.bf16.mxu0 0
  %3570 = vmatpush1.bf16.xpose.msra.mxu0 0
  %3571 = vmatprep.subr.bf16.mxu0 0
  %3572 = vmatpush1.bf16.xpose.msra.mxu0 0
  %3573 = vmatprep.subr.bf16.mxu0 0
  %3574 = vmatpush1.bf16.xpose.msra.mxu0 0
  %3575 = vmatprep.subr.bf16.mxu0 0
  %3576 = vmatpush1.bf16.xpose.msra.mxu0 0
  %3577 = vmatprep.subr.bf16.mxu0 0
  %3578 = vmatpush1.bf16.xpose.msra.mxu0 0
  %3579 = vmatprep.subr.bf16.mxu0 0
  %3580 = vmatpush1.bf16.xpose.msra.mxu0 0
  %3581 = vmatprep.subr.bf16.mxu0 0
  %3582 = vmatpush1.bf16.xpose.msra.mxu0 0
  %3583 = vmatprep.subr.bf16.mxu0 0
  %3584 = vmatpush1.bf16.xpose.msra.mxu0 0
  %3585 = vmatprep.subr.bf16.mxu0 0
  %3586 = vmatpush1.bf16.xpose.msra.mxu0 0
  %3587 = vmatprep.subr.bf16.mxu0 0
  %3588 = vmatpush1.bf16.xpose.msra.mxu0 0
  %3589 = vmatprep.subr.bf16.mxu0 0
  %3590 = vmatpush1.bf16.xpose.msra.mxu0 0
  %3591 = vmatprep.mubr.bf16.mxu0 0
  %3592 = vmatmul.mubr.bf16.gmra.mrb[0].mxu0 %v2432
  %v3593 = vpop.f32.mrb[0].mxu0
  %v3594 = vadd.f32 0.0, %v3593
  %v3595 = vpop.f32.mrb[0].mxu0
  %v3596 = vpop.f32.mrb[0].mxu0
  %v3597 = vpop.f32.mrb[0].mxu0
  %3598 = vdwg.mxu0
  %v3600 = vsel %vm2384, %v2338, 0
  %3602 = vmatprep.subr.bf16.mxu0 0
  %3603 = vmatpush1.bf16.xpose.msra.mxu0 %v3600
  %3604 = vmatprep.subr.bf16.mxu0 0
  %3605 = vmatpush1.bf16.xpose.msra.mxu0 0
  %3606 = vmatprep.subr.bf16.mxu0 0
  %3607 = vmatpush1.bf16.xpose.msra.mxu0 0
  %3608 = vmatprep.subr.bf16.mxu0 0
  %3609 = vmatpush1.bf16.xpose.msra.mxu0 0
  %3610 = vmatprep.subr.bf16.mxu0 0
  %3611 = vmatpush1.bf16.xpose.msra.mxu0 0
  %3612 = vmatprep.subr.bf16.mxu0 0
  %3613 = vmatpush1.bf16.xpose.msra.mxu0 0
  %3614 = vmatprep.subr.bf16.mxu0 0
  %3615 = vmatpush1.bf16.xpose.msra.mxu0 0
  %3616 = vmatprep.subr.bf16.mxu0 0
  %3617 = vmatpush1.bf16.xpose.msra.mxu0 0
  %3618 = vmatprep.subr.bf16.mxu0 0
  %3619 = vmatpush1.bf16.xpose.msra.mxu0 0
  %3620 = vmatprep.subr.bf16.mxu0 0
  %3621 = vmatpush1.bf16.xpose.msra.mxu0 0
  %3622 = vmatprep.subr.bf16.mxu0 0
  %3623 = vmatpush1.bf16.xpose.msra.mxu0 0
  %3624 = vmatprep.subr.bf16.mxu0 0
  %3625 = vmatpush1.bf16.xpose.msra.mxu0 0
  %3626 = vmatprep.subr.bf16.mxu0 0
  %3627 = vmatpush1.bf16.xpose.msra.mxu0 0
  %3628 = vmatprep.subr.bf16.mxu0 0
  %3629 = vmatpush1.bf16.xpose.msra.mxu0 0
  %3630 = vmatprep.subr.bf16.mxu0 0
  %3631 = vmatpush1.bf16.xpose.msra.mxu0 0
  %3632 = vmatprep.subr.bf16.mxu0 0
  %3633 = vmatpush1.bf16.xpose.msra.mxu0 0
  %3634 = vmatprep.mubr.bf16.mxu0 0
  %3635 = vmatmul.mubr.bf16.gmra.mrb[0].mxu0 %v2478
  %v3636 = vpop.f32.mrb[0].mxu0
  %v3637 = vadd.f32 0.0, %v3636
  %v3638 = vpop.f32.mrb[0].mxu0
  %v3639 = vpop.f32.mrb[0].mxu0
  %v3640 = vpop.f32.mrb[0].mxu0
  %3641 = vdwg.mxu0
  %v3643 = vsel %vm2384, %v2339, 0
  %3645 = vmatprep.subr.bf16.mxu0 0
  %3646 = vmatpush1.bf16.xpose.msra.mxu0 %v3643
  %3647 = vmatprep.subr.bf16.mxu0 0
  %3648 = vmatpush1.bf16.xpose.msra.mxu0 0
  %3649 = vmatprep.subr.bf16.mxu0 0
  %3650 = vmatpush1.bf16.xpose.msra.mxu0 0
  %3651 = vmatprep.subr.bf16.mxu0 0
  %3652 = vmatpush1.bf16.xpose.msra.mxu0 0
  %3653 = vmatprep.subr.bf16.mxu0 0
  %3654 = vmatpush1.bf16.xpose.msra.mxu0 0
  %3655 = vmatprep.subr.bf16.mxu0 0
  %3656 = vmatpush1.bf16.xpose.msra.mxu0 0
  %3657 = vmatprep.subr.bf16.mxu0 0
  %3658 = vmatpush1.bf16.xpose.msra.mxu0 0
  %3659 = vmatprep.subr.bf16.mxu0 0
  %3660 = vmatpush1.bf16.xpose.msra.mxu0 0
  %3661 = vmatprep.subr.bf16.mxu0 0
  %3662 = vmatpush1.bf16.xpose.msra.mxu0 0
  %3663 = vmatprep.subr.bf16.mxu0 0
  %3664 = vmatpush1.bf16.xpose.msra.mxu0 0
  %3665 = vmatprep.subr.bf16.mxu0 0
  %3666 = vmatpush1.bf16.xpose.msra.mxu0 0
  %3667 = vmatprep.subr.bf16.mxu0 0
  %3668 = vmatpush1.bf16.xpose.msra.mxu0 0
  %3669 = vmatprep.subr.bf16.mxu0 0
  %3670 = vmatpush1.bf16.xpose.msra.mxu0 0
  %3671 = vmatprep.subr.bf16.mxu0 0
  %3672 = vmatpush1.bf16.xpose.msra.mxu0 0
  %3673 = vmatprep.subr.bf16.mxu0 0
  %3674 = vmatpush1.bf16.xpose.msra.mxu0 0
  %3675 = vmatprep.subr.bf16.mxu0 0
  %3676 = vmatpush1.bf16.xpose.msra.mxu0 0
  %3677 = vmatprep.mubr.bf16.mxu0 0
  %3678 = vmatmul.mubr.bf16.gmra.mrb[0].mxu0 %v2524
  %v3679 = vpop.f32.mrb[0].mxu0
  %v3680 = vadd.f32 0.0, %v3679
  %v3681 = vpop.f32.mrb[0].mxu0
  %v3682 = vpop.f32.mrb[0].mxu0
  %v3683 = vpop.f32.mrb[0].mxu0
  %3684 = vdwg.mxu0
  %v3686 = vsel %vm2384, %v2340, 0
  %3688 = vmatprep.subr.bf16.mxu0 0
  %3689 = vmatpush1.bf16.xpose.msra.mxu0 %v3686
  %3690 = vmatprep.subr.bf16.mxu0 0
  %3691 = vmatpush1.bf16.xpose.msra.mxu0 0
  %3692 = vmatprep.subr.bf16.mxu0 0
  %3693 = vmatpush1.bf16.xpose.msra.mxu0 0
  %3694 = vmatprep.subr.bf16.mxu0 0
  %3695 = vmatpush1.bf16.xpose.msra.mxu0 0
  %3696 = vmatprep.subr.bf16.mxu0 0
  %3697 = vmatpush1.bf16.xpose.msra.mxu0 0
  %3698 = vmatprep.subr.bf16.mxu0 0
  %3699 = vmatpush1.bf16.xpose.msra.mxu0 0
  %3700 = vmatprep.subr.bf16.mxu0 0
  %3701 = vmatpush1.bf16.xpose.msra.mxu0 0
  %3702 = vmatprep.subr.bf16.mxu0 0
  %3703 = vmatpush1.bf16.xpose.msra.mxu0 0
  %3704 = vmatprep.subr.bf16.mxu0 0
  %3705 = vmatpush1.bf16.xpose.msra.mxu0 0
  %3706 = vmatprep.subr.bf16.mxu0 0
  %3707 = vmatpush1.bf16.xpose.msra.mxu0 0
  %3708 = vmatprep.subr.bf16.mxu0 0
  %3709 = vmatpush1.bf16.xpose.msra.mxu0 0
  %3710 = vmatprep.subr.bf16.mxu0 0
  %3711 = vmatpush1.bf16.xpose.msra.mxu0 0
  %3712 = vmatprep.subr.bf16.mxu0 0
  %3713 = vmatpush1.bf16.xpose.msra.mxu0 0
  %3714 = vmatprep.subr.bf16.mxu0 0
  %3715 = vmatpush1.bf16.xpose.msra.mxu0 0
  %3716 = vmatprep.subr.bf16.mxu0 0
  %3717 = vmatpush1.bf16.xpose.msra.mxu0 0
  %3718 = vmatprep.subr.bf16.mxu0 0
  %3719 = vmatpush1.bf16.xpose.msra.mxu0 0
  %3720 = vmatprep.mubr.bf16.mxu0 0
  %3721 = vmatmul.mubr.bf16.gmra.mrb[0].mxu0 %v2570
  %v3722 = vpop.f32.mrb[0].mxu0
  %v3723 = vadd.f32 0.0, %v3722
  %v3724 = vpop.f32.mrb[0].mxu0
  %v3725 = vpop.f32.mrb[0].mxu0
  %v3726 = vpop.f32.mrb[0].mxu0
  %3727 = vdwg.mxu0
  %v3729 = vsel %vm2384, %v2341, 0
  %3731 = vmatprep.subr.bf16.mxu0 0
  %3732 = vmatpush1.bf16.xpose.msra.mxu0 %v3729
  %3733 = vmatprep.subr.bf16.mxu0 0
  %3734 = vmatpush1.bf16.xpose.msra.mxu0 0
  %3735 = vmatprep.subr.bf16.mxu0 0
  %3736 = vmatpush1.bf16.xpose.msra.mxu0 0
  %3737 = vmatprep.subr.bf16.mxu0 0
  %3738 = vmatpush1.bf16.xpose.msra.mxu0 0
  %3739 = vmatprep.subr.bf16.mxu0 0
  %3740 = vmatpush1.bf16.xpose.msra.mxu0 0
  %3741 = vmatprep.subr.bf16.mxu0 0
  %3742 = vmatpush1.bf16.xpose.msra.mxu0 0
  %3743 = vmatprep.subr.bf16.mxu0 0
  %3744 = vmatpush1.bf16.xpose.msra.mxu0 0
  %3745 = vmatprep.subr.bf16.mxu0 0
  %3746 = vmatpush1.bf16.xpose.msra.mxu0 0
  %3747 = vmatprep.subr.bf16.mxu0 0
  %3748 = vmatpush1.bf16.xpose.msra.mxu0 0
  %3749 = vmatprep.subr.bf16.mxu0 0
  %3750 = vmatpush1.bf16.xpose.msra.mxu0 0
  %3751 = vmatprep.subr.bf16.mxu0 0
  %3752 = vmatpush1.bf16.xpose.msra.mxu0 0
  %3753 = vmatprep.subr.bf16.mxu0 0
  %3754 = vmatpush1.bf16.xpose.msra.mxu0 0
  %3755 = vmatprep.subr.bf16.mxu0 0
  %3756 = vmatpush1.bf16.xpose.msra.mxu0 0
  %3757 = vmatprep.subr.bf16.mxu0 0
  %3758 = vmatpush1.bf16.xpose.msra.mxu0 0
  %3759 = vmatprep.subr.bf16.mxu0 0
  %3760 = vmatpush1.bf16.xpose.msra.mxu0 0
  %3761 = vmatprep.subr.bf16.mxu0 0
  %3762 = vmatpush1.bf16.xpose.msra.mxu0 0
  %3763 = vmatprep.mubr.bf16.mxu0 0
  %3764 = vmatmul.mubr.bf16.gmra.mrb[0].mxu0 %v2616
  %v3765 = vpop.f32.mrb[0].mxu0
  %v3766 = vadd.f32 0.0, %v3765
  %v3767 = vpop.f32.mrb[0].mxu0
  %v3768 = vpop.f32.mrb[0].mxu0
  %v3769 = vpop.f32.mrb[0].mxu0
  %3770 = vdwg.mxu0
  %v3772 = vsel %vm2384, %v2342, 0
  %3774 = vmatprep.subr.bf16.mxu0 0
  %3775 = vmatpush1.bf16.xpose.msra.mxu0 %v3772
  %3776 = vmatprep.subr.bf16.mxu0 0
  %3777 = vmatpush1.bf16.xpose.msra.mxu0 0
  %3778 = vmatprep.subr.bf16.mxu0 0
  %3779 = vmatpush1.bf16.xpose.msra.mxu0 0
  %3780 = vmatprep.subr.bf16.mxu0 0
  %3781 = vmatpush1.bf16.xpose.msra.mxu0 0
  %3782 = vmatprep.subr.bf16.mxu0 0
  %3783 = vmatpush1.bf16.xpose.msra.mxu0 0
  %3784 = vmatprep.subr.bf16.mxu0 0
  %3785 = vmatpush1.bf16.xpose.msra.mxu0 0
  %3786 = vmatprep.subr.bf16.mxu0 0
  %3787 = vmatpush1.bf16.xpose.msra.mxu0 0
  %3788 = vmatprep.subr.bf16.mxu0 0
  %3789 = vmatpush1.bf16.xpose.msra.mxu0 0
  %3790 = vmatprep.subr.bf16.mxu0 0
  %3791 = vmatpush1.bf16.xpose.msra.mxu0 0
  %3792 = vmatprep.subr.bf16.mxu0 0
  %3793 = vmatpush1.bf16.xpose.msra.mxu0 0
  %3794 = vmatprep.subr.bf16.mxu0 0
  %3795 = vmatpush1.bf16.xpose.msra.mxu0 0
  %3796 = vmatprep.subr.bf16.mxu0 0
  %3797 = vmatpush1.bf16.xpose.msra.mxu0 0
  %3798 = vmatprep.subr.bf16.mxu0 0
  %3799 = vmatpush1.bf16.xpose.msra.mxu0 0
  %3800 = vmatprep.subr.bf16.mxu0 0
  %3801 = vmatpush1.bf16.xpose.msra.mxu0 0
  %3802 = vmatprep.subr.bf16.mxu0 0
  %3803 = vmatpush1.bf16.xpose.msra.mxu0 0
  %3804 = vmatprep.subr.bf16.mxu0 0
  %3805 = vmatpush1.bf16.xpose.msra.mxu0 0
  %3806 = vmatprep.mubr.bf16.mxu0 0
  %3807 = vmatmul.mubr.bf16.gmra.mrb[0].mxu0 %v2662
  %v3808 = vpop.f32.mrb[0].mxu0
  %v3809 = vadd.f32 0.0, %v3808
  %v3810 = vpop.f32.mrb[0].mxu0
  %v3811 = vpop.f32.mrb[0].mxu0
  %v3812 = vpop.f32.mrb[0].mxu0
  %3813 = vdwg.mxu0
  %v3815 = vsel %vm2384, %v2343, 0
  %3817 = vmatprep.subr.bf16.mxu0 0
  %3818 = vmatpush1.bf16.xpose.msra.mxu0 %v3815
  %3819 = vmatprep.subr.bf16.mxu0 0
  %3820 = vmatpush1.bf16.xpose.msra.mxu0 0
  %3821 = vmatprep.subr.bf16.mxu0 0
  %3822 = vmatpush1.bf16.xpose.msra.mxu0 0
  %3823 = vmatprep.subr.bf16.mxu0 0
  %3824 = vmatpush1.bf16.xpose.msra.mxu0 0
  %3825 = vmatprep.subr.bf16.mxu0 0
  %3826 = vmatpush1.bf16.xpose.msra.mxu0 0
  %3827 = vmatprep.subr.bf16.mxu0 0
  %3828 = vmatpush1.bf16.xpose.msra.mxu0 0
  %3829 = vmatprep.subr.bf16.mxu0 0
  %3830 = vmatpush1.bf16.xpose.msra.mxu0 0
  %3831 = vmatprep.subr.bf16.mxu0 0
  %3832 = vmatpush1.bf16.xpose.msra.mxu0 0
  %3833 = vmatprep.subr.bf16.mxu0 0
  %3834 = vmatpush1.bf16.xpose.msra.mxu0 0
  %3835 = vmatprep.subr.bf16.mxu0 0
  %3836 = vmatpush1.bf16.xpose.msra.mxu0 0
  %3837 = vmatprep.subr.bf16.mxu0 0
  %3838 = vmatpush1.bf16.xpose.msra.mxu0 0
  %3839 = vmatprep.subr.bf16.mxu0 0
  %3840 = vmatpush1.bf16.xpose.msra.mxu0 0
  %3841 = vmatprep.subr.bf16.mxu0 0
  %3842 = vmatpush1.bf16.xpose.msra.mxu0 0
  %3843 = vmatprep.subr.bf16.mxu0 0
  %3844 = vmatpush1.bf16.xpose.msra.mxu0 0
  %3845 = vmatprep.subr.bf16.mxu0 0
  %3846 = vmatpush1.bf16.xpose.msra.mxu0 0
  %3847 = vmatprep.subr.bf16.mxu0 0
  %3848 = vmatpush1.bf16.xpose.msra.mxu0 0
  %3849 = vmatprep.mubr.bf16.mxu0 0
  %3850 = vmatmul.mubr.bf16.gmra.mrb[0].mxu0 %v2708
  %v3851 = vpop.f32.mrb[0].mxu0
  %v3852 = vadd.f32 0.0, %v3851
  %v3853 = vpop.f32.mrb[0].mxu0
  %v3854 = vpop.f32.mrb[0].mxu0
  %v3855 = vpop.f32.mrb[0].mxu0
  %3856 = vdwg.mxu0
  %v3858 = vsel %vm2384, %v2344, 0
  %3860 = vmatprep.subr.bf16.mxu0 0
  %3861 = vmatpush1.bf16.xpose.msra.mxu0 %v3858
  %3862 = vmatprep.subr.bf16.mxu0 0
  %3863 = vmatpush1.bf16.xpose.msra.mxu0 0
  %3864 = vmatprep.subr.bf16.mxu0 0
  %3865 = vmatpush1.bf16.xpose.msra.mxu0 0
  %3866 = vmatprep.subr.bf16.mxu0 0
  %3867 = vmatpush1.bf16.xpose.msra.mxu0 0
  %3868 = vmatprep.subr.bf16.mxu0 0
  %3869 = vmatpush1.bf16.xpose.msra.mxu0 0
  %3870 = vmatprep.subr.bf16.mxu0 0
  %3871 = vmatpush1.bf16.xpose.msra.mxu0 0
  %3872 = vmatprep.subr.bf16.mxu0 0
  %3873 = vmatpush1.bf16.xpose.msra.mxu0 0
  %3874 = vmatprep.subr.bf16.mxu0 0
  %3875 = vmatpush1.bf16.xpose.msra.mxu0 0
  %3876 = vmatprep.subr.bf16.mxu0 0
  %3877 = vmatpush1.bf16.xpose.msra.mxu0 0
  %3878 = vmatprep.subr.bf16.mxu0 0
  %3879 = vmatpush1.bf16.xpose.msra.mxu0 0
  %3880 = vmatprep.subr.bf16.mxu0 0
  %3881 = vmatpush1.bf16.xpose.msra.mxu0 0
  %3882 = vmatprep.subr.bf16.mxu0 0
  %3883 = vmatpush1.bf16.xpose.msra.mxu0 0
  %3884 = vmatprep.subr.bf16.mxu0 0
  %3885 = vmatpush1.bf16.xpose.msra.mxu0 0
  %3886 = vmatprep.subr.bf16.mxu0 0
  %3887 = vmatpush1.bf16.xpose.msra.mxu0 0
  %3888 = vmatprep.subr.bf16.mxu0 0
  %3889 = vmatpush1.bf16.xpose.msra.mxu0 0
  %3890 = vmatprep.subr.bf16.mxu0 0
  %3891 = vmatpush1.bf16.xpose.msra.mxu0 0
  %3892 = vmatprep.mubr.bf16.mxu0 0
  %3893 = vmatmul.mubr.bf16.gmra.mrb[0].mxu0 %v2754
  %v3894 = vpop.f32.mrb[0].mxu0
  %v3895 = vadd.f32 0.0, %v3894
  %v3896 = vpop.f32.mrb[0].mxu0
  %v3897 = vpop.f32.mrb[0].mxu0
  %v3898 = vpop.f32.mrb[0].mxu0
  %3899 = vdwg.mxu0
  %v3901 = vsel %vm2384, %v2345, 0
  %3903 = vmatprep.subr.bf16.mxu0 0
  %3904 = vmatpush1.bf16.xpose.msra.mxu0 %v3901
  %3905 = vmatprep.subr.bf16.mxu0 0
  %3906 = vmatpush1.bf16.xpose.msra.mxu0 0
  %3907 = vmatprep.subr.bf16.mxu0 0
  %3908 = vmatpush1.bf16.xpose.msra.mxu0 0
  %3909 = vmatprep.subr.bf16.mxu0 0
  %3910 = vmatpush1.bf16.xpose.msra.mxu0 0
  %3911 = vmatprep.subr.bf16.mxu0 0
  %3912 = vmatpush1.bf16.xpose.msra.mxu0 0
  %3913 = vmatprep.subr.bf16.mxu0 0
  %3914 = vmatpush1.bf16.xpose.msra.mxu0 0
  %3915 = vmatprep.subr.bf16.mxu0 0
  %3916 = vmatpush1.bf16.xpose.msra.mxu0 0
  %3917 = vmatprep.subr.bf16.mxu0 0
  %3918 = vmatpush1.bf16.xpose.msra.mxu0 0
  %3919 = vmatprep.subr.bf16.mxu0 0
  %3920 = vmatpush1.bf16.xpose.msra.mxu0 0
  %3921 = vmatprep.subr.bf16.mxu0 0
  %3922 = vmatpush1.bf16.xpose.msra.mxu0 0
  %3923 = vmatprep.subr.bf16.mxu0 0
  %3924 = vmatpush1.bf16.xpose.msra.mxu0 0
  %3925 = vmatprep.subr.bf16.mxu0 0
  %3926 = vmatpush1.bf16.xpose.msra.mxu0 0
  %3927 = vmatprep.subr.bf16.mxu0 0
  %3928 = vmatpush1.bf16.xpose.msra.mxu0 0
  %3929 = vmatprep.subr.bf16.mxu0 0
  %3930 = vmatpush1.bf16.xpose.msra.mxu0 0
  %3931 = vmatprep.subr.bf16.mxu0 0
  %3932 = vmatpush1.bf16.xpose.msra.mxu0 0
  %3933 = vmatprep.subr.bf16.mxu0 0
  %3934 = vmatpush1.bf16.xpose.msra.mxu0 0
  %3935 = vmatprep.mubr.bf16.mxu0 0
  %3936 = vmatmul.mubr.bf16.gmra.mrb[0].mxu0 %v2800
  %v3937 = vpop.f32.mrb[0].mxu0
  %v3938 = vadd.f32 0.0, %v3937
  %v3939 = vpop.f32.mrb[0].mxu0
  %v3940 = vpop.f32.mrb[0].mxu0
  %v3941 = vpop.f32.mrb[0].mxu0
  %3942 = vdwg.mxu0
  %v3944 = vsel %vm2384, %v2346, 0
  %3946 = vmatprep.subr.bf16.mxu0 0
  %3947 = vmatpush1.bf16.xpose.msra.mxu0 %v3944
  %3948 = vmatprep.subr.bf16.mxu0 0
  %3949 = vmatpush1.bf16.xpose.msra.mxu0 0
  %3950 = vmatprep.subr.bf16.mxu0 0
  %3951 = vmatpush1.bf16.xpose.msra.mxu0 0
  %3952 = vmatprep.subr.bf16.mxu0 0
  %3953 = vmatpush1.bf16.xpose.msra.mxu0 0
  %3954 = vmatprep.subr.bf16.mxu0 0
  %3955 = vmatpush1.bf16.xpose.msra.mxu0 0
  %3956 = vmatprep.subr.bf16.mxu0 0
  %3957 = vmatpush1.bf16.xpose.msra.mxu0 0
  %3958 = vmatprep.subr.bf16.mxu0 0
  %3959 = vmatpush1.bf16.xpose.msra.mxu0 0
  %3960 = vmatprep.subr.bf16.mxu0 0
  %3961 = vmatpush1.bf16.xpose.msra.mxu0 0
  %3962 = vmatprep.subr.bf16.mxu0 0
  %3963 = vmatpush1.bf16.xpose.msra.mxu0 0
  %3964 = vmatprep.subr.bf16.mxu0 0
  %3965 = vmatpush1.bf16.xpose.msra.mxu0 0
  %3966 = vmatprep.subr.bf16.mxu0 0
  %3967 = vmatpush1.bf16.xpose.msra.mxu0 0
  %3968 = vmatprep.subr.bf16.mxu0 0
  %3969 = vmatpush1.bf16.xpose.msra.mxu0 0
  %3970 = vmatprep.subr.bf16.mxu0 0
  %3971 = vmatpush1.bf16.xpose.msra.mxu0 0
  %3972 = vmatprep.subr.bf16.mxu0 0
  %3973 = vmatpush1.bf16.xpose.msra.mxu0 0
  %3974 = vmatprep.subr.bf16.mxu0 0
  %3975 = vmatpush1.bf16.xpose.msra.mxu0 0
  %3976 = vmatprep.subr.bf16.mxu0 0
  %3977 = vmatpush1.bf16.xpose.msra.mxu0 0
  %3978 = vmatprep.mubr.bf16.mxu0 0
  %3979 = vmatmul.mubr.bf16.gmra.mrb[0].mxu0 %v2846
  %v3980 = vpop.f32.mrb[0].mxu0
  %v3981 = vadd.f32 0.0, %v3980
  %v3982 = vpop.f32.mrb[0].mxu0
  %v3983 = vpop.f32.mrb[0].mxu0
  %v3984 = vpop.f32.mrb[0].mxu0
  %3985 = vdwg.mxu0
  %v3987 = vsel %vm2384, %v2347, 0
  %3989 = vmatprep.subr.bf16.mxu0 0
  %3990 = vmatpush1.bf16.xpose.msra.mxu0 %v3987
  %3991 = vmatprep.subr.bf16.mxu0 0
  %3992 = vmatpush1.bf16.xpose.msra.mxu0 0
  %3993 = vmatprep.subr.bf16.mxu0 0
  %3994 = vmatpush1.bf16.xpose.msra.mxu0 0
  %3995 = vmatprep.subr.bf16.mxu0 0
  %3996 = vmatpush1.bf16.xpose.msra.mxu0 0
  %3997 = vmatprep.subr.bf16.mxu0 0
  %3998 = vmatpush1.bf16.xpose.msra.mxu0 0
  %3999 = vmatprep.subr.bf16.mxu0 0
  %4000 = vmatpush1.bf16.xpose.msra.mxu0 0
  %4001 = vmatprep.subr.bf16.mxu0 0
  %4002 = vmatpush1.bf16.xpose.msra.mxu0 0
  %4003 = vmatprep.subr.bf16.mxu0 0
  %4004 = vmatpush1.bf16.xpose.msra.mxu0 0
  %4005 = vmatprep.subr.bf16.mxu0 0
  %4006 = vmatpush1.bf16.xpose.msra.mxu0 0
  %4007 = vmatprep.subr.bf16.mxu0 0
  %4008 = vmatpush1.bf16.xpose.msra.mxu0 0
  %4009 = vmatprep.subr.bf16.mxu0 0
  %4010 = vmatpush1.bf16.xpose.msra.mxu0 0
  %4011 = vmatprep.subr.bf16.mxu0 0
  %4012 = vmatpush1.bf16.xpose.msra.mxu0 0
  %4013 = vmatprep.subr.bf16.mxu0 0
  %4014 = vmatpush1.bf16.xpose.msra.mxu0 0
  %4015 = vmatprep.subr.bf16.mxu0 0
  %4016 = vmatpush1.bf16.xpose.msra.mxu0 0
  %4017 = vmatprep.subr.bf16.mxu0 0
  %4018 = vmatpush1.bf16.xpose.msra.mxu0 0
  %4019 = vmatprep.subr.bf16.mxu0 0
  %4020 = vmatpush1.bf16.xpose.msra.mxu0 0
  %4021 = vmatprep.mubr.bf16.mxu0 0
  %4022 = vmatmul.mubr.bf16.gmra.mrb[0].mxu0 %v2892
  %v4023 = vpop.f32.mrb[0].mxu0
  %v4024 = vadd.f32 0.0, %v4023
  %v4025 = vpop.f32.mrb[0].mxu0
  %v4026 = vpop.f32.mrb[0].mxu0
  %v4027 = vpop.f32.mrb[0].mxu0
  %4028 = vdwg.mxu0
  %v4030 = vsel %vm2384, %v2348, 0
  %4032 = vmatprep.subr.bf16.mxu0 0
  %4033 = vmatpush1.bf16.xpose.msra.mxu0 %v4030
  %4034 = vmatprep.subr.bf16.mxu0 0
  %4035 = vmatpush1.bf16.xpose.msra.mxu0 0
  %4036 = vmatprep.subr.bf16.mxu0 0
  %4037 = vmatpush1.bf16.xpose.msra.mxu0 0
  %4038 = vmatprep.subr.bf16.mxu0 0
  %4039 = vmatpush1.bf16.xpose.msra.mxu0 0
  %4040 = vmatprep.subr.bf16.mxu0 0
  %4041 = vmatpush1.bf16.xpose.msra.mxu0 0
  %4042 = vmatprep.subr.bf16.mxu0 0
  %4043 = vmatpush1.bf16.xpose.msra.mxu0 0
  %4044 = vmatprep.subr.bf16.mxu0 0
  %4045 = vmatpush1.bf16.xpose.msra.mxu0 0
  %4046 = vmatprep.subr.bf16.mxu0 0
  %4047 = vmatpush1.bf16.xpose.msra.mxu0 0
  %4048 = vmatprep.subr.bf16.mxu0 0
  %4049 = vmatpush1.bf16.xpose.msra.mxu0 0
  %4050 = vmatprep.subr.bf16.mxu0 0
  %4051 = vmatpush1.bf16.xpose.msra.mxu0 0
  %4052 = vmatprep.subr.bf16.mxu0 0
  %4053 = vmatpush1.bf16.xpose.msra.mxu0 0
  %4054 = vmatprep.subr.bf16.mxu0 0
  %4055 = vmatpush1.bf16.xpose.msra.mxu0 0
  %4056 = vmatprep.subr.bf16.mxu0 0
  %4057 = vmatpush1.bf16.xpose.msra.mxu0 0
  %4058 = vmatprep.subr.bf16.mxu0 0
  %4059 = vmatpush1.bf16.xpose.msra.mxu0 0
  %4060 = vmatprep.subr.bf16.mxu0 0
  %4061 = vmatpush1.bf16.xpose.msra.mxu0 0
  %4062 = vmatprep.subr.bf16.mxu0 0
  %4063 = vmatpush1.bf16.xpose.msra.mxu0 0
  %4064 = vmatprep.mubr.bf16.mxu0 0
  %4065 = vmatmul.mubr.bf16.gmra.mrb[0].mxu0 %v2938
  %v4066 = vpop.f32.mrb[0].mxu0
  %v4067 = vadd.f32 0.0, %v4066
  %v4068 = vpop.f32.mrb[0].mxu0
  %v4069 = vpop.f32.mrb[0].mxu0
  %v4070 = vpop.f32.mrb[0].mxu0
  %4071 = vdwg.mxu0
  %v4073 = vsel %vm2384, %v2349, 0
  %4075 = vmatprep.subr.bf16.mxu0 0
  %4076 = vmatpush1.bf16.xpose.msra.mxu0 %v4073
  %4077 = vmatprep.subr.bf16.mxu0 0
  %4078 = vmatpush1.bf16.xpose.msra.mxu0 0
  %4079 = vmatprep.subr.bf16.mxu0 0
  %4080 = vmatpush1.bf16.xpose.msra.mxu0 0
  %4081 = vmatprep.subr.bf16.mxu0 0
  %4082 = vmatpush1.bf16.xpose.msra.mxu0 0
  %4083 = vmatprep.subr.bf16.mxu0 0
  %4084 = vmatpush1.bf16.xpose.msra.mxu0 0
  %4085 = vmatprep.subr.bf16.mxu0 0
  %4086 = vmatpush1.bf16.xpose.msra.mxu0 0
  %4087 = vmatprep.subr.bf16.mxu0 0
  %4088 = vmatpush1.bf16.xpose.msra.mxu0 0
  %4089 = vmatprep.subr.bf16.mxu0 0
  %4090 = vmatpush1.bf16.xpose.msra.mxu0 0
  %4091 = vmatprep.subr.bf16.mxu0 0
  %4092 = vmatpush1.bf16.xpose.msra.mxu0 0
  %4093 = vmatprep.subr.bf16.mxu0 0
  %4094 = vmatpush1.bf16.xpose.msra.mxu0 0
  %4095 = vmatprep.subr.bf16.mxu0 0
  %4096 = vmatpush1.bf16.xpose.msra.mxu0 0
  %4097 = vmatprep.subr.bf16.mxu0 0
  %4098 = vmatpush1.bf16.xpose.msra.mxu0 0
  %4099 = vmatprep.subr.bf16.mxu0 0
  %4100 = vmatpush1.bf16.xpose.msra.mxu0 0
  %4101 = vmatprep.subr.bf16.mxu0 0
  %4102 = vmatpush1.bf16.xpose.msra.mxu0 0
  %4103 = vmatprep.subr.bf16.mxu0 0
  %4104 = vmatpush1.bf16.xpose.msra.mxu0 0
  %4105 = vmatprep.subr.bf16.mxu0 0
  %4106 = vmatpush1.bf16.xpose.msra.mxu0 0
  %4107 = vmatprep.mubr.bf16.mxu0 0
  %4108 = vmatmul.mubr.bf16.gmra.mrb[0].mxu0 %v2984
  %v4109 = vpop.f32.mrb[0].mxu0
  %v4110 = vadd.f32 0.0, %v4109
  %v4111 = vpop.f32.mrb[0].mxu0
  %v4112 = vpop.f32.mrb[0].mxu0
  %v4113 = vpop.f32.mrb[0].mxu0
  %4114 = vdwg.mxu0
  %v4116 = vsel %vm2384, %v2350, 0
  %4118 = vmatprep.subr.bf16.mxu0 0
  %4119 = vmatpush1.bf16.xpose.msra.mxu0 %v4116
  %4120 = vmatprep.subr.bf16.mxu0 0
  %4121 = vmatpush1.bf16.xpose.msra.mxu0 0
  %4122 = vmatprep.subr.bf16.mxu0 0
  %4123 = vmatpush1.bf16.xpose.msra.mxu0 0
  %4124 = vmatprep.subr.bf16.mxu0 0
  %4125 = vmatpush1.bf16.xpose.msra.mxu0 0
  %4126 = vmatprep.subr.bf16.mxu0 0
  %4127 = vmatpush1.bf16.xpose.msra.mxu0 0
  %4128 = vmatprep.subr.bf16.mxu0 0
  %4129 = vmatpush1.bf16.xpose.msra.mxu0 0
  %4130 = vmatprep.subr.bf16.mxu0 0
  %4131 = vmatpush1.bf16.xpose.msra.mxu0 0
  %4132 = vmatprep.subr.bf16.mxu0 0
  %4133 = vmatpush1.bf16.xpose.msra.mxu0 0
  %4134 = vmatprep.subr.bf16.mxu0 0
  %4135 = vmatpush1.bf16.xpose.msra.mxu0 0
  %4136 = vmatprep.subr.bf16.mxu0 0
  %4137 = vmatpush1.bf16.xpose.msra.mxu0 0
  %4138 = vmatprep.subr.bf16.mxu0 0
  %4139 = vmatpush1.bf16.xpose.msra.mxu0 0
  %4140 = vmatprep.subr.bf16.mxu0 0
  %4141 = vmatpush1.bf16.xpose.msra.mxu0 0
  %4142 = vmatprep.subr.bf16.mxu0 0
  %4143 = vmatpush1.bf16.xpose.msra.mxu0 0
  %4144 = vmatprep.subr.bf16.mxu0 0
  %4145 = vmatpush1.bf16.xpose.msra.mxu0 0
  %4146 = vmatprep.subr.bf16.mxu0 0
  %4147 = vmatpush1.bf16.xpose.msra.mxu0 0
  %4148 = vmatprep.subr.bf16.mxu0 0
  %4149 = vmatpush1.bf16.xpose.msra.mxu0 0
  %4150 = vmatprep.mubr.bf16.mxu0 0
  %4151 = vmatmul.mubr.bf16.gmra.mrb[0].mxu0 %v3030
  %v4152 = vpop.f32.mrb[0].mxu0
  %v4153 = vadd.f32 0.0, %v4152
  %v4154 = vpop.f32.mrb[0].mxu0
  %v4155 = vpop.f32.mrb[0].mxu0
  %v4156 = vpop.f32.mrb[0].mxu0
  %4157 = vdwg.mxu0
  %v4159 = vsel %vm2384, %v2351, 0
  %4161 = vmatprep.subr.bf16.mxu0 0
  %4162 = vmatpush1.bf16.xpose.msra.mxu0 %v4159
  %4163 = vmatprep.subr.bf16.mxu0 0
  %4164 = vmatpush1.bf16.xpose.msra.mxu0 0
  %4165 = vmatprep.subr.bf16.mxu0 0
  %4166 = vmatpush1.bf16.xpose.msra.mxu0 0
  %4167 = vmatprep.subr.bf16.mxu0 0
  %4168 = vmatpush1.bf16.xpose.msra.mxu0 0
  %4169 = vmatprep.subr.bf16.mxu0 0
  %4170 = vmatpush1.bf16.xpose.msra.mxu0 0
  %4171 = vmatprep.subr.bf16.mxu0 0
  %4172 = vmatpush1.bf16.xpose.msra.mxu0 0
  %4173 = vmatprep.subr.bf16.mxu0 0
  %4174 = vmatpush1.bf16.xpose.msra.mxu0 0
  %4175 = vmatprep.subr.bf16.mxu0 0
  %4176 = vmatpush1.bf16.xpose.msra.mxu0 0
  %4177 = vmatprep.subr.bf16.mxu0 0
  %4178 = vmatpush1.bf16.xpose.msra.mxu0 0
  %4179 = vmatprep.subr.bf16.mxu0 0
  %4180 = vmatpush1.bf16.xpose.msra.mxu0 0
  %4181 = vmatprep.subr.bf16.mxu0 0
  %4182 = vmatpush1.bf16.xpose.msra.mxu0 0
  %4183 = vmatprep.subr.bf16.mxu0 0
  %4184 = vmatpush1.bf16.xpose.msra.mxu0 0
  %4185 = vmatprep.subr.bf16.mxu0 0
  %4186 = vmatpush1.bf16.xpose.msra.mxu0 0
  %4187 = vmatprep.subr.bf16.mxu0 0
  %4188 = vmatpush1.bf16.xpose.msra.mxu0 0
  %4189 = vmatprep.subr.bf16.mxu0 0
  %4190 = vmatpush1.bf16.xpose.msra.mxu0 0
  %4191 = vmatprep.subr.bf16.mxu0 0
  %4192 = vmatpush1.bf16.xpose.msra.mxu0 0
  %4193 = vmatprep.mubr.bf16.mxu0 0
  %4194 = vmatmul.mubr.bf16.gmra.mrb[0].mxu0 %v3076
  %v4195 = vpop.f32.mrb[0].mxu0
  %v4196 = vadd.f32 0.0, %v4195
  %v4197 = vpop.f32.mrb[0].mxu0
  %v4198 = vpop.f32.mrb[0].mxu0
  %v4199 = vpop.f32.mrb[0].mxu0
  %4200 = vdwg.mxu0
  %v4202 = vsel %vm2384, %v2352, 0
  %4204 = vmatprep.subr.bf16.mxu0 0
  %4205 = vmatpush1.bf16.xpose.msra.mxu0 %v4202
  %4206 = vmatprep.subr.bf16.mxu0 0
  %4207 = vmatpush1.bf16.xpose.msra.mxu0 0
  %4208 = vmatprep.subr.bf16.mxu0 0
  %4209 = vmatpush1.bf16.xpose.msra.mxu0 0
  %4210 = vmatprep.subr.bf16.mxu0 0
  %4211 = vmatpush1.bf16.xpose.msra.mxu0 0
  %4212 = vmatprep.subr.bf16.mxu0 0
  %4213 = vmatpush1.bf16.xpose.msra.mxu0 0
  %4214 = vmatprep.subr.bf16.mxu0 0
  %4215 = vmatpush1.bf16.xpose.msra.mxu0 0
  %4216 = vmatprep.subr.bf16.mxu0 0
  %4217 = vmatpush1.bf16.xpose.msra.mxu0 0
  %4218 = vmatprep.subr.bf16.mxu0 0
  %4219 = vmatpush1.bf16.xpose.msra.mxu0 0
  %4220 = vmatprep.subr.bf16.mxu0 0
  %4221 = vmatpush1.bf16.xpose.msra.mxu0 0
  %4222 = vmatprep.subr.bf16.mxu0 0
  %4223 = vmatpush1.bf16.xpose.msra.mxu0 0
  %4224 = vmatprep.subr.bf16.mxu0 0
  %4225 = vmatpush1.bf16.xpose.msra.mxu0 0
  %4226 = vmatprep.subr.bf16.mxu0 0
  %4227 = vmatpush1.bf16.xpose.msra.mxu0 0
  %4228 = vmatprep.subr.bf16.mxu0 0
  %4229 = vmatpush1.bf16.xpose.msra.mxu0 0
  %4230 = vmatprep.subr.bf16.mxu0 0
  %4231 = vmatpush1.bf16.xpose.msra.mxu0 0
  %4232 = vmatprep.subr.bf16.mxu0 0
  %4233 = vmatpush1.bf16.xpose.msra.mxu0 0
  %4234 = vmatprep.subr.bf16.mxu0 0
  %4235 = vmatpush1.bf16.xpose.msra.mxu0 0
  %4236 = vmatprep.mubr.bf16.mxu0 0
  %4237 = vmatmul.mubr.bf16.gmra.mrb[0].mxu0 %v3122
  %v4238 = vpop.f32.mrb[0].mxu0
  %v4239 = vadd.f32 0.0, %v4238
  %v4240 = vpop.f32.mrb[0].mxu0
  %v4241 = vpop.f32.mrb[0].mxu0
  %v4242 = vpop.f32.mrb[0].mxu0
  %4243 = vdwg.mxu0
  %v4245 = vsel %vm2384, %v2353, 0
  %4247 = vmatprep.subr.bf16.mxu0 0
  %4248 = vmatpush1.bf16.xpose.msra.mxu0 %v4245
  %4249 = vmatprep.subr.bf16.mxu0 0
  %4250 = vmatpush1.bf16.xpose.msra.mxu0 0
  %4251 = vmatprep.subr.bf16.mxu0 0
  %4252 = vmatpush1.bf16.xpose.msra.mxu0 0
  %4253 = vmatprep.subr.bf16.mxu0 0
  %4254 = vmatpush1.bf16.xpose.msra.mxu0 0
  %4255 = vmatprep.subr.bf16.mxu0 0
  %4256 = vmatpush1.bf16.xpose.msra.mxu0 0
  %4257 = vmatprep.subr.bf16.mxu0 0
  %4258 = vmatpush1.bf16.xpose.msra.mxu0 0
  %4259 = vmatprep.subr.bf16.mxu0 0
  %4260 = vmatpush1.bf16.xpose.msra.mxu0 0
  %4261 = vmatprep.subr.bf16.mxu0 0
  %4262 = vmatpush1.bf16.xpose.msra.mxu0 0
  %4263 = vmatprep.subr.bf16.mxu0 0
  %4264 = vmatpush1.bf16.xpose.msra.mxu0 0
  %4265 = vmatprep.subr.bf16.mxu0 0
  %4266 = vmatpush1.bf16.xpose.msra.mxu0 0
  %4267 = vmatprep.subr.bf16.mxu0 0
  %4268 = vmatpush1.bf16.xpose.msra.mxu0 0
  %4269 = vmatprep.subr.bf16.mxu0 0
  %4270 = vmatpush1.bf16.xpose.msra.mxu0 0
  %4271 = vmatprep.subr.bf16.mxu0 0
  %4272 = vmatpush1.bf16.xpose.msra.mxu0 0
  %4273 = vmatprep.subr.bf16.mxu0 0
  %4274 = vmatpush1.bf16.xpose.msra.mxu0 0
  %4275 = vmatprep.subr.bf16.mxu0 0
  %4276 = vmatpush1.bf16.xpose.msra.mxu0 0
  %4277 = vmatprep.subr.bf16.mxu0 0
  %4278 = vmatpush1.bf16.xpose.msra.mxu0 0
  %4279 = vmatprep.mubr.bf16.mxu0 0
  %4280 = vmatmul.mubr.bf16.gmra.mrb[0].mxu0 %v3168
  %v4281 = vpop.f32.mrb[0].mxu0
  %v4282 = vadd.f32 0.0, %v4281
  %v4283 = vpop.f32.mrb[0].mxu0
  %v4284 = vpop.f32.mrb[0].mxu0
  %v4285 = vpop.f32.mrb[0].mxu0
  %4286 = vdwg.mxu0
  %v4288 = vsel %vm2384, %v2354, 0
  %4290 = vmatprep.subr.bf16.mxu0 0
  %4291 = vmatpush1.bf16.xpose.msra.mxu0 %v4288
  %4292 = vmatprep.subr.bf16.mxu0 0
  %4293 = vmatpush1.bf16.xpose.msra.mxu0 0
  %4294 = vmatprep.subr.bf16.mxu0 0
  %4295 = vmatpush1.bf16.xpose.msra.mxu0 0
  %4296 = vmatprep.subr.bf16.mxu0 0
  %4297 = vmatpush1.bf16.xpose.msra.mxu0 0
  %4298 = vmatprep.subr.bf16.mxu0 0
  %4299 = vmatpush1.bf16.xpose.msra.mxu0 0
  %4300 = vmatprep.subr.bf16.mxu0 0
  %4301 = vmatpush1.bf16.xpose.msra.mxu0 0
  %4302 = vmatprep.subr.bf16.mxu0 0
  %4303 = vmatpush1.bf16.xpose.msra.mxu0 0
  %4304 = vmatprep.subr.bf16.mxu0 0
  %4305 = vmatpush1.bf16.xpose.msra.mxu0 0
  %4306 = vmatprep.subr.bf16.mxu0 0
  %4307 = vmatpush1.bf16.xpose.msra.mxu0 0
  %4308 = vmatprep.subr.bf16.mxu0 0
  %4309 = vmatpush1.bf16.xpose.msra.mxu0 0
  %4310 = vmatprep.subr.bf16.mxu0 0
  %4311 = vmatpush1.bf16.xpose.msra.mxu0 0
  %4312 = vmatprep.subr.bf16.mxu0 0
  %4313 = vmatpush1.bf16.xpose.msra.mxu0 0
  %4314 = vmatprep.subr.bf16.mxu0 0
  %4315 = vmatpush1.bf16.xpose.msra.mxu0 0
  %4316 = vmatprep.subr.bf16.mxu0 0
  %4317 = vmatpush1.bf16.xpose.msra.mxu0 0
  %4318 = vmatprep.subr.bf16.mxu0 0
  %4319 = vmatpush1.bf16.xpose.msra.mxu0 0
  %4320 = vmatprep.subr.bf16.mxu0 0
  %4321 = vmatpush1.bf16.xpose.msra.mxu0 0
  %4322 = vmatprep.mubr.bf16.mxu0 0
  %4323 = vmatmul.mubr.bf16.gmra.mrb[0].mxu0 %v3214
  %v4324 = vpop.f32.mrb[0].mxu0
  %v4325 = vadd.f32 0.0, %v4324
  %v4326 = vpop.f32.mrb[0].mxu0
  %v4327 = vpop.f32.mrb[0].mxu0
  %v4328 = vpop.f32.mrb[0].mxu0
  %4329 = vdwg.mxu0
  %v4331 = vsel %vm2384, %v2355, 0
  %4333 = vmatprep.subr.bf16.mxu0 0
  %4334 = vmatpush1.bf16.xpose.msra.mxu0 %v4331
  %4335 = vmatprep.subr.bf16.mxu0 0
  %4336 = vmatpush1.bf16.xpose.msra.mxu0 0
  %4337 = vmatprep.subr.bf16.mxu0 0
  %4338 = vmatpush1.bf16.xpose.msra.mxu0 0
  %4339 = vmatprep.subr.bf16.mxu0 0
  %4340 = vmatpush1.bf16.xpose.msra.mxu0 0
  %4341 = vmatprep.subr.bf16.mxu0 0
  %4342 = vmatpush1.bf16.xpose.msra.mxu0 0
  %4343 = vmatprep.subr.bf16.mxu0 0
  %4344 = vmatpush1.bf16.xpose.msra.mxu0 0
  %4345 = vmatprep.subr.bf16.mxu0 0
  %4346 = vmatpush1.bf16.xpose.msra.mxu0 0
  %4347 = vmatprep.subr.bf16.mxu0 0
  %4348 = vmatpush1.bf16.xpose.msra.mxu0 0
  %4349 = vmatprep.subr.bf16.mxu0 0
  %4350 = vmatpush1.bf16.xpose.msra.mxu0 0
  %4351 = vmatprep.subr.bf16.mxu0 0
  %4352 = vmatpush1.bf16.xpose.msra.mxu0 0
  %4353 = vmatprep.subr.bf16.mxu0 0
  %4354 = vmatpush1.bf16.xpose.msra.mxu0 0
  %4355 = vmatprep.subr.bf16.mxu0 0
  %4356 = vmatpush1.bf16.xpose.msra.mxu0 0
  %4357 = vmatprep.subr.bf16.mxu0 0
  %4358 = vmatpush1.bf16.xpose.msra.mxu0 0
  %4359 = vmatprep.subr.bf16.mxu0 0
  %4360 = vmatpush1.bf16.xpose.msra.mxu0 0
  %4361 = vmatprep.subr.bf16.mxu0 0
  %4362 = vmatpush1.bf16.xpose.msra.mxu0 0
  %4363 = vmatprep.subr.bf16.mxu0 0
  %4364 = vmatpush1.bf16.xpose.msra.mxu0 0
  %4365 = vmatprep.mubr.bf16.mxu0 0
  %4366 = vmatmul.mubr.bf16.gmra.mrb[0].mxu0 %v3260
  %v4367 = vpop.f32.mrb[0].mxu0
  %v4368 = vadd.f32 0.0, %v4367
  %v4369 = vpop.f32.mrb[0].mxu0
  %v4370 = vpop.f32.mrb[0].mxu0
  %v4371 = vpop.f32.mrb[0].mxu0
  %4372 = vdwg.mxu0
  %v4374 = vsel %vm2384, %v2356, 0
  %4376 = vmatprep.subr.bf16.mxu0 0
  %4377 = vmatpush1.bf16.xpose.msra.mxu0 %v4374
  %4378 = vmatprep.subr.bf16.mxu0 0
  %4379 = vmatpush1.bf16.xpose.msra.mxu0 0
  %4380 = vmatprep.subr.bf16.mxu0 0
  %4381 = vmatpush1.bf16.xpose.msra.mxu0 0
  %4382 = vmatprep.subr.bf16.mxu0 0
  %4383 = vmatpush1.bf16.xpose.msra.mxu0 0
  %4384 = vmatprep.subr.bf16.mxu0 0
  %4385 = vmatpush1.bf16.xpose.msra.mxu0 0
  %4386 = vmatprep.subr.bf16.mxu0 0
  %4387 = vmatpush1.bf16.xpose.msra.mxu0 0
  %4388 = vmatprep.subr.bf16.mxu0 0
  %4389 = vmatpush1.bf16.xpose.msra.mxu0 0
  %4390 = vmatprep.subr.bf16.mxu0 0
  %4391 = vmatpush1.bf16.xpose.msra.mxu0 0
  %4392 = vmatprep.subr.bf16.mxu0 0
  %4393 = vmatpush1.bf16.xpose.msra.mxu0 0
  %4394 = vmatprep.subr.bf16.mxu0 0
  %4395 = vmatpush1.bf16.xpose.msra.mxu0 0
  %4396 = vmatprep.subr.bf16.mxu0 0
  %4397 = vmatpush1.bf16.xpose.msra.mxu0 0
  %4398 = vmatprep.subr.bf16.mxu0 0
  %4399 = vmatpush1.bf16.xpose.msra.mxu0 0
  %4400 = vmatprep.subr.bf16.mxu0 0
  %4401 = vmatpush1.bf16.xpose.msra.mxu0 0
  %4402 = vmatprep.subr.bf16.mxu0 0
  %4403 = vmatpush1.bf16.xpose.msra.mxu0 0
  %4404 = vmatprep.subr.bf16.mxu0 0
  %4405 = vmatpush1.bf16.xpose.msra.mxu0 0
  %4406 = vmatprep.subr.bf16.mxu0 0
  %4407 = vmatpush1.bf16.xpose.msra.mxu0 0
  %4408 = vmatprep.mubr.bf16.mxu0 0
  %4409 = vmatmul.mubr.bf16.gmra.mrb[0].mxu0 %v3306
  %v4410 = vpop.f32.mrb[0].mxu0
  %v4411 = vadd.f32 0.0, %v4410
  %v4412 = vpop.f32.mrb[0].mxu0
  %v4413 = vpop.f32.mrb[0].mxu0
  %v4414 = vpop.f32.mrb[0].mxu0
  %4415 = vdwg.mxu0
  %v4417 = vsel %vm2384, %v2357, 0
  %4419 = vmatprep.subr.bf16.mxu0 0
  %4420 = vmatpush1.bf16.xpose.msra.mxu0 %v4417
  %4421 = vmatprep.subr.bf16.mxu0 0
  %4422 = vmatpush1.bf16.xpose.msra.mxu0 0
  %4423 = vmatprep.subr.bf16.mxu0 0
  %4424 = vmatpush1.bf16.xpose.msra.mxu0 0
  %4425 = vmatprep.subr.bf16.mxu0 0
  %4426 = vmatpush1.bf16.xpose.msra.mxu0 0
  %4427 = vmatprep.subr.bf16.mxu0 0
  %4428 = vmatpush1.bf16.xpose.msra.mxu0 0
  %4429 = vmatprep.subr.bf16.mxu0 0
  %4430 = vmatpush1.bf16.xpose.msra.mxu0 0
  %4431 = vmatprep.subr.bf16.mxu0 0
  %4432 = vmatpush1.bf16.xpose.msra.mxu0 0
  %4433 = vmatprep.subr.bf16.mxu0 0
  %4434 = vmatpush1.bf16.xpose.msra.mxu0 0
  %4435 = vmatprep.subr.bf16.mxu0 0
  %4436 = vmatpush1.bf16.xpose.msra.mxu0 0
  %4437 = vmatprep.subr.bf16.mxu0 0
  %4438 = vmatpush1.bf16.xpose.msra.mxu0 0
  %4439 = vmatprep.subr.bf16.mxu0 0
  %4440 = vmatpush1.bf16.xpose.msra.mxu0 0
  %4441 = vmatprep.subr.bf16.mxu0 0
  %4442 = vmatpush1.bf16.xpose.msra.mxu0 0
  %4443 = vmatprep.subr.bf16.mxu0 0
  %4444 = vmatpush1.bf16.xpose.msra.mxu0 0
  %4445 = vmatprep.subr.bf16.mxu0 0
  %4446 = vmatpush1.bf16.xpose.msra.mxu0 0
  %4447 = vmatprep.subr.bf16.mxu0 0
  %4448 = vmatpush1.bf16.xpose.msra.mxu0 0
  %4449 = vmatprep.subr.bf16.mxu0 0
  %4450 = vmatpush1.bf16.xpose.msra.mxu0 0
  %4451 = vmatprep.mubr.bf16.mxu0 0
  %4452 = vmatmul.mubr.bf16.gmra.mrb[0].mxu0 %v3352
  %v4453 = vpop.f32.mrb[0].mxu0
  %v4454 = vadd.f32 0.0, %v4453
  %v4455 = vpop.f32.mrb[0].mxu0
  %v4456 = vpop.f32.mrb[0].mxu0
  %v4457 = vpop.f32.mrb[0].mxu0
  %4458 = vdwg.mxu0
  %v4460 = vsel %vm2384, %v2358, 0
  %4462 = vmatprep.subr.bf16.mxu0 0
  %4463 = vmatpush1.bf16.xpose.msra.mxu0 %v4460
  %4464 = vmatprep.subr.bf16.mxu0 0
  %4465 = vmatpush1.bf16.xpose.msra.mxu0 0
  %4466 = vmatprep.subr.bf16.mxu0 0
  %4467 = vmatpush1.bf16.xpose.msra.mxu0 0
  %4468 = vmatprep.subr.bf16.mxu0 0
  %4469 = vmatpush1.bf16.xpose.msra.mxu0 0
  %4470 = vmatprep.subr.bf16.mxu0 0
  %4471 = vmatpush1.bf16.xpose.msra.mxu0 0
  %4472 = vmatprep.subr.bf16.mxu0 0
  %4473 = vmatpush1.bf16.xpose.msra.mxu0 0
  %4474 = vmatprep.subr.bf16.mxu0 0
  %4475 = vmatpush1.bf16.xpose.msra.mxu0 0
  %4476 = vmatprep.subr.bf16.mxu0 0
  %4477 = vmatpush1.bf16.xpose.msra.mxu0 0
  %4478 = vmatprep.subr.bf16.mxu0 0
  %4479 = vmatpush1.bf16.xpose.msra.mxu0 0
  %4480 = vmatprep.subr.bf16.mxu0 0
  %4481 = vmatpush1.bf16.xpose.msra.mxu0 0
  %4482 = vmatprep.subr.bf16.mxu0 0
  %4483 = vmatpush1.bf16.xpose.msra.mxu0 0
  %4484 = vmatprep.subr.bf16.mxu0 0
  %4485 = vmatpush1.bf16.xpose.msra.mxu0 0
  %4486 = vmatprep.subr.bf16.mxu0 0
  %4487 = vmatpush1.bf16.xpose.msra.mxu0 0
  %4488 = vmatprep.subr.bf16.mxu0 0
  %4489 = vmatpush1.bf16.xpose.msra.mxu0 0
  %4490 = vmatprep.subr.bf16.mxu0 0
  %4491 = vmatpush1.bf16.xpose.msra.mxu0 0
  %4492 = vmatprep.subr.bf16.mxu0 0
  %4493 = vmatpush1.bf16.xpose.msra.mxu0 0
  %4494 = vmatprep.mubr.bf16.mxu0 0
  %4495 = vmatmul.mubr.bf16.gmra.mrb[0].mxu0 %v3398
  %v4496 = vpop.f32.mrb[0].mxu0
  %v4497 = vadd.f32 0.0, %v4496
  %v4498 = vpop.f32.mrb[0].mxu0
  %v4499 = vpop.f32.mrb[0].mxu0
  %v4500 = vpop.f32.mrb[0].mxu0
  %4501 = vdwg.mxu0
  %v4503 = vsel %vm2384, %v2359, 0
  %4505 = vmatprep.subr.bf16.mxu0 0
  %4506 = vmatpush1.bf16.xpose.msra.mxu0 %v4503
  %4507 = vmatprep.subr.bf16.mxu0 0
  %4508 = vmatpush1.bf16.xpose.msra.mxu0 0
  %4509 = vmatprep.subr.bf16.mxu0 0
  %4510 = vmatpush1.bf16.xpose.msra.mxu0 0
  %4511 = vmatprep.subr.bf16.mxu0 0
  %4512 = vmatpush1.bf16.xpose.msra.mxu0 0
  %4513 = vmatprep.subr.bf16.mxu0 0
  %4514 = vmatpush1.bf16.xpose.msra.mxu0 0
  %4515 = vmatprep.subr.bf16.mxu0 0
  %4516 = vmatpush1.bf16.xpose.msra.mxu0 0
  %4517 = vmatprep.subr.bf16.mxu0 0
  %4518 = vmatpush1.bf16.xpose.msra.mxu0 0
  %4519 = vmatprep.subr.bf16.mxu0 0
  %4520 = vmatpush1.bf16.xpose.msra.mxu0 0
  %4521 = vmatprep.subr.bf16.mxu0 0
  %4522 = vmatpush1.bf16.xpose.msra.mxu0 0
  %4523 = vmatprep.subr.bf16.mxu0 0
  %4524 = vmatpush1.bf16.xpose.msra.mxu0 0
  %4525 = vmatprep.subr.bf16.mxu0 0
  %4526 = vmatpush1.bf16.xpose.msra.mxu0 0
  %4527 = vmatprep.subr.bf16.mxu0 0
  %4528 = vmatpush1.bf16.xpose.msra.mxu0 0
  %4529 = vmatprep.subr.bf16.mxu0 0
  %4530 = vmatpush1.bf16.xpose.msra.mxu0 0
  %4531 = vmatprep.subr.bf16.mxu0 0
  %4532 = vmatpush1.bf16.xpose.msra.mxu0 0
  %4533 = vmatprep.subr.bf16.mxu0 0
  %4534 = vmatpush1.bf16.xpose.msra.mxu0 0
  %4535 = vmatprep.subr.bf16.mxu0 0
  %4536 = vmatpush1.bf16.xpose.msra.mxu0 0
  %4537 = vmatprep.mubr.bf16.mxu0 0
  %4538 = vmatmul.mubr.bf16.gmra.mrb[0].mxu0 %v3444
  %v4539 = vpop.f32.mrb[0].mxu0
  %v4540 = vadd.f32 0.0, %v4539
  %v4541 = vpop.f32.mrb[0].mxu0
  %v4542 = vpop.f32.mrb[0].mxu0
  %v4543 = vpop.f32.mrb[0].mxu0
  %4544 = vdwg.mxu0
  %v4545 = vmul.f32 %v3551, 0.35355338
  %v4546 = vmul.f32 %v3594, 0.35355338
  %v4547 = vmul.f32 %v3637, 0.35355338
  %v4548 = vmul.f32 %v3680, 0.35355338
  %v4549 = vmul.f32 %v3723, 0.35355338
  %v4550 = vmul.f32 %v3766, 0.35355338
  %v4551 = vmul.f32 %v3809, 0.35355338
  %v4552 = vmul.f32 %v3852, 0.35355338
  %v4553 = vmul.f32 %v3895, 0.35355338
  %v4554 = vmul.f32 %v3938, 0.35355338
  %v4555 = vmul.f32 %v3981, 0.35355338
  %v4556 = vmul.f32 %v4024, 0.35355338
  %v4557 = vmul.f32 %v4067, 0.35355338
  %v4558 = vmul.f32 %v4110, 0.35355338
  %v4559 = vmul.f32 %v4153, 0.35355338
  %v4560 = vmul.f32 %v4196, 0.35355338
  %v4561 = vmul.f32 %v4239, 0.35355338
  %v4562 = vmul.f32 %v4282, 0.35355338
  %v4563 = vmul.f32 %v4325, 0.35355338
  %v4564 = vmul.f32 %v4368, 0.35355338
  %v4565 = vmul.f32 %v4411, 0.35355338
  %v4566 = vmul.f32 %v4454, 0.35355338
  %v4567 = vmul.f32 %v4497, 0.35355338
  %v4568 = vmul.f32 %v4540, 0.35355338
  %v4569 = vsel %vm2384, %v3489, -inf
  %4570 = vmax.xlane.f32.xlu0 %v4569
  %v4571 = vpop.xlane.xlu0 %4570
  %v4572 = vsel %vm2384, %v3490, -inf
  %4573 = vmax.xlane.f32.xlu0 %v4572
  %v4574 = vpop.xlane.xlu0 %4573
  %v4575 = vsel %vm2384, %v3491, -inf
  %4576 = vmax.xlane.f32.xlu0 %v4575
  %v4577 = vpop.xlane.xlu0 %4576
  %v4578 = vsel %vm2384, %v3492, -inf
  %4579 = vmax.xlane.f32.xlu0 %v4578
  %v4580 = vpop.xlane.xlu0 %4579
  %v4581 = vsel %vm2384, %v3493, -inf
  %4582 = vmax.xlane.f32.xlu0 %v4581
  %v4583 = vpop.xlane.xlu0 %4582
  %v4584 = vsel %vm2384, %v3494, -inf
  %4585 = vmax.xlane.f32.xlu0 %v4584
  %v4586 = vpop.xlane.xlu0 %4585
  %v4587 = vsel %vm2384, %v3495, -inf
  %4588 = vmax.xlane.f32.xlu0 %v4587
  %v4589 = vpop.xlane.xlu0 %4588
  %v4590 = vsel %vm2384, %v3496, -inf
  %4591 = vmax.xlane.f32.xlu0 %v4590
  %v4592 = vpop.xlane.xlu0 %4591
  %v4593 = vsel %vm2384, %v3497, -inf
  %4594 = vmax.xlane.f32.xlu0 %v4593
  %v4595 = vpop.xlane.xlu0 %4594
  %v4596 = vsel %vm2384, %v3498, -inf
  %4597 = vmax.xlane.f32.xlu0 %v4596
  %v4598 = vpop.xlane.xlu0 %4597
  %v4599 = vsel %vm2384, %v3499, -inf
  %4600 = vmax.xlane.f32.xlu0 %v4599
  %v4601 = vpop.xlane.xlu0 %4600
  %v4602 = vsel %vm2384, %v3500, -inf
  %4603 = vmax.xlane.f32.xlu0 %v4602
  %v4604 = vpop.xlane.xlu0 %4603
  %v4605 = vsel %vm2384, %v3501, -inf
  %4606 = vmax.xlane.f32.xlu0 %v4605
  %v4607 = vpop.xlane.xlu0 %4606
  %v4608 = vsel %vm2384, %v3502, -inf
  %4609 = vmax.xlane.f32.xlu0 %v4608
  %v4610 = vpop.xlane.xlu0 %4609
  %v4611 = vsel %vm2384, %v3503, -inf
  %4612 = vmax.xlane.f32.xlu0 %v4611
  %v4613 = vpop.xlane.xlu0 %4612
  %v4614 = vsel %vm2384, %v3504, -inf
  %4615 = vmax.xlane.f32.xlu0 %v4614
  %v4616 = vpop.xlane.xlu0 %4615
  %v4617 = vsel %vm2384, %v3505, -inf
  %4618 = vmax.xlane.f32.xlu0 %v4617
  %v4619 = vpop.xlane.xlu0 %4618
  %v4620 = vsel %vm2384, %v3506, -inf
  %4621 = vmax.xlane.f32.xlu0 %v4620
  %v4622 = vpop.xlane.xlu0 %4621
  %v4623 = vsel %vm2384, %v3507, -inf
  %4624 = vmax.xlane.f32.xlu0 %v4623
  %v4625 = vpop.xlane.xlu0 %4624
  %v4626 = vsel %vm2384, %v3508, -inf
  %4627 = vmax.xlane.f32.xlu0 %v4626
  %v4628 = vpop.xlane.xlu0 %4627
  %v4629 = vsel %vm2384, %v3509, -inf
  %4630 = vmax.xlane.f32.xlu0 %v4629
  %v4631 = vpop.xlane.xlu0 %4630
  %v4632 = vsel %vm2384, %v3510, -inf
  %4633 = vmax.xlane.f32.xlu0 %v4632
  %v4634 = vpop.xlane.xlu0 %4633
  %v4635 = vsel %vm2384, %v3511, -inf
  %4636 = vmax.xlane.f32.xlu0 %v4635
  %v4637 = vpop.xlane.xlu0 %4636
  %v4638 = vsel %vm2384, %v3512, -inf
  %4639 = vmax.xlane.f32.xlu0 %v4638
  %v4640 = vpop.xlane.xlu0 %4639
  %v4641 = vsel %vm2384, %v4545, -inf
  %4642 = vmax.xlane.f32.xlu0 %v4641
  %v4643 = vpop.xlane.xlu0 %4642
  %v4644 = vsel %vm2384, %v4546, -inf
  %4645 = vmax.xlane.f32.xlu0 %v4644
  %v4646 = vpop.xlane.xlu0 %4645
  %v4647 = vsel %vm2384, %v4547, -inf
  %4648 = vmax.xlane.f32.xlu0 %v4647
  %v4649 = vpop.xlane.xlu0 %4648
  %v4650 = vsel %vm2384, %v4548, -inf
  %4651 = vmax.xlane.f32.xlu0 %v4650
  %v4652 = vpop.xlane.xlu0 %4651
  %v4653 = vsel %vm2384, %v4549, -inf
  %4654 = vmax.xlane.f32.xlu0 %v4653
  %v4655 = vpop.xlane.xlu0 %4654
  %v4656 = vsel %vm2384, %v4550, -inf
  %4657 = vmax.xlane.f32.xlu0 %v4656
  %v4658 = vpop.xlane.xlu0 %4657
  %v4659 = vsel %vm2384, %v4551, -inf
  %4660 = vmax.xlane.f32.xlu0 %v4659
  %v4661 = vpop.xlane.xlu0 %4660
  %v4662 = vsel %vm2384, %v4552, -inf
  %4663 = vmax.xlane.f32.xlu0 %v4662
  %v4664 = vpop.xlane.xlu0 %4663
  %v4665 = vsel %vm2384, %v4553, -inf
  %4666 = vmax.xlane.f32.xlu0 %v4665
  %v4667 = vpop.xlane.xlu0 %4666
  %v4668 = vsel %vm2384, %v4554, -inf
  %4669 = vmax.xlane.f32.xlu0 %v4668
  %v4670 = vpop.xlane.xlu0 %4669
  %v4671 = vsel %vm2384, %v4555, -inf
  %4672 = vmax.xlane.f32.xlu0 %v4671
  %v4673 = vpop.xlane.xlu0 %4672
  %v4674 = vsel %vm2384, %v4556, -inf
  %4675 = vmax.xlane.f32.xlu0 %v4674
  %v4676 = vpop.xlane.xlu0 %4675
  %v4677 = vsel %vm2384, %v4557, -inf
  %4678 = vmax.xlane.f32.xlu0 %v4677
  %v4679 = vpop.xlane.xlu0 %4678
  %v4680 = vsel %vm2384, %v4558, -inf
  %4681 = vmax.xlane.f32.xlu0 %v4680
  %v4682 = vpop.xlane.xlu0 %4681
  %v4683 = vsel %vm2384, %v4559, -inf
  %4684 = vmax.xlane.f32.xlu0 %v4683
  %v4685 = vpop.xlane.xlu0 %4684
  %v4686 = vsel %vm2384, %v4560, -inf
  %4687 = vmax.xlane.f32.xlu0 %v4686
  %v4688 = vpop.xlane.xlu0 %4687
  %v4689 = vsel %vm2384, %v4561, -inf
  %4690 = vmax.xlane.f32.xlu0 %v4689
  %v4691 = vpop.xlane.xlu0 %4690
  %v4692 = vsel %vm2384, %v4562, -inf
  %4693 = vmax.xlane.f32.xlu0 %v4692
  %v4694 = vpop.xlane.xlu0 %4693
  %v4695 = vsel %vm2384, %v4563, -inf
  %4696 = vmax.xlane.f32.xlu0 %v4695
  %v4697 = vpop.xlane.xlu0 %4696
  %v4698 = vsel %vm2384, %v4564, -inf
  %4699 = vmax.xlane.f32.xlu0 %v4698
  %v4700 = vpop.xlane.xlu0 %4699
  %v4701 = vsel %vm2384, %v4565, -inf
  %4702 = vmax.xlane.f32.xlu0 %v4701
  %v4703 = vpop.xlane.xlu0 %4702
  %v4704 = vsel %vm2384, %v4566, -inf
  %4705 = vmax.xlane.f32.xlu0 %v4704
  %v4706 = vpop.xlane.xlu0 %4705
  %v4707 = vsel %vm2384, %v4567, -inf
  %4708 = vmax.xlane.f32.xlu0 %v4707
  %v4709 = vpop.xlane.xlu0 %4708
  %v4710 = vsel %vm2384, %v4568, -inf
  %4711 = vmax.xlane.f32.xlu0 %v4710
  %v4712 = vpop.xlane.xlu0 %4711
  %v4713 = vmax.f32 %v4571, %v4643
  %v4714 = vmax.f32 %v4574, %v4646
  %v4715 = vmax.f32 %v4577, %v4649
  %v4716 = vmax.f32 %v4580, %v4652
  %v4717 = vmax.f32 %v4583, %v4655
  %v4718 = vmax.f32 %v4586, %v4658
  %v4719 = vmax.f32 %v4589, %v4661
  %v4720 = vmax.f32 %v4592, %v4664
  %v4721 = vmax.f32 %v4595, %v4667
  %v4722 = vmax.f32 %v4598, %v4670
  %v4723 = vmax.f32 %v4601, %v4673
  %v4724 = vmax.f32 %v4604, %v4676
  %v4725 = vmax.f32 %v4607, %v4679
  %v4726 = vmax.f32 %v4610, %v4682
  %v4727 = vmax.f32 %v4613, %v4685
  %v4728 = vmax.f32 %v4616, %v4688
  %v4729 = vmax.f32 %v4619, %v4691
  %v4730 = vmax.f32 %v4622, %v4694
  %v4731 = vmax.f32 %v4625, %v4697
  %v4732 = vmax.f32 %v4628, %v4700
  %v4733 = vmax.f32 %v4631, %v4703
  %v4734 = vmax.f32 %v4634, %v4706
  %v4735 = vmax.f32 %v4637, %v4709
  %v4736 = vmax.f32 %v4640, %v4712
  %v4737 = vld [vmem:[%s15] sm:$0x3f]
  %v4738 = vld [vmem:[%s16] sm:$0xf]
  %v4739 = vlaneseq
  %v4740 = vshrl.u32 %v4739, 7
  %v4741 = vsub.s32 0, %v4740
  %v4742 = vrot.slane %v4737, %v4741
  %4744 = vbcast.lane.b32.xlu0 %v4742, 256
  %v4745 = vpop.permute.xlu0 %4744
  %v4746 = vlaneseq
  %v4747 = vshrl.u32 %v4746, 7
  %v4748 = vsub.s32 1, %v4747
  %v4749 = vrot.slane %v4737, %v4748
  %4751 = vbcast.lane.b32.xlu0 %v4749, 256
  %v4752 = vpop.permute.xlu0 %4751
  %v4753 = vlaneseq
  %v4754 = vshrl.u32 %v4753, 7
  %v4755 = vsub.s32 2, %v4754
  %v4756 = vrot.slane %v4737, %v4755
  %4758 = vbcast.lane.b32.xlu0 %v4756, 256
  %v4759 = vpop.permute.xlu0 %4758
  %v4760 = vlaneseq
  %v4761 = vshrl.u32 %v4760, 7
  %v4762 = vsub.s32 3, %v4761
  %v4763 = vrot.slane %v4737, %v4762
  %4765 = vbcast.lane.b32.xlu0 %v4763, 256
  %v4766 = vpop.permute.xlu0 %4765
  %v4767 = vlaneseq
  %v4768 = vshrl.u32 %v4767, 7
  %v4769 = vsub.s32 4, %v4768
  %v4770 = vrot.slane %v4737, %v4769
  %4772 = vbcast.lane.b32.xlu0 %v4770, 256
  %v4773 = vpop.permute.xlu0 %4772
  %v4774 = vlaneseq
  %v4775 = vshrl.u32 %v4774, 7
  %v4776 = vsub.s32 5, %v4775
  %v4777 = vrot.slane %v4737, %v4776
  %4779 = vbcast.lane.b32.xlu0 %v4777, 256
  %v4780 = vpop.permute.xlu0 %4779
  %vm4781 = vcmp.gt.f32.partialorder %v4745, 0.5
  %vm4782 = vcmp.gt.f32.partialorder %v4752, 0.5
  %vm4783 = vcmp.gt.f32.partialorder %v4759, 0.5
  %vm4784 = vcmp.gt.f32.partialorder %v4766, 0.5
  %vm4785 = vcmp.gt.f32.partialorder %v4773, 0.5
  %vm4786 = vcmp.gt.f32.partialorder %v4780, 0.5
  %v4787 = vsel %vm4781, 1, 0
  %v4788 = vsel %vm4782, 1, 0
  %v4789 = vsel %vm4783, 1, 0
  %v4790 = vsel %vm4784, 1, 0
  %v4791 = vsel %vm4785, 1, 0
  %v4792 = vsel %vm4786, 1, 0
  %vm4793 = vcmp.eq.s32.totalorder %v4787, 1
  %vm4794 = vcmp.eq.s32.totalorder %v4788, 1
  %vm4795 = vcmp.eq.s32.totalorder %v4789, 1
  %vm4796 = vcmp.eq.s32.totalorder %v4790, 1
  %vm4797 = vcmp.eq.s32.totalorder %v4791, 1
  %vm4798 = vcmp.eq.s32.totalorder %v4792, 1
  %v4823 = vlaneseq
  %v4824 = vand.u32 %v4823, 127
  %v4825 = vlaneseq
  %v4826 = vshrl.u32 %v4825, 7
  %v4827 = vsub.s32 %v4824, %v4826
  %v4828 = vrot.slane %v4713, %v4827
  %v4829 = vlaneseq
  %v4830 = vshrl.u32 %v4829, 7
  %v4831 = vsub.s32 %v4824, %v4830
  %v4832 = vrot.slane %v4714, %v4831
  %v4833 = vlaneseq
  %v4834 = vshrl.u32 %v4833, 7
  %v4835 = vsub.s32 %v4824, %v4834
  %v4836 = vrot.slane %v4715, %v4835
  %v4837 = vlaneseq
  %v4838 = vshrl.u32 %v4837, 7
  %v4839 = vsub.s32 %v4824, %v4838
  %v4840 = vrot.slane %v4716, %v4839
  %v4841 = vlaneseq
  %v4842 = vshrl.u32 %v4841, 7
  %v4843 = vsub.s32 %v4824, %v4842
  %v4844 = vrot.slane %v4717, %v4843
  %v4845 = vlaneseq
  %v4846 = vshrl.u32 %v4845, 7
  %v4847 = vsub.s32 %v4824, %v4846
  %v4848 = vrot.slane %v4718, %v4847
  %v4849 = vlaneseq
  %v4850 = vshrl.u32 %v4849, 7
  %v4851 = vsub.s32 %v4824, %v4850
  %v4852 = vrot.slane %v4719, %v4851
  %v4853 = vlaneseq
  %v4854 = vshrl.u32 %v4853, 7
  %v4855 = vsub.s32 %v4824, %v4854
  %v4856 = vrot.slane %v4720, %v4855
  %v4857 = vlaneseq
  %v4858 = vshrl.u32 %v4857, 7
  %v4859 = vsub.s32 %v4824, %v4858
  %v4860 = vrot.slane %v4721, %v4859
  %v4861 = vlaneseq
  %v4862 = vshrl.u32 %v4861, 7
  %v4863 = vsub.s32 %v4824, %v4862
  %v4864 = vrot.slane %v4722, %v4863
  %v4865 = vlaneseq
  %v4866 = vshrl.u32 %v4865, 7
  %v4867 = vsub.s32 %v4824, %v4866
  %v4868 = vrot.slane %v4723, %v4867
  %v4869 = vlaneseq
  %v4870 = vshrl.u32 %v4869, 7
  %v4871 = vsub.s32 %v4824, %v4870
  %v4872 = vrot.slane %v4724, %v4871
  %v4873 = vlaneseq
  %v4874 = vshrl.u32 %v4873, 7
  %v4875 = vsub.s32 %v4824, %v4874
  %v4876 = vrot.slane %v4725, %v4875
  %v4877 = vlaneseq
  %v4878 = vshrl.u32 %v4877, 7
  %v4879 = vsub.s32 %v4824, %v4878
  %v4880 = vrot.slane %v4726, %v4879
  %v4881 = vlaneseq
  %v4882 = vshrl.u32 %v4881, 7
  %v4883 = vsub.s32 %v4824, %v4882
  %v4884 = vrot.slane %v4727, %v4883
  %v4885 = vlaneseq
  %v4886 = vshrl.u32 %v4885, 7
  %v4887 = vsub.s32 %v4824, %v4886
  %v4888 = vrot.slane %v4728, %v4887
  %v4889 = vlaneseq
  %v4890 = vshrl.u32 %v4889, 7
  %v4891 = vsub.s32 %v4824, %v4890
  %v4892 = vrot.slane %v4729, %v4891
  %v4893 = vlaneseq
  %v4894 = vshrl.u32 %v4893, 7
  %v4895 = vsub.s32 %v4824, %v4894
  %v4896 = vrot.slane %v4730, %v4895
  %v4897 = vlaneseq
  %v4898 = vshrl.u32 %v4897, 7
  %v4899 = vsub.s32 %v4824, %v4898
  %v4900 = vrot.slane %v4731, %v4899
  %v4901 = vlaneseq
  %v4902 = vshrl.u32 %v4901, 7
  %v4903 = vsub.s32 %v4824, %v4902
  %v4904 = vrot.slane %v4732, %v4903
  %v4905 = vlaneseq
  %v4906 = vshrl.u32 %v4905, 7
  %v4907 = vsub.s32 %v4824, %v4906
  %v4908 = vrot.slane %v4733, %v4907
  %v4909 = vlaneseq
  %v4910 = vshrl.u32 %v4909, 7
  %v4911 = vsub.s32 %v4824, %v4910
  %v4912 = vrot.slane %v4734, %v4911
  %v4913 = vlaneseq
  %v4914 = vshrl.u32 %v4913, 7
  %v4915 = vsub.s32 %v4824, %v4914
  %v4916 = vrot.slane %v4735, %v4915
  %v4917 = vlaneseq
  %v4918 = vshrl.u32 %v4917, 7
  %v4919 = vsub.s32 %v4824, %v4918
  %v4920 = vrot.slane %v4736, %v4919
  %vm4921 = vcmask 1041409
  %vm4922 = vcmask 1042434
  %v4923 = vsel %vm4922, %v4828, %v4828
  %vm4924 = vcmask 1043459
  %v4925 = vsel %vm4924, %v4828, %v4923
  %v4926 = vsel %vm4922, %v4832, %v4832
  %v4927 = vsel %vm4924, %v4832, %v4926
  %v4928 = vsel %vm4922, %v4836, %v4836
  %v4929 = vsel %vm4924, %v4836, %v4928
  %v4930 = vsel %vm4922, %v4840, %v4840
  %v4931 = vsel %vm4924, %v4840, %v4930
  %v4932 = vsel %vm4922, %v4844, %v4844
  %v4933 = vsel %vm4924, %v4844, %v4932
  %v4934 = vsel %vm4922, %v4848, %v4848
  %v4935 = vsel %vm4924, %v4848, %v4934
  %v4936 = vsel %vm4922, %v4852, %v4852
  %v4937 = vsel %vm4924, %v4852, %v4936
  %v4938 = vsel %vm4922, %v4856, %v4856
  %v4939 = vsel %vm4924, %v4856, %v4938
  %v4940 = vsel %vm4922, %v4860, %v4860
  %v4941 = vsel %vm4924, %v4860, %v4940
  %v4942 = vsel %vm4922, %v4864, %v4864
  %v4943 = vsel %vm4924, %v4864, %v4942
  %v4944 = vsel %vm4922, %v4868, %v4868
  %v4945 = vsel %vm4924, %v4868, %v4944
  %v4946 = vsel %vm4922, %v4872, %v4872
  %v4947 = vsel %vm4924, %v4872, %v4946
  %v4948 = vsel %vm4922, %v4876, %v4876
  %v4949 = vsel %vm4924, %v4876, %v4948
  %v4950 = vsel %vm4922, %v4880, %v4880
  %v4951 = vsel %vm4924, %v4880, %v4950
  %v4952 = vsel %vm4922, %v4884, %v4884
  %v4953 = vsel %vm4924, %v4884, %v4952
  %v4954 = vsel %vm4922, %v4888, %v4888
  %v4955 = vsel %vm4924, %v4888, %v4954
  %v4956 = vsel %vm4922, %v4892, %v4892
  %v4957 = vsel %vm4924, %v4892, %v4956
  %v4958 = vsel %vm4922, %v4896, %v4896
  %v4959 = vsel %vm4924, %v4896, %v4958
  %v4960 = vsel %vm4922, %v4900, %v4900
  %v4961 = vsel %vm4924, %v4900, %v4960
  %v4962 = vsel %vm4922, %v4904, %v4904
  %v4963 = vsel %vm4924, %v4904, %v4962
  %v4964 = vsel %vm4922, %v4908, %v4908
  %v4965 = vsel %vm4924, %v4908, %v4964
  %v4966 = vsel %vm4922, %v4912, %v4912
  %v4967 = vsel %vm4924, %v4912, %v4966
  %v4968 = vsel %vm4922, %v4916, %v4916
  %v4969 = vsel %vm4924, %v4916, %v4968
  %v4970 = vsel %vm4922, %v4920, %v4920
  %v4971 = vsel %vm4924, %v4920, %v4970
  %v4996 = vsel %vm4793, %v4925, -1e+30
  %v4997 = vsel %vm4794, %v4927, -1e+30
  %v4998 = vsel %vm4795, %v4929, -1e+30
  %v4999 = vsel %vm4796, %v4931, -1e+30
  %v5000 = vsel %vm4797, %v4933, -1e+30
  %v5001 = vsel %vm4798, %v4935, -1e+30
  %v5002 = vsel %vm4793, %v4937, -1e+30
  %v5003 = vsel %vm4794, %v4939, -1e+30
  %v5004 = vsel %vm4795, %v4941, -1e+30
  %v5005 = vsel %vm4796, %v4943, -1e+30
  %v5006 = vsel %vm4797, %v4945, -1e+30
  %v5007 = vsel %vm4798, %v4947, -1e+30
  %v5008 = vsel %vm4793, %v4949, -1e+30
  %v5009 = vsel %vm4794, %v4951, -1e+30
  %v5010 = vsel %vm4795, %v4953, -1e+30
  %v5011 = vsel %vm4796, %v4955, -1e+30
  %v5012 = vsel %vm4797, %v4957, -1e+30
  %v5013 = vsel %vm4798, %v4959, -1e+30
  %v5014 = vsel %vm4793, %v4961, -1e+30
  %v5015 = vsel %vm4794, %v4963, -1e+30
  %v5016 = vsel %vm4795, %v4965, -1e+30
  %v5017 = vsel %vm4796, %v4967, -1e+30
  %v5018 = vsel %vm4797, %v4969, -1e+30
  %v5019 = vsel %vm4798, %v4971, -1e+30
  %vm5020 = vcmask 60416
  %v5021 = vsel %vm5020, %v4996, -inf
  %v5022 = vsel %vm5020, %v4997, -inf
  %v5023 = vmax.f32 %v5021, %v5022
  %v5024 = vsel %vm5020, %v4998, -inf
  %v5025 = vmax.f32 %v5023, %v5024
  %v5026 = vsel %vm5020, %v4999, -inf
  %v5027 = vmax.f32 %v5025, %v5026
  %v5028 = vsel %vm5020, %v5000, -inf
  %v5029 = vmax.f32 %v5027, %v5028
  %v5030 = vsel %vm5020, %v5001, -inf
  %v5031 = vmax.f32 %v5029, %v5030
  %v5032 = vsel %vm5020, %v5002, -inf
  %v5033 = vsel %vm5020, %v5003, -inf
  %v5034 = vmax.f32 %v5032, %v5033
  %v5035 = vsel %vm5020, %v5004, -inf
  %v5036 = vmax.f32 %v5034, %v5035
  %v5037 = vsel %vm5020, %v5005, -inf
  %v5038 = vmax.f32 %v5036, %v5037
  %v5039 = vsel %vm5020, %v5006, -inf
  %v5040 = vmax.f32 %v5038, %v5039
  %v5041 = vsel %vm5020, %v5007, -inf
  %v5042 = vmax.f32 %v5040, %v5041
  %v5043 = vsel %vm5020, %v5008, -inf
  %v5044 = vsel %vm5020, %v5009, -inf
  %v5045 = vmax.f32 %v5043, %v5044
  %v5046 = vsel %vm5020, %v5010, -inf
  %v5047 = vmax.f32 %v5045, %v5046
  %v5048 = vsel %vm5020, %v5011, -inf
  %v5049 = vmax.f32 %v5047, %v5048
  %v5050 = vsel %vm5020, %v5012, -inf
  %v5051 = vmax.f32 %v5049, %v5050
  %v5052 = vsel %vm5020, %v5013, -inf
  %v5053 = vmax.f32 %v5051, %v5052
  %v5054 = vsel %vm5020, %v5014, -inf
  %v5055 = vsel %vm5020, %v5015, -inf
  %v5056 = vmax.f32 %v5054, %v5055
  %v5057 = vsel %vm5020, %v5016, -inf
  %v5058 = vmax.f32 %v5056, %v5057
  %v5059 = vsel %vm5020, %v5017, -inf
  %v5060 = vmax.f32 %v5058, %v5059
  %v5061 = vsel %vm5020, %v5018, -inf
  %v5062 = vmax.f32 %v5060, %v5061
  %v5063 = vsel %vm5020, %v5019, -inf
  %v5064 = vmax.f32 %v5062, %v5063
  %v5066 = vsel %vm819, %v4737, 0
  %vm5068 = vcmask 1043456
  %v5070 = vsel %vm5068, %v5031, 0
  %5072 = vmatprep.subr.mxu0 0.0
  %5073 = vmatpush1.msra.mxu0 %v5070
  %5074 = vmatprep.subr.mxu0 0.0
  %5075 = vmatpush1.msra.mxu0 0.0
  %5076 = vmatprep.subr.mxu0 0.0
  %5077 = vmatpush1.msra.mxu0 0.0
  %5078 = vmatprep.subr.mxu0 0.0
  %5079 = vmatpush1.msra.mxu0 0.0
  %5080 = vmatprep.subr.mxu0 0.0
  %5081 = vmatpush1.msra.mxu0 0.0
  %5082 = vmatprep.subr.mxu0 0.0
  %5083 = vmatpush1.msra.mxu0 0.0
  %5084 = vmatprep.subr.mxu0 0.0
  %5085 = vmatpush1.msra.mxu0 0.0
  %5086 = vmatprep.subr.mxu0 0.0
  %5087 = vmatpush1.msra.mxu0 0.0
  %5088 = vmatprep.subr.mxu0 0.0
  %5089 = vmatpush1.msra.mxu0 0.0
  %5090 = vmatprep.subr.mxu0 0.0
  %5091 = vmatpush1.msra.mxu0 0.0
  %5092 = vmatprep.subr.mxu0 0.0
  %5093 = vmatpush1.msra.mxu0 0.0
  %5094 = vmatprep.subr.mxu0 0.0
  %5095 = vmatpush1.msra.mxu0 0.0
  %5096 = vmatprep.subr.mxu0 0.0
  %5097 = vmatpush1.msra.mxu0 0.0
  %5098 = vmatprep.subr.mxu0 0.0
  %5099 = vmatpush1.msra.mxu0 0.0
  %5100 = vmatprep.subr.mxu0 0.0
  %5101 = vmatpush1.msra.mxu0 0.0
  %5102 = vmatprep.subr.mxu0 0.0
  %5103 = vmatpush1.msra.mxu0 0.0
  %5104 = vmatprep.subr.mxu0 0.0
  %5105 = vmatpush1.msra.mxu0 0.0
  %5106 = vmatprep.subr.mxu0 0.0
  %5107 = vmatpush1.msra.mxu0 0.0
  %5108 = vmatprep.subr.mxu0 0.0
  %5109 = vmatpush1.msra.mxu0 0.0
  %5110 = vmatprep.subr.mxu0 0.0
  %5111 = vmatpush1.msra.mxu0 0.0
  %5112 = vmatprep.subr.mxu0 0.0
  %5113 = vmatpush1.msra.mxu0 0.0
  %5114 = vmatprep.subr.mxu0 0.0
  %5115 = vmatpush1.msra.mxu0 0.0
  %5116 = vmatprep.subr.mxu0 0.0
  %5117 = vmatpush1.msra.mxu0 0.0
  %5118 = vmatprep.subr.mxu0 0.0
  %5119 = vmatpush1.msra.mxu0 0.0
  %5120 = vmatprep.subr.mxu0 0.0
  %5121 = vmatpush1.msra.mxu0 0.0
  %5122 = vmatprep.subr.mxu0 0.0
  %5123 = vmatpush1.msra.mxu0 0.0
  %5124 = vmatprep.subr.mxu0 0.0
  %5125 = vmatpush1.msra.mxu0 0.0
  %5126 = vmatprep.subr.mxu0 0.0
  %5127 = vmatpush1.msra.mxu0 0.0
  %5128 = vmatprep.subr.mxu0 0.0
  %5129 = vmatpush1.msra.mxu0 0.0
  %5130 = vmatprep.subr.mxu0 0.0
  %5131 = vmatpush1.msra.mxu0 0.0
  %5132 = vmatprep.subr.mxu0 0.0
  %5133 = vmatpush1.msra.mxu0 0.0
  %5134 = vmatprep.subr.mxu0 0.0
  %5135 = vmatpush1.msra.mxu0 0.0
  %5136 = vmatprep.mubr.f32.mxu0 0.0
  %5137 = vmatmul.mubr.f32.gmra.mrb[0].mxu0 %v5066
  %v5138 = vpop.f32.mrb[0].mxu0
  %v5139 = vadd.f32 0.0, %v5138
  %v5140 = vpop.f32.mrb[0].mxu0
  %5141 = vdwg.mxu0
  %v5143 = vsel %vm5068, %v5042, 0
  %5145 = vmatprep.subr.mxu0 0.0
  %5146 = vmatpush1.msra.mxu0 %v5143
  %5147 = vmatprep.subr.mxu0 0.0
  %5148 = vmatpush1.msra.mxu0 0.0
  %5149 = vmatprep.subr.mxu0 0.0
  %5150 = vmatpush1.msra.mxu0 0.0
  %5151 = vmatprep.subr.mxu0 0.0
  %5152 = vmatpush1.msra.mxu0 0.0
  %5153 = vmatprep.subr.mxu0 0.0
  %5154 = vmatpush1.msra.mxu0 0.0
  %5155 = vmatprep.subr.mxu0 0.0
  %5156 = vmatpush1.msra.mxu0 0.0
  %5157 = vmatprep.subr.mxu0 0.0
  %5158 = vmatpush1.msra.mxu0 0.0
  %5159 = vmatprep.subr.mxu0 0.0
  %5160 = vmatpush1.msra.mxu0 0.0
  %5161 = vmatprep.subr.mxu0 0.0
  %5162 = vmatpush1.msra.mxu0 0.0
  %5163 = vmatprep.subr.mxu0 0.0
  %5164 = vmatpush1.msra.mxu0 0.0
  %5165 = vmatprep.subr.mxu0 0.0
  %5166 = vmatpush1.msra.mxu0 0.0
  %5167 = vmatprep.subr.mxu0 0.0
  %5168 = vmatpush1.msra.mxu0 0.0
  %5169 = vmatprep.subr.mxu0 0.0
  %5170 = vmatpush1.msra.mxu0 0.0
  %5171 = vmatprep.subr.mxu0 0.0
  %5172 = vmatpush1.msra.mxu0 0.0
  %5173 = vmatprep.subr.mxu0 0.0
  %5174 = vmatpush1.msra.mxu0 0.0
  %5175 = vmatprep.subr.mxu0 0.0
  %5176 = vmatpush1.msra.mxu0 0.0
  %5177 = vmatprep.subr.mxu0 0.0
  %5178 = vmatpush1.msra.mxu0 0.0
  %5179 = vmatprep.subr.mxu0 0.0
  %5180 = vmatpush1.msra.mxu0 0.0
  %5181 = vmatprep.subr.mxu0 0.0
  %5182 = vmatpush1.msra.mxu0 0.0
  %5183 = vmatprep.subr.mxu0 0.0
  %5184 = vmatpush1.msra.mxu0 0.0
  %5185 = vmatprep.subr.mxu0 0.0
  %5186 = vmatpush1.msra.mxu0 0.0
  %5187 = vmatprep.subr.mxu0 0.0
  %5188 = vmatpush1.msra.mxu0 0.0
  %5189 = vmatprep.subr.mxu0 0.0
  %5190 = vmatpush1.msra.mxu0 0.0
  %5191 = vmatprep.subr.mxu0 0.0
  %5192 = vmatpush1.msra.mxu0 0.0
  %5193 = vmatprep.subr.mxu0 0.0
  %5194 = vmatpush1.msra.mxu0 0.0
  %5195 = vmatprep.subr.mxu0 0.0
  %5196 = vmatpush1.msra.mxu0 0.0
  %5197 = vmatprep.subr.mxu0 0.0
  %5198 = vmatpush1.msra.mxu0 0.0
  %5199 = vmatprep.subr.mxu0 0.0
  %5200 = vmatpush1.msra.mxu0 0.0
  %5201 = vmatprep.subr.mxu0 0.0
  %5202 = vmatpush1.msra.mxu0 0.0
  %5203 = vmatprep.subr.mxu0 0.0
  %5204 = vmatpush1.msra.mxu0 0.0
  %5205 = vmatprep.subr.mxu0 0.0
  %5206 = vmatpush1.msra.mxu0 0.0
  %5207 = vmatprep.subr.mxu0 0.0
  %5208 = vmatpush1.msra.mxu0 0.0
  %5209 = vmatprep.mubr.f32.mxu0 0.0
  %5210 = vmatmul.mubr.f32.gmra.mrb[0].mxu0 %v5066
  %v5211 = vpop.f32.mrb[0].mxu0
  %v5212 = vadd.f32 0.0, %v5211
  %v5213 = vpop.f32.mrb[0].mxu0
  %5214 = vdwg.mxu0
  %v5216 = vsel %vm5068, %v5053, 0
  %5218 = vmatprep.subr.mxu0 0.0
  %5219 = vmatpush1.msra.mxu0 %v5216
  %5220 = vmatprep.subr.mxu0 0.0
  %5221 = vmatpush1.msra.mxu0 0.0
  %5222 = vmatprep.subr.mxu0 0.0
  %5223 = vmatpush1.msra.mxu0 0.0
  %5224 = vmatprep.subr.mxu0 0.0
  %5225 = vmatpush1.msra.mxu0 0.0
  %5226 = vmatprep.subr.mxu0 0.0
  %5227 = vmatpush1.msra.mxu0 0.0
  %5228 = vmatprep.subr.mxu0 0.0
  %5229 = vmatpush1.msra.mxu0 0.0
  %5230 = vmatprep.subr.mxu0 0.0
  %5231 = vmatpush1.msra.mxu0 0.0
  %5232 = vmatprep.subr.mxu0 0.0
  %5233 = vmatpush1.msra.mxu0 0.0
  %5234 = vmatprep.subr.mxu0 0.0
  %5235 = vmatpush1.msra.mxu0 0.0
  %5236 = vmatprep.subr.mxu0 0.0
  %5237 = vmatpush1.msra.mxu0 0.0
  %5238 = vmatprep.subr.mxu0 0.0
  %5239 = vmatpush1.msra.mxu0 0.0
  %5240 = vmatprep.subr.mxu0 0.0
  %5241 = vmatpush1.msra.mxu0 0.0
  %5242 = vmatprep.subr.mxu0 0.0
  %5243 = vmatpush1.msra.mxu0 0.0
  %5244 = vmatprep.subr.mxu0 0.0
  %5245 = vmatpush1.msra.mxu0 0.0
  %5246 = vmatprep.subr.mxu0 0.0
  %5247 = vmatpush1.msra.mxu0 0.0
  %5248 = vmatprep.subr.mxu0 0.0
  %5249 = vmatpush1.msra.mxu0 0.0
  %5250 = vmatprep.subr.mxu0 0.0
  %5251 = vmatpush1.msra.mxu0 0.0
  %5252 = vmatprep.subr.mxu0 0.0
  %5253 = vmatpush1.msra.mxu0 0.0
  %5254 = vmatprep.subr.mxu0 0.0
  %5255 = vmatpush1.msra.mxu0 0.0
  %5256 = vmatprep.subr.mxu0 0.0
  %5257 = vmatpush1.msra.mxu0 0.0
  %5258 = vmatprep.subr.mxu0 0.0
  %5259 = vmatpush1.msra.mxu0 0.0
  %5260 = vmatprep.subr.mxu0 0.0
  %5261 = vmatpush1.msra.mxu0 0.0
  %5262 = vmatprep.subr.mxu0 0.0
  %5263 = vmatpush1.msra.mxu0 0.0
  %5264 = vmatprep.subr.mxu0 0.0
  %5265 = vmatpush1.msra.mxu0 0.0
  %5266 = vmatprep.subr.mxu0 0.0
  %5267 = vmatpush1.msra.mxu0 0.0
  %5268 = vmatprep.subr.mxu0 0.0
  %5269 = vmatpush1.msra.mxu0 0.0
  %5270 = vmatprep.subr.mxu0 0.0
  %5271 = vmatpush1.msra.mxu0 0.0
  %5272 = vmatprep.subr.mxu0 0.0
  %5273 = vmatpush1.msra.mxu0 0.0
  %5274 = vmatprep.subr.mxu0 0.0
  %5275 = vmatpush1.msra.mxu0 0.0
  %5276 = vmatprep.subr.mxu0 0.0
  %5277 = vmatpush1.msra.mxu0 0.0
  %5278 = vmatprep.subr.mxu0 0.0
  %5279 = vmatpush1.msra.mxu0 0.0
  %5280 = vmatprep.subr.mxu0 0.0
  %5281 = vmatpush1.msra.mxu0 0.0
  %5282 = vmatprep.mubr.f32.mxu0 0.0
  %5283 = vmatmul.mubr.f32.gmra.mrb[0].mxu0 %v5066
  %v5284 = vpop.f32.mrb[0].mxu0
  %v5285 = vadd.f32 0.0, %v5284
  %v5286 = vpop.f32.mrb[0].mxu0
  %5287 = vdwg.mxu0
  %v5289 = vsel %vm5068, %v5064, 0
  %5291 = vmatprep.subr.mxu0 0.0
  %5292 = vmatpush1.msra.mxu0 %v5289
  %5293 = vmatprep.subr.mxu0 0.0
  %5294 = vmatpush1.msra.mxu0 0.0
  %5295 = vmatprep.subr.mxu0 0.0
  %5296 = vmatpush1.msra.mxu0 0.0
  %5297 = vmatprep.subr.mxu0 0.0
  %5298 = vmatpush1.msra.mxu0 0.0
  %5299 = vmatprep.subr.mxu0 0.0
  %5300 = vmatpush1.msra.mxu0 0.0
  %5301 = vmatprep.subr.mxu0 0.0
  %5302 = vmatpush1.msra.mxu0 0.0
  %5303 = vmatprep.subr.mxu0 0.0
  %5304 = vmatpush1.msra.mxu0 0.0
  %5305 = vmatprep.subr.mxu0 0.0
  %5306 = vmatpush1.msra.mxu0 0.0
  %5307 = vmatprep.subr.mxu0 0.0
  %5308 = vmatpush1.msra.mxu0 0.0
  %5309 = vmatprep.subr.mxu0 0.0
  %5310 = vmatpush1.msra.mxu0 0.0
  %5311 = vmatprep.subr.mxu0 0.0
  %5312 = vmatpush1.msra.mxu0 0.0
  %5313 = vmatprep.subr.mxu0 0.0
  %5314 = vmatpush1.msra.mxu0 0.0
  %5315 = vmatprep.subr.mxu0 0.0
  %5316 = vmatpush1.msra.mxu0 0.0
  %5317 = vmatprep.subr.mxu0 0.0
  %5318 = vmatpush1.msra.mxu0 0.0
  %5319 = vmatprep.subr.mxu0 0.0
  %5320 = vmatpush1.msra.mxu0 0.0
  %5321 = vmatprep.subr.mxu0 0.0
  %5322 = vmatpush1.msra.mxu0 0.0
  %5323 = vmatprep.subr.mxu0 0.0
  %5324 = vmatpush1.msra.mxu0 0.0
  %5325 = vmatprep.subr.mxu0 0.0
  %5326 = vmatpush1.msra.mxu0 0.0
  %5327 = vmatprep.subr.mxu0 0.0
  %5328 = vmatpush1.msra.mxu0 0.0
  %5329 = vmatprep.subr.mxu0 0.0
  %5330 = vmatpush1.msra.mxu0 0.0
  %5331 = vmatprep.subr.mxu0 0.0
  %5332 = vmatpush1.msra.mxu0 0.0
  %5333 = vmatprep.subr.mxu0 0.0
  %5334 = vmatpush1.msra.mxu0 0.0
  %5335 = vmatprep.subr.mxu0 0.0
  %5336 = vmatpush1.msra.mxu0 0.0
  %5337 = vmatprep.subr.mxu0 0.0
  %5338 = vmatpush1.msra.mxu0 0.0
  %5339 = vmatprep.subr.mxu0 0.0
  %5340 = vmatpush1.msra.mxu0 0.0
  %5341 = vmatprep.subr.mxu0 0.0
  %5342 = vmatpush1.msra.mxu0 0.0
  %5343 = vmatprep.subr.mxu0 0.0
  %5344 = vmatpush1.msra.mxu0 0.0
  %5345 = vmatprep.subr.mxu0 0.0
  %5346 = vmatpush1.msra.mxu0 0.0
  %5347 = vmatprep.subr.mxu0 0.0
  %5348 = vmatpush1.msra.mxu0 0.0
  %5349 = vmatprep.subr.mxu0 0.0
  %5350 = vmatpush1.msra.mxu0 0.0
  %5351 = vmatprep.subr.mxu0 0.0
  %5352 = vmatpush1.msra.mxu0 0.0
  %5353 = vmatprep.subr.mxu0 0.0
  %5354 = vmatpush1.msra.mxu0 0.0
  %5355 = vmatprep.mubr.f32.mxu0 0.0
  %5356 = vmatmul.mubr.f32.gmra.mrb[0].mxu0 %v5066
  %v5357 = vpop.f32.mrb[0].mxu0
  %v5358 = vadd.f32 0.0, %v5357
  %v5359 = vpop.f32.mrb[0].mxu0
  %5360 = vdwg.mxu0
  %v5361 = vlaneseq
  %v5362 = vshrl.u32 %v5361, 7
  %v5363 = vsub.s32 0, %v5362
  %v5364 = vrot.slane %v5139, %v5363
  %5366 = vbcast.lane.b32.xlu0 %v5364, 256
  %v5367 = vpop.permute.xlu0 %5366
  %v5368 = vlaneseq
  %v5369 = vshrl.u32 %v5368, 7
  %v5370 = vsub.s32 1, %v5369
  %v5371 = vrot.slane %v5139, %v5370
  %5373 = vbcast.lane.b32.xlu0 %v5371, 256
  %v5374 = vpop.permute.xlu0 %5373
  %v5375 = vlaneseq
  %v5376 = vshrl.u32 %v5375, 7
  %v5377 = vsub.s32 2, %v5376
  %v5378 = vrot.slane %v5139, %v5377
  %5380 = vbcast.lane.b32.xlu0 %v5378, 256
  %v5381 = vpop.permute.xlu0 %5380
  %v5382 = vlaneseq
  %v5383 = vshrl.u32 %v5382, 7
  %v5384 = vsub.s32 3, %v5383
  %v5385 = vrot.slane %v5139, %v5384
  %5387 = vbcast.lane.b32.xlu0 %v5385, 256
  %v5388 = vpop.permute.xlu0 %5387
  %v5389 = vlaneseq
  %v5390 = vshrl.u32 %v5389, 7
  %v5391 = vsub.s32 4, %v5390
  %v5392 = vrot.slane %v5139, %v5391
  %5394 = vbcast.lane.b32.xlu0 %v5392, 256
  %v5395 = vpop.permute.xlu0 %5394
  %v5396 = vlaneseq
  %v5397 = vshrl.u32 %v5396, 7
  %v5398 = vsub.s32 5, %v5397
  %v5399 = vrot.slane %v5139, %v5398
  %5401 = vbcast.lane.b32.xlu0 %v5399, 256
  %v5402 = vpop.permute.xlu0 %5401
  %v5403 = vlaneseq
  %v5404 = vshrl.u32 %v5403, 7
  %v5405 = vsub.s32 0, %v5404
  %v5406 = vrot.slane %v5212, %v5405
  %5408 = vbcast.lane.b32.xlu0 %v5406, 256
  %v5409 = vpop.permute.xlu0 %5408
  %v5410 = vlaneseq
  %v5411 = vshrl.u32 %v5410, 7
  %v5412 = vsub.s32 1, %v5411
  %v5413 = vrot.slane %v5212, %v5412
  %5415 = vbcast.lane.b32.xlu0 %v5413, 256
  %v5416 = vpop.permute.xlu0 %5415
  %v5417 = vlaneseq
  %v5418 = vshrl.u32 %v5417, 7
  %v5419 = vsub.s32 2, %v5418
  %v5420 = vrot.slane %v5212, %v5419
  %5422 = vbcast.lane.b32.xlu0 %v5420, 256
  %v5423 = vpop.permute.xlu0 %5422
  %v5424 = vlaneseq
  %v5425 = vshrl.u32 %v5424, 7
  %v5426 = vsub.s32 3, %v5425
  %v5427 = vrot.slane %v5212, %v5426
  %5429 = vbcast.lane.b32.xlu0 %v5427, 256
  %v5430 = vpop.permute.xlu0 %5429
  %v5431 = vlaneseq
  %v5432 = vshrl.u32 %v5431, 7
  %v5433 = vsub.s32 4, %v5432
  %v5434 = vrot.slane %v5212, %v5433
  %5436 = vbcast.lane.b32.xlu0 %v5434, 256
  %v5437 = vpop.permute.xlu0 %5436
  %v5438 = vlaneseq
  %v5439 = vshrl.u32 %v5438, 7
  %v5440 = vsub.s32 5, %v5439
  %v5441 = vrot.slane %v5212, %v5440
  %5443 = vbcast.lane.b32.xlu0 %v5441, 256
  %v5444 = vpop.permute.xlu0 %5443
  %v5445 = vlaneseq
  %v5446 = vshrl.u32 %v5445, 7
  %v5447 = vsub.s32 0, %v5446
  %v5448 = vrot.slane %v5285, %v5447
  %5450 = vbcast.lane.b32.xlu0 %v5448, 256
  %v5451 = vpop.permute.xlu0 %5450
  %v5452 = vlaneseq
  %v5453 = vshrl.u32 %v5452, 7
  %v5454 = vsub.s32 1, %v5453
  %v5455 = vrot.slane %v5285, %v5454
  %5457 = vbcast.lane.b32.xlu0 %v5455, 256
  %v5458 = vpop.permute.xlu0 %5457
  %v5459 = vlaneseq
  %v5460 = vshrl.u32 %v5459, 7
  %v5461 = vsub.s32 2, %v5460
  %v5462 = vrot.slane %v5285, %v5461
  %5464 = vbcast.lane.b32.xlu0 %v5462, 256
  %v5465 = vpop.permute.xlu0 %5464
  %v5466 = vlaneseq
  %v5467 = vshrl.u32 %v5466, 7
  %v5468 = vsub.s32 3, %v5467
  %v5469 = vrot.slane %v5285, %v5468
  %5471 = vbcast.lane.b32.xlu0 %v5469, 256
  %v5472 = vpop.permute.xlu0 %5471
  %v5473 = vlaneseq
  %v5474 = vshrl.u32 %v5473, 7
  %v5475 = vsub.s32 4, %v5474
  %v5476 = vrot.slane %v5285, %v5475
  %5478 = vbcast.lane.b32.xlu0 %v5476, 256
  %v5479 = vpop.permute.xlu0 %5478
  %v5480 = vlaneseq
  %v5481 = vshrl.u32 %v5480, 7
  %v5482 = vsub.s32 5, %v5481
  %v5483 = vrot.slane %v5285, %v5482
  %5485 = vbcast.lane.b32.xlu0 %v5483, 256
  %v5486 = vpop.permute.xlu0 %5485
  %v5487 = vlaneseq
  %v5488 = vshrl.u32 %v5487, 7
  %v5489 = vsub.s32 0, %v5488
  %v5490 = vrot.slane %v5358, %v5489
  %5492 = vbcast.lane.b32.xlu0 %v5490, 256
  %v5493 = vpop.permute.xlu0 %5492
  %v5494 = vlaneseq
  %v5495 = vshrl.u32 %v5494, 7
  %v5496 = vsub.s32 1, %v5495
  %v5497 = vrot.slane %v5358, %v5496
  %5499 = vbcast.lane.b32.xlu0 %v5497, 256
  %v5500 = vpop.permute.xlu0 %5499
  %v5501 = vlaneseq
  %v5502 = vshrl.u32 %v5501, 7
  %v5503 = vsub.s32 2, %v5502
  %v5504 = vrot.slane %v5358, %v5503
  %5506 = vbcast.lane.b32.xlu0 %v5504, 256
  %v5507 = vpop.permute.xlu0 %5506
  %v5508 = vlaneseq
  %v5509 = vshrl.u32 %v5508, 7
  %v5510 = vsub.s32 3, %v5509
  %v5511 = vrot.slane %v5358, %v5510
  %5513 = vbcast.lane.b32.xlu0 %v5511, 256
  %v5514 = vpop.permute.xlu0 %5513
  %v5515 = vlaneseq
  %v5516 = vshrl.u32 %v5515, 7
  %v5517 = vsub.s32 4, %v5516
  %v5518 = vrot.slane %v5358, %v5517
  %5520 = vbcast.lane.b32.xlu0 %v5518, 256
  %v5521 = vpop.permute.xlu0 %5520
  %v5522 = vlaneseq
  %v5523 = vshrl.u32 %v5522, 7
  %v5524 = vsub.s32 5, %v5523
  %v5525 = vrot.slane %v5358, %v5524
  %5527 = vbcast.lane.b32.xlu0 %v5525, 256
  %v5528 = vpop.permute.xlu0 %5527
  %v5529 = vsub.f32 %v3489, %v5367
  %v5530 = vsub.f32 %v3490, %v5374
  %v5531 = vsub.f32 %v3491, %v5381
  %v5532 = vsub.f32 %v3492, %v5388
  %v5533 = vsub.f32 %v3493, %v5395
  %v5534 = vsub.f32 %v3494, %v5402
  %v5535 = vsub.f32 %v3495, %v5409
  %v5536 = vsub.f32 %v3496, %v5416
  %v5537 = vsub.f32 %v3497, %v5423
  %v5538 = vsub.f32 %v3498, %v5430
  %v5539 = vsub.f32 %v3499, %v5437
  %v5540 = vsub.f32 %v3500, %v5444
  %v5541 = vsub.f32 %v3501, %v5451
  %v5542 = vsub.f32 %v3502, %v5458
  %v5543 = vsub.f32 %v3503, %v5465
  %v5544 = vsub.f32 %v3504, %v5472
  %v5545 = vsub.f32 %v3505, %v5479
  %v5546 = vsub.f32 %v3506, %v5486
  %v5547 = vsub.f32 %v3507, %v5493
  %v5548 = vsub.f32 %v3508, %v5500
  %v5549 = vsub.f32 %v3509, %v5507
  %v5550 = vsub.f32 %v3510, %v5514
  %v5551 = vsub.f32 %v3511, %v5521
  %v5552 = vsub.f32 %v3512, %v5528
  %v5553 = vmul.f32 %v5529, 1.442695
  %v5554 = vpow.pop %v5553
  %v5555 = vmul.f32 %v5530, 1.442695
  %v5556 = vpow.pop %v5555
  %v5557 = vmul.f32 %v5531, 1.442695
  %v5558 = vpow.pop %v5557
  %v5559 = vmul.f32 %v5532, 1.442695
  %v5560 = vpow.pop %v5559
  %v5561 = vmul.f32 %v5533, 1.442695
  %v5562 = vpow.pop %v5561
  %v5563 = vmul.f32 %v5534, 1.442695
  %v5564 = vpow.pop %v5563
  %v5565 = vmul.f32 %v5535, 1.442695
  %v5566 = vpow.pop %v5565
  %v5567 = vmul.f32 %v5536, 1.442695
  %v5568 = vpow.pop %v5567
  %v5569 = vmul.f32 %v5537, 1.442695
  %v5570 = vpow.pop %v5569
  %v5571 = vmul.f32 %v5538, 1.442695
  %v5572 = vpow.pop %v5571
  %v5573 = vmul.f32 %v5539, 1.442695
  %v5574 = vpow.pop %v5573
  %v5575 = vmul.f32 %v5540, 1.442695
  %v5576 = vpow.pop %v5575
  %v5577 = vmul.f32 %v5541, 1.442695
  %v5578 = vpow.pop %v5577
  %v5579 = vmul.f32 %v5542, 1.442695
  %v5580 = vpow.pop %v5579
  %v5581 = vmul.f32 %v5543, 1.442695
  %v5582 = vpow.pop %v5581
  %v5583 = vmul.f32 %v5544, 1.442695
  %v5584 = vpow.pop %v5583
  %v5585 = vmul.f32 %v5545, 1.442695
  %v5586 = vpow.pop %v5585
  %v5587 = vmul.f32 %v5546, 1.442695
  %v5588 = vpow.pop %v5587
  %v5589 = vmul.f32 %v5547, 1.442695
  %v5590 = vpow.pop %v5589
  %v5591 = vmul.f32 %v5548, 1.442695
  %v5592 = vpow.pop %v5591
  %v5593 = vmul.f32 %v5549, 1.442695
  %v5594 = vpow.pop %v5593
  %v5595 = vmul.f32 %v5550, 1.442695
  %v5596 = vpow.pop %v5595
  %v5597 = vmul.f32 %v5551, 1.442695
  %v5598 = vpow.pop %v5597
  %v5599 = vmul.f32 %v5552, 1.442695
  %v5600 = vpow.pop %v5599
  %v5601 = vsub.f32 %v4545, %v5367
  %v5602 = vsub.f32 %v4546, %v5374
  %v5603 = vsub.f32 %v4547, %v5381
  %v5604 = vsub.f32 %v4548, %v5388
  %v5605 = vsub.f32 %v4549, %v5395
  %v5606 = vsub.f32 %v4550, %v5402
  %v5607 = vsub.f32 %v4551, %v5409
  %v5608 = vsub.f32 %v4552, %v5416
  %v5609 = vsub.f32 %v4553, %v5423
  %v5610 = vsub.f32 %v4554, %v5430
  %v5611 = vsub.f32 %v4555, %v5437
  %v5612 = vsub.f32 %v4556, %v5444
  %v5613 = vsub.f32 %v4557, %v5451
  %v5614 = vsub.f32 %v4558, %v5458
  %v5615 = vsub.f32 %v4559, %v5465
  %v5616 = vsub.f32 %v4560, %v5472
  %v5617 = vsub.f32 %v4561, %v5479
  %v5618 = vsub.f32 %v4562, %v5486
  %v5619 = vsub.f32 %v4563, %v5493
  %v5620 = vsub.f32 %v4564, %v5500
  %v5621 = vsub.f32 %v4565, %v5507
  %v5622 = vsub.f32 %v4566, %v5514
  %v5623 = vsub.f32 %v4567, %v5521
  %v5624 = vsub.f32 %v4568, %v5528
  %v5625 = vmul.f32 %v5601, 1.442695
  %v5626 = vpow.pop %v5625
  %v5627 = vmul.f32 %v5602, 1.442695
  %v5628 = vpow.pop %v5627
  %v5629 = vmul.f32 %v5603, 1.442695
  %v5630 = vpow.pop %v5629
  %v5631 = vmul.f32 %v5604, 1.442695
  %v5632 = vpow.pop %v5631
  %v5633 = vmul.f32 %v5605, 1.442695
  %v5634 = vpow.pop %v5633
  %v5635 = vmul.f32 %v5606, 1.442695
  %v5636 = vpow.pop %v5635
  %v5637 = vmul.f32 %v5607, 1.442695
  %v5638 = vpow.pop %v5637
  %v5639 = vmul.f32 %v5608, 1.442695
  %v5640 = vpow.pop %v5639
  %v5641 = vmul.f32 %v5609, 1.442695
  %v5642 = vpow.pop %v5641
  %v5643 = vmul.f32 %v5610, 1.442695
  %v5644 = vpow.pop %v5643
  %v5645 = vmul.f32 %v5611, 1.442695
  %v5646 = vpow.pop %v5645
  %v5647 = vmul.f32 %v5612, 1.442695
  %v5648 = vpow.pop %v5647
  %v5649 = vmul.f32 %v5613, 1.442695
  %v5650 = vpow.pop %v5649
  %v5651 = vmul.f32 %v5614, 1.442695
  %v5652 = vpow.pop %v5651
  %v5653 = vmul.f32 %v5615, 1.442695
  %v5654 = vpow.pop %v5653
  %v5655 = vmul.f32 %v5616, 1.442695
  %v5656 = vpow.pop %v5655
  %v5657 = vmul.f32 %v5617, 1.442695
  %v5658 = vpow.pop %v5657
  %v5659 = vmul.f32 %v5618, 1.442695
  %v5660 = vpow.pop %v5659
  %v5661 = vmul.f32 %v5619, 1.442695
  %v5662 = vpow.pop %v5661
  %v5663 = vmul.f32 %v5620, 1.442695
  %v5664 = vpow.pop %v5663
  %v5665 = vmul.f32 %v5621, 1.442695
  %v5666 = vpow.pop %v5665
  %v5667 = vmul.f32 %v5622, 1.442695
  %v5668 = vpow.pop %v5667
  %v5669 = vmul.f32 %v5623, 1.442695
  %v5670 = vpow.pop %v5669
  %v5671 = vmul.f32 %v5624, 1.442695
  %v5672 = vpow.pop %v5671
  %v5673 = vsel %vm2384, %v5554, 0.0
  %5674 = vadd.xlane.f32.xlu0 %v5673
  %v5675 = vpop.xlane.xlu0 %5674
  %v5676 = vsel %vm2384, %v5556, 0.0
  %5677 = vadd.xlane.f32.xlu0 %v5676
  %v5678 = vpop.xlane.xlu0 %5677
  %v5679 = vsel %vm2384, %v5558, 0.0
  %5680 = vadd.xlane.f32.xlu0 %v5679
  %v5681 = vpop.xlane.xlu0 %5680
  %v5682 = vsel %vm2384, %v5560, 0.0
  %5683 = vadd.xlane.f32.xlu0 %v5682
  %v5684 = vpop.xlane.xlu0 %5683
  %v5685 = vsel %vm2384, %v5562, 0.0
  %5686 = vadd.xlane.f32.xlu0 %v5685
  %v5687 = vpop.xlane.xlu0 %5686
  %v5688 = vsel %vm2384, %v5564, 0.0
  %5689 = vadd.xlane.f32.xlu0 %v5688
  %v5690 = vpop.xlane.xlu0 %5689
  %v5691 = vsel %vm2384, %v5566, 0.0
  %5692 = vadd.xlane.f32.xlu0 %v5691
  %v5693 = vpop.xlane.xlu0 %5692
  %v5694 = vsel %vm2384, %v5568, 0.0
  %5695 = vadd.xlane.f32.xlu0 %v5694
  %v5696 = vpop.xlane.xlu0 %5695
  %v5697 = vsel %vm2384, %v5570, 0.0
  %5698 = vadd.xlane.f32.xlu0 %v5697
  %v5699 = vpop.xlane.xlu0 %5698
  %v5700 = vsel %vm2384, %v5572, 0.0
  %5701 = vadd.xlane.f32.xlu0 %v5700
  %v5702 = vpop.xlane.xlu0 %5701
  %v5703 = vsel %vm2384, %v5574, 0.0
  %5704 = vadd.xlane.f32.xlu0 %v5703
  %v5705 = vpop.xlane.xlu0 %5704
  %v5706 = vsel %vm2384, %v5576, 0.0
  %5707 = vadd.xlane.f32.xlu0 %v5706
  %v5708 = vpop.xlane.xlu0 %5707
  %v5709 = vsel %vm2384, %v5578, 0.0
  %5710 = vadd.xlane.f32.xlu0 %v5709
  %v5711 = vpop.xlane.xlu0 %5710
  %v5712 = vsel %vm2384, %v5580, 0.0
  %5713 = vadd.xlane.f32.xlu0 %v5712
  %v5714 = vpop.xlane.xlu0 %5713
  %v5715 = vsel %vm2384, %v5582, 0.0
  %5716 = vadd.xlane.f32.xlu0 %v5715
  %v5717 = vpop.xlane.xlu0 %5716
  %v5718 = vsel %vm2384, %v5584, 0.0
  %5719 = vadd.xlane.f32.xlu0 %v5718
  %v5720 = vpop.xlane.xlu0 %5719
  %v5721 = vsel %vm2384, %v5586, 0.0
  %5722 = vadd.xlane.f32.xlu0 %v5721
  %v5723 = vpop.xlane.xlu0 %5722
  %v5724 = vsel %vm2384, %v5588, 0.0
  %5725 = vadd.xlane.f32.xlu0 %v5724
  %v5726 = vpop.xlane.xlu0 %5725
  %v5727 = vsel %vm2384, %v5590, 0.0
  %5728 = vadd.xlane.f32.xlu0 %v5727
  %v5729 = vpop.xlane.xlu0 %5728
  %v5730 = vsel %vm2384, %v5592, 0.0
  %5731 = vadd.xlane.f32.xlu0 %v5730
  %v5732 = vpop.xlane.xlu0 %5731
  %v5733 = vsel %vm2384, %v5594, 0.0
  %5734 = vadd.xlane.f32.xlu0 %v5733
  %v5735 = vpop.xlane.xlu0 %5734
  %v5736 = vsel %vm2384, %v5596, 0.0
  %5737 = vadd.xlane.f32.xlu0 %v5736
  %v5738 = vpop.xlane.xlu0 %5737
  %v5739 = vsel %vm2384, %v5598, 0.0
  %5740 = vadd.xlane.f32.xlu0 %v5739
  %v5741 = vpop.xlane.xlu0 %5740
  %v5742 = vsel %vm2384, %v5600, 0.0
  %5743 = vadd.xlane.f32.xlu0 %v5742
  %v5744 = vpop.xlane.xlu0 %5743
  %v5745 = vsel %vm2384, %v5626, 0.0
  %5746 = vadd.xlane.f32.xlu0 %v5745
  %v5747 = vpop.xlane.xlu0 %5746
  %v5748 = vsel %vm2384, %v5628, 0.0
  %5749 = vadd.xlane.f32.xlu0 %v5748
  %v5750 = vpop.xlane.xlu0 %5749
  %v5751 = vsel %vm2384, %v5630, 0.0
  %5752 = vadd.xlane.f32.xlu0 %v5751
  %v5753 = vpop.xlane.xlu0 %5752
  %v5754 = vsel %vm2384, %v5632, 0.0
  %5755 = vadd.xlane.f32.xlu0 %v5754
  %v5756 = vpop.xlane.xlu0 %5755
  %v5757 = vsel %vm2384, %v5634, 0.0
  %5758 = vadd.xlane.f32.xlu0 %v5757
  %v5759 = vpop.xlane.xlu0 %5758
  %v5760 = vsel %vm2384, %v5636, 0.0
  %5761 = vadd.xlane.f32.xlu0 %v5760
  %v5762 = vpop.xlane.xlu0 %5761
  %v5763 = vsel %vm2384, %v5638, 0.0
  %5764 = vadd.xlane.f32.xlu0 %v5763
  %v5765 = vpop.xlane.xlu0 %5764
  %v5766 = vsel %vm2384, %v5640, 0.0
  %5767 = vadd.xlane.f32.xlu0 %v5766
  %v5768 = vpop.xlane.xlu0 %5767
  %v5769 = vsel %vm2384, %v5642, 0.0
  %5770 = vadd.xlane.f32.xlu0 %v5769
  %v5771 = vpop.xlane.xlu0 %5770
  %v5772 = vsel %vm2384, %v5644, 0.0
  %5773 = vadd.xlane.f32.xlu0 %v5772
  %v5774 = vpop.xlane.xlu0 %5773
  %v5775 = vsel %vm2384, %v5646, 0.0
  %5776 = vadd.xlane.f32.xlu0 %v5775
  %v5777 = vpop.xlane.xlu0 %5776
  %v5778 = vsel %vm2384, %v5648, 0.0
  %5779 = vadd.xlane.f32.xlu0 %v5778
  %v5780 = vpop.xlane.xlu0 %5779
  %v5781 = vsel %vm2384, %v5650, 0.0
  %5782 = vadd.xlane.f32.xlu0 %v5781
  %v5783 = vpop.xlane.xlu0 %5782
  %v5784 = vsel %vm2384, %v5652, 0.0
  %5785 = vadd.xlane.f32.xlu0 %v5784
  %v5786 = vpop.xlane.xlu0 %5785
  %v5787 = vsel %vm2384, %v5654, 0.0
  %5788 = vadd.xlane.f32.xlu0 %v5787
  %v5789 = vpop.xlane.xlu0 %5788
  %v5790 = vsel %vm2384, %v5656, 0.0
  %5791 = vadd.xlane.f32.xlu0 %v5790
  %v5792 = vpop.xlane.xlu0 %5791
  %v5793 = vsel %vm2384, %v5658, 0.0
  %5794 = vadd.xlane.f32.xlu0 %v5793
  %v5795 = vpop.xlane.xlu0 %5794
  %v5796 = vsel %vm2384, %v5660, 0.0
  %5797 = vadd.xlane.f32.xlu0 %v5796
  %v5798 = vpop.xlane.xlu0 %5797
  %v5799 = vsel %vm2384, %v5662, 0.0
  %5800 = vadd.xlane.f32.xlu0 %v5799
  %v5801 = vpop.xlane.xlu0 %5800
  %v5802 = vsel %vm2384, %v5664, 0.0
  %5803 = vadd.xlane.f32.xlu0 %v5802
  %v5804 = vpop.xlane.xlu0 %5803
  %v5805 = vsel %vm2384, %v5666, 0.0
  %5806 = vadd.xlane.f32.xlu0 %v5805
  %v5807 = vpop.xlane.xlu0 %5806
  %v5808 = vsel %vm2384, %v5668, 0.0
  %5809 = vadd.xlane.f32.xlu0 %v5808
  %v5810 = vpop.xlane.xlu0 %5809
  %v5811 = vsel %vm2384, %v5670, 0.0
  %5812 = vadd.xlane.f32.xlu0 %v5811
  %v5813 = vpop.xlane.xlu0 %5812
  %v5814 = vsel %vm2384, %v5672, 0.0
  %5815 = vadd.xlane.f32.xlu0 %v5814
  %v5816 = vpop.xlane.xlu0 %5815
  %v5817 = vadd.f32 %v5675, %v5747
  %v5818 = vadd.f32 %v5678, %v5750
  %v5819 = vadd.f32 %v5681, %v5753
  %v5820 = vadd.f32 %v5684, %v5756
  %v5821 = vadd.f32 %v5687, %v5759
  %v5822 = vadd.f32 %v5690, %v5762
  %v5823 = vadd.f32 %v5693, %v5765
  %v5824 = vadd.f32 %v5696, %v5768
  %v5825 = vadd.f32 %v5699, %v5771
  %v5826 = vadd.f32 %v5702, %v5774
  %v5827 = vadd.f32 %v5705, %v5777
  %v5828 = vadd.f32 %v5708, %v5780
  %v5829 = vadd.f32 %v5711, %v5783
  %v5830 = vadd.f32 %v5714, %v5786
  %v5831 = vadd.f32 %v5717, %v5789
  %v5832 = vadd.f32 %v5720, %v5792
  %v5833 = vadd.f32 %v5723, %v5795
  %v5834 = vadd.f32 %v5726, %v5798
  %v5835 = vadd.f32 %v5729, %v5801
  %v5836 = vadd.f32 %v5732, %v5804
  %v5837 = vadd.f32 %v5735, %v5807
  %v5838 = vadd.f32 %v5738, %v5810
  %v5839 = vadd.f32 %v5741, %v5813
  %v5840 = vadd.f32 %v5744, %v5816
  %v5847 = vlaneseq
  %v5848 = vshrl.u32 %v5847, 7
  %v5849 = vsub.s32 %v4824, %v5848
  %v5850 = vrot.slane %v5817, %v5849
  %v5851 = vlaneseq
  %v5852 = vshrl.u32 %v5851, 7
  %v5853 = vsub.s32 %v4824, %v5852
  %v5854 = vrot.slane %v5818, %v5853
  %v5855 = vlaneseq
  %v5856 = vshrl.u32 %v5855, 7
  %v5857 = vsub.s32 %v4824, %v5856
  %v5858 = vrot.slane %v5819, %v5857
  %v5859 = vlaneseq
  %v5860 = vshrl.u32 %v5859, 7
  %v5861 = vsub.s32 %v4824, %v5860
  %v5862 = vrot.slane %v5820, %v5861
  %v5863 = vlaneseq
  %v5864 = vshrl.u32 %v5863, 7
  %v5865 = vsub.s32 %v4824, %v5864
  %v5866 = vrot.slane %v5821, %v5865
  %v5867 = vlaneseq
  %v5868 = vshrl.u32 %v5867, 7
  %v5869 = vsub.s32 %v4824, %v5868
  %v5870 = vrot.slane %v5822, %v5869
  %v5871 = vsel %vm4921, %v5854, %v5850
  %v5872 = vsel %vm4922, %v5858, %v5871
  %v5873 = vsel %vm4924, %v5862, %v5872
  %vm5874 = vcmask 1044484
  %v5875 = vsel %vm5874, %v5866, %v5873
  %vm5876 = vcmask 1045509
  %v5877 = vsel %vm5876, %v5870, %v5875
  %vm5878 = vcmask 48128
  %v5880 = vsel %vm5878, %v4738, 0
  %vm5882 = vcmask 1045504
  %v5883 = vsel %vm5882, %v5877, 0
  %5885 = vmatprep.subr.mxu0 0.0
  %5886 = vmatpush1.msra.mxu0 %v5883
  %5887 = vmatprep.subr.mxu0 0.0
  %5888 = vmatpush1.msra.mxu0 0.0
  %5889 = vmatprep.subr.mxu0 0.0
  %5890 = vmatpush1.msra.mxu0 0.0
  %5891 = vmatprep.subr.mxu0 0.0
  %5892 = vmatpush1.msra.mxu0 0.0
  %5893 = vmatprep.subr.mxu0 0.0
  %5894 = vmatpush1.msra.mxu0 0.0
  %5895 = vmatprep.subr.mxu0 0.0
  %5896 = vmatpush1.msra.mxu0 0.0
  %5897 = vmatprep.subr.mxu0 0.0
  %5898 = vmatpush1.msra.mxu0 0.0
  %5899 = vmatprep.subr.mxu0 0.0
  %5900 = vmatpush1.msra.mxu0 0.0
  %5901 = vmatprep.subr.mxu0 0.0
  %5902 = vmatpush1.msra.mxu0 0.0
  %5903 = vmatprep.subr.mxu0 0.0
  %5904 = vmatpush1.msra.mxu0 0.0
  %5905 = vmatprep.subr.mxu0 0.0
  %5906 = vmatpush1.msra.mxu0 0.0
  %5907 = vmatprep.subr.mxu0 0.0
  %5908 = vmatpush1.msra.mxu0 0.0
  %5909 = vmatprep.subr.mxu0 0.0
  %5910 = vmatpush1.msra.mxu0 0.0
  %5911 = vmatprep.subr.mxu0 0.0
  %5912 = vmatpush1.msra.mxu0 0.0
  %5913 = vmatprep.subr.mxu0 0.0
  %5914 = vmatpush1.msra.mxu0 0.0
  %5915 = vmatprep.subr.mxu0 0.0
  %5916 = vmatpush1.msra.mxu0 0.0
  %5917 = vmatprep.subr.mxu0 0.0
  %5918 = vmatpush1.msra.mxu0 0.0
  %5919 = vmatprep.subr.mxu0 0.0
  %5920 = vmatpush1.msra.mxu0 0.0
  %5921 = vmatprep.subr.mxu0 0.0
  %5922 = vmatpush1.msra.mxu0 0.0
  %5923 = vmatprep.subr.mxu0 0.0
  %5924 = vmatpush1.msra.mxu0 0.0
  %5925 = vmatprep.subr.mxu0 0.0
  %5926 = vmatpush1.msra.mxu0 0.0
  %5927 = vmatprep.subr.mxu0 0.0
  %5928 = vmatpush1.msra.mxu0 0.0
  %5929 = vmatprep.subr.mxu0 0.0
  %5930 = vmatpush1.msra.mxu0 0.0
  %5931 = vmatprep.subr.mxu0 0.0
  %5932 = vmatpush1.msra.mxu0 0.0
  %5933 = vmatprep.subr.mxu0 0.0
  %5934 = vmatpush1.msra.mxu0 0.0
  %5935 = vmatprep.subr.mxu0 0.0
  %5936 = vmatpush1.msra.mxu0 0.0
  %5937 = vmatprep.subr.mxu0 0.0
  %5938 = vmatpush1.msra.mxu0 0.0
  %5939 = vmatprep.subr.mxu0 0.0
  %5940 = vmatpush1.msra.mxu0 0.0
  %5941 = vmatprep.subr.mxu0 0.0
  %5942 = vmatpush1.msra.mxu0 0.0
  %5943 = vmatprep.subr.mxu0 0.0
  %5944 = vmatpush1.msra.mxu0 0.0
  %5945 = vmatprep.subr.mxu0 0.0
  %5946 = vmatpush1.msra.mxu0 0.0
  %5947 = vmatprep.subr.mxu0 0.0
  %5948 = vmatpush1.msra.mxu0 0.0
  %5949 = vmatprep.mubr.f32.mxu0 0.0
  %5950 = vmatmul.mubr.f32.gmra.mrb[0].mxu0 %v5880
  %v5951 = vpop.f32.mrb[0].mxu0
  %v5952 = vadd.f32 0.0, %v5951
  %v5953 = vpop.f32.mrb[0].mxu0
  %5954 = vdwg.mxu0
  %v5961 = vlaneseq
  %v5962 = vshrl.u32 %v5961, 7
  %v5963 = vsub.s32 %v4824, %v5962
  %v5964 = vrot.slane %v5823, %v5963
  %v5965 = vlaneseq
  %v5966 = vshrl.u32 %v5965, 7
  %v5967 = vsub.s32 %v4824, %v5966
  %v5968 = vrot.slane %v5824, %v5967
  %v5969 = vlaneseq
  %v5970 = vshrl.u32 %v5969, 7
  %v5971 = vsub.s32 %v4824, %v5970
  %v5972 = vrot.slane %v5825, %v5971
  %v5973 = vlaneseq
  %v5974 = vshrl.u32 %v5973, 7
  %v5975 = vsub.s32 %v4824, %v5974
  %v5976 = vrot.slane %v5826, %v5975
  %v5977 = vlaneseq
  %v5978 = vshrl.u32 %v5977, 7
  %v5979 = vsub.s32 %v4824, %v5978
  %v5980 = vrot.slane %v5827, %v5979
  %v5981 = vlaneseq
  %v5982 = vshrl.u32 %v5981, 7
  %v5983 = vsub.s32 %v4824, %v5982
  %v5984 = vrot.slane %v5828, %v5983
  %v5985 = vsel %vm4921, %v5968, %v5964
  %v5986 = vsel %vm4922, %v5972, %v5985
  %v5987 = vsel %vm4924, %v5976, %v5986
  %v5988 = vsel %vm5874, %v5980, %v5987
  %v5989 = vsel %vm5876, %v5984, %v5988
  %v5990 = vsel %vm5882, %v5989, 0
  %5992 = vmatprep.subr.mxu0 0.0
  %5993 = vmatpush1.msra.mxu0 %v5990
  %5994 = vmatprep.subr.mxu0 0.0
  %5995 = vmatpush1.msra.mxu0 0.0
  %5996 = vmatprep.subr.mxu0 0.0
  %5997 = vmatpush1.msra.mxu0 0.0
  %5998 = vmatprep.subr.mxu0 0.0
  %5999 = vmatpush1.msra.mxu0 0.0
  %6000 = vmatprep.subr.mxu0 0.0
  %6001 = vmatpush1.msra.mxu0 0.0
  %6002 = vmatprep.subr.mxu0 0.0
  %6003 = vmatpush1.msra.mxu0 0.0
  %6004 = vmatprep.subr.mxu0 0.0
  %6005 = vmatpush1.msra.mxu0 0.0
  %6006 = vmatprep.subr.mxu0 0.0
  %6007 = vmatpush1.msra.mxu0 0.0
  %6008 = vmatprep.subr.mxu0 0.0
  %6009 = vmatpush1.msra.mxu0 0.0
  %6010 = vmatprep.subr.mxu0 0.0
  %6011 = vmatpush1.msra.mxu0 0.0
  %6012 = vmatprep.subr.mxu0 0.0
  %6013 = vmatpush1.msra.mxu0 0.0
  %6014 = vmatprep.subr.mxu0 0.0
  %6015 = vmatpush1.msra.mxu0 0.0
  %6016 = vmatprep.subr.mxu0 0.0
  %6017 = vmatpush1.msra.mxu0 0.0
  %6018 = vmatprep.subr.mxu0 0.0
  %6019 = vmatpush1.msra.mxu0 0.0
  %6020 = vmatprep.subr.mxu0 0.0
  %6021 = vmatpush1.msra.mxu0 0.0
  %6022 = vmatprep.subr.mxu0 0.0
  %6023 = vmatpush1.msra.mxu0 0.0
  %6024 = vmatprep.subr.mxu0 0.0
  %6025 = vmatpush1.msra.mxu0 0.0
  %6026 = vmatprep.subr.mxu0 0.0
  %6027 = vmatpush1.msra.mxu0 0.0
  %6028 = vmatprep.subr.mxu0 0.0
  %6029 = vmatpush1.msra.mxu0 0.0
  %6030 = vmatprep.subr.mxu0 0.0
  %6031 = vmatpush1.msra.mxu0 0.0
  %6032 = vmatprep.subr.mxu0 0.0
  %6033 = vmatpush1.msra.mxu0 0.0
  %6034 = vmatprep.subr.mxu0 0.0
  %6035 = vmatpush1.msra.mxu0 0.0
  %6036 = vmatprep.subr.mxu0 0.0
  %6037 = vmatpush1.msra.mxu0 0.0
  %6038 = vmatprep.subr.mxu0 0.0
  %6039 = vmatpush1.msra.mxu0 0.0
  %6040 = vmatprep.subr.mxu0 0.0
  %6041 = vmatpush1.msra.mxu0 0.0
  %6042 = vmatprep.subr.mxu0 0.0
  %6043 = vmatpush1.msra.mxu0 0.0
  %6044 = vmatprep.subr.mxu0 0.0
  %6045 = vmatpush1.msra.mxu0 0.0
  %6046 = vmatprep.subr.mxu0 0.0
  %6047 = vmatpush1.msra.mxu0 0.0
  %6048 = vmatprep.subr.mxu0 0.0
  %6049 = vmatpush1.msra.mxu0 0.0
  %6050 = vmatprep.subr.mxu0 0.0
  %6051 = vmatpush1.msra.mxu0 0.0
  %6052 = vmatprep.subr.mxu0 0.0
  %6053 = vmatpush1.msra.mxu0 0.0
  %6054 = vmatprep.subr.mxu0 0.0
  %6055 = vmatpush1.msra.mxu0 0.0
  %6056 = vmatprep.mubr.f32.mxu0 0.0
  %6057 = vmatmul.mubr.f32.gmra.mrb[0].mxu0 %v5880
  %v6058 = vpop.f32.mrb[0].mxu0
  %v6059 = vadd.f32 0.0, %v6058
  %v6060 = vpop.f32.mrb[0].mxu0
  %6061 = vdwg.mxu0
  %v6068 = vlaneseq
  %v6069 = vshrl.u32 %v6068, 7
  %v6070 = vsub.s32 %v4824, %v6069
  %v6071 = vrot.slane %v5829, %v6070
  %v6072 = vlaneseq
  %v6073 = vshrl.u32 %v6072, 7
  %v6074 = vsub.s32 %v4824, %v6073
  %v6075 = vrot.slane %v5830, %v6074
  %v6076 = vlaneseq
  %v6077 = vshrl.u32 %v6076, 7
  %v6078 = vsub.s32 %v4824, %v6077
  %v6079 = vrot.slane %v5831, %v6078
  %v6080 = vlaneseq
  %v6081 = vshrl.u32 %v6080, 7
  %v6082 = vsub.s32 %v4824, %v6081
  %v6083 = vrot.slane %v5832, %v6082
  %v6084 = vlaneseq
  %v6085 = vshrl.u32 %v6084, 7
  %v6086 = vsub.s32 %v4824, %v6085
  %v6087 = vrot.slane %v5833, %v6086
  %v6088 = vlaneseq
  %v6089 = vshrl.u32 %v6088, 7
  %v6090 = vsub.s32 %v4824, %v6089
  %v6091 = vrot.slane %v5834, %v6090
  %v6092 = vsel %vm4921, %v6075, %v6071
  %v6093 = vsel %vm4922, %v6079, %v6092
  %v6094 = vsel %vm4924, %v6083, %v6093
  %v6095 = vsel %vm5874, %v6087, %v6094
  %v6096 = vsel %vm5876, %v6091, %v6095
  %v6097 = vsel %vm5882, %v6096, 0
  %6099 = vmatprep.subr.mxu0 0.0
  %6100 = vmatpush1.msra.mxu0 %v6097
  %6101 = vmatprep.subr.mxu0 0.0
  %6102 = vmatpush1.msra.mxu0 0.0
  %6103 = vmatprep.subr.mxu0 0.0
  %6104 = vmatpush1.msra.mxu0 0.0
  %6105 = vmatprep.subr.mxu0 0.0
  %6106 = vmatpush1.msra.mxu0 0.0
  %6107 = vmatprep.subr.mxu0 0.0
  %6108 = vmatpush1.msra.mxu0 0.0
  %6109 = vmatprep.subr.mxu0 0.0
  %6110 = vmatpush1.msra.mxu0 0.0
  %6111 = vmatprep.subr.mxu0 0.0
  %6112 = vmatpush1.msra.mxu0 0.0
  %6113 = vmatprep.subr.mxu0 0.0
  %6114 = vmatpush1.msra.mxu0 0.0
  %6115 = vmatprep.subr.mxu0 0.0
  %6116 = vmatpush1.msra.mxu0 0.0
  %6117 = vmatprep.subr.mxu0 0.0
  %6118 = vmatpush1.msra.mxu0 0.0
  %6119 = vmatprep.subr.mxu0 0.0
  %6120 = vmatpush1.msra.mxu0 0.0
  %6121 = vmatprep.subr.mxu0 0.0
  %6122 = vmatpush1.msra.mxu0 0.0
  %6123 = vmatprep.subr.mxu0 0.0
  %6124 = vmatpush1.msra.mxu0 0.0
  %6125 = vmatprep.subr.mxu0 0.0
  %6126 = vmatpush1.msra.mxu0 0.0
  %6127 = vmatprep.subr.mxu0 0.0
  %6128 = vmatpush1.msra.mxu0 0.0
  %6129 = vmatprep.subr.mxu0 0.0
  %6130 = vmatpush1.msra.mxu0 0.0
  %6131 = vmatprep.subr.mxu0 0.0
  %6132 = vmatpush1.msra.mxu0 0.0
  %6133 = vmatprep.subr.mxu0 0.0
  %6134 = vmatpush1.msra.mxu0 0.0
  %6135 = vmatprep.subr.mxu0 0.0
  %6136 = vmatpush1.msra.mxu0 0.0
  %6137 = vmatprep.subr.mxu0 0.0
  %6138 = vmatpush1.msra.mxu0 0.0
  %6139 = vmatprep.subr.mxu0 0.0
  %6140 = vmatpush1.msra.mxu0 0.0
  %6141 = vmatprep.subr.mxu0 0.0
  %6142 = vmatpush1.msra.mxu0 0.0
  %6143 = vmatprep.subr.mxu0 0.0
  %6144 = vmatpush1.msra.mxu0 0.0
  %6145 = vmatprep.subr.mxu0 0.0
  %6146 = vmatpush1.msra.mxu0 0.0
  %6147 = vmatprep.subr.mxu0 0.0
  %6148 = vmatpush1.msra.mxu0 0.0
  %6149 = vmatprep.subr.mxu0 0.0
  %6150 = vmatpush1.msra.mxu0 0.0
  %6151 = vmatprep.subr.mxu0 0.0
  %6152 = vmatpush1.msra.mxu0 0.0
  %6153 = vmatprep.subr.mxu0 0.0
  %6154 = vmatpush1.msra.mxu0 0.0
  %6155 = vmatprep.subr.mxu0 0.0
  %6156 = vmatpush1.msra.mxu0 0.0
  %6157 = vmatprep.subr.mxu0 0.0
  %6158 = vmatpush1.msra.mxu0 0.0
  %6159 = vmatprep.subr.mxu0 0.0
  %6160 = vmatpush1.msra.mxu0 0.0
  %6161 = vmatprep.subr.mxu0 0.0
  %6162 = vmatpush1.msra.mxu0 0.0
  %6163 = vmatprep.mubr.f32.mxu0 0.0
  %6164 = vmatmul.mubr.f32.gmra.mrb[0].mxu0 %v5880
  %v6165 = vpop.f32.mrb[0].mxu0
  %v6166 = vadd.f32 0.0, %v6165
  %v6167 = vpop.f32.mrb[0].mxu0
  %6168 = vdwg.mxu0
  %v6175 = vlaneseq
  %v6176 = vshrl.u32 %v6175, 7
  %v6177 = vsub.s32 %v4824, %v6176
  %v6178 = vrot.slane %v5835, %v6177
  %v6179 = vlaneseq
  %v6180 = vshrl.u32 %v6179, 7
  %v6181 = vsub.s32 %v4824, %v6180
  %v6182 = vrot.slane %v5836, %v6181
  %v6183 = vlaneseq
  %v6184 = vshrl.u32 %v6183, 7
  %v6185 = vsub.s32 %v4824, %v6184
  %v6186 = vrot.slane %v5837, %v6185
  %v6187 = vlaneseq
  %v6188 = vshrl.u32 %v6187, 7
  %v6189 = vsub.s32 %v4824, %v6188
  %v6190 = vrot.slane %v5838, %v6189
  %v6191 = vlaneseq
  %v6192 = vshrl.u32 %v6191, 7
  %v6193 = vsub.s32 %v4824, %v6192
  %v6194 = vrot.slane %v5839, %v6193
  %v6195 = vlaneseq
  %v6196 = vshrl.u32 %v6195, 7
  %v6197 = vsub.s32 %v4824, %v6196
  %v6198 = vrot.slane %v5840, %v6197
  %v6199 = vsel %vm4921, %v6182, %v6178
  %v6200 = vsel %vm4922, %v6186, %v6199
  %v6201 = vsel %vm4924, %v6190, %v6200
  %v6202 = vsel %vm5874, %v6194, %v6201
  %v6203 = vsel %vm5876, %v6198, %v6202
  %v6204 = vsel %vm5882, %v6203, 0
  %6206 = vmatprep.subr.mxu0 0.0
  %6207 = vmatpush1.msra.mxu0 %v6204
  %6208 = vmatprep.subr.mxu0 0.0
  %6209 = vmatpush1.msra.mxu0 0.0
  %6210 = vmatprep.subr.mxu0 0.0
  %6211 = vmatpush1.msra.mxu0 0.0
  %6212 = vmatprep.subr.mxu0 0.0
  %6213 = vmatpush1.msra.mxu0 0.0
  %6214 = vmatprep.subr.mxu0 0.0
  %6215 = vmatpush1.msra.mxu0 0.0
  %6216 = vmatprep.subr.mxu0 0.0
  %6217 = vmatpush1.msra.mxu0 0.0
  %6218 = vmatprep.subr.mxu0 0.0
  %6219 = vmatpush1.msra.mxu0 0.0
  %6220 = vmatprep.subr.mxu0 0.0
  %6221 = vmatpush1.msra.mxu0 0.0
  %6222 = vmatprep.subr.mxu0 0.0
  %6223 = vmatpush1.msra.mxu0 0.0
  %6224 = vmatprep.subr.mxu0 0.0
  %6225 = vmatpush1.msra.mxu0 0.0
  %6226 = vmatprep.subr.mxu0 0.0
  %6227 = vmatpush1.msra.mxu0 0.0
  %6228 = vmatprep.subr.mxu0 0.0
  %6229 = vmatpush1.msra.mxu0 0.0
  %6230 = vmatprep.subr.mxu0 0.0
  %6231 = vmatpush1.msra.mxu0 0.0
  %6232 = vmatprep.subr.mxu0 0.0
  %6233 = vmatpush1.msra.mxu0 0.0
  %6234 = vmatprep.subr.mxu0 0.0
  %6235 = vmatpush1.msra.mxu0 0.0
  %6236 = vmatprep.subr.mxu0 0.0
  %6237 = vmatpush1.msra.mxu0 0.0
  %6238 = vmatprep.subr.mxu0 0.0
  %6239 = vmatpush1.msra.mxu0 0.0
  %6240 = vmatprep.subr.mxu0 0.0
  %6241 = vmatpush1.msra.mxu0 0.0
  %6242 = vmatprep.subr.mxu0 0.0
  %6243 = vmatpush1.msra.mxu0 0.0
  %6244 = vmatprep.subr.mxu0 0.0
  %6245 = vmatpush1.msra.mxu0 0.0
  %6246 = vmatprep.subr.mxu0 0.0
  %6247 = vmatpush1.msra.mxu0 0.0
  %6248 = vmatprep.subr.mxu0 0.0
  %6249 = vmatpush1.msra.mxu0 0.0
  %6250 = vmatprep.subr.mxu0 0.0
  %6251 = vmatpush1.msra.mxu0 0.0
  %6252 = vmatprep.subr.mxu0 0.0
  %6253 = vmatpush1.msra.mxu0 0.0
  %6254 = vmatprep.subr.mxu0 0.0
  %6255 = vmatpush1.msra.mxu0 0.0
  %6256 = vmatprep.subr.mxu0 0.0
  %6257 = vmatpush1.msra.mxu0 0.0
  %6258 = vmatprep.subr.mxu0 0.0
  %6259 = vmatpush1.msra.mxu0 0.0
  %6260 = vmatprep.subr.mxu0 0.0
  %6261 = vmatpush1.msra.mxu0 0.0
  %6262 = vmatprep.subr.mxu0 0.0
  %6263 = vmatpush1.msra.mxu0 0.0
  %6264 = vmatprep.subr.mxu0 0.0
  %6265 = vmatpush1.msra.mxu0 0.0
  %6266 = vmatprep.subr.mxu0 0.0
  %6267 = vmatpush1.msra.mxu0 0.0
  %6268 = vmatprep.subr.mxu0 0.0
  %6269 = vmatpush1.msra.mxu0 0.0
  %6270 = vmatprep.mubr.f32.mxu0 0.0
  %6271 = vmatmul.mubr.f32.gmra.mrb[0].mxu0 %v5880
  %v6272 = vpop.f32.mrb[0].mxu0
  %v6273 = vadd.f32 0.0, %v6272
  %v6274 = vpop.f32.mrb[0].mxu0
  %6275 = vdwg.mxu0
  %v6277 = vsel %vm5068, %v5952, 0
  %6279 = vmatprep.subr.mxu0 0.0
  %6280 = vmatpush1.msra.mxu0 %v6277
  %6281 = vmatprep.subr.mxu0 0.0
  %6282 = vmatpush1.msra.mxu0 0.0
  %6283 = vmatprep.subr.mxu0 0.0
  %6284 = vmatpush1.msra.mxu0 0.0
  %6285 = vmatprep.subr.mxu0 0.0
  %6286 = vmatpush1.msra.mxu0 0.0
  %6287 = vmatprep.subr.mxu0 0.0
  %6288 = vmatpush1.msra.mxu0 0.0
  %6289 = vmatprep.subr.mxu0 0.0
  %6290 = vmatpush1.msra.mxu0 0.0
  %6291 = vmatprep.subr.mxu0 0.0
  %6292 = vmatpush1.msra.mxu0 0.0
  %6293 = vmatprep.subr.mxu0 0.0
  %6294 = vmatpush1.msra.mxu0 0.0
  %6295 = vmatprep.subr.mxu0 0.0
  %6296 = vmatpush1.msra.mxu0 0.0
  %6297 = vmatprep.subr.mxu0 0.0
  %6298 = vmatpush1.msra.mxu0 0.0
  %6299 = vmatprep.subr.mxu0 0.0
  %6300 = vmatpush1.msra.mxu0 0.0
  %6301 = vmatprep.subr.mxu0 0.0
  %6302 = vmatpush1.msra.mxu0 0.0
  %6303 = vmatprep.subr.mxu0 0.0
  %6304 = vmatpush1.msra.mxu0 0.0
  %6305 = vmatprep.subr.mxu0 0.0
  %6306 = vmatpush1.msra.mxu0 0.0
  %6307 = vmatprep.subr.mxu0 0.0
  %6308 = vmatpush1.msra.mxu0 0.0
  %6309 = vmatprep.subr.mxu0 0.0
  %6310 = vmatpush1.msra.mxu0 0.0
  %6311 = vmatprep.subr.mxu0 0.0
  %6312 = vmatpush1.msra.mxu0 0.0
  %6313 = vmatprep.subr.mxu0 0.0
  %6314 = vmatpush1.msra.mxu0 0.0
  %6315 = vmatprep.subr.mxu0 0.0
  %6316 = vmatpush1.msra.mxu0 0.0
  %6317 = vmatprep.subr.mxu0 0.0
  %6318 = vmatpush1.msra.mxu0 0.0
  %6319 = vmatprep.subr.mxu0 0.0
  %6320 = vmatpush1.msra.mxu0 0.0
  %6321 = vmatprep.subr.mxu0 0.0
  %6322 = vmatpush1.msra.mxu0 0.0
  %6323 = vmatprep.subr.mxu0 0.0
  %6324 = vmatpush1.msra.mxu0 0.0
  %6325 = vmatprep.subr.mxu0 0.0
  %6326 = vmatpush1.msra.mxu0 0.0
  %6327 = vmatprep.subr.mxu0 0.0
  %6328 = vmatpush1.msra.mxu0 0.0
  %6329 = vmatprep.subr.mxu0 0.0
  %6330 = vmatpush1.msra.mxu0 0.0
  %6331 = vmatprep.subr.mxu0 0.0
  %6332 = vmatpush1.msra.mxu0 0.0
  %6333 = vmatprep.subr.mxu0 0.0
  %6334 = vmatpush1.msra.mxu0 0.0
  %6335 = vmatprep.subr.mxu0 0.0
  %6336 = vmatpush1.msra.mxu0 0.0
  %6337 = vmatprep.subr.mxu0 0.0
  %6338 = vmatpush1.msra.mxu0 0.0
  %6339 = vmatprep.subr.mxu0 0.0
  %6340 = vmatpush1.msra.mxu0 0.0
  %6341 = vmatprep.subr.mxu0 0.0
  %6342 = vmatpush1.msra.mxu0 0.0
  %6343 = vmatprep.mubr.f32.mxu0 0.0
  %6344 = vmatmul.mubr.f32.gmra.mrb[0].mxu0 %v5066
  %v6345 = vpop.f32.mrb[0].mxu0
  %v6346 = vadd.f32 0.0, %v6345
  %v6347 = vpop.f32.mrb[0].mxu0
  %6348 = vdwg.mxu0
  %v6350 = vsel %vm5068, %v6059, 0
  %6352 = vmatprep.subr.mxu0 0.0
  %6353 = vmatpush1.msra.mxu0 %v6350
  %6354 = vmatprep.subr.mxu0 0.0
  %6355 = vmatpush1.msra.mxu0 0.0
  %6356 = vmatprep.subr.mxu0 0.0
  %6357 = vmatpush1.msra.mxu0 0.0
  %6358 = vmatprep.subr.mxu0 0.0
  %6359 = vmatpush1.msra.mxu0 0.0
  %6360 = vmatprep.subr.mxu0 0.0
  %6361 = vmatpush1.msra.mxu0 0.0
  %6362 = vmatprep.subr.mxu0 0.0
  %6363 = vmatpush1.msra.mxu0 0.0
  %6364 = vmatprep.subr.mxu0 0.0
  %6365 = vmatpush1.msra.mxu0 0.0
  %6366 = vmatprep.subr.mxu0 0.0
  %6367 = vmatpush1.msra.mxu0 0.0
  %6368 = vmatprep.subr.mxu0 0.0
  %6369 = vmatpush1.msra.mxu0 0.0
  %6370 = vmatprep.subr.mxu0 0.0
  %6371 = vmatpush1.msra.mxu0 0.0
  %6372 = vmatprep.subr.mxu0 0.0
  %6373 = vmatpush1.msra.mxu0 0.0
  %6374 = vmatprep.subr.mxu0 0.0
  %6375 = vmatpush1.msra.mxu0 0.0
  %6376 = vmatprep.subr.mxu0 0.0
  %6377 = vmatpush1.msra.mxu0 0.0
  %6378 = vmatprep.subr.mxu0 0.0
  %6379 = vmatpush1.msra.mxu0 0.0
  %6380 = vmatprep.subr.mxu0 0.0
  %6381 = vmatpush1.msra.mxu0 0.0
  %6382 = vmatprep.subr.mxu0 0.0
  %6383 = vmatpush1.msra.mxu0 0.0
  %6384 = vmatprep.subr.mxu0 0.0
  %6385 = vmatpush1.msra.mxu0 0.0
  %6386 = vmatprep.subr.mxu0 0.0
  %6387 = vmatpush1.msra.mxu0 0.0
  %6388 = vmatprep.subr.mxu0 0.0
  %6389 = vmatpush1.msra.mxu0 0.0
  %6390 = vmatprep.subr.mxu0 0.0
  %6391 = vmatpush1.msra.mxu0 0.0
  %6392 = vmatprep.subr.mxu0 0.0
  %6393 = vmatpush1.msra.mxu0 0.0
  %6394 = vmatprep.subr.mxu0 0.0
  %6395 = vmatpush1.msra.mxu0 0.0
  %6396 = vmatprep.subr.mxu0 0.0
  %6397 = vmatpush1.msra.mxu0 0.0
  %6398 = vmatprep.subr.mxu0 0.0
  %6399 = vmatpush1.msra.mxu0 0.0
  %6400 = vmatprep.subr.mxu0 0.0
  %6401 = vmatpush1.msra.mxu0 0.0
  %6402 = vmatprep.subr.mxu0 0.0
  %6403 = vmatpush1.msra.mxu0 0.0
  %6404 = vmatprep.subr.mxu0 0.0
  %6405 = vmatpush1.msra.mxu0 0.0
  %6406 = vmatprep.subr.mxu0 0.0
  %6407 = vmatpush1.msra.mxu0 0.0
  %6408 = vmatprep.subr.mxu0 0.0
  %6409 = vmatpush1.msra.mxu0 0.0
  %6410 = vmatprep.subr.mxu0 0.0
  %6411 = vmatpush1.msra.mxu0 0.0
  %6412 = vmatprep.subr.mxu0 0.0
  %6413 = vmatpush1.msra.mxu0 0.0
  %6414 = vmatprep.subr.mxu0 0.0
  %6415 = vmatpush1.msra.mxu0 0.0
  %6416 = vmatprep.mubr.f32.mxu0 0.0
  %6417 = vmatmul.mubr.f32.gmra.mrb[0].mxu0 %v5066
  %v6418 = vpop.f32.mrb[0].mxu0
  %v6419 = vadd.f32 0.0, %v6418
  %v6420 = vpop.f32.mrb[0].mxu0
  %6421 = vdwg.mxu0
  %v6423 = vsel %vm5068, %v6166, 0
  %6425 = vmatprep.subr.mxu0 0.0
  %6426 = vmatpush1.msra.mxu0 %v6423
  %6427 = vmatprep.subr.mxu0 0.0
  %6428 = vmatpush1.msra.mxu0 0.0
  %6429 = vmatprep.subr.mxu0 0.0
  %6430 = vmatpush1.msra.mxu0 0.0
  %6431 = vmatprep.subr.mxu0 0.0
  %6432 = vmatpush1.msra.mxu0 0.0
  %6433 = vmatprep.subr.mxu0 0.0
  %6434 = vmatpush1.msra.mxu0 0.0
  %6435 = vmatprep.subr.mxu0 0.0
  %6436 = vmatpush1.msra.mxu0 0.0
  %6437 = vmatprep.subr.mxu0 0.0
  %6438 = vmatpush1.msra.mxu0 0.0
  %6439 = vmatprep.subr.mxu0 0.0
  %6440 = vmatpush1.msra.mxu0 0.0
  %6441 = vmatprep.subr.mxu0 0.0
  %6442 = vmatpush1.msra.mxu0 0.0
  %6443 = vmatprep.subr.mxu0 0.0
  %6444 = vmatpush1.msra.mxu0 0.0
  %6445 = vmatprep.subr.mxu0 0.0
  %6446 = vmatpush1.msra.mxu0 0.0
  %6447 = vmatprep.subr.mxu0 0.0
  %6448 = vmatpush1.msra.mxu0 0.0
  %6449 = vmatprep.subr.mxu0 0.0
  %6450 = vmatpush1.msra.mxu0 0.0
  %6451 = vmatprep.subr.mxu0 0.0
  %6452 = vmatpush1.msra.mxu0 0.0
  %6453 = vmatprep.subr.mxu0 0.0
  %6454 = vmatpush1.msra.mxu0 0.0
  %6455 = vmatprep.subr.mxu0 0.0
  %6456 = vmatpush1.msra.mxu0 0.0
  %6457 = vmatprep.subr.mxu0 0.0
  %6458 = vmatpush1.msra.mxu0 0.0
  %6459 = vmatprep.subr.mxu0 0.0
  %6460 = vmatpush1.msra.mxu0 0.0
  %6461 = vmatprep.subr.mxu0 0.0
  %6462 = vmatpush1.msra.mxu0 0.0
  %6463 = vmatprep.subr.mxu0 0.0
  %6464 = vmatpush1.msra.mxu0 0.0
  %6465 = vmatprep.subr.mxu0 0.0
  %6466 = vmatpush1.msra.mxu0 0.0
  %6467 = vmatprep.subr.mxu0 0.0
  %6468 = vmatpush1.msra.mxu0 0.0
  %6469 = vmatprep.subr.mxu0 0.0
  %6470 = vmatpush1.msra.mxu0 0.0
  %6471 = vmatprep.subr.mxu0 0.0
  %6472 = vmatpush1.msra.mxu0 0.0
  %6473 = vmatprep.subr.mxu0 0.0
  %6474 = vmatpush1.msra.mxu0 0.0
  %6475 = vmatprep.subr.mxu0 0.0
  %6476 = vmatpush1.msra.mxu0 0.0
  %6477 = vmatprep.subr.mxu0 0.0
  %6478 = vmatpush1.msra.mxu0 0.0
  %6479 = vmatprep.subr.mxu0 0.0
  %6480 = vmatpush1.msra.mxu0 0.0
  %6481 = vmatprep.subr.mxu0 0.0
  %6482 = vmatpush1.msra.mxu0 0.0
  %6483 = vmatprep.subr.mxu0 0.0
  %6484 = vmatpush1.msra.mxu0 0.0
  %6485 = vmatprep.subr.mxu0 0.0
  %6486 = vmatpush1.msra.mxu0 0.0
  %6487 = vmatprep.subr.mxu0 0.0
  %6488 = vmatpush1.msra.mxu0 0.0
  %6489 = vmatprep.mubr.f32.mxu0 0.0
  %6490 = vmatmul.mubr.f32.gmra.mrb[0].mxu0 %v5066
  %v6491 = vpop.f32.mrb[0].mxu0
  %v6492 = vadd.f32 0.0, %v6491
  %v6493 = vpop.f32.mrb[0].mxu0
  %6494 = vdwg.mxu0
  %v6496 = vsel %vm5068, %v6273, 0
  %6498 = vmatprep.subr.mxu0 0.0
  %6499 = vmatpush1.msra.mxu0 %v6496
  %6500 = vmatprep.subr.mxu0 0.0
  %6501 = vmatpush1.msra.mxu0 0.0
  %6502 = vmatprep.subr.mxu0 0.0
  %6503 = vmatpush1.msra.mxu0 0.0
  %6504 = vmatprep.subr.mxu0 0.0
  %6505 = vmatpush1.msra.mxu0 0.0
  %6506 = vmatprep.subr.mxu0 0.0
  %6507 = vmatpush1.msra.mxu0 0.0
  %6508 = vmatprep.subr.mxu0 0.0
  %6509 = vmatpush1.msra.mxu0 0.0
  %6510 = vmatprep.subr.mxu0 0.0
  %6511 = vmatpush1.msra.mxu0 0.0
  %6512 = vmatprep.subr.mxu0 0.0
  %6513 = vmatpush1.msra.mxu0 0.0
  %6514 = vmatprep.subr.mxu0 0.0
  %6515 = vmatpush1.msra.mxu0 0.0
  %6516 = vmatprep.subr.mxu0 0.0
  %6517 = vmatpush1.msra.mxu0 0.0
  %6518 = vmatprep.subr.mxu0 0.0
  %6519 = vmatpush1.msra.mxu0 0.0
  %6520 = vmatprep.subr.mxu0 0.0
  %6521 = vmatpush1.msra.mxu0 0.0
  %6522 = vmatprep.subr.mxu0 0.0
  %6523 = vmatpush1.msra.mxu0 0.0
  %6524 = vmatprep.subr.mxu0 0.0
  %6525 = vmatpush1.msra.mxu0 0.0
  %6526 = vmatprep.subr.mxu0 0.0
  %6527 = vmatpush1.msra.mxu0 0.0
  %6528 = vmatprep.subr.mxu0 0.0
  %6529 = vmatpush1.msra.mxu0 0.0
  %6530 = vmatprep.subr.mxu0 0.0
  %6531 = vmatpush1.msra.mxu0 0.0
  %6532 = vmatprep.subr.mxu0 0.0
  %6533 = vmatpush1.msra.mxu0 0.0
  %6534 = vmatprep.subr.mxu0 0.0
  %6535 = vmatpush1.msra.mxu0 0.0
  %6536 = vmatprep.subr.mxu0 0.0
  %6537 = vmatpush1.msra.mxu0 0.0
  %6538 = vmatprep.subr.mxu0 0.0
  %6539 = vmatpush1.msra.mxu0 0.0
  %6540 = vmatprep.subr.mxu0 0.0
  %6541 = vmatpush1.msra.mxu0 0.0
  %6542 = vmatprep.subr.mxu0 0.0
  %6543 = vmatpush1.msra.mxu0 0.0
  %6544 = vmatprep.subr.mxu0 0.0
  %6545 = vmatpush1.msra.mxu0 0.0
  %6546 = vmatprep.subr.mxu0 0.0
  %6547 = vmatpush1.msra.mxu0 0.0
  %6548 = vmatprep.subr.mxu0 0.0
  %6549 = vmatpush1.msra.mxu0 0.0
  %6550 = vmatprep.subr.mxu0 0.0
  %6551 = vmatpush1.msra.mxu0 0.0
  %6552 = vmatprep.subr.mxu0 0.0
  %6553 = vmatpush1.msra.mxu0 0.0
  %6554 = vmatprep.subr.mxu0 0.0
  %6555 = vmatpush1.msra.mxu0 0.0
  %6556 = vmatprep.subr.mxu0 0.0
  %6557 = vmatpush1.msra.mxu0 0.0
  %6558 = vmatprep.subr.mxu0 0.0
  %6559 = vmatpush1.msra.mxu0 0.0
  %6560 = vmatprep.subr.mxu0 0.0
  %6561 = vmatpush1.msra.mxu0 0.0
  %6562 = vmatprep.mubr.f32.mxu0 0.0
  %6563 = vmatmul.mubr.f32.gmra.mrb[0].mxu0 %v5066
  %v6564 = vpop.f32.mrb[0].mxu0
  %v6565 = vadd.f32 0.0, %v6564
  %v6566 = vpop.f32.mrb[0].mxu0
  %6567 = vdwg.mxu0
  %v6568 = vlaneseq
  %v6569 = vshrl.u32 %v6568, 7
  %v6570 = vsub.s32 0, %v6569
  %v6571 = vrot.slane %v6346, %v6570
  %6573 = vbcast.lane.b32.xlu0 %v6571, 256
  %v6574 = vpop.permute.xlu0 %6573
  %v6575 = vlaneseq
  %v6576 = vshrl.u32 %v6575, 7
  %v6577 = vsub.s32 1, %v6576
  %v6578 = vrot.slane %v6346, %v6577
  %6580 = vbcast.lane.b32.xlu0 %v6578, 256
  %v6581 = vpop.permute.xlu0 %6580
  %v6582 = vlaneseq
  %v6583 = vshrl.u32 %v6582, 7
  %v6584 = vsub.s32 2, %v6583
  %v6585 = vrot.slane %v6346, %v6584
  %6587 = vbcast.lane.b32.xlu0 %v6585, 256
  %v6588 = vpop.permute.xlu0 %6587
  %v6589 = vlaneseq
  %v6590 = vshrl.u32 %v6589, 7
  %v6591 = vsub.s32 3, %v6590
  %v6592 = vrot.slane %v6346, %v6591
  %6594 = vbcast.lane.b32.xlu0 %v6592, 256
  %v6595 = vpop.permute.xlu0 %6594
  %v6596 = vlaneseq
  %v6597 = vshrl.u32 %v6596, 7
  %v6598 = vsub.s32 4, %v6597
  %v6599 = vrot.slane %v6346, %v6598
  %6601 = vbcast.lane.b32.xlu0 %v6599, 256
  %v6602 = vpop.permute.xlu0 %6601
  %v6603 = vlaneseq
  %v6604 = vshrl.u32 %v6603, 7
  %v6605 = vsub.s32 5, %v6604
  %v6606 = vrot.slane %v6346, %v6605
  %6608 = vbcast.lane.b32.xlu0 %v6606, 256
  %v6609 = vpop.permute.xlu0 %6608
  %v6610 = vlaneseq
  %v6611 = vshrl.u32 %v6610, 7
  %v6612 = vsub.s32 0, %v6611
  %v6613 = vrot.slane %v6419, %v6612
  %6615 = vbcast.lane.b32.xlu0 %v6613, 256
  %v6616 = vpop.permute.xlu0 %6615
  %v6617 = vlaneseq
  %v6618 = vshrl.u32 %v6617, 7
  %v6619 = vsub.s32 1, %v6618
  %v6620 = vrot.slane %v6419, %v6619
  %6622 = vbcast.lane.b32.xlu0 %v6620, 256
  %v6623 = vpop.permute.xlu0 %6622
  %v6624 = vlaneseq
  %v6625 = vshrl.u32 %v6624, 7
  %v6626 = vsub.s32 2, %v6625
  %v6627 = vrot.slane %v6419, %v6626
  %6629 = vbcast.lane.b32.xlu0 %v6627, 256
  %v6630 = vpop.permute.xlu0 %6629
  %v6631 = vlaneseq
  %v6632 = vshrl.u32 %v6631, 7
  %v6633 = vsub.s32 3, %v6632
  %v6634 = vrot.slane %v6419, %v6633
  %6636 = vbcast.lane.b32.xlu0 %v6634, 256
  %v6637 = vpop.permute.xlu0 %6636
  %v6638 = vlaneseq
  %v6639 = vshrl.u32 %v6638, 7
  %v6640 = vsub.s32 4, %v6639
  %v6641 = vrot.slane %v6419, %v6640
  %6643 = vbcast.lane.b32.xlu0 %v6641, 256
  %v6644 = vpop.permute.xlu0 %6643
  %v6645 = vlaneseq
  %v6646 = vshrl.u32 %v6645, 7
  %v6647 = vsub.s32 5, %v6646
  %v6648 = vrot.slane %v6419, %v6647
  %6650 = vbcast.lane.b32.xlu0 %v6648, 256
  %v6651 = vpop.permute.xlu0 %6650
  %v6652 = vlaneseq
  %v6653 = vshrl.u32 %v6652, 7
  %v6654 = vsub.s32 0, %v6653
  %v6655 = vrot.slane %v6492, %v6654
  %6657 = vbcast.lane.b32.xlu0 %v6655, 256
  %v6658 = vpop.permute.xlu0 %6657
  %v6659 = vlaneseq
  %v6660 = vshrl.u32 %v6659, 7
  %v6661 = vsub.s32 1, %v6660
  %v6662 = vrot.slane %v6492, %v6661
  %6664 = vbcast.lane.b32.xlu0 %v6662, 256
  %v6665 = vpop.permute.xlu0 %6664
  %v6666 = vlaneseq
  %v6667 = vshrl.u32 %v6666, 7
  %v6668 = vsub.s32 2, %v6667
  %v6669 = vrot.slane %v6492, %v6668
  %6671 = vbcast.lane.b32.xlu0 %v6669, 256
  %v6672 = vpop.permute.xlu0 %6671
  %v6673 = vlaneseq
  %v6674 = vshrl.u32 %v6673, 7
  %v6675 = vsub.s32 3, %v6674
  %v6676 = vrot.slane %v6492, %v6675
  %6678 = vbcast.lane.b32.xlu0 %v6676, 256
  %v6679 = vpop.permute.xlu0 %6678
  %v6680 = vlaneseq
  %v6681 = vshrl.u32 %v6680, 7
  %v6682 = vsub.s32 4, %v6681
  %v6683 = vrot.slane %v6492, %v6682
  %6685 = vbcast.lane.b32.xlu0 %v6683, 256
  %v6686 = vpop.permute.xlu0 %6685
  %v6687 = vlaneseq
  %v6688 = vshrl.u32 %v6687, 7
  %v6689 = vsub.s32 5, %v6688
  %v6690 = vrot.slane %v6492, %v6689
  %6692 = vbcast.lane.b32.xlu0 %v6690, 256
  %v6693 = vpop.permute.xlu0 %6692
  %v6694 = vlaneseq
  %v6695 = vshrl.u32 %v6694, 7
  %v6696 = vsub.s32 0, %v6695
  %v6697 = vrot.slane %v6565, %v6696
  %6699 = vbcast.lane.b32.xlu0 %v6697, 256
  %v6700 = vpop.permute.xlu0 %6699
  %v6701 = vlaneseq
  %v6702 = vshrl.u32 %v6701, 7
  %v6703 = vsub.s32 1, %v6702
  %v6704 = vrot.slane %v6565, %v6703
  %6706 = vbcast.lane.b32.xlu0 %v6704, 256
  %v6707 = vpop.permute.xlu0 %6706
  %v6708 = vlaneseq
  %v6709 = vshrl.u32 %v6708, 7
  %v6710 = vsub.s32 2, %v6709
  %v6711 = vrot.slane %v6565, %v6710
  %6713 = vbcast.lane.b32.xlu0 %v6711, 256
  %v6714 = vpop.permute.xlu0 %6713
  %v6715 = vlaneseq
  %v6716 = vshrl.u32 %v6715, 7
  %v6717 = vsub.s32 3, %v6716
  %v6718 = vrot.slane %v6565, %v6717
  %6720 = vbcast.lane.b32.xlu0 %v6718, 256
  %v6721 = vpop.permute.xlu0 %6720
  %v6722 = vlaneseq
  %v6723 = vshrl.u32 %v6722, 7
  %v6724 = vsub.s32 4, %v6723
  %v6725 = vrot.slane %v6565, %v6724
  %6727 = vbcast.lane.b32.xlu0 %v6725, 256
  %v6728 = vpop.permute.xlu0 %6727
  %v6729 = vlaneseq
  %v6730 = vshrl.u32 %v6729, 7
  %v6731 = vsub.s32 5, %v6730
  %v6732 = vrot.slane %v6565, %v6731
  %6734 = vbcast.lane.b32.xlu0 %v6732, 256
  %v6735 = vpop.permute.xlu0 %6734
  %v6736 = vadd.f32 %v6574, 1e-16
  %v6737 = vadd.f32 %v6581, 1e-16
  %v6738 = vadd.f32 %v6588, 1e-16
  %v6739 = vadd.f32 %v6595, 1e-16
  %v6740 = vadd.f32 %v6602, 1e-16
  %v6741 = vadd.f32 %v6609, 1e-16
  %v6742 = vadd.f32 %v6616, 1e-16
  %v6743 = vadd.f32 %v6623, 1e-16
  %v6744 = vadd.f32 %v6630, 1e-16
  %v6745 = vadd.f32 %v6637, 1e-16
  %v6746 = vadd.f32 %v6644, 1e-16
  %v6747 = vadd.f32 %v6651, 1e-16
  %v6748 = vadd.f32 %v6658, 1e-16
  %v6749 = vadd.f32 %v6665, 1e-16
  %v6750 = vadd.f32 %v6672, 1e-16
  %v6751 = vadd.f32 %v6679, 1e-16
  %v6752 = vadd.f32 %v6686, 1e-16
  %v6753 = vadd.f32 %v6693, 1e-16
  %v6754 = vadd.f32 %v6700, 1e-16
  %v6755 = vadd.f32 %v6707, 1e-16
  %v6756 = vadd.f32 %v6714, 1e-16
  %v6757 = vadd.f32 %v6721, 1e-16
  %v6758 = vadd.f32 %v6728, 1e-16
  %v6759 = vadd.f32 %v6735, 1e-16
  %v6760 = vrcp.pop %v6736
  %v6761 = vmul.f32 1.0, %v6760
  %v6762 = vrcp.pop %v6737
  %v6763 = vmul.f32 1.0, %v6762
  %v6764 = vrcp.pop %v6738
  %v6765 = vmul.f32 1.0, %v6764
  %v6766 = vrcp.pop %v6739
  %v6767 = vmul.f32 1.0, %v6766
  %v6768 = vrcp.pop %v6740
  %v6769 = vmul.f32 1.0, %v6768
  %v6770 = vrcp.pop %v6741
  %v6771 = vmul.f32 1.0, %v6770
  %v6772 = vrcp.pop %v6742
  %v6773 = vmul.f32 1.0, %v6772
  %v6774 = vrcp.pop %v6743
  %v6775 = vmul.f32 1.0, %v6774
  %v6776 = vrcp.pop %v6744
  %v6777 = vmul.f32 1.0, %v6776
  %v6778 = vrcp.pop %v6745
  %v6779 = vmul.f32 1.0, %v6778
  %v6780 = vrcp.pop %v6746
  %v6781 = vmul.f32 1.0, %v6780
  %v6782 = vrcp.pop %v6747
  %v6783 = vmul.f32 1.0, %v6782
  %v6784 = vrcp.pop %v6748
  %v6785 = vmul.f32 1.0, %v6784
  %v6786 = vrcp.pop %v6749
  %v6787 = vmul.f32 1.0, %v6786
  %v6788 = vrcp.pop %v6750
  %v6789 = vmul.f32 1.0, %v6788
  %v6790 = vrcp.pop %v6751
  %v6791 = vmul.f32 1.0, %v6790
  %v6792 = vrcp.pop %v6752
  %v6793 = vmul.f32 1.0, %v6792
  %v6794 = vrcp.pop %v6753
  %v6795 = vmul.f32 1.0, %v6794
  %v6796 = vrcp.pop %v6754
  %v6797 = vmul.f32 1.0, %v6796
  %v6798 = vrcp.pop %v6755
  %v6799 = vmul.f32 1.0, %v6798
  %v6800 = vrcp.pop %v6756
  %v6801 = vmul.f32 1.0, %v6800
  %v6802 = vrcp.pop %v6757
  %v6803 = vmul.f32 1.0, %v6802
  %v6804 = vrcp.pop %v6758
  %v6805 = vmul.f32 1.0, %v6804
  %v6806 = vrcp.pop %v6759
  %v6807 = vmul.f32 1.0, %v6806
  %v6808 = vmul.f32 %v5554, %v6761
  %v6809 = vmul.f32 %v5556, %v6763
  %v6810 = vmul.f32 %v5558, %v6765
  %v6811 = vmul.f32 %v5560, %v6767
  %v6812 = vmul.f32 %v5562, %v6769
  %v6813 = vmul.f32 %v5564, %v6771
  %v6814 = vmul.f32 %v5566, %v6773
  %v6815 = vmul.f32 %v5568, %v6775
  %v6816 = vmul.f32 %v5570, %v6777
  %v6817 = vmul.f32 %v5572, %v6779
  %v6818 = vmul.f32 %v5574, %v6781
  %v6819 = vmul.f32 %v5576, %v6783
  %v6820 = vmul.f32 %v5578, %v6785
  %v6821 = vmul.f32 %v5580, %v6787
  %v6822 = vmul.f32 %v5582, %v6789
  %v6823 = vmul.f32 %v5584, %v6791
  %v6824 = vmul.f32 %v5586, %v6793
  %v6825 = vmul.f32 %v5588, %v6795
  %v6826 = vmul.f32 %v5590, %v6797
  %v6827 = vmul.f32 %v5592, %v6799
  %v6828 = vmul.f32 %v5594, %v6801
  %v6829 = vmul.f32 %v5596, %v6803
  %v6830 = vmul.f32 %v5598, %v6805
  %v6831 = vmul.f32 %v5600, %v6807
  %v6832 = vpack.c.bf16 %v6808, %v6808
  %v6833 = vpack.c.bf16 %v6809, %v6809
  %v6834 = vpack.c.bf16 %v6810, %v6810
  %v6835 = vpack.c.bf16 %v6811, %v6811
  %v6836 = vpack.c.bf16 %v6812, %v6812
  %v6837 = vpack.c.bf16 %v6813, %v6813
  %v6838 = vpack.c.bf16 %v6814, %v6814
  %v6839 = vpack.c.bf16 %v6815, %v6815
  %v6840 = vpack.c.bf16 %v6816, %v6816
  %v6841 = vpack.c.bf16 %v6817, %v6817
  %v6842 = vpack.c.bf16 %v6818, %v6818
  %v6843 = vpack.c.bf16 %v6819, %v6819
  %v6844 = vpack.c.bf16 %v6820, %v6820
  %v6845 = vpack.c.bf16 %v6821, %v6821
  %v6846 = vpack.c.bf16 %v6822, %v6822
  %v6847 = vpack.c.bf16 %v6823, %v6823
  %v6848 = vpack.c.bf16 %v6824, %v6824
  %v6849 = vpack.c.bf16 %v6825, %v6825
  %v6850 = vpack.c.bf16 %v6826, %v6826
  %v6851 = vpack.c.bf16 %v6827, %v6827
  %v6852 = vpack.c.bf16 %v6828, %v6828
  %v6853 = vpack.c.bf16 %v6829, %v6829
  %v6854 = vpack.c.bf16 %v6830, %v6830
  %v6855 = vpack.c.bf16 %v6831, %v6831
  %v6856 = vmul.f32 %v5626, %v6761
  %v6857 = vmul.f32 %v5628, %v6763
  %v6858 = vmul.f32 %v5630, %v6765
  %v6859 = vmul.f32 %v5632, %v6767
  %v6860 = vmul.f32 %v5634, %v6769
  %v6861 = vmul.f32 %v5636, %v6771
  %v6862 = vmul.f32 %v5638, %v6773
  %v6863 = vmul.f32 %v5640, %v6775
  %v6864 = vmul.f32 %v5642, %v6777
  %v6865 = vmul.f32 %v5644, %v6779
  %v6866 = vmul.f32 %v5646, %v6781
  %v6867 = vmul.f32 %v5648, %v6783
  %v6868 = vmul.f32 %v5650, %v6785
  %v6869 = vmul.f32 %v5652, %v6787
  %v6870 = vmul.f32 %v5654, %v6789
  %v6871 = vmul.f32 %v5656, %v6791
  %v6872 = vmul.f32 %v5658, %v6793
  %v6873 = vmul.f32 %v5660, %v6795
  %v6874 = vmul.f32 %v5662, %v6797
  %v6875 = vmul.f32 %v5664, %v6799
  %v6876 = vmul.f32 %v5666, %v6801
  %v6877 = vmul.f32 %v5668, %v6803
  %v6878 = vmul.f32 %v5670, %v6805
  %v6879 = vmul.f32 %v5672, %v6807
  %v6880 = vpack.c.bf16 %v6856, %v6856
  %v6881 = vpack.c.bf16 %v6857, %v6857
  %v6882 = vpack.c.bf16 %v6858, %v6858
  %v6883 = vpack.c.bf16 %v6859, %v6859
  %v6884 = vpack.c.bf16 %v6860, %v6860
  %v6885 = vpack.c.bf16 %v6861, %v6861
  %v6886 = vpack.c.bf16 %v6862, %v6862
  %v6887 = vpack.c.bf16 %v6863, %v6863
  %v6888 = vpack.c.bf16 %v6864, %v6864
  %v6889 = vpack.c.bf16 %v6865, %v6865
  %v6890 = vpack.c.bf16 %v6866, %v6866
  %v6891 = vpack.c.bf16 %v6867, %v6867
  %v6892 = vpack.c.bf16 %v6868, %v6868
  %v6893 = vpack.c.bf16 %v6869, %v6869
  %v6894 = vpack.c.bf16 %v6870, %v6870
  %v6895 = vpack.c.bf16 %v6871, %v6871
  %v6896 = vpack.c.bf16 %v6872, %v6872
  %v6897 = vpack.c.bf16 %v6873, %v6873
  %v6898 = vpack.c.bf16 %v6874, %v6874
  %v6899 = vpack.c.bf16 %v6875, %v6875
  %v6900 = vpack.c.bf16 %v6876, %v6876
  %v6901 = vpack.c.bf16 %v6877, %v6877
  %v6902 = vpack.c.bf16 %v6878, %v6878
  %v6903 = vpack.c.bf16 %v6879, %v6879
  %6905 = vrot.lane.b32.xlu0 %v2360, 120
  %v6906 = vpop.permute.xlu0 %6905
  %v6908 = vsel %vm2384, %v6880, 0
  %v6911 = vsel %vm5068, %v6906, 0
  %6913 = vmatprep.subr.bf16.mxu0 0
  %6914 = vmatpush1.bf16.msra.mxu0 %v6911
  %6915 = vmatprep.subr.bf16.mxu0 0
  %6916 = vmatpush1.bf16.msra.mxu0 0
  %6917 = vmatprep.subr.bf16.mxu0 0
  %6918 = vmatpush1.bf16.msra.mxu0 0
  %6919 = vmatprep.subr.bf16.mxu0 0
  %6920 = vmatpush1.bf16.msra.mxu0 0
  %6921 = vmatprep.subr.bf16.mxu0 0
  %6922 = vmatpush1.bf16.msra.mxu0 0
  %6923 = vmatprep.subr.bf16.mxu0 0
  %6924 = vmatpush1.bf16.msra.mxu0 0
  %6925 = vmatprep.subr.bf16.mxu0 0
  %6926 = vmatpush1.bf16.msra.mxu0 0
  %6927 = vmatprep.subr.bf16.mxu0 0
  %6928 = vmatpush1.bf16.msra.mxu0 0
  %6929 = vmatprep.subr.bf16.mxu0 0
  %6930 = vmatpush1.bf16.msra.mxu0 0
  %6931 = vmatprep.subr.bf16.mxu0 0
  %6932 = vmatpush1.bf16.msra.mxu0 0
  %6933 = vmatprep.subr.bf16.mxu0 0
  %6934 = vmatpush1.bf16.msra.mxu0 0
  %6935 = vmatprep.subr.bf16.mxu0 0
  %6936 = vmatpush1.bf16.msra.mxu0 0
  %6937 = vmatprep.subr.bf16.mxu0 0
  %6938 = vmatpush1.bf16.msra.mxu0 0
  %6939 = vmatprep.subr.bf16.mxu0 0
  %6940 = vmatpush1.bf16.msra.mxu0 0
  %6941 = vmatprep.subr.bf16.mxu0 0
  %6942 = vmatpush1.bf16.msra.mxu0 0
  %6943 = vmatprep.subr.bf16.mxu0 0
  %6944 = vmatpush1.bf16.msra.mxu0 0
  %6945 = vmatprep.mubr.bf16.mxu0 0
  %6946 = vmatmul.mubr.bf16.gmra.mrb[0].mxu0 %v6908
  %v6947 = vpop.f32.mrb[0].mxu0
  %v6948 = vadd.f32 0.0, %v6947
  %v6949 = vpop.f32.mrb[0].mxu0
  %v6950 = vpop.f32.mrb[0].mxu0
  %v6951 = vpop.f32.mrb[0].mxu0
  %6952 = vdwg.mxu0
  %6954 = vrot.lane.b32.xlu0 %v2361, 120
  %v6955 = vpop.permute.xlu0 %6954
  %v6957 = vsel %vm2384, %v6881, 0
  %v6960 = vsel %vm5068, %v6955, 0
  %6962 = vmatprep.subr.bf16.mxu0 0
  %6963 = vmatpush1.bf16.msra.mxu0 %v6960
  %6964 = vmatprep.subr.bf16.mxu0 0
  %6965 = vmatpush1.bf16.msra.mxu0 0
  %6966 = vmatprep.subr.bf16.mxu0 0
  %6967 = vmatpush1.bf16.msra.mxu0 0
  %6968 = vmatprep.subr.bf16.mxu0 0
  %6969 = vmatpush1.bf16.msra.mxu0 0
  %6970 = vmatprep.subr.bf16.mxu0 0
  %6971 = vmatpush1.bf16.msra.mxu0 0
  %6972 = vmatprep.subr.bf16.mxu0 0
  %6973 = vmatpush1.bf16.msra.mxu0 0
  %6974 = vmatprep.subr.bf16.mxu0 0
  %6975 = vmatpush1.bf16.msra.mxu0 0
  %6976 = vmatprep.subr.bf16.mxu0 0
  %6977 = vmatpush1.bf16.msra.mxu0 0
  %6978 = vmatprep.subr.bf16.mxu0 0
  %6979 = vmatpush1.bf16.msra.mxu0 0
  %6980 = vmatprep.subr.bf16.mxu0 0
  %6981 = vmatpush1.bf16.msra.mxu0 0
  %6982 = vmatprep.subr.bf16.mxu0 0
  %6983 = vmatpush1.bf16.msra.mxu0 0
  %6984 = vmatprep.subr.bf16.mxu0 0
  %6985 = vmatpush1.bf16.msra.mxu0 0
  %6986 = vmatprep.subr.bf16.mxu0 0
  %6987 = vmatpush1.bf16.msra.mxu0 0
  %6988 = vmatprep.subr.bf16.mxu0 0
  %6989 = vmatpush1.bf16.msra.mxu0 0
  %6990 = vmatprep.subr.bf16.mxu0 0
  %6991 = vmatpush1.bf16.msra.mxu0 0
  %6992 = vmatprep.subr.bf16.mxu0 0
  %6993 = vmatpush1.bf16.msra.mxu0 0
  %6994 = vmatprep.mubr.bf16.mxu0 0
  %6995 = vmatmul.mubr.bf16.gmra.mrb[0].mxu0 %v6957
  %v6996 = vpop.f32.mrb[0].mxu0
  %v6997 = vadd.f32 0.0, %v6996
  %v6998 = vpop.f32.mrb[0].mxu0
  %v6999 = vpop.f32.mrb[0].mxu0
  %v7000 = vpop.f32.mrb[0].mxu0
  %7001 = vdwg.mxu0
  %7003 = vrot.lane.b32.xlu0 %v2362, 120
  %v7004 = vpop.permute.xlu0 %7003
  %v7006 = vsel %vm2384, %v6882, 0
  %v7009 = vsel %vm5068, %v7004, 0
  %7011 = vmatprep.subr.bf16.mxu0 0
  %7012 = vmatpush1.bf16.msra.mxu0 %v7009
  %7013 = vmatprep.subr.bf16.mxu0 0
  %7014 = vmatpush1.bf16.msra.mxu0 0
  %7015 = vmatprep.subr.bf16.mxu0 0
  %7016 = vmatpush1.bf16.msra.mxu0 0
  %7017 = vmatprep.subr.bf16.mxu0 0
  %7018 = vmatpush1.bf16.msra.mxu0 0
  %7019 = vmatprep.subr.bf16.mxu0 0
  %7020 = vmatpush1.bf16.msra.mxu0 0
  %7021 = vmatprep.subr.bf16.mxu0 0
  %7022 = vmatpush1.bf16.msra.mxu0 0
  %7023 = vmatprep.subr.bf16.mxu0 0
  %7024 = vmatpush1.bf16.msra.mxu0 0
  %7025 = vmatprep.subr.bf16.mxu0 0
  %7026 = vmatpush1.bf16.msra.mxu0 0
  %7027 = vmatprep.subr.bf16.mxu0 0
  %7028 = vmatpush1.bf16.msra.mxu0 0
  %7029 = vmatprep.subr.bf16.mxu0 0
  %7030 = vmatpush1.bf16.msra.mxu0 0
  %7031 = vmatprep.subr.bf16.mxu0 0
  %7032 = vmatpush1.bf16.msra.mxu0 0
  %7033 = vmatprep.subr.bf16.mxu0 0
  %7034 = vmatpush1.bf16.msra.mxu0 0
  %7035 = vmatprep.subr.bf16.mxu0 0
  %7036 = vmatpush1.bf16.msra.mxu0 0
  %7037 = vmatprep.subr.bf16.mxu0 0
  %7038 = vmatpush1.bf16.msra.mxu0 0
  %7039 = vmatprep.subr.bf16.mxu0 0
  %7040 = vmatpush1.bf16.msra.mxu0 0
  %7041 = vmatprep.subr.bf16.mxu0 0
  %7042 = vmatpush1.bf16.msra.mxu0 0
  %7043 = vmatprep.mubr.bf16.mxu0 0
  %7044 = vmatmul.mubr.bf16.gmra.mrb[0].mxu0 %v7006
  %v7045 = vpop.f32.mrb[0].mxu0
  %v7046 = vadd.f32 0.0, %v7045
  %v7047 = vpop.f32.mrb[0].mxu0
  %v7048 = vpop.f32.mrb[0].mxu0
  %v7049 = vpop.f32.mrb[0].mxu0
  %7050 = vdwg.mxu0
  %7052 = vrot.lane.b32.xlu0 %v2363, 120
  %v7053 = vpop.permute.xlu0 %7052
  %v7055 = vsel %vm2384, %v6883, 0
  %v7058 = vsel %vm5068, %v7053, 0
  %7060 = vmatprep.subr.bf16.mxu0 0
  %7061 = vmatpush1.bf16.msra.mxu0 %v7058
  %7062 = vmatprep.subr.bf16.mxu0 0
  %7063 = vmatpush1.bf16.msra.mxu0 0
  %7064 = vmatprep.subr.bf16.mxu0 0
  %7065 = vmatpush1.bf16.msra.mxu0 0
  %7066 = vmatprep.subr.bf16.mxu0 0
  %7067 = vmatpush1.bf16.msra.mxu0 0
  %7068 = vmatprep.subr.bf16.mxu0 0
  %7069 = vmatpush1.bf16.msra.mxu0 0
  %7070 = vmatprep.subr.bf16.mxu0 0
  %7071 = vmatpush1.bf16.msra.mxu0 0
  %7072 = vmatprep.subr.bf16.mxu0 0
  %7073 = vmatpush1.bf16.msra.mxu0 0
  %7074 = vmatprep.subr.bf16.mxu0 0
  %7075 = vmatpush1.bf16.msra.mxu0 0
  %7076 = vmatprep.subr.bf16.mxu0 0
  %7077 = vmatpush1.bf16.msra.mxu0 0
  %7078 = vmatprep.subr.bf16.mxu0 0
  %7079 = vmatpush1.bf16.msra.mxu0 0
  %7080 = vmatprep.subr.bf16.mxu0 0
  %7081 = vmatpush1.bf16.msra.mxu0 0
  %7082 = vmatprep.subr.bf16.mxu0 0
  %7083 = vmatpush1.bf16.msra.mxu0 0
  %7084 = vmatprep.subr.bf16.mxu0 0
  %7085 = vmatpush1.bf16.msra.mxu0 0
  %7086 = vmatprep.subr.bf16.mxu0 0
  %7087 = vmatpush1.bf16.msra.mxu0 0
  %7088 = vmatprep.subr.bf16.mxu0 0
  %7089 = vmatpush1.bf16.msra.mxu0 0
  %7090 = vmatprep.subr.bf16.mxu0 0
  %7091 = vmatpush1.bf16.msra.mxu0 0
  %7092 = vmatprep.mubr.bf16.mxu0 0
  %7093 = vmatmul.mubr.bf16.gmra.mrb[0].mxu0 %v7055
  %v7094 = vpop.f32.mrb[0].mxu0
  %v7095 = vadd.f32 0.0, %v7094
  %v7096 = vpop.f32.mrb[0].mxu0
  %v7097 = vpop.f32.mrb[0].mxu0
  %v7098 = vpop.f32.mrb[0].mxu0
  %7099 = vdwg.mxu0
  %7101 = vrot.lane.b32.xlu0 %v2364, 120
  %v7102 = vpop.permute.xlu0 %7101
  %v7104 = vsel %vm2384, %v6884, 0
  %v7107 = vsel %vm5068, %v7102, 0
  %7109 = vmatprep.subr.bf16.mxu0 0
  %7110 = vmatpush1.bf16.msra.mxu0 %v7107
  %7111 = vmatprep.subr.bf16.mxu0 0
  %7112 = vmatpush1.bf16.msra.mxu0 0
  %7113 = vmatprep.subr.bf16.mxu0 0
  %7114 = vmatpush1.bf16.msra.mxu0 0
  %7115 = vmatprep.subr.bf16.mxu0 0
  %7116 = vmatpush1.bf16.msra.mxu0 0
  %7117 = vmatprep.subr.bf16.mxu0 0
  %7118 = vmatpush1.bf16.msra.mxu0 0
  %7119 = vmatprep.subr.bf16.mxu0 0
  %7120 = vmatpush1.bf16.msra.mxu0 0
  %7121 = vmatprep.subr.bf16.mxu0 0
  %7122 = vmatpush1.bf16.msra.mxu0 0
  %7123 = vmatprep.subr.bf16.mxu0 0
  %7124 = vmatpush1.bf16.msra.mxu0 0
  %7125 = vmatprep.subr.bf16.mxu0 0
  %7126 = vmatpush1.bf16.msra.mxu0 0
  %7127 = vmatprep.subr.bf16.mxu0 0
  %7128 = vmatpush1.bf16.msra.mxu0 0
  %7129 = vmatprep.subr.bf16.mxu0 0
  %7130 = vmatpush1.bf16.msra.mxu0 0
  %7131 = vmatprep.subr.bf16.mxu0 0
  %7132 = vmatpush1.bf16.msra.mxu0 0
  %7133 = vmatprep.subr.bf16.mxu0 0
  %7134 = vmatpush1.bf16.msra.mxu0 0
  %7135 = vmatprep.subr.bf16.mxu0 0
  %7136 = vmatpush1.bf16.msra.mxu0 0
  %7137 = vmatprep.subr.bf16.mxu0 0
  %7138 = vmatpush1.bf16.msra.mxu0 0
  %7139 = vmatprep.subr.bf16.mxu0 0
  %7140 = vmatpush1.bf16.msra.mxu0 0
  %7141 = vmatprep.mubr.bf16.mxu0 0
  %7142 = vmatmul.mubr.bf16.gmra.mrb[0].mxu0 %v7104
  %v7143 = vpop.f32.mrb[0].mxu0
  %v7144 = vadd.f32 0.0, %v7143
  %v7145 = vpop.f32.mrb[0].mxu0
  %v7146 = vpop.f32.mrb[0].mxu0
  %v7147 = vpop.f32.mrb[0].mxu0
  %7148 = vdwg.mxu0
  %7150 = vrot.lane.b32.xlu0 %v2365, 120
  %v7151 = vpop.permute.xlu0 %7150
  %v7153 = vsel %vm2384, %v6885, 0
  %v7156 = vsel %vm5068, %v7151, 0
  %7158 = vmatprep.subr.bf16.mxu0 0
  %7159 = vmatpush1.bf16.msra.mxu0 %v7156
  %7160 = vmatprep.subr.bf16.mxu0 0
  %7161 = vmatpush1.bf16.msra.mxu0 0
  %7162 = vmatprep.subr.bf16.mxu0 0
  %7163 = vmatpush1.bf16.msra.mxu0 0
  %7164 = vmatprep.subr.bf16.mxu0 0
  %7165 = vmatpush1.bf16.msra.mxu0 0
  %7166 = vmatprep.subr.bf16.mxu0 0
  %7167 = vmatpush1.bf16.msra.mxu0 0
  %7168 = vmatprep.subr.bf16.mxu0 0
  %7169 = vmatpush1.bf16.msra.mxu0 0
  %7170 = vmatprep.subr.bf16.mxu0 0
  %7171 = vmatpush1.bf16.msra.mxu0 0
  %7172 = vmatprep.subr.bf16.mxu0 0
  %7173 = vmatpush1.bf16.msra.mxu0 0
  %7174 = vmatprep.subr.bf16.mxu0 0
  %7175 = vmatpush1.bf16.msra.mxu0 0
  %7176 = vmatprep.subr.bf16.mxu0 0
  %7177 = vmatpush1.bf16.msra.mxu0 0
  %7178 = vmatprep.subr.bf16.mxu0 0
  %7179 = vmatpush1.bf16.msra.mxu0 0
  %7180 = vmatprep.subr.bf16.mxu0 0
  %7181 = vmatpush1.bf16.msra.mxu0 0
  %7182 = vmatprep.subr.bf16.mxu0 0
  %7183 = vmatpush1.bf16.msra.mxu0 0
  %7184 = vmatprep.subr.bf16.mxu0 0
  %7185 = vmatpush1.bf16.msra.mxu0 0
  %7186 = vmatprep.subr.bf16.mxu0 0
  %7187 = vmatpush1.bf16.msra.mxu0 0
  %7188 = vmatprep.subr.bf16.mxu0 0
  %7189 = vmatpush1.bf16.msra.mxu0 0
  %7190 = vmatprep.mubr.bf16.mxu0 0
  %7191 = vmatmul.mubr.bf16.gmra.mrb[0].mxu0 %v7153
  %v7192 = vpop.f32.mrb[0].mxu0
  %v7193 = vadd.f32 0.0, %v7192
  %v7194 = vpop.f32.mrb[0].mxu0
  %v7195 = vpop.f32.mrb[0].mxu0
  %v7196 = vpop.f32.mrb[0].mxu0
  %7197 = vdwg.mxu0
  %7199 = vrot.lane.b32.xlu0 %v2366, 120
  %v7200 = vpop.permute.xlu0 %7199
  %v7202 = vsel %vm2384, %v6886, 0
  %v7205 = vsel %vm5068, %v7200, 0
  %7207 = vmatprep.subr.bf16.mxu0 0
  %7208 = vmatpush1.bf16.msra.mxu0 %v7205
  %7209 = vmatprep.subr.bf16.mxu0 0
  %7210 = vmatpush1.bf16.msra.mxu0 0
  %7211 = vmatprep.subr.bf16.mxu0 0
  %7212 = vmatpush1.bf16.msra.mxu0 0
  %7213 = vmatprep.subr.bf16.mxu0 0
  %7214 = vmatpush1.bf16.msra.mxu0 0
  %7215 = vmatprep.subr.bf16.mxu0 0
  %7216 = vmatpush1.bf16.msra.mxu0 0
  %7217 = vmatprep.subr.bf16.mxu0 0
  %7218 = vmatpush1.bf16.msra.mxu0 0
  %7219 = vmatprep.subr.bf16.mxu0 0
  %7220 = vmatpush1.bf16.msra.mxu0 0
  %7221 = vmatprep.subr.bf16.mxu0 0
  %7222 = vmatpush1.bf16.msra.mxu0 0
  %7223 = vmatprep.subr.bf16.mxu0 0
  %7224 = vmatpush1.bf16.msra.mxu0 0
  %7225 = vmatprep.subr.bf16.mxu0 0
  %7226 = vmatpush1.bf16.msra.mxu0 0
  %7227 = vmatprep.subr.bf16.mxu0 0
  %7228 = vmatpush1.bf16.msra.mxu0 0
  %7229 = vmatprep.subr.bf16.mxu0 0
  %7230 = vmatpush1.bf16.msra.mxu0 0
  %7231 = vmatprep.subr.bf16.mxu0 0
  %7232 = vmatpush1.bf16.msra.mxu0 0
  %7233 = vmatprep.subr.bf16.mxu0 0
  %7234 = vmatpush1.bf16.msra.mxu0 0
  %7235 = vmatprep.subr.bf16.mxu0 0
  %7236 = vmatpush1.bf16.msra.mxu0 0
  %7237 = vmatprep.subr.bf16.mxu0 0
  %7238 = vmatpush1.bf16.msra.mxu0 0
  %7239 = vmatprep.mubr.bf16.mxu0 0
  %7240 = vmatmul.mubr.bf16.gmra.mrb[0].mxu0 %v7202
  %v7241 = vpop.f32.mrb[0].mxu0
  %v7242 = vadd.f32 0.0, %v7241
  %v7243 = vpop.f32.mrb[0].mxu0
  %v7244 = vpop.f32.mrb[0].mxu0
  %v7245 = vpop.f32.mrb[0].mxu0
  %7246 = vdwg.mxu0
  %7248 = vrot.lane.b32.xlu0 %v2367, 120
  %v7249 = vpop.permute.xlu0 %7248
  %v7251 = vsel %vm2384, %v6887, 0
  %v7254 = vsel %vm5068, %v7249, 0
  %7256 = vmatprep.subr.bf16.mxu0 0
  %7257 = vmatpush1.bf16.msra.mxu0 %v7254
  %7258 = vmatprep.subr.bf16.mxu0 0
  %7259 = vmatpush1.bf16.msra.mxu0 0
  %7260 = vmatprep.subr.bf16.mxu0 0
  %7261 = vmatpush1.bf16.msra.mxu0 0
  %7262 = vmatprep.subr.bf16.mxu0 0
  %7263 = vmatpush1.bf16.msra.mxu0 0
  %7264 = vmatprep.subr.bf16.mxu0 0
  %7265 = vmatpush1.bf16.msra.mxu0 0
  %7266 = vmatprep.subr.bf16.mxu0 0
  %7267 = vmatpush1.bf16.msra.mxu0 0
  %7268 = vmatprep.subr.bf16.mxu0 0
  %7269 = vmatpush1.bf16.msra.mxu0 0
  %7270 = vmatprep.subr.bf16.mxu0 0
  %7271 = vmatpush1.bf16.msra.mxu0 0
  %7272 = vmatprep.subr.bf16.mxu0 0
  %7273 = vmatpush1.bf16.msra.mxu0 0
  %7274 = vmatprep.subr.bf16.mxu0 0
  %7275 = vmatpush1.bf16.msra.mxu0 0
  %7276 = vmatprep.subr.bf16.mxu0 0
  %7277 = vmatpush1.bf16.msra.mxu0 0
  %7278 = vmatprep.subr.bf16.mxu0 0
  %7279 = vmatpush1.bf16.msra.mxu0 0
  %7280 = vmatprep.subr.bf16.mxu0 0
  %7281 = vmatpush1.bf16.msra.mxu0 0
  %7282 = vmatprep.subr.bf16.mxu0 0
  %7283 = vmatpush1.bf16.msra.mxu0 0
  %7284 = vmatprep.subr.bf16.mxu0 0
  %7285 = vmatpush1.bf16.msra.mxu0 0
  %7286 = vmatprep.subr.bf16.mxu0 0
  %7287 = vmatpush1.bf16.msra.mxu0 0
  %7288 = vmatprep.mubr.bf16.mxu0 0
  %7289 = vmatmul.mubr.bf16.gmra.mrb[0].mxu0 %v7251
  %v7290 = vpop.f32.mrb[0].mxu0
  %v7291 = vadd.f32 0.0, %v7290
  %v7292 = vpop.f32.mrb[0].mxu0
  %v7293 = vpop.f32.mrb[0].mxu0
  %v7294 = vpop.f32.mrb[0].mxu0
  %7295 = vdwg.mxu0
  %7297 = vrot.lane.b32.xlu0 %v2368, 120
  %v7298 = vpop.permute.xlu0 %7297
  %v7300 = vsel %vm2384, %v6888, 0
  %v7303 = vsel %vm5068, %v7298, 0
  %7305 = vmatprep.subr.bf16.mxu0 0
  %7306 = vmatpush1.bf16.msra.mxu0 %v7303
  %7307 = vmatprep.subr.bf16.mxu0 0
  %7308 = vmatpush1.bf16.msra.mxu0 0
  %7309 = vmatprep.subr.bf16.mxu0 0
  %7310 = vmatpush1.bf16.msra.mxu0 0
  %7311 = vmatprep.subr.bf16.mxu0 0
  %7312 = vmatpush1.bf16.msra.mxu0 0
  %7313 = vmatprep.subr.bf16.mxu0 0
  %7314 = vmatpush1.bf16.msra.mxu0 0
  %7315 = vmatprep.subr.bf16.mxu0 0
  %7316 = vmatpush1.bf16.msra.mxu0 0
  %7317 = vmatprep.subr.bf16.mxu0 0
  %7318 = vmatpush1.bf16.msra.mxu0 0
  %7319 = vmatprep.subr.bf16.mxu0 0
  %7320 = vmatpush1.bf16.msra.mxu0 0
  %7321 = vmatprep.subr.bf16.mxu0 0
  %7322 = vmatpush1.bf16.msra.mxu0 0
  %7323 = vmatprep.subr.bf16.mxu0 0
  %7324 = vmatpush1.bf16.msra.mxu0 0
  %7325 = vmatprep.subr.bf16.mxu0 0
  %7326 = vmatpush1.bf16.msra.mxu0 0
  %7327 = vmatprep.subr.bf16.mxu0 0
  %7328 = vmatpush1.bf16.msra.mxu0 0
  %7329 = vmatprep.subr.bf16.mxu0 0
  %7330 = vmatpush1.bf16.msra.mxu0 0
  %7331 = vmatprep.subr.bf16.mxu0 0
  %7332 = vmatpush1.bf16.msra.mxu0 0
  %7333 = vmatprep.subr.bf16.mxu0 0
  %7334 = vmatpush1.bf16.msra.mxu0 0
  %7335 = vmatprep.subr.bf16.mxu0 0
  %7336 = vmatpush1.bf16.msra.mxu0 0
  %7337 = vmatprep.mubr.bf16.mxu0 0
  %7338 = vmatmul.mubr.bf16.gmra.mrb[0].mxu0 %v7300
  %v7339 = vpop.f32.mrb[0].mxu0
  %v7340 = vadd.f32 0.0, %v7339
  %v7341 = vpop.f32.mrb[0].mxu0
  %v7342 = vpop.f32.mrb[0].mxu0
  %v7343 = vpop.f32.mrb[0].mxu0
  %7344 = vdwg.mxu0
  %7346 = vrot.lane.b32.xlu0 %v2369, 120
  %v7347 = vpop.permute.xlu0 %7346
  %v7349 = vsel %vm2384, %v6889, 0
  %v7352 = vsel %vm5068, %v7347, 0
  %7354 = vmatprep.subr.bf16.mxu0 0
  %7355 = vmatpush1.bf16.msra.mxu0 %v7352
  %7356 = vmatprep.subr.bf16.mxu0 0
  %7357 = vmatpush1.bf16.msra.mxu0 0
  %7358 = vmatprep.subr.bf16.mxu0 0
  %7359 = vmatpush1.bf16.msra.mxu0 0
  %7360 = vmatprep.subr.bf16.mxu0 0
  %7361 = vmatpush1.bf16.msra.mxu0 0
  %7362 = vmatprep.subr.bf16.mxu0 0
  %7363 = vmatpush1.bf16.msra.mxu0 0
  %7364 = vmatprep.subr.bf16.mxu0 0
  %7365 = vmatpush1.bf16.msra.mxu0 0
  %7366 = vmatprep.subr.bf16.mxu0 0
  %7367 = vmatpush1.bf16.msra.mxu0 0
  %7368 = vmatprep.subr.bf16.mxu0 0
  %7369 = vmatpush1.bf16.msra.mxu0 0
  %7370 = vmatprep.subr.bf16.mxu0 0
  %7371 = vmatpush1.bf16.msra.mxu0 0
  %7372 = vmatprep.subr.bf16.mxu0 0
  %7373 = vmatpush1.bf16.msra.mxu0 0
  %7374 = vmatprep.subr.bf16.mxu0 0
  %7375 = vmatpush1.bf16.msra.mxu0 0
  %7376 = vmatprep.subr.bf16.mxu0 0
  %7377 = vmatpush1.bf16.msra.mxu0 0
  %7378 = vmatprep.subr.bf16.mxu0 0
  %7379 = vmatpush1.bf16.msra.mxu0 0
  %7380 = vmatprep.subr.bf16.mxu0 0
  %7381 = vmatpush1.bf16.msra.mxu0 0
  %7382 = vmatprep.subr.bf16.mxu0 0
  %7383 = vmatpush1.bf16.msra.mxu0 0
  %7384 = vmatprep.subr.bf16.mxu0 0
  %7385 = vmatpush1.bf16.msra.mxu0 0
  %7386 = vmatprep.mubr.bf16.mxu0 0
  %7387 = vmatmul.mubr.bf16.gmra.mrb[0].mxu0 %v7349
  %v7388 = vpop.f32.mrb[0].mxu0
  %v7389 = vadd.f32 0.0, %v7388
  %v7390 = vpop.f32.mrb[0].mxu0
  %v7391 = vpop.f32.mrb[0].mxu0
  %v7392 = vpop.f32.mrb[0].mxu0
  %7393 = vdwg.mxu0
  %7395 = vrot.lane.b32.xlu0 %v2370, 120
  %v7396 = vpop.permute.xlu0 %7395
  %v7398 = vsel %vm2384, %v6890, 0
  %v7401 = vsel %vm5068, %v7396, 0
  %7403 = vmatprep.subr.bf16.mxu0 0
  %7404 = vmatpush1.bf16.msra.mxu0 %v7401
  %7405 = vmatprep.subr.bf16.mxu0 0
  %7406 = vmatpush1.bf16.msra.mxu0 0
  %7407 = vmatprep.subr.bf16.mxu0 0
  %7408 = vmatpush1.bf16.msra.mxu0 0
  %7409 = vmatprep.subr.bf16.mxu0 0
  %7410 = vmatpush1.bf16.msra.mxu0 0
  %7411 = vmatprep.subr.bf16.mxu0 0
  %7412 = vmatpush1.bf16.msra.mxu0 0
  %7413 = vmatprep.subr.bf16.mxu0 0
  %7414 = vmatpush1.bf16.msra.mxu0 0
  %7415 = vmatprep.subr.bf16.mxu0 0
  %7416 = vmatpush1.bf16.msra.mxu0 0
  %7417 = vmatprep.subr.bf16.mxu0 0
  %7418 = vmatpush1.bf16.msra.mxu0 0
  %7419 = vmatprep.subr.bf16.mxu0 0
  %7420 = vmatpush1.bf16.msra.mxu0 0
  %7421 = vmatprep.subr.bf16.mxu0 0
  %7422 = vmatpush1.bf16.msra.mxu0 0
  %7423 = vmatprep.subr.bf16.mxu0 0
  %7424 = vmatpush1.bf16.msra.mxu0 0
  %7425 = vmatprep.subr.bf16.mxu0 0
  %7426 = vmatpush1.bf16.msra.mxu0 0
  %7427 = vmatprep.subr.bf16.mxu0 0
  %7428 = vmatpush1.bf16.msra.mxu0 0
  %7429 = vmatprep.subr.bf16.mxu0 0
  %7430 = vmatpush1.bf16.msra.mxu0 0
  %7431 = vmatprep.subr.bf16.mxu0 0
  %7432 = vmatpush1.bf16.msra.mxu0 0
  %7433 = vmatprep.subr.bf16.mxu0 0
  %7434 = vmatpush1.bf16.msra.mxu0 0
  %7435 = vmatprep.mubr.bf16.mxu0 0
  %7436 = vmatmul.mubr.bf16.gmra.mrb[0].mxu0 %v7398
  %v7437 = vpop.f32.mrb[0].mxu0
  %v7438 = vadd.f32 0.0, %v7437
  %v7439 = vpop.f32.mrb[0].mxu0
  %v7440 = vpop.f32.mrb[0].mxu0
  %v7441 = vpop.f32.mrb[0].mxu0
  %7442 = vdwg.mxu0
  %7444 = vrot.lane.b32.xlu0 %v2371, 120
  %v7445 = vpop.permute.xlu0 %7444
  %v7447 = vsel %vm2384, %v6891, 0
  %v7450 = vsel %vm5068, %v7445, 0
  %7452 = vmatprep.subr.bf16.mxu0 0
  %7453 = vmatpush1.bf16.msra.mxu0 %v7450
  %7454 = vmatprep.subr.bf16.mxu0 0
  %7455 = vmatpush1.bf16.msra.mxu0 0
  %7456 = vmatprep.subr.bf16.mxu0 0
  %7457 = vmatpush1.bf16.msra.mxu0 0
  %7458 = vmatprep.subr.bf16.mxu0 0
  %7459 = vmatpush1.bf16.msra.mxu0 0
  %7460 = vmatprep.subr.bf16.mxu0 0
  %7461 = vmatpush1.bf16.msra.mxu0 0
  %7462 = vmatprep.subr.bf16.mxu0 0
  %7463 = vmatpush1.bf16.msra.mxu0 0
  %7464 = vmatprep.subr.bf16.mxu0 0
  %7465 = vmatpush1.bf16.msra.mxu0 0
  %7466 = vmatprep.subr.bf16.mxu0 0
  %7467 = vmatpush1.bf16.msra.mxu0 0
  %7468 = vmatprep.subr.bf16.mxu0 0
  %7469 = vmatpush1.bf16.msra.mxu0 0
  %7470 = vmatprep.subr.bf16.mxu0 0
  %7471 = vmatpush1.bf16.msra.mxu0 0
  %7472 = vmatprep.subr.bf16.mxu0 0
  %7473 = vmatpush1.bf16.msra.mxu0 0
  %7474 = vmatprep.subr.bf16.mxu0 0
  %7475 = vmatpush1.bf16.msra.mxu0 0
  %7476 = vmatprep.subr.bf16.mxu0 0
  %7477 = vmatpush1.bf16.msra.mxu0 0
  %7478 = vmatprep.subr.bf16.mxu0 0
  %7479 = vmatpush1.bf16.msra.mxu0 0
  %7480 = vmatprep.subr.bf16.mxu0 0
  %7481 = vmatpush1.bf16.msra.mxu0 0
  %7482 = vmatprep.subr.bf16.mxu0 0
  %7483 = vmatpush1.bf16.msra.mxu0 0
  %7484 = vmatprep.mubr.bf16.mxu0 0
  %7485 = vmatmul.mubr.bf16.gmra.mrb[0].mxu0 %v7447
  %v7486 = vpop.f32.mrb[0].mxu0
  %v7487 = vadd.f32 0.0, %v7486
  %v7488 = vpop.f32.mrb[0].mxu0
  %v7489 = vpop.f32.mrb[0].mxu0
  %v7490 = vpop.f32.mrb[0].mxu0
  %7491 = vdwg.mxu0
  %7493 = vrot.lane.b32.xlu0 %v2372, 120
  %v7494 = vpop.permute.xlu0 %7493
  %v7496 = vsel %vm2384, %v6892, 0
  %v7499 = vsel %vm5068, %v7494, 0
  %7501 = vmatprep.subr.bf16.mxu0 0
  %7502 = vmatpush1.bf16.msra.mxu0 %v7499
  %7503 = vmatprep.subr.bf16.mxu0 0
  %7504 = vmatpush1.bf16.msra.mxu0 0
  %7505 = vmatprep.subr.bf16.mxu0 0
  %7506 = vmatpush1.bf16.msra.mxu0 0
  %7507 = vmatprep.subr.bf16.mxu0 0
  %7508 = vmatpush1.bf16.msra.mxu0 0
  %7509 = vmatprep.subr.bf16.mxu0 0
  %7510 = vmatpush1.bf16.msra.mxu0 0
  %7511 = vmatprep.subr.bf16.mxu0 0
  %7512 = vmatpush1.bf16.msra.mxu0 0
  %7513 = vmatprep.subr.bf16.mxu0 0
  %7514 = vmatpush1.bf16.msra.mxu0 0
  %7515 = vmatprep.subr.bf16.mxu0 0
  %7516 = vmatpush1.bf16.msra.mxu0 0
  %7517 = vmatprep.subr.bf16.mxu0 0
  %7518 = vmatpush1.bf16.msra.mxu0 0
  %7519 = vmatprep.subr.bf16.mxu0 0
  %7520 = vmatpush1.bf16.msra.mxu0 0
  %7521 = vmatprep.subr.bf16.mxu0 0
  %7522 = vmatpush1.bf16.msra.mxu0 0
  %7523 = vmatprep.subr.bf16.mxu0 0
  %7524 = vmatpush1.bf16.msra.mxu0 0
  %7525 = vmatprep.subr.bf16.mxu0 0
  %7526 = vmatpush1.bf16.msra.mxu0 0
  %7527 = vmatprep.subr.bf16.mxu0 0
  %7528 = vmatpush1.bf16.msra.mxu0 0
  %7529 = vmatprep.subr.bf16.mxu0 0
  %7530 = vmatpush1.bf16.msra.mxu0 0
  %7531 = vmatprep.subr.bf16.mxu0 0
  %7532 = vmatpush1.bf16.msra.mxu0 0
  %7533 = vmatprep.mubr.bf16.mxu0 0
  %7534 = vmatmul.mubr.bf16.gmra.mrb[0].mxu0 %v7496
  %v7535 = vpop.f32.mrb[0].mxu0
  %v7536 = vadd.f32 0.0, %v7535
  %v7537 = vpop.f32.mrb[0].mxu0
  %v7538 = vpop.f32.mrb[0].mxu0
  %v7539 = vpop.f32.mrb[0].mxu0
  %7540 = vdwg.mxu0
  %7542 = vrot.lane.b32.xlu0 %v2373, 120
  %v7543 = vpop.permute.xlu0 %7542
  %v7545 = vsel %vm2384, %v6893, 0
  %v7548 = vsel %vm5068, %v7543, 0
  %7550 = vmatprep.subr.bf16.mxu0 0
  %7551 = vmatpush1.bf16.msra.mxu0 %v7548
  %7552 = vmatprep.subr.bf16.mxu0 0
  %7553 = vmatpush1.bf16.msra.mxu0 0
  %7554 = vmatprep.subr.bf16.mxu0 0
  %7555 = vmatpush1.bf16.msra.mxu0 0
  %7556 = vmatprep.subr.bf16.mxu0 0
  %7557 = vmatpush1.bf16.msra.mxu0 0
  %7558 = vmatprep.subr.bf16.mxu0 0
  %7559 = vmatpush1.bf16.msra.mxu0 0
  %7560 = vmatprep.subr.bf16.mxu0 0
  %7561 = vmatpush1.bf16.msra.mxu0 0
  %7562 = vmatprep.subr.bf16.mxu0 0
  %7563 = vmatpush1.bf16.msra.mxu0 0
  %7564 = vmatprep.subr.bf16.mxu0 0
  %7565 = vmatpush1.bf16.msra.mxu0 0
  %7566 = vmatprep.subr.bf16.mxu0 0
  %7567 = vmatpush1.bf16.msra.mxu0 0
  %7568 = vmatprep.subr.bf16.mxu0 0
  %7569 = vmatpush1.bf16.msra.mxu0 0
  %7570 = vmatprep.subr.bf16.mxu0 0
  %7571 = vmatpush1.bf16.msra.mxu0 0
  %7572 = vmatprep.subr.bf16.mxu0 0
  %7573 = vmatpush1.bf16.msra.mxu0 0
  %7574 = vmatprep.subr.bf16.mxu0 0
  %7575 = vmatpush1.bf16.msra.mxu0 0
  %7576 = vmatprep.subr.bf16.mxu0 0
  %7577 = vmatpush1.bf16.msra.mxu0 0
  %7578 = vmatprep.subr.bf16.mxu0 0
  %7579 = vmatpush1.bf16.msra.mxu0 0
  %7580 = vmatprep.subr.bf16.mxu0 0
  %7581 = vmatpush1.bf16.msra.mxu0 0
  %7582 = vmatprep.mubr.bf16.mxu0 0
  %7583 = vmatmul.mubr.bf16.gmra.mrb[0].mxu0 %v7545
  %v7584 = vpop.f32.mrb[0].mxu0
  %v7585 = vadd.f32 0.0, %v7584
  %v7586 = vpop.f32.mrb[0].mxu0
  %v7587 = vpop.f32.mrb[0].mxu0
  %v7588 = vpop.f32.mrb[0].mxu0
  %7589 = vdwg.mxu0
  %7591 = vrot.lane.b32.xlu0 %v2374, 120
  %v7592 = vpop.permute.xlu0 %7591
  %v7594 = vsel %vm2384, %v6894, 0
  %v7597 = vsel %vm5068, %v7592, 0
  %7599 = vmatprep.subr.bf16.mxu0 0
  %7600 = vmatpush1.bf16.msra.mxu0 %v7597
  %7601 = vmatprep.subr.bf16.mxu0 0
  %7602 = vmatpush1.bf16.msra.mxu0 0
  %7603 = vmatprep.subr.bf16.mxu0 0
  %7604 = vmatpush1.bf16.msra.mxu0 0
  %7605 = vmatprep.subr.bf16.mxu0 0
  %7606 = vmatpush1.bf16.msra.mxu0 0
  %7607 = vmatprep.subr.bf16.mxu0 0
  %7608 = vmatpush1.bf16.msra.mxu0 0
  %7609 = vmatprep.subr.bf16.mxu0 0
  %7610 = vmatpush1.bf16.msra.mxu0 0
  %7611 = vmatprep.subr.bf16.mxu0 0
  %7612 = vmatpush1.bf16.msra.mxu0 0
  %7613 = vmatprep.subr.bf16.mxu0 0
  %7614 = vmatpush1.bf16.msra.mxu0 0
  %7615 = vmatprep.subr.bf16.mxu0 0
  %7616 = vmatpush1.bf16.msra.mxu0 0
  %7617 = vmatprep.subr.bf16.mxu0 0
  %7618 = vmatpush1.bf16.msra.mxu0 0
  %7619 = vmatprep.subr.bf16.mxu0 0
  %7620 = vmatpush1.bf16.msra.mxu0 0
  %7621 = vmatprep.subr.bf16.mxu0 0
  %7622 = vmatpush1.bf16.msra.mxu0 0
  %7623 = vmatprep.subr.bf16.mxu0 0
  %7624 = vmatpush1.bf16.msra.mxu0 0
  %7625 = vmatprep.subr.bf16.mxu0 0
  %7626 = vmatpush1.bf16.msra.mxu0 0
  %7627 = vmatprep.subr.bf16.mxu0 0
  %7628 = vmatpush1.bf16.msra.mxu0 0
  %7629 = vmatprep.subr.bf16.mxu0 0
  %7630 = vmatpush1.bf16.msra.mxu0 0
  %7631 = vmatprep.mubr.bf16.mxu0 0
  %7632 = vmatmul.mubr.bf16.gmra.mrb[0].mxu0 %v7594
  %v7633 = vpop.f32.mrb[0].mxu0
  %v7634 = vadd.f32 0.0, %v7633
  %v7635 = vpop.f32.mrb[0].mxu0
  %v7636 = vpop.f32.mrb[0].mxu0
  %v7637 = vpop.f32.mrb[0].mxu0
  %7638 = vdwg.mxu0
  %7640 = vrot.lane.b32.xlu0 %v2375, 120
  %v7641 = vpop.permute.xlu0 %7640
  %v7643 = vsel %vm2384, %v6895, 0
  %v7646 = vsel %vm5068, %v7641, 0
  %7648 = vmatprep.subr.bf16.mxu0 0
  %7649 = vmatpush1.bf16.msra.mxu0 %v7646
  %7650 = vmatprep.subr.bf16.mxu0 0
  %7651 = vmatpush1.bf16.msra.mxu0 0
  %7652 = vmatprep.subr.bf16.mxu0 0
  %7653 = vmatpush1.bf16.msra.mxu0 0
  %7654 = vmatprep.subr.bf16.mxu0 0
  %7655 = vmatpush1.bf16.msra.mxu0 0
  %7656 = vmatprep.subr.bf16.mxu0 0
  %7657 = vmatpush1.bf16.msra.mxu0 0
  %7658 = vmatprep.subr.bf16.mxu0 0
  %7659 = vmatpush1.bf16.msra.mxu0 0
  %7660 = vmatprep.subr.bf16.mxu0 0
  %7661 = vmatpush1.bf16.msra.mxu0 0
  %7662 = vmatprep.subr.bf16.mxu0 0
  %7663 = vmatpush1.bf16.msra.mxu0 0
  %7664 = vmatprep.subr.bf16.mxu0 0
  %7665 = vmatpush1.bf16.msra.mxu0 0
  %7666 = vmatprep.subr.bf16.mxu0 0
  %7667 = vmatpush1.bf16.msra.mxu0 0
  %7668 = vmatprep.subr.bf16.mxu0 0
  %7669 = vmatpush1.bf16.msra.mxu0 0
  %7670 = vmatprep.subr.bf16.mxu0 0
  %7671 = vmatpush1.bf16.msra.mxu0 0
  %7672 = vmatprep.subr.bf16.mxu0 0
  %7673 = vmatpush1.bf16.msra.mxu0 0
  %7674 = vmatprep.subr.bf16.mxu0 0
  %7675 = vmatpush1.bf16.msra.mxu0 0
  %7676 = vmatprep.subr.bf16.mxu0 0
  %7677 = vmatpush1.bf16.msra.mxu0 0
  %7678 = vmatprep.subr.bf16.mxu0 0
  %7679 = vmatpush1.bf16.msra.mxu0 0
  %7680 = vmatprep.mubr.bf16.mxu0 0
  %7681 = vmatmul.mubr.bf16.gmra.mrb[0].mxu0 %v7643
  %v7682 = vpop.f32.mrb[0].mxu0
  %v7683 = vadd.f32 0.0, %v7682
  %v7684 = vpop.f32.mrb[0].mxu0
  %v7685 = vpop.f32.mrb[0].mxu0
  %v7686 = vpop.f32.mrb[0].mxu0
  %7687 = vdwg.mxu0
  %7689 = vrot.lane.b32.xlu0 %v2376, 120
  %v7690 = vpop.permute.xlu0 %7689
  %v7692 = vsel %vm2384, %v6896, 0
  %v7695 = vsel %vm5068, %v7690, 0
  %7697 = vmatprep.subr.bf16.mxu0 0
  %7698 = vmatpush1.bf16.msra.mxu0 %v7695
  %7699 = vmatprep.subr.bf16.mxu0 0
  %7700 = vmatpush1.bf16.msra.mxu0 0
  %7701 = vmatprep.subr.bf16.mxu0 0
  %7702 = vmatpush1.bf16.msra.mxu0 0
  %7703 = vmatprep.subr.bf16.mxu0 0
  %7704 = vmatpush1.bf16.msra.mxu0 0
  %7705 = vmatprep.subr.bf16.mxu0 0
  %7706 = vmatpush1.bf16.msra.mxu0 0
  %7707 = vmatprep.subr.bf16.mxu0 0
  %7708 = vmatpush1.bf16.msra.mxu0 0
  %7709 = vmatprep.subr.bf16.mxu0 0
  %7710 = vmatpush1.bf16.msra.mxu0 0
  %7711 = vmatprep.subr.bf16.mxu0 0
  %7712 = vmatpush1.bf16.msra.mxu0 0
  %7713 = vmatprep.subr.bf16.mxu0 0
  %7714 = vmatpush1.bf16.msra.mxu0 0
  %7715 = vmatprep.subr.bf16.mxu0 0
  %7716 = vmatpush1.bf16.msra.mxu0 0
  %7717 = vmatprep.subr.bf16.mxu0 0
  %7718 = vmatpush1.bf16.msra.mxu0 0
  %7719 = vmatprep.subr.bf16.mxu0 0
  %7720 = vmatpush1.bf16.msra.mxu0 0
  %7721 = vmatprep.subr.bf16.mxu0 0
  %7722 = vmatpush1.bf16.msra.mxu0 0
  %7723 = vmatprep.subr.bf16.mxu0 0
  %7724 = vmatpush1.bf16.msra.mxu0 0
  %7725 = vmatprep.subr.bf16.mxu0 0
  %7726 = vmatpush1.bf16.msra.mxu0 0
  %7727 = vmatprep.subr.bf16.mxu0 0
  %7728 = vmatpush1.bf16.msra.mxu0 0
  %7729 = vmatprep.mubr.bf16.mxu0 0
  %7730 = vmatmul.mubr.bf16.gmra.mrb[0].mxu0 %v7692
  %v7731 = vpop.f32.mrb[0].mxu0
  %v7732 = vadd.f32 0.0, %v7731
  %v7733 = vpop.f32.mrb[0].mxu0
  %v7734 = vpop.f32.mrb[0].mxu0
  %v7735 = vpop.f32.mrb[0].mxu0
  %7736 = vdwg.mxu0
  %7738 = vrot.lane.b32.xlu0 %v2377, 120
  %v7739 = vpop.permute.xlu0 %7738
  %v7741 = vsel %vm2384, %v6897, 0
  %v7744 = vsel %vm5068, %v7739, 0
  %7746 = vmatprep.subr.bf16.mxu0 0
  %7747 = vmatpush1.bf16.msra.mxu0 %v7744
  %7748 = vmatprep.subr.bf16.mxu0 0
  %7749 = vmatpush1.bf16.msra.mxu0 0
  %7750 = vmatprep.subr.bf16.mxu0 0
  %7751 = vmatpush1.bf16.msra.mxu0 0
  %7752 = vmatprep.subr.bf16.mxu0 0
  %7753 = vmatpush1.bf16.msra.mxu0 0
  %7754 = vmatprep.subr.bf16.mxu0 0
  %7755 = vmatpush1.bf16.msra.mxu0 0
  %7756 = vmatprep.subr.bf16.mxu0 0
  %7757 = vmatpush1.bf16.msra.mxu0 0
  %7758 = vmatprep.subr.bf16.mxu0 0
  %7759 = vmatpush1.bf16.msra.mxu0 0
  %7760 = vmatprep.subr.bf16.mxu0 0
  %7761 = vmatpush1.bf16.msra.mxu0 0
  %7762 = vmatprep.subr.bf16.mxu0 0
  %7763 = vmatpush1.bf16.msra.mxu0 0
  %7764 = vmatprep.subr.bf16.mxu0 0
  %7765 = vmatpush1.bf16.msra.mxu0 0
  %7766 = vmatprep.subr.bf16.mxu0 0
  %7767 = vmatpush1.bf16.msra.mxu0 0
  %7768 = vmatprep.subr.bf16.mxu0 0
  %7769 = vmatpush1.bf16.msra.mxu0 0
  %7770 = vmatprep.subr.bf16.mxu0 0
  %7771 = vmatpush1.bf16.msra.mxu0 0
  %7772 = vmatprep.subr.bf16.mxu0 0
  %7773 = vmatpush1.bf16.msra.mxu0 0
  %7774 = vmatprep.subr.bf16.mxu0 0
  %7775 = vmatpush1.bf16.msra.mxu0 0
  %7776 = vmatprep.subr.bf16.mxu0 0
  %7777 = vmatpush1.bf16.msra.mxu0 0
  %7778 = vmatprep.mubr.bf16.mxu0 0
  %7779 = vmatmul.mubr.bf16.gmra.mrb[0].mxu0 %v7741
  %v7780 = vpop.f32.mrb[0].mxu0
  %v7781 = vadd.f32 0.0, %v7780
  %v7782 = vpop.f32.mrb[0].mxu0
  %v7783 = vpop.f32.mrb[0].mxu0
  %v7784 = vpop.f32.mrb[0].mxu0
  %7785 = vdwg.mxu0
  %7787 = vrot.lane.b32.xlu0 %v2378, 120
  %v7788 = vpop.permute.xlu0 %7787
  %v7790 = vsel %vm2384, %v6898, 0
  %v7793 = vsel %vm5068, %v7788, 0
  %7795 = vmatprep.subr.bf16.mxu0 0
  %7796 = vmatpush1.bf16.msra.mxu0 %v7793
  %7797 = vmatprep.subr.bf16.mxu0 0
  %7798 = vmatpush1.bf16.msra.mxu0 0
  %7799 = vmatprep.subr.bf16.mxu0 0
  %7800 = vmatpush1.bf16.msra.mxu0 0
  %7801 = vmatprep.subr.bf16.mxu0 0
  %7802 = vmatpush1.bf16.msra.mxu0 0
  %7803 = vmatprep.subr.bf16.mxu0 0
  %7804 = vmatpush1.bf16.msra.mxu0 0
  %7805 = vmatprep.subr.bf16.mxu0 0
  %7806 = vmatpush1.bf16.msra.mxu0 0
  %7807 = vmatprep.subr.bf16.mxu0 0
  %7808 = vmatpush1.bf16.msra.mxu0 0
  %7809 = vmatprep.subr.bf16.mxu0 0
  %7810 = vmatpush1.bf16.msra.mxu0 0
  %7811 = vmatprep.subr.bf16.mxu0 0
  %7812 = vmatpush1.bf16.msra.mxu0 0
  %7813 = vmatprep.subr.bf16.mxu0 0
  %7814 = vmatpush1.bf16.msra.mxu0 0
  %7815 = vmatprep.subr.bf16.mxu0 0
  %7816 = vmatpush1.bf16.msra.mxu0 0
  %7817 = vmatprep.subr.bf16.mxu0 0
  %7818 = vmatpush1.bf16.msra.mxu0 0
  %7819 = vmatprep.subr.bf16.mxu0 0
  %7820 = vmatpush1.bf16.msra.mxu0 0
  %7821 = vmatprep.subr.bf16.mxu0 0
  %7822 = vmatpush1.bf16.msra.mxu0 0
  %7823 = vmatprep.subr.bf16.mxu0 0
  %7824 = vmatpush1.bf16.msra.mxu0 0
  %7825 = vmatprep.subr.bf16.mxu0 0
  %7826 = vmatpush1.bf16.msra.mxu0 0
  %7827 = vmatprep.mubr.bf16.mxu0 0
  %7828 = vmatmul.mubr.bf16.gmra.mrb[0].mxu0 %v7790
  %v7829 = vpop.f32.mrb[0].mxu0
  %v7830 = vadd.f32 0.0, %v7829
  %v7831 = vpop.f32.mrb[0].mxu0
  %v7832 = vpop.f32.mrb[0].mxu0
  %v7833 = vpop.f32.mrb[0].mxu0
  %7834 = vdwg.mxu0
  %7836 = vrot.lane.b32.xlu0 %v2379, 120
  %v7837 = vpop.permute.xlu0 %7836
  %v7839 = vsel %vm2384, %v6899, 0
  %v7842 = vsel %vm5068, %v7837, 0
  %7844 = vmatprep.subr.bf16.mxu0 0
  %7845 = vmatpush1.bf16.msra.mxu0 %v7842
  %7846 = vmatprep.subr.bf16.mxu0 0
  %7847 = vmatpush1.bf16.msra.mxu0 0
  %7848 = vmatprep.subr.bf16.mxu0 0
  %7849 = vmatpush1.bf16.msra.mxu0 0
  %7850 = vmatprep.subr.bf16.mxu0 0
  %7851 = vmatpush1.bf16.msra.mxu0 0
  %7852 = vmatprep.subr.bf16.mxu0 0
  %7853 = vmatpush1.bf16.msra.mxu0 0
  %7854 = vmatprep.subr.bf16.mxu0 0
  %7855 = vmatpush1.bf16.msra.mxu0 0
  %7856 = vmatprep.subr.bf16.mxu0 0
  %7857 = vmatpush1.bf16.msra.mxu0 0
  %7858 = vmatprep.subr.bf16.mxu0 0
  %7859 = vmatpush1.bf16.msra.mxu0 0
  %7860 = vmatprep.subr.bf16.mxu0 0
  %7861 = vmatpush1.bf16.msra.mxu0 0
  %7862 = vmatprep.subr.bf16.mxu0 0
  %7863 = vmatpush1.bf16.msra.mxu0 0
  %7864 = vmatprep.subr.bf16.mxu0 0
  %7865 = vmatpush1.bf16.msra.mxu0 0
  %7866 = vmatprep.subr.bf16.mxu0 0
  %7867 = vmatpush1.bf16.msra.mxu0 0
  %7868 = vmatprep.subr.bf16.mxu0 0
  %7869 = vmatpush1.bf16.msra.mxu0 0
  %7870 = vmatprep.subr.bf16.mxu0 0
  %7871 = vmatpush1.bf16.msra.mxu0 0
  %7872 = vmatprep.subr.bf16.mxu0 0
  %7873 = vmatpush1.bf16.msra.mxu0 0
  %7874 = vmatprep.subr.bf16.mxu0 0
  %7875 = vmatpush1.bf16.msra.mxu0 0
  %7876 = vmatprep.mubr.bf16.mxu0 0
  %7877 = vmatmul.mubr.bf16.gmra.mrb[0].mxu0 %v7839
  %v7878 = vpop.f32.mrb[0].mxu0
  %v7879 = vadd.f32 0.0, %v7878
  %v7880 = vpop.f32.mrb[0].mxu0
  %v7881 = vpop.f32.mrb[0].mxu0
  %v7882 = vpop.f32.mrb[0].mxu0
  %7883 = vdwg.mxu0
  %7885 = vrot.lane.b32.xlu0 %v2380, 120
  %v7886 = vpop.permute.xlu0 %7885
  %v7888 = vsel %vm2384, %v6900, 0
  %v7891 = vsel %vm5068, %v7886, 0
  %7893 = vmatprep.subr.bf16.mxu0 0
  %7894 = vmatpush1.bf16.msra.mxu0 %v7891
  %7895 = vmatprep.subr.bf16.mxu0 0
  %7896 = vmatpush1.bf16.msra.mxu0 0
  %7897 = vmatprep.subr.bf16.mxu0 0
  %7898 = vmatpush1.bf16.msra.mxu0 0
  %7899 = vmatprep.subr.bf16.mxu0 0
  %7900 = vmatpush1.bf16.msra.mxu0 0
  %7901 = vmatprep.subr.bf16.mxu0 0
  %7902 = vmatpush1.bf16.msra.mxu0 0
  %7903 = vmatprep.subr.bf16.mxu0 0
  %7904 = vmatpush1.bf16.msra.mxu0 0
  %7905 = vmatprep.subr.bf16.mxu0 0
  %7906 = vmatpush1.bf16.msra.mxu0 0
  %7907 = vmatprep.subr.bf16.mxu0 0
  %7908 = vmatpush1.bf16.msra.mxu0 0
  %7909 = vmatprep.subr.bf16.mxu0 0
  %7910 = vmatpush1.bf16.msra.mxu0 0
  %7911 = vmatprep.subr.bf16.mxu0 0
  %7912 = vmatpush1.bf16.msra.mxu0 0
  %7913 = vmatprep.subr.bf16.mxu0 0
  %7914 = vmatpush1.bf16.msra.mxu0 0
  %7915 = vmatprep.subr.bf16.mxu0 0
  %7916 = vmatpush1.bf16.msra.mxu0 0
  %7917 = vmatprep.subr.bf16.mxu0 0
  %7918 = vmatpush1.bf16.msra.mxu0 0
  %7919 = vmatprep.subr.bf16.mxu0 0
  %7920 = vmatpush1.bf16.msra.mxu0 0
  %7921 = vmatprep.subr.bf16.mxu0 0
  %7922 = vmatpush1.bf16.msra.mxu0 0
  %7923 = vmatprep.subr.bf16.mxu0 0
  %7924 = vmatpush1.bf16.msra.mxu0 0
  %7925 = vmatprep.mubr.bf16.mxu0 0
  %7926 = vmatmul.mubr.bf16.gmra.mrb[0].mxu0 %v7888
  %v7927 = vpop.f32.mrb[0].mxu0
  %v7928 = vadd.f32 0.0, %v7927
  %v7929 = vpop.f32.mrb[0].mxu0
  %v7930 = vpop.f32.mrb[0].mxu0
  %v7931 = vpop.f32.mrb[0].mxu0
  %7932 = vdwg.mxu0
  %7934 = vrot.lane.b32.xlu0 %v2381, 120
  %v7935 = vpop.permute.xlu0 %7934
  %v7937 = vsel %vm2384, %v6901, 0
  %v7940 = vsel %vm5068, %v7935, 0
  %7942 = vmatprep.subr.bf16.mxu0 0
  %7943 = vmatpush1.bf16.msra.mxu0 %v7940
  %7944 = vmatprep.subr.bf16.mxu0 0
  %7945 = vmatpush1.bf16.msra.mxu0 0
  %7946 = vmatprep.subr.bf16.mxu0 0
  %7947 = vmatpush1.bf16.msra.mxu0 0
  %7948 = vmatprep.subr.bf16.mxu0 0
  %7949 = vmatpush1.bf16.msra.mxu0 0
  %7950 = vmatprep.subr.bf16.mxu0 0
  %7951 = vmatpush1.bf16.msra.mxu0 0
  %7952 = vmatprep.subr.bf16.mxu0 0
  %7953 = vmatpush1.bf16.msra.mxu0 0
  %7954 = vmatprep.subr.bf16.mxu0 0
  %7955 = vmatpush1.bf16.msra.mxu0 0
  %7956 = vmatprep.subr.bf16.mxu0 0
  %7957 = vmatpush1.bf16.msra.mxu0 0
  %7958 = vmatprep.subr.bf16.mxu0 0
  %7959 = vmatpush1.bf16.msra.mxu0 0
  %7960 = vmatprep.subr.bf16.mxu0 0
  %7961 = vmatpush1.bf16.msra.mxu0 0
  %7962 = vmatprep.subr.bf16.mxu0 0
  %7963 = vmatpush1.bf16.msra.mxu0 0
  %7964 = vmatprep.subr.bf16.mxu0 0
  %7965 = vmatpush1.bf16.msra.mxu0 0
  %7966 = vmatprep.subr.bf16.mxu0 0
  %7967 = vmatpush1.bf16.msra.mxu0 0
  %7968 = vmatprep.subr.bf16.mxu0 0
  %7969 = vmatpush1.bf16.msra.mxu0 0
  %7970 = vmatprep.subr.bf16.mxu0 0
  %7971 = vmatpush1.bf16.msra.mxu0 0
  %7972 = vmatprep.subr.bf16.mxu0 0
  %7973 = vmatpush1.bf16.msra.mxu0 0
  %7974 = vmatprep.mubr.bf16.mxu0 0
  %7975 = vmatmul.mubr.bf16.gmra.mrb[0].mxu0 %v7937
  %v7976 = vpop.f32.mrb[0].mxu0
  %v7977 = vadd.f32 0.0, %v7976
  %v7978 = vpop.f32.mrb[0].mxu0
  %v7979 = vpop.f32.mrb[0].mxu0
  %v7980 = vpop.f32.mrb[0].mxu0
  %7981 = vdwg.mxu0
  %7983 = vrot.lane.b32.xlu0 %v2382, 120
  %v7984 = vpop.permute.xlu0 %7983
  %v7986 = vsel %vm2384, %v6902, 0
  %v7989 = vsel %vm5068, %v7984, 0
  %7991 = vmatprep.subr.bf16.mxu0 0
  %7992 = vmatpush1.bf16.msra.mxu0 %v7989
  %7993 = vmatprep.subr.bf16.mxu0 0
  %7994 = vmatpush1.bf16.msra.mxu0 0
  %7995 = vmatprep.subr.bf16.mxu0 0
  %7996 = vmatpush1.bf16.msra.mxu0 0
  %7997 = vmatprep.subr.bf16.mxu0 0
  %7998 = vmatpush1.bf16.msra.mxu0 0
  %7999 = vmatprep.subr.bf16.mxu0 0
  %8000 = vmatpush1.bf16.msra.mxu0 0
  %8001 = vmatprep.subr.bf16.mxu0 0
  %8002 = vmatpush1.bf16.msra.mxu0 0
  %8003 = vmatprep.subr.bf16.mxu0 0
  %8004 = vmatpush1.bf16.msra.mxu0 0
  %8005 = vmatprep.subr.bf16.mxu0 0
  %8006 = vmatpush1.bf16.msra.mxu0 0
  %8007 = vmatprep.subr.bf16.mxu0 0
  %8008 = vmatpush1.bf16.msra.mxu0 0
  %8009 = vmatprep.subr.bf16.mxu0 0
  %8010 = vmatpush1.bf16.msra.mxu0 0
  %8011 = vmatprep.subr.bf16.mxu0 0
  %8012 = vmatpush1.bf16.msra.mxu0 0
  %8013 = vmatprep.subr.bf16.mxu0 0
  %8014 = vmatpush1.bf16.msra.mxu0 0
  %8015 = vmatprep.subr.bf16.mxu0 0
  %8016 = vmatpush1.bf16.msra.mxu0 0
  %8017 = vmatprep.subr.bf16.mxu0 0
  %8018 = vmatpush1.bf16.msra.mxu0 0
  %8019 = vmatprep.subr.bf16.mxu0 0
  %8020 = vmatpush1.bf16.msra.mxu0 0
  %8021 = vmatprep.subr.bf16.mxu0 0
  %8022 = vmatpush1.bf16.msra.mxu0 0
  %8023 = vmatprep.mubr.bf16.mxu0 0
  %8024 = vmatmul.mubr.bf16.gmra.mrb[0].mxu0 %v7986
  %v8025 = vpop.f32.mrb[0].mxu0
  %v8026 = vadd.f32 0.0, %v8025
  %v8027 = vpop.f32.mrb[0].mxu0
  %v8028 = vpop.f32.mrb[0].mxu0
  %v8029 = vpop.f32.mrb[0].mxu0
  %8030 = vdwg.mxu0
  %8032 = vrot.lane.b32.xlu0 %v2383, 120
  %v8033 = vpop.permute.xlu0 %8032
  %v8035 = vsel %vm2384, %v6903, 0
  %v8038 = vsel %vm5068, %v8033, 0
  %8040 = vmatprep.subr.bf16.mxu0 0
  %8041 = vmatpush1.bf16.msra.mxu0 %v8038
  %8042 = vmatprep.subr.bf16.mxu0 0
  %8043 = vmatpush1.bf16.msra.mxu0 0
  %8044 = vmatprep.subr.bf16.mxu0 0
  %8045 = vmatpush1.bf16.msra.mxu0 0
  %8046 = vmatprep.subr.bf16.mxu0 0
  %8047 = vmatpush1.bf16.msra.mxu0 0
  %8048 = vmatprep.subr.bf16.mxu0 0
  %8049 = vmatpush1.bf16.msra.mxu0 0
  %8050 = vmatprep.subr.bf16.mxu0 0
  %8051 = vmatpush1.bf16.msra.mxu0 0
  %8052 = vmatprep.subr.bf16.mxu0 0
  %8053 = vmatpush1.bf16.msra.mxu0 0
  %8054 = vmatprep.subr.bf16.mxu0 0
  %8055 = vmatpush1.bf16.msra.mxu0 0
  %8056 = vmatprep.subr.bf16.mxu0 0
  %8057 = vmatpush1.bf16.msra.mxu0 0
  %8058 = vmatprep.subr.bf16.mxu0 0
  %8059 = vmatpush1.bf16.msra.mxu0 0
  %8060 = vmatprep.subr.bf16.mxu0 0
  %8061 = vmatpush1.bf16.msra.mxu0 0
  %8062 = vmatprep.subr.bf16.mxu0 0
  %8063 = vmatpush1.bf16.msra.mxu0 0
  %8064 = vmatprep.subr.bf16.mxu0 0
  %8065 = vmatpush1.bf16.msra.mxu0 0
  %8066 = vmatprep.subr.bf16.mxu0 0
  %8067 = vmatpush1.bf16.msra.mxu0 0
  %8068 = vmatprep.subr.bf16.mxu0 0
  %8069 = vmatpush1.bf16.msra.mxu0 0
  %8070 = vmatprep.subr.bf16.mxu0 0
  %8071 = vmatpush1.bf16.msra.mxu0 0
  %8072 = vmatprep.mubr.bf16.mxu0 0
  %8073 = vmatmul.mubr.bf16.gmra.mrb[0].mxu0 %v8035
  %v8074 = vpop.f32.mrb[0].mxu0
  %v8075 = vadd.f32 0.0, %v8074
  %v8076 = vpop.f32.mrb[0].mxu0
  %v8077 = vpop.f32.mrb[0].mxu0
  %v8078 = vpop.f32.mrb[0].mxu0
  %8079 = vdwg.mxu0
  %v8081 = vsel %vm2384, %v6832, 0
  %v8084 = vsel %vm5068, %v2312, 0
  %8086 = vmatprep.subr.bf16.mxu0 0
  %8087 = vmatpush1.bf16.msra.mxu0 %v8084
  %8088 = vmatprep.subr.bf16.mxu0 0
  %8089 = vmatpush1.bf16.msra.mxu0 0
  %8090 = vmatprep.subr.bf16.mxu0 0
  %8091 = vmatpush1.bf16.msra.mxu0 0
  %8092 = vmatprep.subr.bf16.mxu0 0
  %8093 = vmatpush1.bf16.msra.mxu0 0
  %8094 = vmatprep.subr.bf16.mxu0 0
  %8095 = vmatpush1.bf16.msra.mxu0 0
  %8096 = vmatprep.subr.bf16.mxu0 0
  %8097 = vmatpush1.bf16.msra.mxu0 0
  %8098 = vmatprep.subr.bf16.mxu0 0
  %8099 = vmatpush1.bf16.msra.mxu0 0
  %8100 = vmatprep.subr.bf16.mxu0 0
  %8101 = vmatpush1.bf16.msra.mxu0 0
  %8102 = vmatprep.subr.bf16.mxu0 0
  %8103 = vmatpush1.bf16.msra.mxu0 0
  %8104 = vmatprep.subr.bf16.mxu0 0
  %8105 = vmatpush1.bf16.msra.mxu0 0
  %8106 = vmatprep.subr.bf16.mxu0 0
  %8107 = vmatpush1.bf16.msra.mxu0 0
  %8108 = vmatprep.subr.bf16.mxu0 0
  %8109 = vmatpush1.bf16.msra.mxu0 0
  %8110 = vmatprep.subr.bf16.mxu0 0
  %8111 = vmatpush1.bf16.msra.mxu0 0
  %8112 = vmatprep.subr.bf16.mxu0 0
  %8113 = vmatpush1.bf16.msra.mxu0 0
  %8114 = vmatprep.subr.bf16.mxu0 0
  %8115 = vmatpush1.bf16.msra.mxu0 0
  %8116 = vmatprep.subr.bf16.mxu0 0
  %8117 = vmatpush1.bf16.msra.mxu0 0
  %8118 = vmatprep.mubr.bf16.mxu0 0
  %8119 = vmatmul.mubr.bf16.gmra.mrb[0].mxu0 %v8081
  %v8120 = vpop.f32.mrb[0].mxu0
  %v8121 = vadd.f32 %v6948, %v8120
  %v8122 = vpop.f32.mrb[0].mxu0
  %v8123 = vpop.f32.mrb[0].mxu0
  %v8124 = vpop.f32.mrb[0].mxu0
  %8125 = vdwg.mxu0
  %v8127 = vsel %vm2384, %v6833, 0
  %v8130 = vsel %vm5068, %v2313, 0
  %8132 = vmatprep.subr.bf16.mxu0 0
  %8133 = vmatpush1.bf16.msra.mxu0 %v8130
  %8134 = vmatprep.subr.bf16.mxu0 0
  %8135 = vmatpush1.bf16.msra.mxu0 0
  %8136 = vmatprep.subr.bf16.mxu0 0
  %8137 = vmatpush1.bf16.msra.mxu0 0
  %8138 = vmatprep.subr.bf16.mxu0 0
  %8139 = vmatpush1.bf16.msra.mxu0 0
  %8140 = vmatprep.subr.bf16.mxu0 0
  %8141 = vmatpush1.bf16.msra.mxu0 0
  %8142 = vmatprep.subr.bf16.mxu0 0
  %8143 = vmatpush1.bf16.msra.mxu0 0
  %8144 = vmatprep.subr.bf16.mxu0 0
  %8145 = vmatpush1.bf16.msra.mxu0 0
  %8146 = vmatprep.subr.bf16.mxu0 0
  %8147 = vmatpush1.bf16.msra.mxu0 0
  %8148 = vmatprep.subr.bf16.mxu0 0
  %8149 = vmatpush1.bf16.msra.mxu0 0
  %8150 = vmatprep.subr.bf16.mxu0 0
  %8151 = vmatpush1.bf16.msra.mxu0 0
  %8152 = vmatprep.subr.bf16.mxu0 0
  %8153 = vmatpush1.bf16.msra.mxu0 0
  %8154 = vmatprep.subr.bf16.mxu0 0
  %8155 = vmatpush1.bf16.msra.mxu0 0
  %8156 = vmatprep.subr.bf16.mxu0 0
  %8157 = vmatpush1.bf16.msra.mxu0 0
  %8158 = vmatprep.subr.bf16.mxu0 0
  %8159 = vmatpush1.bf16.msra.mxu0 0
  %8160 = vmatprep.subr.bf16.mxu0 0
  %8161 = vmatpush1.bf16.msra.mxu0 0
  %8162 = vmatprep.subr.bf16.mxu0 0
  %8163 = vmatpush1.bf16.msra.mxu0 0
  %8164 = vmatprep.mubr.bf16.mxu0 0
  %8165 = vmatmul.mubr.bf16.gmra.mrb[0].mxu0 %v8127
  %v8166 = vpop.f32.mrb[0].mxu0
  %v8167 = vadd.f32 %v6997, %v8166
  %v8168 = vpop.f32.mrb[0].mxu0
  %v8169 = vpop.f32.mrb[0].mxu0
  %v8170 = vpop.f32.mrb[0].mxu0
  %8171 = vdwg.mxu0
  %v8173 = vsel %vm2384, %v6834, 0
  %v8176 = vsel %vm5068, %v2314, 0
  %8178 = vmatprep.subr.bf16.mxu0 0
  %8179 = vmatpush1.bf16.msra.mxu0 %v8176
  %8180 = vmatprep.subr.bf16.mxu0 0
  %8181 = vmatpush1.bf16.msra.mxu0 0
  %8182 = vmatprep.subr.bf16.mxu0 0
  %8183 = vmatpush1.bf16.msra.mxu0 0
  %8184 = vmatprep.subr.bf16.mxu0 0
  %8185 = vmatpush1.bf16.msra.mxu0 0
  %8186 = vmatprep.subr.bf16.mxu0 0
  %8187 = vmatpush1.bf16.msra.mxu0 0
  %8188 = vmatprep.subr.bf16.mxu0 0
  %8189 = vmatpush1.bf16.msra.mxu0 0
  %8190 = vmatprep.subr.bf16.mxu0 0
  %8191 = vmatpush1.bf16.msra.mxu0 0
  %8192 = vmatprep.subr.bf16.mxu0 0
  %8193 = vmatpush1.bf16.msra.mxu0 0
  %8194 = vmatprep.subr.bf16.mxu0 0
  %8195 = vmatpush1.bf16.msra.mxu0 0
  %8196 = vmatprep.subr.bf16.mxu0 0
  %8197 = vmatpush1.bf16.msra.mxu0 0
  %8198 = vmatprep.subr.bf16.mxu0 0
  %8199 = vmatpush1.bf16.msra.mxu0 0
  %8200 = vmatprep.subr.bf16.mxu0 0
  %8201 = vmatpush1.bf16.msra.mxu0 0
  %8202 = vmatprep.subr.bf16.mxu0 0
  %8203 = vmatpush1.bf16.msra.mxu0 0
  %8204 = vmatprep.subr.bf16.mxu0 0
  %8205 = vmatpush1.bf16.msra.mxu0 0
  %8206 = vmatprep.subr.bf16.mxu0 0
  %8207 = vmatpush1.bf16.msra.mxu0 0
  %8208 = vmatprep.subr.bf16.mxu0 0
  %8209 = vmatpush1.bf16.msra.mxu0 0
  %8210 = vmatprep.mubr.bf16.mxu0 0
  %8211 = vmatmul.mubr.bf16.gmra.mrb[0].mxu0 %v8173
  %v8212 = vpop.f32.mrb[0].mxu0
  %v8213 = vadd.f32 %v7046, %v8212
  %v8214 = vpop.f32.mrb[0].mxu0
  %v8215 = vpop.f32.mrb[0].mxu0
  %v8216 = vpop.f32.mrb[0].mxu0
  %8217 = vdwg.mxu0
  %v8219 = vsel %vm2384, %v6835, 0
  %v8222 = vsel %vm5068, %v2315, 0
  %8224 = vmatprep.subr.bf16.mxu0 0
  %8225 = vmatpush1.bf16.msra.mxu0 %v8222
  %8226 = vmatprep.subr.bf16.mxu0 0
  %8227 = vmatpush1.bf16.msra.mxu0 0
  %8228 = vmatprep.subr.bf16.mxu0 0
  %8229 = vmatpush1.bf16.msra.mxu0 0
  %8230 = vmatprep.subr.bf16.mxu0 0
  %8231 = vmatpush1.bf16.msra.mxu0 0
  %8232 = vmatprep.subr.bf16.mxu0 0
  %8233 = vmatpush1.bf16.msra.mxu0 0
  %8234 = vmatprep.subr.bf16.mxu0 0
  %8235 = vmatpush1.bf16.msra.mxu0 0
  %8236 = vmatprep.subr.bf16.mxu0 0
  %8237 = vmatpush1.bf16.msra.mxu0 0
  %8238 = vmatprep.subr.bf16.mxu0 0
  %8239 = vmatpush1.bf16.msra.mxu0 0
  %8240 = vmatprep.subr.bf16.mxu0 0
  %8241 = vmatpush1.bf16.msra.mxu0 0
  %8242 = vmatprep.subr.bf16.mxu0 0
  %8243 = vmatpush1.bf16.msra.mxu0 0
  %8244 = vmatprep.subr.bf16.mxu0 0
  %8245 = vmatpush1.bf16.msra.mxu0 0
  %8246 = vmatprep.subr.bf16.mxu0 0
  %8247 = vmatpush1.bf16.msra.mxu0 0
  %8248 = vmatprep.subr.bf16.mxu0 0
  %8249 = vmatpush1.bf16.msra.mxu0 0
  %8250 = vmatprep.subr.bf16.mxu0 0
  %8251 = vmatpush1.bf16.msra.mxu0 0
  %8252 = vmatprep.subr.bf16.mxu0 0
  %8253 = vmatpush1.bf16.msra.mxu0 0
  %8254 = vmatprep.subr.bf16.mxu0 0
  %8255 = vmatpush1.bf16.msra.mxu0 0
  %8256 = vmatprep.mubr.bf16.mxu0 0
  %8257 = vmatmul.mubr.bf16.gmra.mrb[0].mxu0 %v8219
  %v8258 = vpop.f32.mrb[0].mxu0
  %v8259 = vadd.f32 %v7095, %v8258
  %v8260 = vpop.f32.mrb[0].mxu0
  %v8261 = vpop.f32.mrb[0].mxu0
  %v8262 = vpop.f32.mrb[0].mxu0
  %8263 = vdwg.mxu0
  %v8265 = vsel %vm2384, %v6836, 0
  %v8268 = vsel %vm5068, %v2316, 0
  %8270 = vmatprep.subr.bf16.mxu0 0
  %8271 = vmatpush1.bf16.msra.mxu0 %v8268
  %8272 = vmatprep.subr.bf16.mxu0 0
  %8273 = vmatpush1.bf16.msra.mxu0 0
  %8274 = vmatprep.subr.bf16.mxu0 0
  %8275 = vmatpush1.bf16.msra.mxu0 0
  %8276 = vmatprep.subr.bf16.mxu0 0
  %8277 = vmatpush1.bf16.msra.mxu0 0
  %8278 = vmatprep.subr.bf16.mxu0 0
  %8279 = vmatpush1.bf16.msra.mxu0 0
  %8280 = vmatprep.subr.bf16.mxu0 0
  %8281 = vmatpush1.bf16.msra.mxu0 0
  %8282 = vmatprep.subr.bf16.mxu0 0
  %8283 = vmatpush1.bf16.msra.mxu0 0
  %8284 = vmatprep.subr.bf16.mxu0 0
  %8285 = vmatpush1.bf16.msra.mxu0 0
  %8286 = vmatprep.subr.bf16.mxu0 0
  %8287 = vmatpush1.bf16.msra.mxu0 0
  %8288 = vmatprep.subr.bf16.mxu0 0
  %8289 = vmatpush1.bf16.msra.mxu0 0
  %8290 = vmatprep.subr.bf16.mxu0 0
  %8291 = vmatpush1.bf16.msra.mxu0 0
  %8292 = vmatprep.subr.bf16.mxu0 0
  %8293 = vmatpush1.bf16.msra.mxu0 0
  %8294 = vmatprep.subr.bf16.mxu0 0
  %8295 = vmatpush1.bf16.msra.mxu0 0
  %8296 = vmatprep.subr.bf16.mxu0 0
  %8297 = vmatpush1.bf16.msra.mxu0 0
  %8298 = vmatprep.subr.bf16.mxu0 0
  %8299 = vmatpush1.bf16.msra.mxu0 0
  %8300 = vmatprep.subr.bf16.mxu0 0
  %8301 = vmatpush1.bf16.msra.mxu0 0
  %8302 = vmatprep.mubr.bf16.mxu0 0
  %8303 = vmatmul.mubr.bf16.gmra.mrb[0].mxu0 %v8265
  %v8304 = vpop.f32.mrb[0].mxu0
  %v8305 = vadd.f32 %v7144, %v8304
  %v8306 = vpop.f32.mrb[0].mxu0
  %v8307 = vpop.f32.mrb[0].mxu0
  %v8308 = vpop.f32.mrb[0].mxu0
  %8309 = vdwg.mxu0
  %v8311 = vsel %vm2384, %v6837, 0
  %v8314 = vsel %vm5068, %v2317, 0
  %8316 = vmatprep.subr.bf16.mxu0 0
  %8317 = vmatpush1.bf16.msra.mxu0 %v8314
  %8318 = vmatprep.subr.bf16.mxu0 0
  %8319 = vmatpush1.bf16.msra.mxu0 0
  %8320 = vmatprep.subr.bf16.mxu0 0
  %8321 = vmatpush1.bf16.msra.mxu0 0
  %8322 = vmatprep.subr.bf16.mxu0 0
  %8323 = vmatpush1.bf16.msra.mxu0 0
  %8324 = vmatprep.subr.bf16.mxu0 0
  %8325 = vmatpush1.bf16.msra.mxu0 0
  %8326 = vmatprep.subr.bf16.mxu0 0
  %8327 = vmatpush1.bf16.msra.mxu0 0
  %8328 = vmatprep.subr.bf16.mxu0 0
  %8329 = vmatpush1.bf16.msra.mxu0 0
  %8330 = vmatprep.subr.bf16.mxu0 0
  %8331 = vmatpush1.bf16.msra.mxu0 0
  %8332 = vmatprep.subr.bf16.mxu0 0
  %8333 = vmatpush1.bf16.msra.mxu0 0
  %8334 = vmatprep.subr.bf16.mxu0 0
  %8335 = vmatpush1.bf16.msra.mxu0 0
  %8336 = vmatprep.subr.bf16.mxu0 0
  %8337 = vmatpush1.bf16.msra.mxu0 0
  %8338 = vmatprep.subr.bf16.mxu0 0
  %8339 = vmatpush1.bf16.msra.mxu0 0
  %8340 = vmatprep.subr.bf16.mxu0 0
  %8341 = vmatpush1.bf16.msra.mxu0 0
  %8342 = vmatprep.subr.bf16.mxu0 0
  %8343 = vmatpush1.bf16.msra.mxu0 0
  %8344 = vmatprep.subr.bf16.mxu0 0
  %8345 = vmatpush1.bf16.msra.mxu0 0
  %8346 = vmatprep.subr.bf16.mxu0 0
  %8347 = vmatpush1.bf16.msra.mxu0 0
  %8348 = vmatprep.mubr.bf16.mxu0 0
  %8349 = vmatmul.mubr.bf16.gmra.mrb[0].mxu0 %v8311
  %v8350 = vpop.f32.mrb[0].mxu0
  %v8351 = vadd.f32 %v7193, %v8350
  %v8352 = vpop.f32.mrb[0].mxu0
  %v8353 = vpop.f32.mrb[0].mxu0
  %v8354 = vpop.f32.mrb[0].mxu0
  %8355 = vdwg.mxu0
  %v8357 = vsel %vm2384, %v6838, 0
  %v8360 = vsel %vm5068, %v2318, 0
  %8362 = vmatprep.subr.bf16.mxu0 0
  %8363 = vmatpush1.bf16.msra.mxu0 %v8360
  %8364 = vmatprep.subr.bf16.mxu0 0
  %8365 = vmatpush1.bf16.msra.mxu0 0
  %8366 = vmatprep.subr.bf16.mxu0 0
  %8367 = vmatpush1.bf16.msra.mxu0 0
  %8368 = vmatprep.subr.bf16.mxu0 0
  %8369 = vmatpush1.bf16.msra.mxu0 0
  %8370 = vmatprep.subr.bf16.mxu0 0
  %8371 = vmatpush1.bf16.msra.mxu0 0
  %8372 = vmatprep.subr.bf16.mxu0 0
  %8373 = vmatpush1.bf16.msra.mxu0 0
  %8374 = vmatprep.subr.bf16.mxu0 0
  %8375 = vmatpush1.bf16.msra.mxu0 0
  %8376 = vmatprep.subr.bf16.mxu0 0
  %8377 = vmatpush1.bf16.msra.mxu0 0
  %8378 = vmatprep.subr.bf16.mxu0 0
  %8379 = vmatpush1.bf16.msra.mxu0 0
  %8380 = vmatprep.subr.bf16.mxu0 0
  %8381 = vmatpush1.bf16.msra.mxu0 0
  %8382 = vmatprep.subr.bf16.mxu0 0
  %8383 = vmatpush1.bf16.msra.mxu0 0
  %8384 = vmatprep.subr.bf16.mxu0 0
  %8385 = vmatpush1.bf16.msra.mxu0 0
  %8386 = vmatprep.subr.bf16.mxu0 0
  %8387 = vmatpush1.bf16.msra.mxu0 0
  %8388 = vmatprep.subr.bf16.mxu0 0
  %8389 = vmatpush1.bf16.msra.mxu0 0
  %8390 = vmatprep.subr.bf16.mxu0 0
  %8391 = vmatpush1.bf16.msra.mxu0 0
  %8392 = vmatprep.subr.bf16.mxu0 0
  %8393 = vmatpush1.bf16.msra.mxu0 0
  %8394 = vmatprep.mubr.bf16.mxu0 0
  %8395 = vmatmul.mubr.bf16.gmra.mrb[0].mxu0 %v8357
  %v8396 = vpop.f32.mrb[0].mxu0
  %v8397 = vadd.f32 %v7242, %v8396
  %v8398 = vpop.f32.mrb[0].mxu0
  %v8399 = vpop.f32.mrb[0].mxu0
  %v8400 = vpop.f32.mrb[0].mxu0
  %8401 = vdwg.mxu0
  %v8403 = vsel %vm2384, %v6839, 0
  %v8406 = vsel %vm5068, %v2319, 0
  %8408 = vmatprep.subr.bf16.mxu0 0
  %8409 = vmatpush1.bf16.msra.mxu0 %v8406
  %8410 = vmatprep.subr.bf16.mxu0 0
  %8411 = vmatpush1.bf16.msra.mxu0 0
  %8412 = vmatprep.subr.bf16.mxu0 0
  %8413 = vmatpush1.bf16.msra.mxu0 0
  %8414 = vmatprep.subr.bf16.mxu0 0
  %8415 = vmatpush1.bf16.msra.mxu0 0
  %8416 = vmatprep.subr.bf16.mxu0 0
  %8417 = vmatpush1.bf16.msra.mxu0 0
  %8418 = vmatprep.subr.bf16.mxu0 0
  %8419 = vmatpush1.bf16.msra.mxu0 0
  %8420 = vmatprep.subr.bf16.mxu0 0
  %8421 = vmatpush1.bf16.msra.mxu0 0
  %8422 = vmatprep.subr.bf16.mxu0 0
  %8423 = vmatpush1.bf16.msra.mxu0 0
  %8424 = vmatprep.subr.bf16.mxu0 0
  %8425 = vmatpush1.bf16.msra.mxu0 0
  %8426 = vmatprep.subr.bf16.mxu0 0
  %8427 = vmatpush1.bf16.msra.mxu0 0
  %8428 = vmatprep.subr.bf16.mxu0 0
  %8429 = vmatpush1.bf16.msra.mxu0 0
  %8430 = vmatprep.subr.bf16.mxu0 0
  %8431 = vmatpush1.bf16.msra.mxu0 0
  %8432 = vmatprep.subr.bf16.mxu0 0
  %8433 = vmatpush1.bf16.msra.mxu0 0
  %8434 = vmatprep.subr.bf16.mxu0 0
  %8435 = vmatpush1.bf16.msra.mxu0 0
  %8436 = vmatprep.subr.bf16.mxu0 0
  %8437 = vmatpush1.bf16.msra.mxu0 0
  %8438 = vmatprep.subr.bf16.mxu0 0
  %8439 = vmatpush1.bf16.msra.mxu0 0
  %8440 = vmatprep.mubr.bf16.mxu0 0
  %8441 = vmatmul.mubr.bf16.gmra.mrb[0].mxu0 %v8403
  %v8442 = vpop.f32.mrb[0].mxu0
  %v8443 = vadd.f32 %v7291, %v8442
  %v8444 = vpop.f32.mrb[0].mxu0
  %v8445 = vpop.f32.mrb[0].mxu0
  %v8446 = vpop.f32.mrb[0].mxu0
  %8447 = vdwg.mxu0
  %v8449 = vsel %vm2384, %v6840, 0
  %v8452 = vsel %vm5068, %v2320, 0
  %8454 = vmatprep.subr.bf16.mxu0 0
  %8455 = vmatpush1.bf16.msra.mxu0 %v8452
  %8456 = vmatprep.subr.bf16.mxu0 0
  %8457 = vmatpush1.bf16.msra.mxu0 0
  %8458 = vmatprep.subr.bf16.mxu0 0
  %8459 = vmatpush1.bf16.msra.mxu0 0
  %8460 = vmatprep.subr.bf16.mxu0 0
  %8461 = vmatpush1.bf16.msra.mxu0 0
  %8462 = vmatprep.subr.bf16.mxu0 0
  %8463 = vmatpush1.bf16.msra.mxu0 0
  %8464 = vmatprep.subr.bf16.mxu0 0
  %8465 = vmatpush1.bf16.msra.mxu0 0
  %8466 = vmatprep.subr.bf16.mxu0 0
  %8467 = vmatpush1.bf16.msra.mxu0 0
  %8468 = vmatprep.subr.bf16.mxu0 0
  %8469 = vmatpush1.bf16.msra.mxu0 0
  %8470 = vmatprep.subr.bf16.mxu0 0
  %8471 = vmatpush1.bf16.msra.mxu0 0
  %8472 = vmatprep.subr.bf16.mxu0 0
  %8473 = vmatpush1.bf16.msra.mxu0 0
  %8474 = vmatprep.subr.bf16.mxu0 0
  %8475 = vmatpush1.bf16.msra.mxu0 0
  %8476 = vmatprep.subr.bf16.mxu0 0
  %8477 = vmatpush1.bf16.msra.mxu0 0
  %8478 = vmatprep.subr.bf16.mxu0 0
  %8479 = vmatpush1.bf16.msra.mxu0 0
  %8480 = vmatprep.subr.bf16.mxu0 0
  %8481 = vmatpush1.bf16.msra.mxu0 0
  %8482 = vmatprep.subr.bf16.mxu0 0
  %8483 = vmatpush1.bf16.msra.mxu0 0
  %8484 = vmatprep.subr.bf16.mxu0 0
  %8485 = vmatpush1.bf16.msra.mxu0 0
  %8486 = vmatprep.mubr.bf16.mxu0 0
  %8487 = vmatmul.mubr.bf16.gmra.mrb[0].mxu0 %v8449
  %v8488 = vpop.f32.mrb[0].mxu0
  %v8489 = vadd.f32 %v7340, %v8488
  %v8490 = vpop.f32.mrb[0].mxu0
  %v8491 = vpop.f32.mrb[0].mxu0
  %v8492 = vpop.f32.mrb[0].mxu0
  %8493 = vdwg.mxu0
  %v8495 = vsel %vm2384, %v6841, 0
  %v8498 = vsel %vm5068, %v2321, 0
  %8500 = vmatprep.subr.bf16.mxu0 0
  %8501 = vmatpush1.bf16.msra.mxu0 %v8498
  %8502 = vmatprep.subr.bf16.mxu0 0
  %8503 = vmatpush1.bf16.msra.mxu0 0
  %8504 = vmatprep.subr.bf16.mxu0 0
  %8505 = vmatpush1.bf16.msra.mxu0 0
  %8506 = vmatprep.subr.bf16.mxu0 0
  %8507 = vmatpush1.bf16.msra.mxu0 0
  %8508 = vmatprep.subr.bf16.mxu0 0
  %8509 = vmatpush1.bf16.msra.mxu0 0
  %8510 = vmatprep.subr.bf16.mxu0 0
  %8511 = vmatpush1.bf16.msra.mxu0 0
  %8512 = vmatprep.subr.bf16.mxu0 0
  %8513 = vmatpush1.bf16.msra.mxu0 0
  %8514 = vmatprep.subr.bf16.mxu0 0
  %8515 = vmatpush1.bf16.msra.mxu0 0
  %8516 = vmatprep.subr.bf16.mxu0 0
  %8517 = vmatpush1.bf16.msra.mxu0 0
  %8518 = vmatprep.subr.bf16.mxu0 0
  %8519 = vmatpush1.bf16.msra.mxu0 0
  %8520 = vmatprep.subr.bf16.mxu0 0
  %8521 = vmatpush1.bf16.msra.mxu0 0
  %8522 = vmatprep.subr.bf16.mxu0 0
  %8523 = vmatpush1.bf16.msra.mxu0 0
  %8524 = vmatprep.subr.bf16.mxu0 0
  %8525 = vmatpush1.bf16.msra.mxu0 0
  %8526 = vmatprep.subr.bf16.mxu0 0
  %8527 = vmatpush1.bf16.msra.mxu0 0
  %8528 = vmatprep.subr.bf16.mxu0 0
  %8529 = vmatpush1.bf16.msra.mxu0 0
  %8530 = vmatprep.subr.bf16.mxu0 0
  %8531 = vmatpush1.bf16.msra.mxu0 0
  %8532 = vmatprep.mubr.bf16.mxu0 0
  %8533 = vmatmul.mubr.bf16.gmra.mrb[0].mxu0 %v8495
  %v8534 = vpop.f32.mrb[0].mxu0
  %v8535 = vadd.f32 %v7389, %v8534
  %v8536 = vpop.f32.mrb[0].mxu0
  %v8537 = vpop.f32.mrb[0].mxu0
  %v8538 = vpop.f32.mrb[0].mxu0
  %8539 = vdwg.mxu0
  %v8541 = vsel %vm2384, %v6842, 0
  %v8544 = vsel %vm5068, %v2322, 0
  %8546 = vmatprep.subr.bf16.mxu0 0
  %8547 = vmatpush1.bf16.msra.mxu0 %v8544
  %8548 = vmatprep.subr.bf16.mxu0 0
  %8549 = vmatpush1.bf16.msra.mxu0 0
  %8550 = vmatprep.subr.bf16.mxu0 0
  %8551 = vmatpush1.bf16.msra.mxu0 0
  %8552 = vmatprep.subr.bf16.mxu0 0
  %8553 = vmatpush1.bf16.msra.mxu0 0
  %8554 = vmatprep.subr.bf16.mxu0 0
  %8555 = vmatpush1.bf16.msra.mxu0 0
  %8556 = vmatprep.subr.bf16.mxu0 0
  %8557 = vmatpush1.bf16.msra.mxu0 0
  %8558 = vmatprep.subr.bf16.mxu0 0
  %8559 = vmatpush1.bf16.msra.mxu0 0
  %8560 = vmatprep.subr.bf16.mxu0 0
  %8561 = vmatpush1.bf16.msra.mxu0 0
  %8562 = vmatprep.subr.bf16.mxu0 0
  %8563 = vmatpush1.bf16.msra.mxu0 0
  %8564 = vmatprep.subr.bf16.mxu0 0
  %8565 = vmatpush1.bf16.msra.mxu0 0
  %8566 = vmatprep.subr.bf16.mxu0 0
  %8567 = vmatpush1.bf16.msra.mxu0 0
  %8568 = vmatprep.subr.bf16.mxu0 0
  %8569 = vmatpush1.bf16.msra.mxu0 0
  %8570 = vmatprep.subr.bf16.mxu0 0
  %8571 = vmatpush1.bf16.msra.mxu0 0
  %8572 = vmatprep.subr.bf16.mxu0 0
  %8573 = vmatpush1.bf16.msra.mxu0 0
  %8574 = vmatprep.subr.bf16.mxu0 0
  %8575 = vmatpush1.bf16.msra.mxu0 0
  %8576 = vmatprep.subr.bf16.mxu0 0
  %8577 = vmatpush1.bf16.msra.mxu0 0
  %8578 = vmatprep.mubr.bf16.mxu0 0
  %8579 = vmatmul.mubr.bf16.gmra.mrb[0].mxu0 %v8541
  %v8580 = vpop.f32.mrb[0].mxu0
  %v8581 = vadd.f32 %v7438, %v8580
  %v8582 = vpop.f32.mrb[0].mxu0
  %v8583 = vpop.f32.mrb[0].mxu0
  %v8584 = vpop.f32.mrb[0].mxu0
  %8585 = vdwg.mxu0
  %v8587 = vsel %vm2384, %v6843, 0
  %v8590 = vsel %vm5068, %v2323, 0
  %8592 = vmatprep.subr.bf16.mxu0 0
  %8593 = vmatpush1.bf16.msra.mxu0 %v8590
  %8594 = vmatprep.subr.bf16.mxu0 0
  %8595 = vmatpush1.bf16.msra.mxu0 0
  %8596 = vmatprep.subr.bf16.mxu0 0
  %8597 = vmatpush1.bf16.msra.mxu0 0
  %8598 = vmatprep.subr.bf16.mxu0 0
  %8599 = vmatpush1.bf16.msra.mxu0 0
  %8600 = vmatprep.subr.bf16.mxu0 0
  %8601 = vmatpush1.bf16.msra.mxu0 0
  %8602 = vmatprep.subr.bf16.mxu0 0
  %8603 = vmatpush1.bf16.msra.mxu0 0
  %8604 = vmatprep.subr.bf16.mxu0 0
  %8605 = vmatpush1.bf16.msra.mxu0 0
  %8606 = vmatprep.subr.bf16.mxu0 0
  %8607 = vmatpush1.bf16.msra.mxu0 0
  %8608 = vmatprep.subr.bf16.mxu0 0
  %8609 = vmatpush1.bf16.msra.mxu0 0
  %8610 = vmatprep.subr.bf16.mxu0 0
  %8611 = vmatpush1.bf16.msra.mxu0 0
  %8612 = vmatprep.subr.bf16.mxu0 0
  %8613 = vmatpush1.bf16.msra.mxu0 0
  %8614 = vmatprep.subr.bf16.mxu0 0
  %8615 = vmatpush1.bf16.msra.mxu0 0
  %8616 = vmatprep.subr.bf16.mxu0 0
  %8617 = vmatpush1.bf16.msra.mxu0 0
  %8618 = vmatprep.subr.bf16.mxu0 0
  %8619 = vmatpush1.bf16.msra.mxu0 0
  %8620 = vmatprep.subr.bf16.mxu0 0
  %8621 = vmatpush1.bf16.msra.mxu0 0
  %8622 = vmatprep.subr.bf16.mxu0 0
  %8623 = vmatpush1.bf16.msra.mxu0 0
  %8624 = vmatprep.mubr.bf16.mxu0 0
  %8625 = vmatmul.mubr.bf16.gmra.mrb[0].mxu0 %v8587
  %v8626 = vpop.f32.mrb[0].mxu0
  %v8627 = vadd.f32 %v7487, %v8626
  %v8628 = vpop.f32.mrb[0].mxu0
  %v8629 = vpop.f32.mrb[0].mxu0
  %v8630 = vpop.f32.mrb[0].mxu0
  %8631 = vdwg.mxu0
  %v8633 = vsel %vm2384, %v6844, 0
  %v8636 = vsel %vm5068, %v2324, 0
  %8638 = vmatprep.subr.bf16.mxu0 0
  %8639 = vmatpush1.bf16.msra.mxu0 %v8636
  %8640 = vmatprep.subr.bf16.mxu0 0
  %8641 = vmatpush1.bf16.msra.mxu0 0
  %8642 = vmatprep.subr.bf16.mxu0 0
  %8643 = vmatpush1.bf16.msra.mxu0 0
  %8644 = vmatprep.subr.bf16.mxu0 0
  %8645 = vmatpush1.bf16.msra.mxu0 0
  %8646 = vmatprep.subr.bf16.mxu0 0
  %8647 = vmatpush1.bf16.msra.mxu0 0
  %8648 = vmatprep.subr.bf16.mxu0 0
  %8649 = vmatpush1.bf16.msra.mxu0 0
  %8650 = vmatprep.subr.bf16.mxu0 0
  %8651 = vmatpush1.bf16.msra.mxu0 0
  %8652 = vmatprep.subr.bf16.mxu0 0
  %8653 = vmatpush1.bf16.msra.mxu0 0
  %8654 = vmatprep.subr.bf16.mxu0 0
  %8655 = vmatpush1.bf16.msra.mxu0 0
  %8656 = vmatprep.subr.bf16.mxu0 0
  %8657 = vmatpush1.bf16.msra.mxu0 0
  %8658 = vmatprep.subr.bf16.mxu0 0
  %8659 = vmatpush1.bf16.msra.mxu0 0
  %8660 = vmatprep.subr.bf16.mxu0 0
  %8661 = vmatpush1.bf16.msra.mxu0 0
  %8662 = vmatprep.subr.bf16.mxu0 0
  %8663 = vmatpush1.bf16.msra.mxu0 0
  %8664 = vmatprep.subr.bf16.mxu0 0
  %8665 = vmatpush1.bf16.msra.mxu0 0
  %8666 = vmatprep.subr.bf16.mxu0 0
  %8667 = vmatpush1.bf16.msra.mxu0 0
  %8668 = vmatprep.subr.bf16.mxu0 0
  %8669 = vmatpush1.bf16.msra.mxu0 0
  %8670 = vmatprep.mubr.bf16.mxu0 0
  %8671 = vmatmul.mubr.bf16.gmra.mrb[0].mxu0 %v8633
  %v8672 = vpop.f32.mrb[0].mxu0
  %v8673 = vadd.f32 %v7536, %v8672
  %v8674 = vpop.f32.mrb[0].mxu0
  %v8675 = vpop.f32.mrb[0].mxu0
  %v8676 = vpop.f32.mrb[0].mxu0
  %8677 = vdwg.mxu0
  %v8679 = vsel %vm2384, %v6845, 0
  %v8682 = vsel %vm5068, %v2325, 0
  %8684 = vmatprep.subr.bf16.mxu0 0
  %8685 = vmatpush1.bf16.msra.mxu0 %v8682
  %8686 = vmatprep.subr.bf16.mxu0 0
  %8687 = vmatpush1.bf16.msra.mxu0 0
  %8688 = vmatprep.subr.bf16.mxu0 0
  %8689 = vmatpush1.bf16.msra.mxu0 0
  %8690 = vmatprep.subr.bf16.mxu0 0
  %8691 = vmatpush1.bf16.msra.mxu0 0
  %8692 = vmatprep.subr.bf16.mxu0 0
  %8693 = vmatpush1.bf16.msra.mxu0 0
  %8694 = vmatprep.subr.bf16.mxu0 0
  %8695 = vmatpush1.bf16.msra.mxu0 0
  %8696 = vmatprep.subr.bf16.mxu0 0
  %8697 = vmatpush1.bf16.msra.mxu0 0
  %8698 = vmatprep.subr.bf16.mxu0 0
  %8699 = vmatpush1.bf16.msra.mxu0 0
  %8700 = vmatprep.subr.bf16.mxu0 0
  %8701 = vmatpush1.bf16.msra.mxu0 0
  %8702 = vmatprep.subr.bf16.mxu0 0
  %8703 = vmatpush1.bf16.msra.mxu0 0
  %8704 = vmatprep.subr.bf16.mxu0 0
  %8705 = vmatpush1.bf16.msra.mxu0 0
  %8706 = vmatprep.subr.bf16.mxu0 0
  %8707 = vmatpush1.bf16.msra.mxu0 0
  %8708 = vmatprep.subr.bf16.mxu0 0
  %8709 = vmatpush1.bf16.msra.mxu0 0
  %8710 = vmatprep.subr.bf16.mxu0 0
  %8711 = vmatpush1.bf16.msra.mxu0 0
  %8712 = vmatprep.subr.bf16.mxu0 0
  %8713 = vmatpush1.bf16.msra.mxu0 0
  %8714 = vmatprep.subr.bf16.mxu0 0
  %8715 = vmatpush1.bf16.msra.mxu0 0
  %8716 = vmatprep.mubr.bf16.mxu0 0
  %8717 = vmatmul.mubr.bf16.gmra.mrb[0].mxu0 %v8679
  %v8718 = vpop.f32.mrb[0].mxu0
  %v8719 = vadd.f32 %v7585, %v8718
  %v8720 = vpop.f32.mrb[0].mxu0
  %v8721 = vpop.f32.mrb[0].mxu0
  %v8722 = vpop.f32.mrb[0].mxu0
  %8723 = vdwg.mxu0
  %v8725 = vsel %vm2384, %v6846, 0
  %v8728 = vsel %vm5068, %v2326, 0
  %8730 = vmatprep.subr.bf16.mxu0 0
  %8731 = vmatpush1.bf16.msra.mxu0 %v8728
  %8732 = vmatprep.subr.bf16.mxu0 0
  %8733 = vmatpush1.bf16.msra.mxu0 0
  %8734 = vmatprep.subr.bf16.mxu0 0
  %8735 = vmatpush1.bf16.msra.mxu0 0
  %8736 = vmatprep.subr.bf16.mxu0 0
  %8737 = vmatpush1.bf16.msra.mxu0 0
  %8738 = vmatprep.subr.bf16.mxu0 0
  %8739 = vmatpush1.bf16.msra.mxu0 0
  %8740 = vmatprep.subr.bf16.mxu0 0
  %8741 = vmatpush1.bf16.msra.mxu0 0
  %8742 = vmatprep.subr.bf16.mxu0 0
  %8743 = vmatpush1.bf16.msra.mxu0 0
  %8744 = vmatprep.subr.bf16.mxu0 0
  %8745 = vmatpush1.bf16.msra.mxu0 0
  %8746 = vmatprep.subr.bf16.mxu0 0
  %8747 = vmatpush1.bf16.msra.mxu0 0
  %8748 = vmatprep.subr.bf16.mxu0 0
  %8749 = vmatpush1.bf16.msra.mxu0 0
  %8750 = vmatprep.subr.bf16.mxu0 0
  %8751 = vmatpush1.bf16.msra.mxu0 0
  %8752 = vmatprep.subr.bf16.mxu0 0
  %8753 = vmatpush1.bf16.msra.mxu0 0
  %8754 = vmatprep.subr.bf16.mxu0 0
  %8755 = vmatpush1.bf16.msra.mxu0 0
  %8756 = vmatprep.subr.bf16.mxu0 0
  %8757 = vmatpush1.bf16.msra.mxu0 0
  %8758 = vmatprep.subr.bf16.mxu0 0
  %8759 = vmatpush1.bf16.msra.mxu0 0
  %8760 = vmatprep.subr.bf16.mxu0 0
  %8761 = vmatpush1.bf16.msra.mxu0 0
  %8762 = vmatprep.mubr.bf16.mxu0 0
  %8763 = vmatmul.mubr.bf16.gmra.mrb[0].mxu0 %v8725
  %v8764 = vpop.f32.mrb[0].mxu0
  %v8765 = vadd.f32 %v7634, %v8764
  %v8766 = vpop.f32.mrb[0].mxu0
  %v8767 = vpop.f32.mrb[0].mxu0
  %v8768 = vpop.f32.mrb[0].mxu0
  %8769 = vdwg.mxu0
  %v8771 = vsel %vm2384, %v6847, 0
  %v8774 = vsel %vm5068, %v2327, 0
  %8776 = vmatprep.subr.bf16.mxu0 0
  %8777 = vmatpush1.bf16.msra.mxu0 %v8774
  %8778 = vmatprep.subr.bf16.mxu0 0
  %8779 = vmatpush1.bf16.msra.mxu0 0
  %8780 = vmatprep.subr.bf16.mxu0 0
  %8781 = vmatpush1.bf16.msra.mxu0 0
  %8782 = vmatprep.subr.bf16.mxu0 0
  %8783 = vmatpush1.bf16.msra.mxu0 0
  %8784 = vmatprep.subr.bf16.mxu0 0
  %8785 = vmatpush1.bf16.msra.mxu0 0
  %8786 = vmatprep.subr.bf16.mxu0 0
  %8787 = vmatpush1.bf16.msra.mxu0 0
  %8788 = vmatprep.subr.bf16.mxu0 0
  %8789 = vmatpush1.bf16.msra.mxu0 0
  %8790 = vmatprep.subr.bf16.mxu0 0
  %8791 = vmatpush1.bf16.msra.mxu0 0
  %8792 = vmatprep.subr.bf16.mxu0 0
  %8793 = vmatpush1.bf16.msra.mxu0 0
  %8794 = vmatprep.subr.bf16.mxu0 0
  %8795 = vmatpush1.bf16.msra.mxu0 0
  %8796 = vmatprep.subr.bf16.mxu0 0
  %8797 = vmatpush1.bf16.msra.mxu0 0
  %8798 = vmatprep.subr.bf16.mxu0 0
  %8799 = vmatpush1.bf16.msra.mxu0 0
  %8800 = vmatprep.subr.bf16.mxu0 0
  %8801 = vmatpush1.bf16.msra.mxu0 0
  %8802 = vmatprep.subr.bf16.mxu0 0
  %8803 = vmatpush1.bf16.msra.mxu0 0
  %8804 = vmatprep.subr.bf16.mxu0 0
  %8805 = vmatpush1.bf16.msra.mxu0 0
  %8806 = vmatprep.subr.bf16.mxu0 0
  %8807 = vmatpush1.bf16.msra.mxu0 0
  %8808 = vmatprep.mubr.bf16.mxu0 0
  %8809 = vmatmul.mubr.bf16.gmra.mrb[0].mxu0 %v8771
  %v8810 = vpop.f32.mrb[0].mxu0
  %v8811 = vadd.f32 %v7683, %v8810
  %v8812 = vpop.f32.mrb[0].mxu0
  %v8813 = vpop.f32.mrb[0].mxu0
  %v8814 = vpop.f32.mrb[0].mxu0
  %8815 = vdwg.mxu0
  %v8817 = vsel %vm2384, %v6848, 0
  %v8820 = vsel %vm5068, %v2328, 0
  %8822 = vmatprep.subr.bf16.mxu0 0
  %8823 = vmatpush1.bf16.msra.mxu0 %v8820
  %8824 = vmatprep.subr.bf16.mxu0 0
  %8825 = vmatpush1.bf16.msra.mxu0 0
  %8826 = vmatprep.subr.bf16.mxu0 0
  %8827 = vmatpush1.bf16.msra.mxu0 0
  %8828 = vmatprep.subr.bf16.mxu0 0
  %8829 = vmatpush1.bf16.msra.mxu0 0
  %8830 = vmatprep.subr.bf16.mxu0 0
  %8831 = vmatpush1.bf16.msra.mxu0 0
  %8832 = vmatprep.subr.bf16.mxu0 0
  %8833 = vmatpush1.bf16.msra.mxu0 0
  %8834 = vmatprep.subr.bf16.mxu0 0
  %8835 = vmatpush1.bf16.msra.mxu0 0
  %8836 = vmatprep.subr.bf16.mxu0 0
  %8837 = vmatpush1.bf16.msra.mxu0 0
  %8838 = vmatprep.subr.bf16.mxu0 0
  %8839 = vmatpush1.bf16.msra.mxu0 0
  %8840 = vmatprep.subr.bf16.mxu0 0
  %8841 = vmatpush1.bf16.msra.mxu0 0
  %8842 = vmatprep.subr.bf16.mxu0 0
  %8843 = vmatpush1.bf16.msra.mxu0 0
  %8844 = vmatprep.subr.bf16.mxu0 0
  %8845 = vmatpush1.bf16.msra.mxu0 0
  %8846 = vmatprep.subr.bf16.mxu0 0
  %8847 = vmatpush1.bf16.msra.mxu0 0
  %8848 = vmatprep.subr.bf16.mxu0 0
  %8849 = vmatpush1.bf16.msra.mxu0 0
  %8850 = vmatprep.subr.bf16.mxu0 0
  %8851 = vmatpush1.bf16.msra.mxu0 0
  %8852 = vmatprep.subr.bf16.mxu0 0
  %8853 = vmatpush1.bf16.msra.mxu0 0
  %8854 = vmatprep.mubr.bf16.mxu0 0
  %8855 = vmatmul.mubr.bf16.gmra.mrb[0].mxu0 %v8817
  %v8856 = vpop.f32.mrb[0].mxu0
  %v8857 = vadd.f32 %v7732, %v8856
  %v8858 = vpop.f32.mrb[0].mxu0
  %v8859 = vpop.f32.mrb[0].mxu0
  %v8860 = vpop.f32.mrb[0].mxu0
  %8861 = vdwg.mxu0
  %v8863 = vsel %vm2384, %v6849, 0
  %v8866 = vsel %vm5068, %v2329, 0
  %8868 = vmatprep.subr.bf16.mxu0 0
  %8869 = vmatpush1.bf16.msra.mxu0 %v8866
  %8870 = vmatprep.subr.bf16.mxu0 0
  %8871 = vmatpush1.bf16.msra.mxu0 0
  %8872 = vmatprep.subr.bf16.mxu0 0
  %8873 = vmatpush1.bf16.msra.mxu0 0
  %8874 = vmatprep.subr.bf16.mxu0 0
  %8875 = vmatpush1.bf16.msra.mxu0 0
  %8876 = vmatprep.subr.bf16.mxu0 0
  %8877 = vmatpush1.bf16.msra.mxu0 0
  %8878 = vmatprep.subr.bf16.mxu0 0
  %8879 = vmatpush1.bf16.msra.mxu0 0
  %8880 = vmatprep.subr.bf16.mxu0 0
  %8881 = vmatpush1.bf16.msra.mxu0 0
  %8882 = vmatprep.subr.bf16.mxu0 0
  %8883 = vmatpush1.bf16.msra.mxu0 0
  %8884 = vmatprep.subr.bf16.mxu0 0
  %8885 = vmatpush1.bf16.msra.mxu0 0
  %8886 = vmatprep.subr.bf16.mxu0 0
  %8887 = vmatpush1.bf16.msra.mxu0 0
  %8888 = vmatprep.subr.bf16.mxu0 0
  %8889 = vmatpush1.bf16.msra.mxu0 0
  %8890 = vmatprep.subr.bf16.mxu0 0
  %8891 = vmatpush1.bf16.msra.mxu0 0
  %8892 = vmatprep.subr.bf16.mxu0 0
  %8893 = vmatpush1.bf16.msra.mxu0 0
  %8894 = vmatprep.subr.bf16.mxu0 0
  %8895 = vmatpush1.bf16.msra.mxu0 0
  %8896 = vmatprep.subr.bf16.mxu0 0
  %8897 = vmatpush1.bf16.msra.mxu0 0
  %8898 = vmatprep.subr.bf16.mxu0 0
  %8899 = vmatpush1.bf16.msra.mxu0 0
  %8900 = vmatprep.mubr.bf16.mxu0 0
  %8901 = vmatmul.mubr.bf16.gmra.mrb[0].mxu0 %v8863
  %v8902 = vpop.f32.mrb[0].mxu0
  %v8903 = vadd.f32 %v7781, %v8902
  %v8904 = vpop.f32.mrb[0].mxu0
  %v8905 = vpop.f32.mrb[0].mxu0
  %v8906 = vpop.f32.mrb[0].mxu0
  %8907 = vdwg.mxu0
  %v8909 = vsel %vm2384, %v6850, 0
  %v8912 = vsel %vm5068, %v2330, 0
  %8914 = vmatprep.subr.bf16.mxu0 0
  %8915 = vmatpush1.bf16.msra.mxu0 %v8912
  %8916 = vmatprep.subr.bf16.mxu0 0
  %8917 = vmatpush1.bf16.msra.mxu0 0
  %8918 = vmatprep.subr.bf16.mxu0 0
  %8919 = vmatpush1.bf16.msra.mxu0 0
  %8920 = vmatprep.subr.bf16.mxu0 0
  %8921 = vmatpush1.bf16.msra.mxu0 0
  %8922 = vmatprep.subr.bf16.mxu0 0
  %8923 = vmatpush1.bf16.msra.mxu0 0
  %8924 = vmatprep.subr.bf16.mxu0 0
  %8925 = vmatpush1.bf16.msra.mxu0 0
  %8926 = vmatprep.subr.bf16.mxu0 0
  %8927 = vmatpush1.bf16.msra.mxu0 0
  %8928 = vmatprep.subr.bf16.mxu0 0
  %8929 = vmatpush1.bf16.msra.mxu0 0
  %8930 = vmatprep.subr.bf16.mxu0 0
  %8931 = vmatpush1.bf16.msra.mxu0 0
  %8932 = vmatprep.subr.bf16.mxu0 0
  %8933 = vmatpush1.bf16.msra.mxu0 0
  %8934 = vmatprep.subr.bf16.mxu0 0
  %8935 = vmatpush1.bf16.msra.mxu0 0
  %8936 = vmatprep.subr.bf16.mxu0 0
  %8937 = vmatpush1.bf16.msra.mxu0 0
  %8938 = vmatprep.subr.bf16.mxu0 0
  %8939 = vmatpush1.bf16.msra.mxu0 0
  %8940 = vmatprep.subr.bf16.mxu0 0
  %8941 = vmatpush1.bf16.msra.mxu0 0
  %8942 = vmatprep.subr.bf16.mxu0 0
  %8943 = vmatpush1.bf16.msra.mxu0 0
  %8944 = vmatprep.subr.bf16.mxu0 0
  %8945 = vmatpush1.bf16.msra.mxu0 0
  %8946 = vmatprep.mubr.bf16.mxu0 0
  %8947 = vmatmul.mubr.bf16.gmra.mrb[0].mxu0 %v8909
  %v8948 = vpop.f32.mrb[0].mxu0
  %v8949 = vadd.f32 %v7830, %v8948
  %v8950 = vpop.f32.mrb[0].mxu0
  %v8951 = vpop.f32.mrb[0].mxu0
  %v8952 = vpop.f32.mrb[0].mxu0
  %8953 = vdwg.mxu0
  %v8955 = vsel %vm2384, %v6851, 0
  %v8958 = vsel %vm5068, %v2331, 0
  %8960 = vmatprep.subr.bf16.mxu0 0
  %8961 = vmatpush1.bf16.msra.mxu0 %v8958
  %8962 = vmatprep.subr.bf16.mxu0 0
  %8963 = vmatpush1.bf16.msra.mxu0 0
  %8964 = vmatprep.subr.bf16.mxu0 0
  %8965 = vmatpush1.bf16.msra.mxu0 0
  %8966 = vmatprep.subr.bf16.mxu0 0
  %8967 = vmatpush1.bf16.msra.mxu0 0
  %8968 = vmatprep.subr.bf16.mxu0 0
  %8969 = vmatpush1.bf16.msra.mxu0 0
  %8970 = vmatprep.subr.bf16.mxu0 0
  %8971 = vmatpush1.bf16.msra.mxu0 0
  %8972 = vmatprep.subr.bf16.mxu0 0
  %8973 = vmatpush1.bf16.msra.mxu0 0
  %8974 = vmatprep.subr.bf16.mxu0 0
  %8975 = vmatpush1.bf16.msra.mxu0 0
  %8976 = vmatprep.subr.bf16.mxu0 0
  %8977 = vmatpush1.bf16.msra.mxu0 0
  %8978 = vmatprep.subr.bf16.mxu0 0
  %8979 = vmatpush1.bf16.msra.mxu0 0
  %8980 = vmatprep.subr.bf16.mxu0 0
  %8981 = vmatpush1.bf16.msra.mxu0 0
  %8982 = vmatprep.subr.bf16.mxu0 0
  %8983 = vmatpush1.bf16.msra.mxu0 0
  %8984 = vmatprep.subr.bf16.mxu0 0
  %8985 = vmatpush1.bf16.msra.mxu0 0
  %8986 = vmatprep.subr.bf16.mxu0 0
  %8987 = vmatpush1.bf16.msra.mxu0 0
  %8988 = vmatprep.subr.bf16.mxu0 0
  %8989 = vmatpush1.bf16.msra.mxu0 0
  %8990 = vmatprep.subr.bf16.mxu0 0
  %8991 = vmatpush1.bf16.msra.mxu0 0
  %8992 = vmatprep.mubr.bf16.mxu0 0
  %8993 = vmatmul.mubr.bf16.gmra.mrb[0].mxu0 %v8955
  %v8994 = vpop.f32.mrb[0].mxu0
  %v8995 = vadd.f32 %v7879, %v8994
  %v8996 = vpop.f32.mrb[0].mxu0
  %v8997 = vpop.f32.mrb[0].mxu0
  %v8998 = vpop.f32.mrb[0].mxu0
  %8999 = vdwg.mxu0
  %v9001 = vsel %vm2384, %v6852, 0
  %v9004 = vsel %vm5068, %v2332, 0
  %9006 = vmatprep.subr.bf16.mxu0 0
  %9007 = vmatpush1.bf16.msra.mxu0 %v9004
  %9008 = vmatprep.subr.bf16.mxu0 0
  %9009 = vmatpush1.bf16.msra.mxu0 0
  %9010 = vmatprep.subr.bf16.mxu0 0
  %9011 = vmatpush1.bf16.msra.mxu0 0
  %9012 = vmatprep.subr.bf16.mxu0 0
  %9013 = vmatpush1.bf16.msra.mxu0 0
  %9014 = vmatprep.subr.bf16.mxu0 0
  %9015 = vmatpush1.bf16.msra.mxu0 0
  %9016 = vmatprep.subr.bf16.mxu0 0
  %9017 = vmatpush1.bf16.msra.mxu0 0
  %9018 = vmatprep.subr.bf16.mxu0 0
  %9019 = vmatpush1.bf16.msra.mxu0 0
  %9020 = vmatprep.subr.bf16.mxu0 0
  %9021 = vmatpush1.bf16.msra.mxu0 0
  %9022 = vmatprep.subr.bf16.mxu0 0
  %9023 = vmatpush1.bf16.msra.mxu0 0
  %9024 = vmatprep.subr.bf16.mxu0 0
  %9025 = vmatpush1.bf16.msra.mxu0 0
  %9026 = vmatprep.subr.bf16.mxu0 0
  %9027 = vmatpush1.bf16.msra.mxu0 0
  %9028 = vmatprep.subr.bf16.mxu0 0
  %9029 = vmatpush1.bf16.msra.mxu0 0
  %9030 = vmatprep.subr.bf16.mxu0 0
  %9031 = vmatpush1.bf16.msra.mxu0 0
  %9032 = vmatprep.subr.bf16.mxu0 0
  %9033 = vmatpush1.bf16.msra.mxu0 0
  %9034 = vmatprep.subr.bf16.mxu0 0
  %9035 = vmatpush1.bf16.msra.mxu0 0
  %9036 = vmatprep.subr.bf16.mxu0 0
  %9037 = vmatpush1.bf16.msra.mxu0 0
  %9038 = vmatprep.mubr.bf16.mxu0 0
  %9039 = vmatmul.mubr.bf16.gmra.mrb[0].mxu0 %v9001
  %v9040 = vpop.f32.mrb[0].mxu0
  %v9041 = vadd.f32 %v7928, %v9040
  %v9042 = vpop.f32.mrb[0].mxu0
  %v9043 = vpop.f32.mrb[0].mxu0
  %v9044 = vpop.f32.mrb[0].mxu0
  %9045 = vdwg.mxu0
  %v9047 = vsel %vm2384, %v6853, 0
  %v9050 = vsel %vm5068, %v2333, 0
  %9052 = vmatprep.subr.bf16.mxu0 0
  %9053 = vmatpush1.bf16.msra.mxu0 %v9050
  %9054 = vmatprep.subr.bf16.mxu0 0
  %9055 = vmatpush1.bf16.msra.mxu0 0
  %9056 = vmatprep.subr.bf16.mxu0 0
  %9057 = vmatpush1.bf16.msra.mxu0 0
  %9058 = vmatprep.subr.bf16.mxu0 0
  %9059 = vmatpush1.bf16.msra.mxu0 0
  %9060 = vmatprep.subr.bf16.mxu0 0
  %9061 = vmatpush1.bf16.msra.mxu0 0
  %9062 = vmatprep.subr.bf16.mxu0 0
  %9063 = vmatpush1.bf16.msra.mxu0 0
  %9064 = vmatprep.subr.bf16.mxu0 0
  %9065 = vmatpush1.bf16.msra.mxu0 0
  %9066 = vmatprep.subr.bf16.mxu0 0
  %9067 = vmatpush1.bf16.msra.mxu0 0
  %9068 = vmatprep.subr.bf16.mxu0 0
  %9069 = vmatpush1.bf16.msra.mxu0 0
  %9070 = vmatprep.subr.bf16.mxu0 0
  %9071 = vmatpush1.bf16.msra.mxu0 0
  %9072 = vmatprep.subr.bf16.mxu0 0
  %9073 = vmatpush1.bf16.msra.mxu0 0
  %9074 = vmatprep.subr.bf16.mxu0 0
  %9075 = vmatpush1.bf16.msra.mxu0 0
  %9076 = vmatprep.subr.bf16.mxu0 0
  %9077 = vmatpush1.bf16.msra.mxu0 0
  %9078 = vmatprep.subr.bf16.mxu0 0
  %9079 = vmatpush1.bf16.msra.mxu0 0
  %9080 = vmatprep.subr.bf16.mxu0 0
  %9081 = vmatpush1.bf16.msra.mxu0 0
  %9082 = vmatprep.subr.bf16.mxu0 0
  %9083 = vmatpush1.bf16.msra.mxu0 0
  %9084 = vmatprep.mubr.bf16.mxu0 0
  %9085 = vmatmul.mubr.bf16.gmra.mrb[0].mxu0 %v9047
  %v9086 = vpop.f32.mrb[0].mxu0
  %v9087 = vadd.f32 %v7977, %v9086
  %v9088 = vpop.f32.mrb[0].mxu0
  %v9089 = vpop.f32.mrb[0].mxu0
  %v9090 = vpop.f32.mrb[0].mxu0
  %9091 = vdwg.mxu0
  %v9093 = vsel %vm2384, %v6854, 0
  %v9096 = vsel %vm5068, %v2334, 0
  %9098 = vmatprep.subr.bf16.mxu0 0
  %9099 = vmatpush1.bf16.msra.mxu0 %v9096
  %9100 = vmatprep.subr.bf16.mxu0 0
  %9101 = vmatpush1.bf16.msra.mxu0 0
  %9102 = vmatprep.subr.bf16.mxu0 0
  %9103 = vmatpush1.bf16.msra.mxu0 0
  %9104 = vmatprep.subr.bf16.mxu0 0
  %9105 = vmatpush1.bf16.msra.mxu0 0
  %9106 = vmatprep.subr.bf16.mxu0 0
  %9107 = vmatpush1.bf16.msra.mxu0 0
  %9108 = vmatprep.subr.bf16.mxu0 0
  %9109 = vmatpush1.bf16.msra.mxu0 0
  %9110 = vmatprep.subr.bf16.mxu0 0
  %9111 = vmatpush1.bf16.msra.mxu0 0
  %9112 = vmatprep.subr.bf16.mxu0 0
  %9113 = vmatpush1.bf16.msra.mxu0 0
  %9114 = vmatprep.subr.bf16.mxu0 0
  %9115 = vmatpush1.bf16.msra.mxu0 0
  %9116 = vmatprep.subr.bf16.mxu0 0
  %9117 = vmatpush1.bf16.msra.mxu0 0
  %9118 = vmatprep.subr.bf16.mxu0 0
  %9119 = vmatpush1.bf16.msra.mxu0 0
  %9120 = vmatprep.subr.bf16.mxu0 0
  %9121 = vmatpush1.bf16.msra.mxu0 0
  %9122 = vmatprep.subr.bf16.mxu0 0
  %9123 = vmatpush1.bf16.msra.mxu0 0
  %9124 = vmatprep.subr.bf16.mxu0 0
  %9125 = vmatpush1.bf16.msra.mxu0 0
  %9126 = vmatprep.subr.bf16.mxu0 0
  %9127 = vmatpush1.bf16.msra.mxu0 0
  %9128 = vmatprep.subr.bf16.mxu0 0
  %9129 = vmatpush1.bf16.msra.mxu0 0
  %9130 = vmatprep.mubr.bf16.mxu0 0
  %9131 = vmatmul.mubr.bf16.gmra.mrb[0].mxu0 %v9093
  %v9132 = vpop.f32.mrb[0].mxu0
  %v9133 = vadd.f32 %v8026, %v9132
  %v9134 = vpop.f32.mrb[0].mxu0
  %v9135 = vpop.f32.mrb[0].mxu0
  %v9136 = vpop.f32.mrb[0].mxu0
  %9137 = vdwg.mxu0
  %v9139 = vsel %vm2384, %v6855, 0
  %v9142 = vsel %vm5068, %v2335, 0
  %9144 = vmatprep.subr.bf16.mxu0 0
  %9145 = vmatpush1.bf16.msra.mxu0 %v9142
  %9146 = vmatprep.subr.bf16.mxu0 0
  %9147 = vmatpush1.bf16.msra.mxu0 0
  %9148 = vmatprep.subr.bf16.mxu0 0
  %9149 = vmatpush1.bf16.msra.mxu0 0
  %9150 = vmatprep.subr.bf16.mxu0 0
  %9151 = vmatpush1.bf16.msra.mxu0 0
  %9152 = vmatprep.subr.bf16.mxu0 0
  %9153 = vmatpush1.bf16.msra.mxu0 0
  %9154 = vmatprep.subr.bf16.mxu0 0
  %9155 = vmatpush1.bf16.msra.mxu0 0
  %9156 = vmatprep.subr.bf16.mxu0 0
  %9157 = vmatpush1.bf16.msra.mxu0 0
  %9158 = vmatprep.subr.bf16.mxu0 0
  %9159 = vmatpush1.bf16.msra.mxu0 0
  %9160 = vmatprep.subr.bf16.mxu0 0
  %9161 = vmatpush1.bf16.msra.mxu0 0
  %9162 = vmatprep.subr.bf16.mxu0 0
  %9163 = vmatpush1.bf16.msra.mxu0 0
  %9164 = vmatprep.subr.bf16.mxu0 0
  %9165 = vmatpush1.bf16.msra.mxu0 0
  %9166 = vmatprep.subr.bf16.mxu0 0
  %9167 = vmatpush1.bf16.msra.mxu0 0
  %9168 = vmatprep.subr.bf16.mxu0 0
  %9169 = vmatpush1.bf16.msra.mxu0 0
  %9170 = vmatprep.subr.bf16.mxu0 0
  %9171 = vmatpush1.bf16.msra.mxu0 0
  %9172 = vmatprep.subr.bf16.mxu0 0
  %9173 = vmatpush1.bf16.msra.mxu0 0
  %9174 = vmatprep.subr.bf16.mxu0 0
  %9175 = vmatpush1.bf16.msra.mxu0 0
  %9176 = vmatprep.mubr.bf16.mxu0 0
  %9177 = vmatmul.mubr.bf16.gmra.mrb[0].mxu0 %v9139
  %v9178 = vpop.f32.mrb[0].mxu0
  %v9179 = vadd.f32 %v8075, %v9178
  %v9180 = vpop.f32.mrb[0].mxu0
  %v9181 = vpop.f32.mrb[0].mxu0
  %v9182 = vpop.f32.mrb[0].mxu0
  %9183 = vdwg.mxu0
  %v9184 = vld [vmem:[%s14] sm:$0xff]
  %v9185 = vld [vmem:[%s14 + $0x8] sm:$0xff]
  %v9186 = vld [vmem:[%s14 + $0x10] sm:$0xff]
  %v9187 = vld [vmem:[%s14 + $0x18] sm:$0xff]
  %v9188 = vpack.c.bf16 %v9185, %v9184
  %v9189 = vpack.c.bf16 %v9187, %v9186
  %v9190 = vpack.c.bf16 %v8167, %v8121
  %v9191 = vpack.c.bf16 %v8259, %v8213
  %v9192 = vpack.c.bf16 %v8351, %v8305
  %v9193 = vpack.c.bf16 %v8443, %v8397
  %v9194 = vpack.c.bf16 %v8535, %v8489
  %v9195 = vpack.c.bf16 %v8627, %v8581
  %v9196 = vpack.c.bf16 %v8719, %v8673
  %v9197 = vpack.c.bf16 %v8811, %v8765
  %v9198 = vpack.c.bf16 %v8903, %v8857
  %v9199 = vpack.c.bf16 %v8995, %v8949
  %v9200 = vpack.c.bf16 %v9087, %v9041
  %v9201 = vpack.c.bf16 %v9179, %v9133
  %vm9202 = vcmask 392192
  %v9204 = vsel %vm9202, %v9188, 0
  %v9207 = vsel %vm9202, %v9189, 0
  %9209 = vmatprep.subr.bf16.mxu0 0
  %9210 = vmatpush1.bf16.msra.mxu0 %v9190
  %9211 = vmatprep.subr.bf16.mxu0 0
  %9212 = vmatpush1.bf16.msra.mxu0 %v9191
  %9213 = vmatprep.subr.bf16.mxu0 0
  %9214 = vmatpush1.bf16.msra.mxu0 %v9192
  %9215 = vmatprep.subr.bf16.mxu0 0
  %9216 = vmatpush1.bf16.msra.mxu0 0
  %9217 = vmatprep.subr.bf16.mxu0 0
  %9218 = vmatpush1.bf16.msra.mxu0 0
  %9219 = vmatprep.subr.bf16.mxu0 0
  %9220 = vmatpush1.bf16.msra.mxu0 0
  %9221 = vmatprep.subr.bf16.mxu0 0
  %9222 = vmatpush1.bf16.msra.mxu0 0
  %9223 = vmatprep.subr.bf16.mxu0 0
  %9224 = vmatpush1.bf16.msra.mxu0 0
  %9225 = vmatprep.subr.bf16.mxu0 0
  %9226 = vmatpush1.bf16.msra.mxu0 0
  %9227 = vmatprep.subr.bf16.mxu0 0
  %9228 = vmatpush1.bf16.msra.mxu0 0
  %9229 = vmatprep.subr.bf16.mxu0 0
  %9230 = vmatpush1.bf16.msra.mxu0 0
  %9231 = vmatprep.subr.bf16.mxu0 0
  %9232 = vmatpush1.bf16.msra.mxu0 0
  %9233 = vmatprep.subr.bf16.mxu0 0
  %9234 = vmatpush1.bf16.msra.mxu0 0
  %9235 = vmatprep.subr.bf16.mxu0 0
  %9236 = vmatpush1.bf16.msra.mxu0 0
  %9237 = vmatprep.subr.bf16.mxu0 0
  %9238 = vmatpush1.bf16.msra.mxu0 0
  %9239 = vmatprep.subr.bf16.mxu0 0
  %9240 = vmatpush1.bf16.msra.mxu0 0
  %9241 = vmatprep.mubr.bf16.mxu0 0
  %9242 = vmatmul.mubr.bf16.gmra.mrb[0].mxu0 %v9204
  %v9243 = vpop.f32.mrb[0].mxu0
  %v9244 = vadd.f32 0.0, %v9243
  %v9245 = vpop.f32.mrb[0].mxu0
  %v9246 = vpop.f32.mrb[0].mxu0
  %v9247 = vadd.f32 0.0, %v9246
  %v9248 = vpop.f32.mrb[0].mxu0
  %9249 = vmatprep.mubr.bf16.mxu0 0
  %9250 = vmatmul.mubr.bf16.gmra.mrb[0].mxu0 %v9207
  %v9251 = vpop.f32.mrb[0].mxu0
  %v9252 = vadd.f32 0.0, %v9251
  %v9253 = vpop.f32.mrb[0].mxu0
  %v9254 = vpop.f32.mrb[0].mxu0
  %v9255 = vadd.f32 0.0, %v9254
  %v9256 = vpop.f32.mrb[0].mxu0
  %9257 = vdwg.mxu0
  %9258 = vmatprep.subr.bf16.mxu0 0
  %9259 = vmatpush1.bf16.msra.mxu0 %v9193
  %9260 = vmatprep.subr.bf16.mxu0 0
  %9261 = vmatpush1.bf16.msra.mxu0 %v9194
  %9262 = vmatprep.subr.bf16.mxu0 0
  %9263 = vmatpush1.bf16.msra.mxu0 %v9195
  %9264 = vmatprep.subr.bf16.mxu0 0
  %9265 = vmatpush1.bf16.msra.mxu0 0
  %9266 = vmatprep.subr.bf16.mxu0 0
  %9267 = vmatpush1.bf16.msra.mxu0 0
  %9268 = vmatprep.subr.bf16.mxu0 0
  %9269 = vmatpush1.bf16.msra.mxu0 0
  %9270 = vmatprep.subr.bf16.mxu0 0
  %9271 = vmatpush1.bf16.msra.mxu0 0
  %9272 = vmatprep.subr.bf16.mxu0 0
  %9273 = vmatpush1.bf16.msra.mxu0 0
  %9274 = vmatprep.subr.bf16.mxu0 0
  %9275 = vmatpush1.bf16.msra.mxu0 0
  %9276 = vmatprep.subr.bf16.mxu0 0
  %9277 = vmatpush1.bf16.msra.mxu0 0
  %9278 = vmatprep.subr.bf16.mxu0 0
  %9279 = vmatpush1.bf16.msra.mxu0 0
  %9280 = vmatprep.subr.bf16.mxu0 0
  %9281 = vmatpush1.bf16.msra.mxu0 0
  %9282 = vmatprep.subr.bf16.mxu0 0
  %9283 = vmatpush1.bf16.msra.mxu0 0
  %9284 = vmatprep.subr.bf16.mxu0 0
  %9285 = vmatpush1.bf16.msra.mxu0 0
  %9286 = vmatprep.subr.bf16.mxu0 0
  %9287 = vmatpush1.bf16.msra.mxu0 0
  %9288 = vmatprep.subr.bf16.mxu0 0
  %9289 = vmatpush1.bf16.msra.mxu0 0
  %9290 = vmatprep.mubr.bf16.mxu0 0
  %9291 = vmatmul.mubr.bf16.gmra.mrb[0].mxu0 %v9204
  %v9292 = vpop.f32.mrb[0].mxu0
  %v9293 = vadd.f32 0.0, %v9292
  %v9294 = vpop.f32.mrb[0].mxu0
  %v9295 = vpop.f32.mrb[0].mxu0
  %v9296 = vadd.f32 0.0, %v9295
  %v9297 = vpop.f32.mrb[0].mxu0
  %9298 = vmatprep.mubr.bf16.mxu0 0
  %9299 = vmatmul.mubr.bf16.gmra.mrb[0].mxu0 %v9207
  %v9300 = vpop.f32.mrb[0].mxu0
  %v9301 = vadd.f32 0.0, %v9300
  %v9302 = vpop.f32.mrb[0].mxu0
  %v9303 = vpop.f32.mrb[0].mxu0
  %v9304 = vadd.f32 0.0, %v9303
  %v9305 = vpop.f32.mrb[0].mxu0
  %9306 = vdwg.mxu0
  %9307 = vmatprep.subr.bf16.mxu0 0
  %9308 = vmatpush1.bf16.msra.mxu0 %v9196
  %9309 = vmatprep.subr.bf16.mxu0 0
  %9310 = vmatpush1.bf16.msra.mxu0 %v9197
  %9311 = vmatprep.subr.bf16.mxu0 0
  %9312 = vmatpush1.bf16.msra.mxu0 %v9198
  %9313 = vmatprep.subr.bf16.mxu0 0
  %9314 = vmatpush1.bf16.msra.mxu0 0
  %9315 = vmatprep.subr.bf16.mxu0 0
  %9316 = vmatpush1.bf16.msra.mxu0 0
  %9317 = vmatprep.subr.bf16.mxu0 0
  %9318 = vmatpush1.bf16.msra.mxu0 0
  %9319 = vmatprep.subr.bf16.mxu0 0
  %9320 = vmatpush1.bf16.msra.mxu0 0
  %9321 = vmatprep.subr.bf16.mxu0 0
  %9322 = vmatpush1.bf16.msra.mxu0 0
  %9323 = vmatprep.subr.bf16.mxu0 0
  %9324 = vmatpush1.bf16.msra.mxu0 0
  %9325 = vmatprep.subr.bf16.mxu0 0
  %9326 = vmatpush1.bf16.msra.mxu0 0
  %9327 = vmatprep.subr.bf16.mxu0 0
  %9328 = vmatpush1.bf16.msra.mxu0 0
  %9329 = vmatprep.subr.bf16.mxu0 0
  %9330 = vmatpush1.bf16.msra.mxu0 0
  %9331 = vmatprep.subr.bf16.mxu0 0
  %9332 = vmatpush1.bf16.msra.mxu0 0
  %9333 = vmatprep.subr.bf16.mxu0 0
  %9334 = vmatpush1.bf16.msra.mxu0 0
  %9335 = vmatprep.subr.bf16.mxu0 0
  %9336 = vmatpush1.bf16.msra.mxu0 0
  %9337 = vmatprep.subr.bf16.mxu0 0
  %9338 = vmatpush1.bf16.msra.mxu0 0
  %9339 = vmatprep.mubr.bf16.mxu0 0
  %9340 = vmatmul.mubr.bf16.gmra.mrb[0].mxu0 %v9204
  %v9341 = vpop.f32.mrb[0].mxu0
  %v9342 = vadd.f32 0.0, %v9341
  %v9343 = vpop.f32.mrb[0].mxu0
  %v9344 = vpop.f32.mrb[0].mxu0
  %v9345 = vadd.f32 0.0, %v9344
  %v9346 = vpop.f32.mrb[0].mxu0
  %9347 = vmatprep.mubr.bf16.mxu0 0
  %9348 = vmatmul.mubr.bf16.gmra.mrb[0].mxu0 %v9207
  %v9349 = vpop.f32.mrb[0].mxu0
  %v9350 = vadd.f32 0.0, %v9349
  %v9351 = vpop.f32.mrb[0].mxu0
  %v9352 = vpop.f32.mrb[0].mxu0
  %v9353 = vadd.f32 0.0, %v9352
  %v9354 = vpop.f32.mrb[0].mxu0
  %9355 = vdwg.mxu0
  %9356 = vmatprep.subr.bf16.mxu0 0
  %9357 = vmatpush1.bf16.msra.mxu0 %v9199
  %9358 = vmatprep.subr.bf16.mxu0 0
  %9359 = vmatpush1.bf16.msra.mxu0 %v9200
  %9360 = vmatprep.subr.bf16.mxu0 0
  %9361 = vmatpush1.bf16.msra.mxu0 %v9201
  %9362 = vmatprep.subr.bf16.mxu0 0
  %9363 = vmatpush1.bf16.msra.mxu0 0
  %9364 = vmatprep.subr.bf16.mxu0 0
  %9365 = vmatpush1.bf16.msra.mxu0 0
  %9366 = vmatprep.subr.bf16.mxu0 0
  %9367 = vmatpush1.bf16.msra.mxu0 0
  %9368 = vmatprep.subr.bf16.mxu0 0
  %9369 = vmatpush1.bf16.msra.mxu0 0
  %9370 = vmatprep.subr.bf16.mxu0 0
  %9371 = vmatpush1.bf16.msra.mxu0 0
  %9372 = vmatprep.subr.bf16.mxu0 0
  %9373 = vmatpush1.bf16.msra.mxu0 0
  %9374 = vmatprep.subr.bf16.mxu0 0
  %9375 = vmatpush1.bf16.msra.mxu0 0
  %9376 = vmatprep.subr.bf16.mxu0 0
  %9377 = vmatpush1.bf16.msra.mxu0 0
  %9378 = vmatprep.subr.bf16.mxu0 0
  %9379 = vmatpush1.bf16.msra.mxu0 0
  %9380 = vmatprep.subr.bf16.mxu0 0
  %9381 = vmatpush1.bf16.msra.mxu0 0
  %9382 = vmatprep.subr.bf16.mxu0 0
  %9383 = vmatpush1.bf16.msra.mxu0 0
  %9384 = vmatprep.subr.bf16.mxu0 0
  %9385 = vmatpush1.bf16.msra.mxu0 0
  %9386 = vmatprep.subr.bf16.mxu0 0
  %9387 = vmatpush1.bf16.msra.mxu0 0
  %9388 = vmatprep.mubr.bf16.mxu0 0
  %9389 = vmatmul.mubr.bf16.gmra.mrb[0].mxu0 %v9204
  %v9390 = vpop.f32.mrb[0].mxu0
  %v9391 = vadd.f32 0.0, %v9390
  %v9392 = vpop.f32.mrb[0].mxu0
  %v9393 = vpop.f32.mrb[0].mxu0
  %v9394 = vadd.f32 0.0, %v9393
  %v9395 = vpop.f32.mrb[0].mxu0
  %9396 = vmatprep.mubr.bf16.mxu0 0
  %9397 = vmatmul.mubr.bf16.gmra.mrb[0].mxu0 %v9207
  %v9398 = vpop.f32.mrb[0].mxu0
  %v9399 = vadd.f32 0.0, %v9398
  %v9400 = vpop.f32.mrb[0].mxu0
  %v9401 = vpop.f32.mrb[0].mxu0
  %v9402 = vadd.f32 0.0, %v9401
  %v9403 = vpop.f32.mrb[0].mxu0
  %9404 = vdwg.mxu0
  %v9405 = vpack.c.bf16 %v9247, %v9244
  %v9406 = vpack.c.bf16 %v9255, %v9252
  %v9407 = vpack.c.bf16 %v9296, %v9293
  %v9408 = vpack.c.bf16 %v9304, %v9301
  %v9409 = vpack.c.bf16 %v9345, %v9342
  %v9410 = vpack.c.bf16 %v9353, %v9350
  %v9411 = vpack.c.bf16 %v9394, %v9391
  %v9412 = vpack.c.bf16 %v9402, %v9399
  %v9413 = vld [vmem:[%s17] sm:$0xff]
  %v9414 = vld [vmem:[%s17 + $0x8] sm:$0xff]
  %v9415 = vld [vmem:[%s17 + $0x10] sm:$0xff]
  %v9416 = vld [vmem:[%s17 + $0x18] sm:$0xff]
  %v9417 = vpack.c.bf16 %v9413, %v9413
  %v9418 = vpack.c.bf16 %v9414, %v9414
  %v9419 = vpack.c.bf16 %v9415, %v9415
  %v9420 = vpack.c.bf16 %v9416, %v9416
  %v9422 = vsel %vm2384, %v9405, 0
  %v9425 = vsel %vm2384, %v9406, 0
  %v9428 = vsel %vm5068, %v9417, 0
  %9430 = vmatprep.subr.bf16.mxu0 0
  %9431 = vmatpush1.bf16.msra.mxu0 %v9428
  %9432 = vmatprep.subr.bf16.mxu0 0
  %9433 = vmatpush1.bf16.msra.mxu0 0
  %9434 = vmatprep.subr.bf16.mxu0 0
  %9435 = vmatpush1.bf16.msra.mxu0 0
  %9436 = vmatprep.subr.bf16.mxu0 0
  %9437 = vmatpush1.bf16.msra.mxu0 0
  %9438 = vmatprep.subr.bf16.mxu0 0
  %9439 = vmatpush1.bf16.msra.mxu0 0
  %9440 = vmatprep.subr.bf16.mxu0 0
  %9441 = vmatpush1.bf16.msra.mxu0 0
  %9442 = vmatprep.subr.bf16.mxu0 0
  %9443 = vmatpush1.bf16.msra.mxu0 0
  %9444 = vmatprep.subr.bf16.mxu0 0
  %9445 = vmatpush1.bf16.msra.mxu0 0
  %9446 = vmatprep.subr.bf16.mxu0 0
  %9447 = vmatpush1.bf16.msra.mxu0 0
  %9448 = vmatprep.subr.bf16.mxu0 0
  %9449 = vmatpush1.bf16.msra.mxu0 0
  %9450 = vmatprep.subr.bf16.mxu0 0
  %9451 = vmatpush1.bf16.msra.mxu0 0
  %9452 = vmatprep.subr.bf16.mxu0 0
  %9453 = vmatpush1.bf16.msra.mxu0 0
  %9454 = vmatprep.subr.bf16.mxu0 0
  %9455 = vmatpush1.bf16.msra.mxu0 0
  %9456 = vmatprep.subr.bf16.mxu0 0
  %9457 = vmatpush1.bf16.msra.mxu0 0
  %9458 = vmatprep.subr.bf16.mxu0 0
  %9459 = vmatpush1.bf16.msra.mxu0 0
  %9460 = vmatprep.subr.bf16.mxu0 0
  %9461 = vmatpush1.bf16.msra.mxu0 0
  %9462 = vmatprep.mubr.bf16.mxu0 0
  %9463 = vmatmul.mubr.bf16.gmra.mrb[0].mxu0 %v9422
  %v9464 = vpop.f32.mrb[0].mxu0
  %v9465 = vadd.f32 0.0, %v9464
  %v9466 = vpop.f32.mrb[0].mxu0
  %v9467 = vpop.f32.mrb[0].mxu0
  %v9468 = vadd.f32 0.0, %v9467
  %v9469 = vpop.f32.mrb[0].mxu0
  %9470 = vmatprep.mubr.bf16.mxu0 0
  %9471 = vmatmul.mubr.bf16.gmra.mrb[0].mxu0 %v9425
  %v9472 = vpop.f32.mrb[0].mxu0
  %v9473 = vadd.f32 0.0, %v9472
  %v9474 = vpop.f32.mrb[0].mxu0
  %v9475 = vpop.f32.mrb[0].mxu0
  %v9476 = vadd.f32 0.0, %v9475
  %v9477 = vpop.f32.mrb[0].mxu0
  %9478 = vdwg.mxu0
  %v9480 = vsel %vm2384, %v9407, 0
  %v9483 = vsel %vm2384, %v9408, 0
  %v9486 = vsel %vm5068, %v9418, 0
  %9488 = vmatprep.subr.bf16.mxu0 0
  %9489 = vmatpush1.bf16.msra.mxu0 %v9486
  %9490 = vmatprep.subr.bf16.mxu0 0
  %9491 = vmatpush1.bf16.msra.mxu0 0
  %9492 = vmatprep.subr.bf16.mxu0 0
  %9493 = vmatpush1.bf16.msra.mxu0 0
  %9494 = vmatprep.subr.bf16.mxu0 0
  %9495 = vmatpush1.bf16.msra.mxu0 0
  %9496 = vmatprep.subr.bf16.mxu0 0
  %9497 = vmatpush1.bf16.msra.mxu0 0
  %9498 = vmatprep.subr.bf16.mxu0 0
  %9499 = vmatpush1.bf16.msra.mxu0 0
  %9500 = vmatprep.subr.bf16.mxu0 0
  %9501 = vmatpush1.bf16.msra.mxu0 0
  %9502 = vmatprep.subr.bf16.mxu0 0
  %9503 = vmatpush1.bf16.msra.mxu0 0
  %9504 = vmatprep.subr.bf16.mxu0 0
  %9505 = vmatpush1.bf16.msra.mxu0 0
  %9506 = vmatprep.subr.bf16.mxu0 0
  %9507 = vmatpush1.bf16.msra.mxu0 0
  %9508 = vmatprep.subr.bf16.mxu0 0
  %9509 = vmatpush1.bf16.msra.mxu0 0
  %9510 = vmatprep.subr.bf16.mxu0 0
  %9511 = vmatpush1.bf16.msra.mxu0 0
  %9512 = vmatprep.subr.bf16.mxu0 0
  %9513 = vmatpush1.bf16.msra.mxu0 0
  %9514 = vmatprep.subr.bf16.mxu0 0
  %9515 = vmatpush1.bf16.msra.mxu0 0
  %9516 = vmatprep.subr.bf16.mxu0 0
  %9517 = vmatpush1.bf16.msra.mxu0 0
  %9518 = vmatprep.subr.bf16.mxu0 0
  %9519 = vmatpush1.bf16.msra.mxu0 0
  %9520 = vmatprep.mubr.bf16.mxu0 0
  %9521 = vmatmul.mubr.bf16.gmra.mrb[0].mxu0 %v9480
  %v9522 = vpop.f32.mrb[0].mxu0
  %v9523 = vadd.f32 0.0, %v9522
  %v9524 = vpop.f32.mrb[0].mxu0
  %v9525 = vpop.f32.mrb[0].mxu0
  %v9526 = vadd.f32 0.0, %v9525
  %v9527 = vpop.f32.mrb[0].mxu0
  %9528 = vmatprep.mubr.bf16.mxu0 0
  %9529 = vmatmul.mubr.bf16.gmra.mrb[0].mxu0 %v9483
  %v9530 = vpop.f32.mrb[0].mxu0
  %v9531 = vadd.f32 0.0, %v9530
  %v9532 = vpop.f32.mrb[0].mxu0
  %v9533 = vpop.f32.mrb[0].mxu0
  %v9534 = vadd.f32 0.0, %v9533
  %v9535 = vpop.f32.mrb[0].mxu0
  %9536 = vdwg.mxu0
  %v9538 = vsel %vm2384, %v9409, 0
  %v9541 = vsel %vm2384, %v9410, 0
  %v9544 = vsel %vm5068, %v9419, 0
  %9546 = vmatprep.subr.bf16.mxu0 0
  %9547 = vmatpush1.bf16.msra.mxu0 %v9544
  %9548 = vmatprep.subr.bf16.mxu0 0
  %9549 = vmatpush1.bf16.msra.mxu0 0
  %9550 = vmatprep.subr.bf16.mxu0 0
  %9551 = vmatpush1.bf16.msra.mxu0 0
  %9552 = vmatprep.subr.bf16.mxu0 0
  %9553 = vmatpush1.bf16.msra.mxu0 0
  %9554 = vmatprep.subr.bf16.mxu0 0
  %9555 = vmatpush1.bf16.msra.mxu0 0
  %9556 = vmatprep.subr.bf16.mxu0 0
  %9557 = vmatpush1.bf16.msra.mxu0 0
  %9558 = vmatprep.subr.bf16.mxu0 0
  %9559 = vmatpush1.bf16.msra.mxu0 0
  %9560 = vmatprep.subr.bf16.mxu0 0
  %9561 = vmatpush1.bf16.msra.mxu0 0
  %9562 = vmatprep.subr.bf16.mxu0 0
  %9563 = vmatpush1.bf16.msra.mxu0 0
  %9564 = vmatprep.subr.bf16.mxu0 0
  %9565 = vmatpush1.bf16.msra.mxu0 0
  %9566 = vmatprep.subr.bf16.mxu0 0
  %9567 = vmatpush1.bf16.msra.mxu0 0
  %9568 = vmatprep.subr.bf16.mxu0 0
  %9569 = vmatpush1.bf16.msra.mxu0 0
  %9570 = vmatprep.subr.bf16.mxu0 0
  %9571 = vmatpush1.bf16.msra.mxu0 0
  %9572 = vmatprep.subr.bf16.mxu0 0
  %9573 = vmatpush1.bf16.msra.mxu0 0
  %9574 = vmatprep.subr.bf16.mxu0 0
  %9575 = vmatpush1.bf16.msra.mxu0 0
  %9576 = vmatprep.subr.bf16.mxu0 0
  %9577 = vmatpush1.bf16.msra.mxu0 0
  %9578 = vmatprep.mubr.bf16.mxu0 0
  %9579 = vmatmul.mubr.bf16.gmra.mrb[0].mxu0 %v9538
  %v9580 = vpop.f32.mrb[0].mxu0
  %v9581 = vadd.f32 0.0, %v9580
  %v9582 = vpop.f32.mrb[0].mxu0
  %v9583 = vpop.f32.mrb[0].mxu0
  %v9584 = vadd.f32 0.0, %v9583
  %v9585 = vpop.f32.mrb[0].mxu0
  %9586 = vmatprep.mubr.bf16.mxu0 0
  %9587 = vmatmul.mubr.bf16.gmra.mrb[0].mxu0 %v9541
  %v9588 = vpop.f32.mrb[0].mxu0
  %v9589 = vadd.f32 0.0, %v9588
  %v9590 = vpop.f32.mrb[0].mxu0
  %v9591 = vpop.f32.mrb[0].mxu0
  %v9592 = vadd.f32 0.0, %v9591
  %v9593 = vpop.f32.mrb[0].mxu0
  %9594 = vdwg.mxu0
  %v9596 = vsel %vm2384, %v9411, 0
  %v9599 = vsel %vm2384, %v9412, 0
  %v9602 = vsel %vm5068, %v9420, 0
  %9604 = vmatprep.subr.bf16.mxu0 0
  %9605 = vmatpush1.bf16.msra.mxu0 %v9602
  %9606 = vmatprep.subr.bf16.mxu0 0
  %9607 = vmatpush1.bf16.msra.mxu0 0
  %9608 = vmatprep.subr.bf16.mxu0 0
  %9609 = vmatpush1.bf16.msra.mxu0 0
  %9610 = vmatprep.subr.bf16.mxu0 0
  %9611 = vmatpush1.bf16.msra.mxu0 0
  %9612 = vmatprep.subr.bf16.mxu0 0
  %9613 = vmatpush1.bf16.msra.mxu0 0
  %9614 = vmatprep.subr.bf16.mxu0 0
  %9615 = vmatpush1.bf16.msra.mxu0 0
  %9616 = vmatprep.subr.bf16.mxu0 0
  %9617 = vmatpush1.bf16.msra.mxu0 0
  %9618 = vmatprep.subr.bf16.mxu0 0
  %9619 = vmatpush1.bf16.msra.mxu0 0
  %9620 = vmatprep.subr.bf16.mxu0 0
  %9621 = vmatpush1.bf16.msra.mxu0 0
  %9622 = vmatprep.subr.bf16.mxu0 0
  %9623 = vmatpush1.bf16.msra.mxu0 0
  %9624 = vmatprep.subr.bf16.mxu0 0
  %9625 = vmatpush1.bf16.msra.mxu0 0
  %9626 = vmatprep.subr.bf16.mxu0 0
  %9627 = vmatpush1.bf16.msra.mxu0 0
  %9628 = vmatprep.subr.bf16.mxu0 0
  %9629 = vmatpush1.bf16.msra.mxu0 0
  %9630 = vmatprep.subr.bf16.mxu0 0
  %9631 = vmatpush1.bf16.msra.mxu0 0
  %9632 = vmatprep.subr.bf16.mxu0 0
  %9633 = vmatpush1.bf16.msra.mxu0 0
  %9634 = vmatprep.subr.bf16.mxu0 0
  %9635 = vmatpush1.bf16.msra.mxu0 0
  %9636 = vmatprep.mubr.bf16.mxu0 0
  %9637 = vmatmul.mubr.bf16.gmra.mrb[0].mxu0 %v9596
  %v9638 = vpop.f32.mrb[0].mxu0
  %v9639 = vadd.f32 0.0, %v9638
  %v9640 = vpop.f32.mrb[0].mxu0
  %v9641 = vpop.f32.mrb[0].mxu0
  %v9642 = vadd.f32 0.0, %v9641
  %v9643 = vpop.f32.mrb[0].mxu0
  %9644 = vmatprep.mubr.bf16.mxu0 0
  %9645 = vmatmul.mubr.bf16.gmra.mrb[0].mxu0 %v9599
  %v9646 = vpop.f32.mrb[0].mxu0
  %v9647 = vadd.f32 0.0, %v9646
  %v9648 = vpop.f32.mrb[0].mxu0
  %v9649 = vpop.f32.mrb[0].mxu0
  %v9650 = vadd.f32 0.0, %v9649
  %v9651 = vpop.f32.mrb[0].mxu0
  %9652 = vdwg.mxu0
  %v9653 = vsel %vm81, %v9465, 0.0
  %v9654 = vsel %vm81, %v9523, 0.0
  %v9655 = vadd.f32 %v9653, %v9654
  %v9656 = vsel %vm81, %v9581, 0.0
  %v9657 = vadd.f32 %v9655, %v9656
  %v9658 = vsel %vm81, %v9639, 0.0
  %v9659 = vadd.f32 %v9657, %v9658
  %v9660 = vsel %vm81, %v9468, 0.0
  %v9661 = vsel %vm81, %v9526, 0.0
  %v9662 = vadd.f32 %v9660, %v9661
  %v9663 = vsel %vm81, %v9584, 0.0
  %v9664 = vadd.f32 %v9662, %v9663
  %v9665 = vsel %vm81, %v9642, 0.0
  %v9666 = vadd.f32 %v9664, %v9665
  %v9667 = vsel %vm81, %v9473, 0.0
  %v9668 = vsel %vm81, %v9531, 0.0
  %v9669 = vadd.f32 %v9667, %v9668
  %v9670 = vsel %vm81, %v9589, 0.0
  %v9671 = vadd.f32 %v9669, %v9670
  %v9672 = vsel %vm81, %v9647, 0.0
  %v9673 = vadd.f32 %v9671, %v9672
  %v9674 = vsel %vm81, %v9476, 0.0
  %v9675 = vsel %vm81, %v9534, 0.0
  %v9676 = vadd.f32 %v9674, %v9675
  %v9677 = vsel %vm81, %v9592, 0.0
  %v9678 = vadd.f32 %v9676, %v9677
  %v9679 = vsel %vm81, %v9650, 0.0
  %v9680 = vadd.f32 %v9678, %v9679
  %v9681 = vadd.f32 %v66, %v9659
  %v9682 = vadd.f32 %v67, %v9666
  %v9683 = vadd.f32 %v68, %v9673
  %v9684 = vadd.f32 %v69, %v9680
  %v9685 = vld [vmem:[%s3] sm:$0x1]
  %v9686 = vmul.f32 %v9681, %v9681
  %v9687 = vmul.f32 %v9682, %v9682
  %v9688 = vmul.f32 %v9683, %v9683
  %v9689 = vmul.f32 %v9684, %v9684
  %v9690 = vsel %vm81, %v9686, 0.0
  %9691 = vadd.xlane.f32.xlu0 %v9690
  %v9692 = vpop.xlane.xlu0 %9691
  %v9693 = vsel %vm81, %v9687, 0.0
  %9694 = vadd.xlane.f32.xlu0 %v9693
  %v9695 = vpop.xlane.xlu0 %9694
  %v9696 = vsel %vm81, %v9688, 0.0
  %9697 = vadd.xlane.f32.xlu0 %v9696
  %v9698 = vpop.xlane.xlu0 %9697
  %v9699 = vsel %vm81, %v9689, 0.0
  %9700 = vadd.xlane.f32.xlu0 %v9699
  %v9701 = vpop.xlane.xlu0 %9700
  %v9702 = vmul.f32 %v9692, %v94
  %v9703 = vmul.f32 %v9695, %v94
  %v9704 = vmul.f32 %v9698, %v94
  %v9705 = vmul.f32 %v9701, %v94
  %v9706 = vadd.f32 %v9702, 1e-06
  %v9707 = vadd.f32 %v9703, 1e-06
  %v9708 = vadd.f32 %v9704, 1e-06
  %v9709 = vadd.f32 %v9705, 1e-06
  %v9710 = vrsqrt.pop %v9706
  %v9711 = vrsqrt.pop %v9707
  %v9712 = vrsqrt.pop %v9708
  %v9713 = vrsqrt.pop %v9709
  %v9714 = vmul.f32 %v9681, %v9710
  %v9715 = vmul.f32 %v9682, %v9711
  %v9716 = vmul.f32 %v9683, %v9712
  %v9717 = vmul.f32 %v9684, %v9713
  %v9719 = vlaneseq
  %v9720 = vshrl.u32 %v9719, 7
  %v9721 = vsub.s32 0, %v9720
  %v9722 = vrot.slane %v9685, %v9721
  %v9724 = vmul.f32 %v9714, %v9722
  %v9725 = vmul.f32 %v9715, %v9722
  %v9726 = vmul.f32 %v9716, %v9722
  %v9727 = vmul.f32 %v9717, %v9722
  %v9728 = vpack.c.bf16 %v9725, %v9724
  %v9729 = vpack.c.bf16 %v9727, %v9726
  %v9730 = vld [vmem:[%s18] sm:$0xff]
  %v9731 = vld [vmem:[%s18 + $0x8] sm:$0xff]
  %v9732 = vld [vmem:[%s18 + $0x10] sm:$0xff]
  %v9733 = vld [vmem:[%s18 + $0x18] sm:$0xff]
  %v9734 = vpack.c.bf16 %v9731, %v9730
  %v9735 = vpack.c.bf16 %v9733, %v9732
  %v9737 = vsel %vm81, %v9728, 0
  %v9740 = vsel %vm81, %v9729, 0
  %9742 = vmatprep.subr.bf16.mxu0 0
  %9743 = vmatpush1.bf16.msra.mxu0 %v9734
  %9744 = vmatprep.subr.bf16.mxu0 0
  %9745 = vmatpush1.bf16.msra.mxu0 %v9735
  %9746 = vmatprep.subr.bf16.mxu0 0
  %9747 = vmatpush1.bf16.msra.mxu0 0
  %9748 = vmatprep.subr.bf16.mxu0 0
  %9749 = vmatpush1.bf16.msra.mxu0 0
  %9750 = vmatprep.subr.bf16.mxu0 0
  %9751 = vmatpush1.bf16.msra.mxu0 0
  %9752 = vmatprep.subr.bf16.mxu0 0
  %9753 = vmatpush1.bf16.msra.mxu0 0
  %9754 = vmatprep.subr.bf16.mxu0 0
  %9755 = vmatpush1.bf16.msra.mxu0 0
  %9756 = vmatprep.subr.bf16.mxu0 0
  %9757 = vmatpush1.bf16.msra.mxu0 0
  %9758 = vmatprep.subr.bf16.mxu0 0
  %9759 = vmatpush1.bf16.msra.mxu0 0
  %9760 = vmatprep.subr.bf16.mxu0 0
  %9761 = vmatpush1.bf16.msra.mxu0 0
  %9762 = vmatprep.subr.bf16.mxu0 0
  %9763 = vmatpush1.bf16.msra.mxu0 0
  %9764 = vmatprep.subr.bf16.mxu0 0
  %9765 = vmatpush1.bf16.msra.mxu0 0
  %9766 = vmatprep.subr.bf16.mxu0 0
  %9767 = vmatpush1.bf16.msra.mxu0 0
  %9768 = vmatprep.subr.bf16.mxu0 0
  %9769 = vmatpush1.bf16.msra.mxu0 0
  %9770 = vmatprep.subr.bf16.mxu0 0
  %9771 = vmatpush1.bf16.msra.mxu0 0
  %9772 = vmatprep.subr.bf16.mxu0 0
  %9773 = vmatpush1.bf16.msra.mxu0 0
  %9774 = vmatprep.mubr.bf16.mxu0 0
  %9775 = vmatmul.mubr.bf16.gmra.mrb[0].mxu0 %v9737
  %v9776 = vpop.f32.mrb[0].mxu0
  %v9777 = vadd.f32 0.0, %v9776
  %v9778 = vpop.f32.mrb[0].mxu0
  %v9779 = vpop.f32.mrb[0].mxu0
  %v9780 = vadd.f32 0.0, %v9779
  %v9781 = vpop.f32.mrb[0].mxu0
  %9782 = vmatprep.mubr.bf16.mxu0 0
  %9783 = vmatmul.mubr.bf16.gmra.mrb[0].mxu0 %v9740
  %v9784 = vpop.f32.mrb[0].mxu0
  %v9785 = vadd.f32 0.0, %v9784
  %v9786 = vpop.f32.mrb[0].mxu0
  %v9787 = vpop.f32.mrb[0].mxu0
  %v9788 = vadd.f32 0.0, %v9787
  %v9789 = vpop.f32.mrb[0].mxu0
  %9790 = vdwg.mxu0
  %v9791 = vxor.u32 %v9777, 2147483648
  %v9792 = vxor.u32 %v9780, 2147483648
  %v9793 = vxor.u32 %v9785, 2147483648
  %v9794 = vxor.u32 %v9788, 2147483648
  %v9795 = vmul.f32 %v9791, 1.442695
  %v9796 = vpow.pop %v9795
  %v9797 = vmul.f32 %v9792, 1.442695
  %v9798 = vpow.pop %v9797
  %v9799 = vmul.f32 %v9793, 1.442695
  %v9800 = vpow.pop %v9799
  %v9801 = vmul.f32 %v9794, 1.442695
  %v9802 = vpow.pop %v9801
  %v9803 = vadd.f32 %v9796, 1.0
  %v9804 = vadd.f32 %v9798, 1.0
  %v9805 = vadd.f32 %v9800, 1.0
  %v9806 = vadd.f32 %v9802, 1.0
  %v9807 = vrcp.pop %v9803
  %v9808 = vmul.f32 1.0, %v9807
  %v9809 = vrcp.pop %v9804
  %v9810 = vmul.f32 1.0, %v9809
  %v9811 = vrcp.pop %v9805
  %v9812 = vmul.f32 1.0, %v9811
  %v9813 = vrcp.pop %v9806
  %v9814 = vmul.f32 1.0, %v9813
  %v9815 = vmul.f32 %v9777, %v9808
  %v9816 = vmul.f32 %v9780, %v9810
  %v9817 = vmul.f32 %v9785, %v9812
  %v9818 = vmul.f32 %v9788, %v9814
  %9823 = vrot.lane.b32.xlu0 %v9777, 64
  %v9824 = vpop.permute.xlu0 %9823
  %9825 = vrot.lane.b32.xlu0 %v9780, 64
  %v9826 = vpop.permute.xlu0 %9825
  %9827 = vrot.lane.b32.xlu0 %v9785, 64
  %v9828 = vpop.permute.xlu0 %9827
  %9829 = vrot.lane.b32.xlu0 %v9788, 64
  %v9830 = vpop.permute.xlu0 %9829
  %v9835 = vmul.f32 %v9815, %v9824
  %v9836 = vmul.f32 %v9816, %v9826
  %v9837 = vmul.f32 %v9817, %v9828
  %v9838 = vmul.f32 %v9818, %v9830
  %v9839 = vpack.c.bf16 %v9836, %v9835
  %v9840 = vpack.c.bf16 %v9838, %v9837
  %v9841 = vld [vmem:[%s19] sm:$0xff]
  %v9842 = vld [vmem:[%s19 + $0x8] sm:$0xff]
  %v9843 = vld [vmem:[%s19 + $0x10] sm:$0xff]
  %v9844 = vld [vmem:[%s19 + $0x18] sm:$0xff]
  %v9845 = vld [vmem:[%s19 + $0x20] sm:$0xff]
  %v9846 = vld [vmem:[%s19 + $0x28] sm:$0xff]
  %v9847 = vld [vmem:[%s19 + $0x30] sm:$0xff]
  %v9848 = vld [vmem:[%s19 + $0x38] sm:$0xff]
  %v9849 = vpack.c.bf16 %v9842, %v9841
  %v9850 = vpack.c.bf16 %v9844, %v9843
  %v9851 = vpack.c.bf16 %v9846, %v9845
  %v9852 = vpack.c.bf16 %v9848, %v9847
  %vm9853 = vcmask 523264
  %v9855 = vsel %vm9853, %v9839, 0
  %v9858 = vsel %vm9853, %v9840, 0
  %9860 = vmatprep.subr.bf16.mxu0 0
  %9861 = vmatpush1.bf16.msra.mxu0 %v9849
  %9862 = vmatprep.subr.bf16.mxu0 0
  %9863 = vmatpush1.bf16.msra.mxu0 %v9850
  %9864 = vmatprep.subr.bf16.mxu0 0
  %9865 = vmatpush1.bf16.msra.mxu0 %v9851
  %9866 = vmatprep.subr.bf16.mxu0 0
  %9867 = vmatpush1.bf16.msra.mxu0 %v9852
  %9868 = vmatprep.subr.bf16.mxu0 0
  %9869 = vmatpush1.bf16.msra.mxu0 0
  %9870 = vmatprep.subr.bf16.mxu0 0
  %9871 = vmatpush1.bf16.msra.mxu0 0
  %9872 = vmatprep.subr.bf16.mxu0 0
  %9873 = vmatpush1.bf16.msra.mxu0 0
  %9874 = vmatprep.subr.bf16.mxu0 0
  %9875 = vmatpush1.bf16.msra.mxu0 0
  %9876 = vmatprep.subr.bf16.mxu0 0
  %9877 = vmatpush1.bf16.msra.mxu0 0
  %9878 = vmatprep.subr.bf16.mxu0 0
  %9879 = vmatpush1.bf16.msra.mxu0 0
  %9880 = vmatprep.subr.bf16.mxu0 0
  %9881 = vmatpush1.bf16.msra.mxu0 0
  %9882 = vmatprep.subr.bf16.mxu0 0
  %9883 = vmatpush1.bf16.msra.mxu0 0
  %9884 = vmatprep.subr.bf16.mxu0 0
  %9885 = vmatpush1.bf16.msra.mxu0 0
  %9886 = vmatprep.subr.bf16.mxu0 0
  %9887 = vmatpush1.bf16.msra.mxu0 0
  %9888 = vmatprep.subr.bf16.mxu0 0
  %9889 = vmatpush1.bf16.msra.mxu0 0
  %9890 = vmatprep.subr.bf16.mxu0 0
  %9891 = vmatpush1.bf16.msra.mxu0 0
  %9892 = vmatprep.mubr.bf16.mxu0 0
  %9893 = vmatmul.mubr.bf16.gmra.mrb[0].mxu0 %v9855
  %v9894 = vpop.f32.mrb[0].mxu0
  %v9895 = vadd.f32 0.0, %v9894
  %v9896 = vpop.f32.mrb[0].mxu0
  %v9897 = vpop.f32.mrb[0].mxu0
  %v9898 = vadd.f32 0.0, %v9897
  %v9899 = vpop.f32.mrb[0].mxu0
  %9900 = vmatprep.mubr.bf16.mxu0 0
  %9901 = vmatmul.mubr.bf16.gmra.mrb[0].mxu0 %v9858
  %v9902 = vpop.f32.mrb[0].mxu0
  %v9903 = vadd.f32 0.0, %v9902
  %v9904 = vpop.f32.mrb[0].mxu0
  %v9905 = vpop.f32.mrb[0].mxu0
  %v9906 = vadd.f32 0.0, %v9905
  %v9907 = vpop.f32.mrb[0].mxu0
  %9908 = vdwg.mxu0
  %v9909 = vadd.f32 %v9681, %v9895
  %v9910 = vadd.f32 %v9682, %v9898
  %v9911 = vadd.f32 %v9683, %v9903
  %v9912 = vadd.f32 %v9684, %v9906
  %v9917 = vrot.slane %v9910, 7
  %v9918 = vsel %vm4921, %v9917, %v9909
  %v9919 = vrot.slane %v9911, 6
  %v9920 = vsel %vm4922, %v9919, %v9918
  %v9921 = vrot.slane %v9912, 5
  %v9922 = vsel %vm4924, %v9921, %v9920
  %v9924 = vrot.slane %v9909, 1
  %v9925 = vsel %vm4921, %v9910, %v9924
  %v9926 = vrot.slane %v9911, 7
  %v9927 = vsel %vm4922, %v9926, %v9925
  %v9928 = vrot.slane %v9912, 6
  %v9929 = vsel %vm4924, %v9928, %v9927
  %9930 = vrot.lane.b32.xlu0 %v9929, 32
  %v9931 = vpop.permute.xlu0 %9930
  %v9933 = vrot.slane %v9909, 2
  %v9934 = vrot.slane %v9910, 1
  %v9935 = vsel %vm4921, %v9934, %v9933
  %v9936 = vsel %vm4922, %v9911, %v9935
  %v9937 = vrot.slane %v9912, 7
  %v9938 = vsel %vm4924, %v9937, %v9936
  %9939 = vrot.lane.b32.xlu0 %v9938, 64
  %v9940 = vpop.permute.xlu0 %9939
  %v9942 = vrot.slane %v9909, 3
  %v9943 = vrot.slane %v9910, 2
  %v9944 = vsel %vm4921, %v9943, %v9942
  %v9945 = vrot.slane %v9911, 1
  %v9946 = vsel %vm4922, %v9945, %v9944
  %v9947 = vsel %vm4924, %v9912, %v9946
  %9948 = vrot.lane.b32.xlu0 %v9947, 96
  %v9949 = vpop.permute.xlu0 %9948
  %v9951 = vrot.slane %v9909, 4
  %v9952 = vrot.slane %v9910, 3
  %v9953 = vsel %vm4921, %v9952, %v9951
  %v9954 = vrot.slane %v9911, 2
  %v9955 = vsel %vm4922, %v9954, %v9953
  %v9956 = vrot.slane %v9912, 1
  %v9957 = vsel %vm4924, %v9956, %v9955
  %v9959 = vrot.slane %v9909, 5
  %v9960 = vrot.slane %v9910, 4
  %v9961 = vsel %vm4921, %v9960, %v9959
  %v9962 = vrot.slane %v9911, 3
  %v9963 = vsel %vm4922, %v9962, %v9961
  %v9964 = vrot.slane %v9912, 2
  %v9965 = vsel %vm4924, %v9964, %v9963
  %9966 = vrot.lane.b32.xlu0 %v9965, 32
  %v9967 = vpop.permute.xlu0 %9966
  %v9969 = vrot.slane %v9909, 6
  %v9970 = vrot.slane %v9910, 5
  %v9971 = vsel %vm4921, %v9970, %v9969
  %v9972 = vrot.slane %v9911, 4
  %v9973 = vsel %vm4922, %v9972, %v9971
  %v9974 = vrot.slane %v9912, 3
  %v9975 = vsel %vm4924, %v9974, %v9973
  %9976 = vrot.lane.b32.xlu0 %v9975, 64
  %v9977 = vpop.permute.xlu0 %9976
  %v9979 = vrot.slane %v9909, 7
  %v9980 = vrot.slane %v9910, 6
  %v9981 = vsel %vm4921, %v9980, %v9979
  %v9982 = vrot.slane %v9911, 5
  %v9983 = vsel %vm4922, %v9982, %v9981
  %v9984 = vrot.slane %v9912, 4
  %v9985 = vsel %vm4924, %v9984, %v9983
  %9986 = vrot.lane.b32.xlu0 %v9985, 96
  %v9987 = vpop.permute.xlu0 %9986
  %v9989 = vsel %vm81, %v9922, %v9931
  %v9990 = vsel %vm9853, %v9989, %v9940
  %vm9991 = vcmask 785408
  %v9992 = vsel %vm9991, %v9990, %v9949
  %v9993 = vsel %vm81, %v9957, %v9967
  %v9994 = vsel %vm9853, %v9993, %v9977
  %v9995 = vsel %vm9991, %v9994, %v9987
  %v9998 = vcombine.low %v9992, %v9995
  %10000 = vst [vmem:[%s20] sm:$0xff] %v9998
  // Predicated region
  $region82: #{gofa_decoder_layer.1} parent=0 // pred_check
    _
  $region83: #{gofa_decoder_layer.1} parent=0 // pred_check_branch
    %10002 = sbr.rel (0) target = $region85
  $region84: #{gofa_decoder_layer.1} parent=0 // pred_region
    _
  $region85: #{gofa_decoder_layer.1} parent=0 // pred_fallthru
    _
  // Predicated region
  $region86: #{gofa_decoder_layer.1} parent=0 // pred_check
    _
  $region87: #{gofa_decoder_layer.1} parent=0 // pred_check_branch
    %10004 = sbr.rel (0) target = $region89
  $region88: #{gofa_decoder_layer.1} parent=0 // pred_region
    _
  $region89: #{gofa_decoder_layer.1} parent=0 // pred_fallthru
    _

</llo_original>
